<compile_context>
chip_gen: v6e
topology: v6e:2x2x1
jax: 0.10.0
libtpu: 0.0.40
codegen_flags: <defaults>
</compile_context>

<pallas_src>
import functools

import jax
import jax.numpy as jnp
from jax import lax
from jax.experimental import pallas as pl
from jax.experimental.pallas import tpu as pltpu


# ----------------------------- Pallas kernel --------------------------------
def attention_kernel(x_ref, wqkv_ref, bqkv_ref, wpe_ref, bpe_ref,
                     wproj_ref, bproj_ref, o_ref,
                     *, num_heads, key_dim, head_dim, H, W):
    C = num_heads * head_dim
    N = H * W
    nq = num_heads * key_dim  # rows in the q group (== k group)

    x = x_ref[...]  # (C, N) lane-dense slab

    # qkv 1x1 conv (BN folded; rows pre-permuted to [q | k | v] grouped layout,
    # attention scale pre-folded into the q rows):  (h, C) @ (C, N) + (h, 1)
    qkv = jnp.dot(wqkv_ref[...], x, preferred_element_type=jnp.float32) + bqkv_ref[...]

    # contiguous, tile-aligned row blocks (no strided per-head sublane gathers)
    q = qkv[:nq, :].reshape(num_heads, key_dim, N)           # (nh, kd, N), scale folded in
    k = qkv[nq:2 * nq, :].reshape(num_heads, key_dim, N)     # (nh, kd, N)
    v_flat = qkv[2 * nq:, :]                                 # (C, N) head-major, zero-cost view
    v = v_flat.reshape(num_heads, head_dim, N)               # (nh, hd, N)

    # ---- attention, computed transposed: keys (m) on sublanes, queries (n) on lanes ----
    # s_T[h, m, n] = sum_d k[h, d, m] * q[h, d, n]
    s_t = jnp.einsum('hdm,hdn->hmn', k, q,
                     preferred_element_type=jnp.float32)      # (nh, N, N)
    # softmax over keys (axis=1) = sublane reduction; max lands lane-dense (nh, 1, N)
    m_max = jnp.max(s_t, axis=1, keepdims=True)
    p_t = jnp.exp(s_t - m_max).astype(jnp.bfloat16)           # (nh, N, N) bf16 MXU operand

    # fuse the softmax denominator into the V matmul: append a ones row to v so that
    # row `head_dim` of the result is l[h, n] = sum_m p_T[h, m, n].
    v_aug = jnp.concatenate([v, jnp.ones_like(v[:, :1, :])], axis=1)   # (nh, hd+1, N)
    out_aug = jnp.einsum('hdm,hmn->hdn', v_aug.astype(jnp.bfloat16), p_t,
                         preferred_element_type=jnp.float32)           # (nh, hd+1, N)
    l = out_aug[:, head_dim:, :]                                       # (nh, 1, N) lane-dense
    out = (out_aug[:, :head_dim, :] / l).reshape(C, N)                 # normalized (C, N)

    # ---- positional encoding: depthwise 3x3 conv (stride 1, pad 1) over v, computed on
    # the lane-dense (C, N) layout with lane rolls + iota edge masks (no padded scratch).
    n_idx = lax.broadcasted_iota(jnp.int32, (C, N), 1)
    col = n_idx % W
    ok_up = n_idx >= W                 # row above exists    (di = -1)
    ok_down = n_idx < (H - 1) * W      # row below exists    (di = +1)
    ok_left = col >= 1                 # column left exists  (dj = -1)
    ok_right = col <= W - 2            # column right exists (dj = +1)

    wpe = wpe_ref[...]                                   # (C, 9) depthwise taps
    w_taps = [wpe[:, t:t + 1] for t in range(9)]         # hoisted (C, 1) slices

    pe = jnp.zeros((C, N), jnp.float32)
    for di in (-1, 0, 1):
        for dj in (-1, 0, 1):
            off = di * W + dj
            tap = w_taps[(di + 1) * 3 + (dj + 1)]
            if off == 0:
                shifted = v_flat
            else:
                shifted = pltpu.roll(v_flat, shift=(-off) % N, axis=1)
            mask = None
            if di == -1:
                mask = ok_up
            elif di == 1:
                mask = ok_down
            if dj == -1:
                mask = ok_left if mask is None else jnp.logical_and(mask, ok_left)
            elif dj == 1:
                mask = ok_right if mask is None else jnp.logical_and(mask, ok_right)
            contrib = shifted if mask is None else jnp.where(mask, shifted, 0.0)
            pe = pe + tap * contrib
    pe = pe + bpe_ref[...]                                # (C, 1) bias

    # ---- proj 1x1 conv (BN folded) ----
    y = out + pe
    o = jnp.dot(wproj_ref[...], y, preferred_element_type=jnp.float32) + bproj_ref[...]
    o_ref[...] = o.astype(o_ref.dtype)


# ------------------------------ wrapper --------------------------------------
def attention_pallas(x, params, *, num_heads, key_dim, head_dim):
    B, C, H, W = x.shape
    N = H * W
    hc = 2 * key_dim + head_dim
    h_ch = hc * num_heads
    nq = num_heads * key_dim
    scale = float(key_dim) ** -0.5
    xf = x.reshape(B, C, N)

    # Host-side weight prep (free one-off parameter shuffle, per perf review):
    #  * permute qkv rows from per-head-interleaved [q|k|v] to grouped
    #    [all q | all k | all v] (head-major within each group),
    #  * fold the attention scale into the q rows (weights and bias).
    heads = jnp.arange(num_heads)
    q_rows = (heads[:, None] * hc + jnp.arange(key_dim)[None, :]).reshape(-1)
    k_rows = q_rows + key_dim
    v_rows = (heads[:, None] * hc + 2 * key_dim + jnp.arange(head_dim)[None, :]).reshape(-1)
    perm = jnp.concatenate([q_rows, k_rows, v_rows])
    row_scale = jnp.where(jnp.arange(h_ch) < nq, scale, 1.0).astype(jnp.float32)[:, None]
    wqkv_g = params["wqkv"][perm] * row_scale
    bqkv_g = params["bqkv"][perm] * row_scale

    kernel = functools.partial(
        attention_kernel, num_heads=num_heads, key_dim=key_dim,
        head_dim=head_dim, H=H, W=W)

    out = pl.pallas_call(
        kernel,
        out_shape=jax.ShapeDtypeStruct((B, C, N), jnp.float32),
        grid_spec=pltpu.PrefetchScalarGridSpec(
            num_scalar_prefetch=0,
            grid=(B,),
            in_specs=[
                pl.BlockSpec((None, C, N), lambda b: (b, 0, 0)),  # x (batch squeezed)
                pl.BlockSpec((h_ch, C), lambda b: (0, 0)),        # wqkv (grouped rows)
                pl.BlockSpec((h_ch, 1), lambda b: (0, 0)),        # bqkv
                pl.BlockSpec((C, 9), lambda b: (0, 0)),           # wpe (depthwise taps)
                pl.BlockSpec((C, 1), lambda b: (0, 0)),           # bpe
                pl.BlockSpec((C, C), lambda b: (0, 0)),           # wproj
                pl.BlockSpec((C, 1), lambda b: (0, 0)),           # bproj
            ],
            out_specs=pl.BlockSpec((None, C, N), lambda b: (b, 0, 0)),
        ),
        compiler_params=pltpu.CompilerParams(
            dimension_semantics=("parallel",),
            vmem_limit_bytes=32 * 1024 * 1024,
        ),
    )(xf, wqkv_g, bqkv_g, params["wpe"], params["bpe"],
      params["wproj"], params["bproj"])
    return out.reshape(B, C, H, W)


# --------------------------- parameter init -----------------------------------
def _fold_bn(w_flat, gamma, beta, mean, var, eps=1e-3):
    s = gamma / jnp.sqrt(var + eps)
    return w_flat * s[:, None], beta - mean * s


def init_params(key, dim, num_heads, attn_ratio=0.5):
    head_dim = dim // num_heads
    key_dim = int(head_dim * attn_ratio)
    h = dim + 2 * key_dim * num_heads
    keys = jax.random.split(key, 6)

    def bn(k, c):
        k1, k2, k3, k4 = jax.random.split(k, 4)
        gamma = jax.random.uniform(k1, (c,), minval=0.5, maxval=1.5)
        beta = 0.1 * jax.random.normal(k2, (c,))
        mean = 0.1 * jax.random.normal(k3, (c,))
        var = jax.random.uniform(k4, (c,), minval=0.5, maxval=1.5)
        return gamma, beta, mean, var

    w_qkv = 0.1 * jax.random.normal(keys[0], (h, dim), dtype=jnp.float32)
    w_proj = 0.1 * jax.random.normal(keys[1], (dim, dim), dtype=jnp.float32)
    w_pe = 0.1 * jax.random.normal(keys[2], (dim, 9), dtype=jnp.float32)  # depthwise (C,1,3,3) flat

    wqkv, bqkv = _fold_bn(w_qkv, *bn(keys[3], h))
    wproj, bproj = _fold_bn(w_proj, *bn(keys[4], dim))
    wpe, bpe = _fold_bn(w_pe, *bn(keys[5], dim))

    return dict(wqkv=wqkv, bqkv=bqkv[:, None],
                wpe=wpe, bpe=bpe[:, None],
                wproj=wproj, bproj=bproj[:, None])


# --------------------------- pure-JAX reference --------------------------------
def attention_reference(x, params, num_heads, key_dim, head_dim):
    B, C, H, W = x.shape
    N = H * W
    scale = float(key_dim) ** -0.5
    P = jax.lax.Precision.HIGHEST

    xf = x.reshape(B, C, N)
    qkv = jnp.einsum('oc,bcn->bon', params["wqkv"], xf, precision=P) + params["bqkv"][None]
    qkv = qkv.reshape(B, num_heads, -1, N)
    q = qkv[:, :, :key_dim]
    k = qkv[:, :, key_dim:2 * key_dim]
    v = qkv[:, :, 2 * key_dim:]

    attn = jnp.einsum('bhdn,bhdm->bhnm', q, k, precision=P) * scale
    attn = jax.nn.softmax(attn, axis=-1)
    out = jnp.einsum('bhdm,bhnm->bhdn', v, attn, precision=P).reshape(B, C, H, W)

    v_img = v.reshape(B, C, H, W)
    wpe4 = params["wpe"].reshape(C, 1, 3, 3)
    pe = lax.conv_general_dilated(
        v_img, wpe4, (1, 1), [(1, 1), (1, 1)],
        feature_group_count=C,
        dimension_numbers=('NCHW', 'OIHW', 'NCHW'),
        precision=P) + params["bpe"].reshape(1, C, 1, 1)

    y = out + pe
    o = jnp.einsum('oc,bchw->bohw', params["wproj"], y, precision=P) \
        + params["bproj"].reshape(1, C, 1, 1)
    return o


# --------------------------------- main -----------------------------------------
if __name__ == "__main__":
    B, dim, H, W = 2, 32, 16, 16
    num_heads = 8
    attn_ratio = 0.5
    head_dim = dim // num_heads            # 4
    key_dim = int(head_dim * attn_ratio)   # 2

    key = jax.random.PRNGKey(0)
    kx, kp = jax.random.split(key)
    x = jax.random.normal(kx, (B, dim, H, W), dtype=jnp.float32)
    params = init_params(kp, dim, num_heads, attn_ratio)

    out = attention_pallas(x, params, num_heads=num_heads,
                           key_dim=key_dim, head_dim=head_dim)
    out = jax.block_until_ready(out)

    ref = attention_reference(x, params, num_heads, key_dim, head_dim)
    assert out.shape == (B, dim, H, W)
    max_err = float(jnp.max(jnp.abs(out - ref)))
    if max_err > 1e-2:
        raise SystemExit(f"mismatch vs reference, max abs err = {max_err:e}")
    print("KERNEL_OK")
</pallas_src>

<mosaic_0001>
module attributes {stable_mosaic.version = 11 : i64} {
  func.func @attention_kernel(%arg0: i32, %arg1: memref<1x32x256xf32, #tpu.memory_space<vmem>>, %arg2: memref<64x32xf32, #tpu.memory_space<vmem>>, %arg3: memref<64x1xf32, #tpu.memory_space<vmem>>, %arg4: memref<32x9xf32, #tpu.memory_space<vmem>>, %arg5: memref<32x1xf32, #tpu.memory_space<vmem>>, %arg6: memref<32x32xf32, #tpu.memory_space<vmem>>, %arg7: memref<32x1xf32, #tpu.memory_space<vmem>>, %arg8: memref<1x32x256xf32, #tpu.memory_space<vmem>>) attributes {dimension_semantics = [#tpu.dimension_semantics<parallel>], iteration_bounds = array<i64: 2>, scalar_prefetch = 0 : i64, scratch_operands = 0 : i64, tpu.core_type = #tpu.core_type<tc>, window_params = [{transform_indices = @transform_0, window_bounds = array<i64: 1, 32, 256>}, {pipeline_mode = #tpu.pipeline_mode<synchronous>, transform_indices = @transform_1, window_bounds = array<i64: 64, 32>}, {pipeline_mode = #tpu.pipeline_mode<synchronous>, transform_indices = @transform_2, window_bounds = array<i64: 64, 1>}, {pipeline_mode = #tpu.pipeline_mode<synchronous>, transform_indices = @transform_3, window_bounds = array<i64: 32, 9>}, {pipeline_mode = #tpu.pipeline_mode<synchronous>, transform_indices = @transform_4, window_bounds = array<i64: 32, 1>}, {pipeline_mode = #tpu.pipeline_mode<synchronous>, transform_indices = @transform_5, window_bounds = array<i64: 32, 32>}, {pipeline_mode = #tpu.pipeline_mode<synchronous>, transform_indices = @transform_6, window_bounds = array<i64: 32, 1>}, {transform_indices = @transform_7, window_bounds = array<i64: 1, 32, 256>}]} {
    %c0 = arith.constant 0 : index
    %c0_0 = arith.constant 0 : index
    %c0_1 = arith.constant 0 : index
    %0 = vector.load %arg1[%c0, %c0_0, %c0_1] : memref<1x32x256xf32, #tpu.memory_space<vmem>>, vector<1x32x256xf32>
    %1 = vector.shape_cast %0 : vector<1x32x256xf32> to vector<32x256xf32>
    %c0_2 = arith.constant 0 : index
    %c0_3 = arith.constant 0 : index
    %2 = vector.load %arg2[%c0_2, %c0_3] : memref<64x32xf32, #tpu.memory_space<vmem>>, vector<64x32xf32>
    %cst = arith.constant dense<0.000000e+00> : vector<64x256xf32>
    %3 = tpu.matmul %2, %1, %cst {dimension_numbers = #tpu.dot_dimension_numbers<[1], [0], [0], [1], [0, 0, 1, 1], [], []>} : vector<64x32xf32>, vector<32x256xf32>, vector<64x256xf32> -> vector<64x256xf32>
    %c0_4 = arith.constant 0 : index
    %c0_5 = arith.constant 0 : index
    %4 = vector.load %arg3[%c0_4, %c0_5] : memref<64x1xf32, #tpu.memory_space<vmem>>, vector<64x1xf32>
    %5 = vector.broadcast %4 : vector<64x1xf32> to vector<64x256xf32>
    %6 = arith.addf %3, %5 : vector<64x256xf32>
    %7 = vector.extract_strided_slice %6 {offsets = [0, 0], sizes = [16, 256], strides = [1, 1]} : vector<64x256xf32> to vector<16x256xf32>
    %8 = vector.shape_cast %7 : vector<16x256xf32> to vector<8x2x256xf32>
    %9 = vector.extract_strided_slice %6 {offsets = [16, 0], sizes = [16, 256], strides = [1, 1]} : vector<64x256xf32> to vector<16x256xf32>
    %10 = vector.shape_cast %9 : vector<16x256xf32> to vector<8x2x256xf32>
    %11 = vector.extract_strided_slice %6 {offsets = [32, 0], sizes = [32, 256], strides = [1, 1]} : vector<64x256xf32> to vector<32x256xf32>
    %12 = vector.shape_cast %11 : vector<32x256xf32> to vector<8x4x256xf32>
    "tpu.trace_start"() <{level = 10 : i32, message = "hdm,hdn->hmn"}> : () -> ()
    %cst_6 = arith.constant dense<0.000000e+00> : vector<8x256x256xf32>
    %13 = tpu.matmul %10, %8, %cst_6 {dimension_numbers = #tpu.dot_dimension_numbers<[1], [1], [2], [2], [0, 0, 0, 2, 1, 2], [0], [0]>} : vector<8x2x256xf32>, vector<8x2x256xf32>, vector<8x256x256xf32> -> vector<8x256x256xf32>
    "tpu.trace_stop"() : () -> ()
    %cst_7 = arith.constant dense<0xFF800000> : vector<8x256xf32>
    %14 = vector.multi_reduction <maximumf>, %13, %cst_7 [1] : vector<8x256x256xf32> to vector<8x256xf32>
    %15 = vector.shape_cast %14 : vector<8x256xf32> to vector<8x1x256xf32>
    %16 = vector.broadcast %15 : vector<8x1x256xf32> to vector<8x256x256xf32>
    %17 = arith.subf %13, %16 : vector<8x256x256xf32>
    %18 = math.exp %17 : vector<8x256x256xf32>
    %19 = arith.truncf %18 : vector<8x256x256xf32> to vector<8x256x256xbf16>
    %cst_8 = arith.constant 1.000000e+00 : f32
    %20 = vector.broadcast %cst_8 : f32 to vector<8x1x256xf32>
    %21 = tpu.concatenate %12, %20 in 1 : vector<8x4x256xf32>, vector<8x1x256xf32> -> vector<8x5x256xf32>
    %22 = arith.truncf %21 : vector<8x5x256xf32> to vector<8x5x256xbf16>
    "tpu.trace_start"() <{level = 10 : i32, message = "hdm,hmn->hdn"}> : () -> ()
    %cst_9 = arith.constant dense<0.000000e+00> : vector<8x5x256xf32>
    %23 = tpu.matmul %22, %19, %cst_9 {dimension_numbers = #tpu.dot_dimension_numbers<[2], [1], [1], [2], [0, 0, 0, 1, 1, 2], [0], [0]>} : vector<8x5x256xbf16>, vector<8x256x256xbf16>, vector<8x5x256xf32> -> vector<8x5x256xf32>
    "tpu.trace_stop"() : () -> ()
    %24 = vector.extract_strided_slice %23 {offsets = [0, 4, 0], sizes = [8, 1, 256], strides = [1, 1, 1]} : vector<8x5x256xf32> to vector<8x1x256xf32>
    %25 = vector.extract_strided_slice %23 {offsets = [0, 0, 0], sizes = [8, 4, 256], strides = [1, 1, 1]} : vector<8x5x256xf32> to vector<8x4x256xf32>
    %26 = vector.broadcast %24 : vector<8x1x256xf32> to vector<8x4x256xf32>
    %27 = arith.divf %25, %26 : vector<8x4x256xf32>
    %28 = vector.shape_cast %27 : vector<8x4x256xf32> to vector<32x256xf32>
    %29 = tpu.iota {dimensions = array<i32: 1>} : vector<32x256xi32>
    %c16_i32 = arith.constant 16 : i32
    %c0_i32 = arith.constant 0 : i32
    %30 = arith.cmpi eq, %c16_i32, %c0_i32 : i32
    %c1_i32 = arith.constant 1 : i32
    %31 = arith.select %30, %c1_i32, %c16_i32 : i32
    %32 = vector.broadcast %31 : i32 to vector<32x256xi32>
    %33 = arith.remsi %29, %32 : vector<32x256xi32>
    %c0_i32_10 = arith.constant 0 : i32
    %34 = vector.broadcast %c0_i32_10 : i32 to vector<32x256xi32>
    %35 = arith.cmpi ne, %33, %34 : vector<32x256xi32>
    %c0_i32_11 = arith.constant 0 : i32
    %36 = vector.broadcast %c0_i32_11 : i32 to vector<32x256xi32>
    %37 = arith.cmpi slt, %33, %36 : vector<32x256xi32>
    %c0_i32_12 = arith.constant 0 : i32
    %38 = arith.cmpi slt, %31, %c0_i32_12 : i32
    %39 = vector.broadcast %38 : i1 to vector<32x256xi1>
    %40 = vector.broadcast %39 : vector<32x256xi1> to vector<32x256xi1>
    %41 = arith.xori %37, %40 : vector<32x256xi1>
    %42 = arith.andi %41, %35 : vector<32x256xi1>
    %43 = vector.broadcast %31 : i32 to vector<32x256xi32>
    %44 = arith.addi %33, %43 : vector<32x256xi32>
    %45 = arith.select %42, %44, %33 : vector<32x256xi1>, vector<32x256xi32>
    %c16_i32_13 = arith.constant 16 : i32
    %46 = vector.broadcast %c16_i32_13 : i32 to vector<32x256xi32>
    %47 = arith.cmpi sge, %29, %46 : vector<32x256xi32>
    %c240_i32 = arith.constant 240 : i32
    %48 = vector.broadcast %c240_i32 : i32 to vector<32x256xi32>
    %49 = arith.cmpi slt, %29, %48 : vector<32x256xi32>
    %c1_i32_14 = arith.constant 1 : i32
    %50 = vector.broadcast %c1_i32_14 : i32 to vector<32x256xi32>
    %51 = arith.cmpi sge, %45, %50 : vector<32x256xi32>
    %c14_i32 = arith.constant 14 : i32
    %52 = vector.broadcast %c14_i32 : i32 to vector<32x256xi32>
    %53 = arith.cmpi sle, %45, %52 : vector<32x256xi32>
    %c0_15 = arith.constant 0 : index
    %c0_16 = arith.constant 0 : index
    %54 = vector.load %arg4[%c0_15, %c0_16] : memref<32x9xf32, #tpu.memory_space<vmem>>, vector<32x9xf32>
    %55 = vector.extract_strided_slice %54 {offsets = [0, 0], sizes = [32, 1], strides = [1, 1]} : vector<32x9xf32> to vector<32x1xf32>
    %56 = vector.extract_strided_slice %54 {offsets = [0, 1], sizes = [32, 1], strides = [1, 1]} : vector<32x9xf32> to vector<32x1xf32>
    %57 = vector.extract_strided_slice %54 {offsets = [0, 2], sizes = [32, 1], strides = [1, 1]} : vector<32x9xf32> to vector<32x1xf32>
    %58 = vector.extract_strided_slice %54 {offsets = [0, 3], sizes = [32, 1], strides = [1, 1]} : vector<32x9xf32> to vector<32x1xf32>
    %59 = vector.extract_strided_slice %54 {offsets = [0, 4], sizes = [32, 1], strides = [1, 1]} : vector<32x9xf32> to vector<32x1xf32>
    %60 = vector.extract_strided_slice %54 {offsets = [0, 5], sizes = [32, 1], strides = [1, 1]} : vector<32x9xf32> to vector<32x1xf32>
    %61 = vector.extract_strided_slice %54 {offsets = [0, 6], sizes = [32, 1], strides = [1, 1]} : vector<32x9xf32> to vector<32x1xf32>
    %62 = vector.extract_strided_slice %54 {offsets = [0, 7], sizes = [32, 1], strides = [1, 1]} : vector<32x9xf32> to vector<32x1xf32>
    %63 = vector.extract_strided_slice %54 {offsets = [0, 8], sizes = [32, 1], strides = [1, 1]} : vector<32x9xf32> to vector<32x1xf32>
    %cst_17 = arith.constant 0.000000e+00 : f32
    %64 = vector.broadcast %cst_17 : f32 to vector<32x256xf32>
    %c17_i32 = arith.constant 17 : i32
    %65 = tpu.dynamic_rotate %11 by %c17_i32 dim 1 : vector<32x256xf32>, i32 -> vector<32x256xf32>
    %66 = arith.andi %47, %51 : vector<32x256xi1>
    %cst_18 = arith.constant 0.000000e+00 : f32
    %67 = vector.broadcast %cst_18 : f32 to vector<32x256xf32>
    %68 = arith.select %66, %65, %67 : vector<32x256xi1>, vector<32x256xf32>
    %69 = vector.broadcast %55 : vector<32x1xf32> to vector<32x256xf32>
    %70 = arith.mulf %69, %68 : vector<32x256xf32>
    %71 = arith.addf %64, %70 : vector<32x256xf32>
    %c16_i32_19 = arith.constant 16 : i32
    %72 = tpu.dynamic_rotate %11 by %c16_i32_19 dim 1 : vector<32x256xf32>, i32 -> vector<32x256xf32>
    %cst_20 = arith.constant 0.000000e+00 : f32
    %73 = vector.broadcast %cst_20 : f32 to vector<32x256xf32>
    %74 = arith.select %47, %72, %73 : vector<32x256xi1>, vector<32x256xf32>
    %75 = vector.broadcast %56 : vector<32x1xf32> to vector<32x256xf32>
    %76 = arith.mulf %75, %74 : vector<32x256xf32>
    %77 = arith.addf %71, %76 : vector<32x256xf32>
    %c15_i32 = arith.constant 15 : i32
    %78 = tpu.dynamic_rotate %11 by %c15_i32 dim 1 : vector<32x256xf32>, i32 -> vector<32x256xf32>
    %79 = arith.andi %47, %53 : vector<32x256xi1>
    %cst_21 = arith.constant 0.000000e+00 : f32
    %80 = vector.broadcast %cst_21 : f32 to vector<32x256xf32>
    %81 = arith.select %79, %78, %80 : vector<32x256xi1>, vector<32x256xf32>
    %82 = vector.broadcast %57 : vector<32x1xf32> to vector<32x256xf32>
    %83 = arith.mulf %82, %81 : vector<32x256xf32>
    %84 = arith.addf %77, %83 : vector<32x256xf32>
    %c1_i32_22 = arith.constant 1 : i32
    %85 = tpu.dynamic_rotate %11 by %c1_i32_22 dim 1 : vector<32x256xf32>, i32 -> vector<32x256xf32>
    %cst_23 = arith.constant 0.000000e+00 : f32
    %86 = vector.broadcast %cst_23 : f32 to vector<32x256xf32>
    %87 = arith.select %51, %85, %86 : vector<32x256xi1>, vector<32x256xf32>
    %88 = vector.broadcast %58 : vector<32x1xf32> to vector<32x256xf32>
    %89 = arith.mulf %88, %87 : vector<32x256xf32>
    %90 = arith.addf %84, %89 : vector<32x256xf32>
    %91 = vector.broadcast %59 : vector<32x1xf32> to vector<32x256xf32>
    %92 = arith.mulf %91, %11 : vector<32x256xf32>
    %93 = arith.addf %90, %92 : vector<32x256xf32>
    %c255_i32 = arith.constant 255 : i32
    %94 = tpu.dynamic_rotate %11 by %c255_i32 dim 1 : vector<32x256xf32>, i32 -> vector<32x256xf32>
    %cst_24 = arith.constant 0.000000e+00 : f32
    %95 = vector.broadcast %cst_24 : f32 to vector<32x256xf32>
    %96 = arith.select %53, %94, %95 : vector<32x256xi1>, vector<32x256xf32>
    %97 = vector.broadcast %60 : vector<32x1xf32> to vector<32x256xf32>
    %98 = arith.mulf %97, %96 : vector<32x256xf32>
    %99 = arith.addf %93, %98 : vector<32x256xf32>
    %c241_i32 = arith.constant 241 : i32
    %100 = tpu.dynamic_rotate %11 by %c241_i32 dim 1 : vector<32x256xf32>, i32 -> vector<32x256xf32>
    %101 = arith.andi %49, %51 : vector<32x256xi1>
    %cst_25 = arith.constant 0.000000e+00 : f32
    %102 = vector.broadcast %cst_25 : f32 to vector<32x256xf32>
    %103 = arith.select %101, %100, %102 : vector<32x256xi1>, vector<32x256xf32>
    %104 = vector.broadcast %61 : vector<32x1xf32> to vector<32x256xf32>
    %105 = arith.mulf %104, %103 : vector<32x256xf32>
    %106 = arith.addf %99, %105 : vector<32x256xf32>
    %c240_i32_26 = arith.constant 240 : i32
    %107 = tpu.dynamic_rotate %11 by %c240_i32_26 dim 1 : vector<32x256xf32>, i32 -> vector<32x256xf32>
    %cst_27 = arith.constant 0.000000e+00 : f32
    %108 = vector.broadcast %cst_27 : f32 to vector<32x256xf32>
    %109 = arith.select %49, %107, %108 : vector<32x256xi1>, vector<32x256xf32>
    %110 = vector.broadcast %62 : vector<32x1xf32> to vector<32x256xf32>
    %111 = arith.mulf %110, %109 : vector<32x256xf32>
    %112 = arith.addf %106, %111 : vector<32x256xf32>
    %c239_i32 = arith.constant 239 : i32
    %113 = tpu.dynamic_rotate %11 by %c239_i32 dim 1 : vector<32x256xf32>, i32 -> vector<32x256xf32>
    %114 = arith.andi %49, %53 : vector<32x256xi1>
    %cst_28 = arith.constant 0.000000e+00 : f32
    %115 = vector.broadcast %cst_28 : f32 to vector<32x256xf32>
    %116 = arith.select %114, %113, %115 : vector<32x256xi1>, vector<32x256xf32>
    %117 = vector.broadcast %63 : vector<32x1xf32> to vector<32x256xf32>
    %118 = arith.mulf %117, %116 : vector<32x256xf32>
    %119 = arith.addf %112, %118 : vector<32x256xf32>
    %c0_29 = arith.constant 0 : index
    %c0_30 = arith.constant 0 : index
    %120 = vector.load %arg5[%c0_29, %c0_30] : memref<32x1xf32, #tpu.memory_space<vmem>>, vector<32x1xf32>
    %121 = vector.broadcast %120 : vector<32x1xf32> to vector<32x256xf32>
    %122 = arith.addf %119, %121 : vector<32x256xf32>
    %123 = arith.addf %28, %122 : vector<32x256xf32>
    %c0_31 = arith.constant 0 : index
    %c0_32 = arith.constant 0 : index
    %124 = vector.load %arg6[%c0_31, %c0_32] : memref<32x32xf32, #tpu.memory_space<vmem>>, vector<32x32xf32>
    %cst_33 = arith.constant dense<0.000000e+00> : vector<32x256xf32>
    %125 = tpu.matmul %124, %123, %cst_33 {dimension_numbers = #tpu.dot_dimension_numbers<[1], [0], [0], [1], [0, 0, 1, 1], [], []>} : vector<32x32xf32>, vector<32x256xf32>, vector<32x256xf32> -> vector<32x256xf32>
    %c0_34 = arith.constant 0 : index
    %c0_35 = arith.constant 0 : index
    %126 = vector.load %arg7[%c0_34, %c0_35] : memref<32x1xf32, #tpu.memory_space<vmem>>, vector<32x1xf32>
    %127 = vector.broadcast %126 : vector<32x1xf32> to vector<32x256xf32>
    %128 = arith.addf %125, %127 : vector<32x256xf32>
    %c0_36 = arith.constant 0 : index
    %c0_37 = arith.constant 0 : index
    %c0_38 = arith.constant 0 : index
    %129 = vector.load %arg8[%c0_36, %c0_37, %c0_38] : memref<1x32x256xf32, #tpu.memory_space<vmem>>, vector<1x32x256xf32>
    %130 = vector.shape_cast %129 : vector<1x32x256xf32> to vector<32x256xf32>
    %131 = vector.shape_cast %128 : vector<32x256xf32> to vector<1x32x256xf32>
    tpu.vector_store %arg8[%c0_36, %c0_37, %c0_38], %131 {strides = array<i32>} : memref<1x32x256xf32, #tpu.memory_space<vmem>>, vector<1x32x256xf32>,
    return
  }
  func.func @transform_0(%arg0: i32) -> (i32, i32, i32) {
    %c0_i32 = arith.constant 0 : i32
    %c0_i32_0 = arith.constant 0 : i32
    %c0_i32_1 = arith.constant 0 : i32
    return %arg0, %c0_i32, %c0_i32_0 : i32, i32, i32
  }
  func.func @transform_1(%arg0: i32) -> (i32, i32) {
    %c0_i32 = arith.constant 0 : i32
    %c0_i32_0 = arith.constant 0 : i32
    %c0_i32_1 = arith.constant 0 : i32
    return %c0_i32, %c0_i32_0 : i32, i32
  }
  func.func @transform_2(%arg0: i32) -> (i32, i32) {
    %c0_i32 = arith.constant 0 : i32
    %c0_i32_0 = arith.constant 0 : i32
    %c0_i32_1 = arith.constant 0 : i32
    return %c0_i32, %c0_i32_0 : i32, i32
  }
  func.func @transform_3(%arg0: i32) -> (i32, i32) {
    %c0_i32 = arith.constant 0 : i32
    %c0_i32_0 = arith.constant 0 : i32
    %c0_i32_1 = arith.constant 0 : i32
    return %c0_i32, %c0_i32_0 : i32, i32
  }
  func.func @transform_4(%arg0: i32) -> (i32, i32) {
    %c0_i32 = arith.constant 0 : i32
    %c0_i32_0 = arith.constant 0 : i32
    %c0_i32_1 = arith.constant 0 : i32
    return %c0_i32, %c0_i32_0 : i32, i32
  }
  func.func @transform_5(%arg0: i32) -> (i32, i32) {
    %c0_i32 = arith.constant 0 : i32
    %c0_i32_0 = arith.constant 0 : i32
    %c0_i32_1 = arith.constant 0 : i32
    return %c0_i32, %c0_i32_0 : i32, i32
  }
  func.func @transform_6(%arg0: i32) -> (i32, i32) {
    %c0_i32 = arith.constant 0 : i32
    %c0_i32_0 = arith.constant 0 : i32
    %c0_i32_1 = arith.constant 0 : i32
    return %c0_i32, %c0_i32_0 : i32, i32
  }
  func.func @transform_7(%arg0: i32) -> (i32, i32, i32) {
    %c0_i32 = arith.constant 0 : i32
    %c0_i32_0 = arith.constant 0 : i32
    %c0_i32_1 = arith.constant 0 : i32
    return %arg0, %c0_i32, %c0_i32_0 : i32, i32, i32
  }
}

</mosaic_0001>

<llo_original>
// kernel: tpu_custom_call.1
$region0: #{tpu_custom_call.1}
  #allocation0 [shape = 'u32[]', space=smem, size = 0x4, offset = 0x4, fixed_abs, tag = 'smem constant byte address 0x4 - core index']
  #allocation1 [shape = 'u32[144,128]{1,0:T(1,128)}', space=vmem, size = 0x12000, scoped, tag = 'internal scratch']
  %s0 = inlined_call_operand.vmem [shape: f32[2,32,256], index: 0, kind: input, shape index: {}]
  %s1 = inlined_call_operand.vmem [shape: f32[64,32], index: 1, kind: input, shape index: {}]
  %s2 = inlined_call_operand.vmem [shape: f32[64,1], index: 2, kind: input, shape index: {}]
  %s3 = inlined_call_operand.vmem [shape: f32[32,9], index: 3, kind: input, shape index: {}]
  %s4 = inlined_call_operand.vmem [shape: f32[32,1], index: 4, kind: input, shape index: {}]
  %s5 = inlined_call_operand.vmem [shape: f32[32,32], index: 5, kind: input, shape index: {}]
  %s6 = inlined_call_operand.vmem [shape: f32[32,1], index: 6, kind: input, shape index: {}]
  %s7 = inlined_call_operand.hbm [shape: f32[2,32,256], index: 7, kind: output, shape index: {}]
  %s8 = sld [smem:[#allocation0]]
  $region61: #{tpu_custom_call.1} parent=0
    _
  %s10 = ssub.s32 1, %s8
  %s11 = scalar_select 0, %s10, %s8
  $region1: #{tpu_custom_call.1} parent=0
    #allocation2 [shape = 'u8[65536]{0}', space=vmem, size = 0x10000, scoped, tag = 'output window, operand 0']
    #allocation3 [shape = 's32[2]{0}', space=sflag, size = 0x8, scoped, tag = 'scoped memory for tpu_custom_call.1']
    %12 = vsyncpa [#allocation3], 0
    %s13 = scalar_lea.sflag [#allocation3], 1
    %14 = vsyncpa %s13, 0
    loop: start=0, step=1, limit=4
    $region2: #{tpu_custom_call.1} parent=1 // loop_pre_header
      _
    $region3: #{tpu_custom_call.1} parent=1 // loop_header
      %s16 = sphi 0, %s20
      %p17 = scmp.ge.s32.totalorder %s16, 4
      %s26 = sphi 0, %s28
      %s29 = sphi 0, %s26
      %s30 = sphi 0, %s29
      %s46 = sphi 0, %s30
      %s50 = sphi 0, %s50
      %s52 = sphi 0, %s50
      %s53 = sphi 0, %s52
      %s67 = sphi 0, %s53
      %s71 = sphi 0, %s71
      %s73 = sphi 0, %s71
      %s74 = sphi 0, %s73
      %s88 = sphi 0, %s74
      %s92 = sphi 0, %s92
      %s94 = sphi 0, %s92
      %s95 = sphi 0, %s94
      %s109 = sphi 0, %s95
      %s113 = sphi 0, %s113
      %s115 = sphi 0, %s113
      %s116 = sphi 0, %s115
      %s130 = sphi 0, %s116
      %s134 = sphi 0, %s134
      %s136 = sphi 0, %s134
      %s137 = sphi 0, %s136
      %s151 = sphi 0, %s137
      %s155 = sphi 0, %s155
      %s157 = sphi 0, %s155
      %s158 = sphi 0, %s157
      %s172 = sphi 0, %s158
      %s178 = sphi 0, %s180
      %s181 = sphi 0, %s178
      %s182 = sphi 0, %s181
      %s198 = sphi 0, %s182
    $region4: #{tpu_custom_call.1} parent=1 // loop_header_branch
      %19 = sbr.rel (%p17) target = $region8
    $region5: #{tpu_custom_call.1} parent=1 // loop_body
      %s21 = ssub.s32 %s16, 1
      %s22 = ssub.s32 %s16, 2
      %s23 = sadd.s32 %s16, 1
      %s24 = ssub.s32 %s16, %s23
      %p25 = scmp.eq.s32.totalorder %s24, 0
      %s27 = sadd.s32 %s26, 1
      %s28 = scalar_select %p25, %s26, %s27
      %p31 = pneg %p25
      %p32 = scmp.eq.s32.totalorder %s16, 1
      %p33 = por %p31, %p32
      %p34 = scmp.ne.s32.totalorder %s26, %s29
      %p35 = scmp.eq.s32.totalorder %s16, 0
      %p36 = por %p34, %p35
      %p37 = scmp.ne.s32.totalorder %s26, %s29
      %p38 = scmp.eq.s32.totalorder %s21, 1
      %p39 = por %p37, %p38
      %p40 = scmp.ne.s32.totalorder %s29, %s30
      %p41 = scmp.eq.s32.totalorder %s21, 0
      %p42 = por %p40, %p41
      %p43 = scmp.ne.s32.totalorder %s29, %s30
      %p44 = scmp.eq.s32.totalorder %s22, 1
      %p45 = por %p43, %p44
      %p47 = scmp.ne.s32.totalorder %s30, %s46
      %p48 = scmp.eq.s32.totalorder %s22, 0
      %p49 = por %p47, %p48
      %s51 = sadd.s32 %s50, 1
      %p54 = scmp.eq.s32.totalorder %s16, 1
      %p55 = scmp.ne.s32.totalorder %s50, %s52
      %p56 = scmp.eq.s32.totalorder %s16, 0
      %p57 = por %p55, %p56
      %p58 = scmp.ne.s32.totalorder %s50, %s52
      %p59 = scmp.eq.s32.totalorder %s21, 1
      %p60 = por %p58, %p59
      %p61 = scmp.ne.s32.totalorder %s52, %s53
      %p62 = scmp.eq.s32.totalorder %s21, 0
      %p63 = por %p61, %p62
      %p64 = scmp.ne.s32.totalorder %s52, %s53
      %p65 = scmp.eq.s32.totalorder %s22, 1
      %p66 = por %p64, %p65
      %p68 = scmp.ne.s32.totalorder %s53, %s67
      %p69 = scmp.eq.s32.totalorder %s22, 0
      %p70 = por %p68, %p69
      %s72 = sadd.s32 %s71, 1
      %p75 = scmp.eq.s32.totalorder %s16, 1
      %p76 = scmp.ne.s32.totalorder %s71, %s73
      %p77 = scmp.eq.s32.totalorder %s16, 0
      %p78 = por %p76, %p77
      %p79 = scmp.ne.s32.totalorder %s71, %s73
      %p80 = scmp.eq.s32.totalorder %s21, 1
      %p81 = por %p79, %p80
      %p82 = scmp.ne.s32.totalorder %s73, %s74
      %p83 = scmp.eq.s32.totalorder %s21, 0
      %p84 = por %p82, %p83
      %p85 = scmp.ne.s32.totalorder %s73, %s74
      %p86 = scmp.eq.s32.totalorder %s22, 1
      %p87 = por %p85, %p86
      %p89 = scmp.ne.s32.totalorder %s74, %s88
      %p90 = scmp.eq.s32.totalorder %s22, 0
      %p91 = por %p89, %p90
      %s93 = sadd.s32 %s92, 1
      %p96 = scmp.eq.s32.totalorder %s16, 1
      %p97 = scmp.ne.s32.totalorder %s92, %s94
      %p98 = scmp.eq.s32.totalorder %s16, 0
      %p99 = por %p97, %p98
      %p100 = scmp.ne.s32.totalorder %s92, %s94
      %p101 = scmp.eq.s32.totalorder %s21, 1
      %p102 = por %p100, %p101
      %p103 = scmp.ne.s32.totalorder %s94, %s95
      %p104 = scmp.eq.s32.totalorder %s21, 0
      %p105 = por %p103, %p104
      %p106 = scmp.ne.s32.totalorder %s94, %s95
      %p107 = scmp.eq.s32.totalorder %s22, 1
      %p108 = por %p106, %p107
      %p110 = scmp.ne.s32.totalorder %s95, %s109
      %p111 = scmp.eq.s32.totalorder %s22, 0
      %p112 = por %p110, %p111
      %s114 = sadd.s32 %s113, 1
      %p117 = scmp.eq.s32.totalorder %s16, 1
      %p118 = scmp.ne.s32.totalorder %s113, %s115
      %p119 = scmp.eq.s32.totalorder %s16, 0
      %p120 = por %p118, %p119
      %p121 = scmp.ne.s32.totalorder %s113, %s115
      %p122 = scmp.eq.s32.totalorder %s21, 1
      %p123 = por %p121, %p122
      %p124 = scmp.ne.s32.totalorder %s115, %s116
      %p125 = scmp.eq.s32.totalorder %s21, 0
      %p126 = por %p124, %p125
      %p127 = scmp.ne.s32.totalorder %s115, %s116
      %p128 = scmp.eq.s32.totalorder %s22, 1
      %p129 = por %p127, %p128
      %p131 = scmp.ne.s32.totalorder %s116, %s130
      %p132 = scmp.eq.s32.totalorder %s22, 0
      %p133 = por %p131, %p132
      %s135 = sadd.s32 %s134, 1
      %p138 = scmp.eq.s32.totalorder %s16, 1
      %p139 = scmp.ne.s32.totalorder %s134, %s136
      %p140 = scmp.eq.s32.totalorder %s16, 0
      %p141 = por %p139, %p140
      %p142 = scmp.ne.s32.totalorder %s134, %s136
      %p143 = scmp.eq.s32.totalorder %s21, 1
      %p144 = por %p142, %p143
      %p145 = scmp.ne.s32.totalorder %s136, %s137
      %p146 = scmp.eq.s32.totalorder %s21, 0
      %p147 = por %p145, %p146
      %p148 = scmp.ne.s32.totalorder %s136, %s137
      %p149 = scmp.eq.s32.totalorder %s22, 1
      %p150 = por %p148, %p149
      %p152 = scmp.ne.s32.totalorder %s137, %s151
      %p153 = scmp.eq.s32.totalorder %s22, 0
      %p154 = por %p152, %p153
      %s156 = sadd.s32 %s155, 1
      %p159 = scmp.eq.s32.totalorder %s16, 1
      %p160 = scmp.ne.s32.totalorder %s155, %s157
      %p161 = scmp.eq.s32.totalorder %s16, 0
      %p162 = por %p160, %p161
      %p163 = scmp.ne.s32.totalorder %s155, %s157
      %p164 = scmp.eq.s32.totalorder %s21, 1
      %p165 = por %p163, %p164
      %p166 = scmp.ne.s32.totalorder %s157, %s158
      %p167 = scmp.eq.s32.totalorder %s21, 0
      %p168 = por %p166, %p167
      %p169 = scmp.ne.s32.totalorder %s157, %s158
      %p170 = scmp.eq.s32.totalorder %s22, 1
      %p171 = por %p169, %p170
      %p173 = scmp.ne.s32.totalorder %s158, %s172
      %p174 = scmp.eq.s32.totalorder %s22, 0
      %p175 = por %p173, %p174
      %s176 = ssub.s32 %s16, %s23
      %p177 = scmp.eq.s32.totalorder %s176, 0
      %s179 = sadd.s32 %s178, 1
      %s180 = scalar_select %p177, %s178, %s179
      %p183 = pneg %p177
      %p184 = scmp.eq.s32.totalorder %s16, 1
      %p185 = por %p183, %p184
      %p186 = scmp.ne.s32.totalorder %s178, %s181
      %p187 = scmp.eq.s32.totalorder %s16, 0
      %p188 = por %p186, %p187
      %p189 = scmp.ne.s32.totalorder %s178, %s181
      %p190 = scmp.eq.s32.totalorder %s21, 1
      %p191 = por %p189, %p190
      %p192 = scmp.ne.s32.totalorder %s181, %s182
      %p193 = scmp.eq.s32.totalorder %s21, 0
      %p194 = por %p192, %p193
      %p195 = scmp.ne.s32.totalorder %s181, %s182
      %p196 = scmp.eq.s32.totalorder %s22, 1
      %p197 = por %p195, %p196
      %p199 = scmp.ne.s32.totalorder %s182, %s198
      %p200 = scmp.eq.s32.totalorder %s22, 0
      %p201 = por %p199, %p200
      %p202 = scmp.le.s32.totalorder 1, %s16
      %p203 = scmp.lt.s32.totalorder %s16, 3
      %p204 = pnand %p202, %p203
      %p205 = pneg %p204
      // Predicated region
      $region9: #{tpu_custom_call.1} parent=5 // pred_check
        _
      $region10: #{tpu_custom_call.1} parent=5 // pred_check_branch
        %207 = sbr.rel (%p204) target = $region12
      $region11: #{tpu_custom_call.1} parent=5 // pred_region
        %s208 = ssub.s32 %s16, 1
        // Predicated region
        $region13: #{tpu_custom_call.1} parent=11 // pred_check
          %p209 = pneg %p63
        $region14: #{tpu_custom_call.1} parent=11 // pred_check_branch
          %211 = sbr.rel (%p209) target = $region16
        $region15: #{tpu_custom_call.1} parent=11 // pred_region
          _
        $region16: #{tpu_custom_call.1} parent=11 // pred_fallthru
          _
        // Predicated region
        $region17: #{tpu_custom_call.1} parent=11 // pred_check
          %p212 = pneg %p84
        $region18: #{tpu_custom_call.1} parent=11 // pred_check_branch
          %214 = sbr.rel (%p212) target = $region20
        $region19: #{tpu_custom_call.1} parent=11 // pred_region
          _
        $region20: #{tpu_custom_call.1} parent=11 // pred_fallthru
          _
        // Predicated region
        $region21: #{tpu_custom_call.1} parent=11 // pred_check
          %p215 = pneg %p105
        $region22: #{tpu_custom_call.1} parent=11 // pred_check_branch
          %217 = sbr.rel (%p215) target = $region24
        $region23: #{tpu_custom_call.1} parent=11 // pred_region
          _
        $region24: #{tpu_custom_call.1} parent=11 // pred_fallthru
          _
        // Predicated region
        $region25: #{tpu_custom_call.1} parent=11 // pred_check
          %p218 = pneg %p126
        $region26: #{tpu_custom_call.1} parent=11 // pred_check_branch
          %220 = sbr.rel (%p218) target = $region28
        $region27: #{tpu_custom_call.1} parent=11 // pred_region
          _
        $region28: #{tpu_custom_call.1} parent=11 // pred_fallthru
          _
        // Predicated region
        $region29: #{tpu_custom_call.1} parent=11 // pred_check
          %p221 = pneg %p147
        $region30: #{tpu_custom_call.1} parent=11 // pred_check_branch
          %223 = sbr.rel (%p221) target = $region32
        $region31: #{tpu_custom_call.1} parent=11 // pred_region
          _
        $region32: #{tpu_custom_call.1} parent=11 // pred_fallthru
          _
        // Predicated region
        $region33: #{tpu_custom_call.1} parent=11 // pred_check
          %p224 = pneg %p168
        $region34: #{tpu_custom_call.1} parent=11 // pred_check_branch
          %226 = sbr.rel (%p224) target = $region36
        $region35: #{tpu_custom_call.1} parent=11 // pred_region
          _
        $region36: #{tpu_custom_call.1} parent=11 // pred_fallthru
          _
      $region12: #{tpu_custom_call.1} parent=5 // pred_fallthru
        _
      %p227 = scmp.lt.s32.totalorder %s16, 2
      // Predicated region
      $region37: #{tpu_custom_call.1} parent=5 // pred_check
        %p228 = pneg %p227
      $region38: #{tpu_custom_call.1} parent=5 // pred_check_branch
        %230 = sbr.rel (%p228) target = $region40
      $region39: #{tpu_custom_call.1} parent=5 // pred_region
        // Predicated region
        $region41: #{tpu_custom_call.1} parent=39 // pred_check
          %p231 = pneg %p36
        $region42: #{tpu_custom_call.1} parent=39 // pred_check_branch
          %233 = sbr.rel (%p231) target = $region44
        $region43: #{tpu_custom_call.1} parent=39 // pred_region
          %p234 = scmp.lt.s32.totalorder %s16, 1
          %s235 = scalar_select %p234, %s16, 1
          %s236 = smul.addr %s235, 8
          %s237 = smul.addr %s236, 8
          %s238 = scalar_lea.vmem %s0, %s237
        $region44: #{tpu_custom_call.1} parent=39 // pred_fallthru
          _
      $region40: #{tpu_custom_call.1} parent=5 // pred_fallthru
        _
      %p239 = scmp.le.s32.totalorder 1, %s16
      %p240 = scmp.lt.s32.totalorder %s16, 3
      %p241 = pnand %p239, %p240
      %p242 = pneg %p241
      // Predicated region
      $region45: #{tpu_custom_call.1} parent=5 // pred_check
        _
      $region46: #{tpu_custom_call.1} parent=5 // pred_check_branch
        %244 = sbr.rel (%p241) target = $region48
      $region47: #{tpu_custom_call.1} parent=5 // pred_region
        %s245 = ssub.s32 %s16, 1
        %p246 = scmp.lt.s32.totalorder %s21, 1
        %s247 = scalar_select %p246, %s21, 1
        %s248 = smul.addr %s247, 8
        %s249 = smul.addr %s248, 8
        %s250 = scalar_lea.vmem %s0, %s249
        %p251 = pneg %p42
        %p252 = pneg %p39
        %p253 = pneg %p63
        %p254 = pneg %p60
        %p255 = pneg %p84
        %p256 = pneg %p81
        %p257 = pneg %p105
        %p258 = pneg %p102
        %p259 = pneg %p126
        %p260 = pneg %p123
        %p261 = pneg %p147
        %p262 = pneg %p144
        %p263 = pneg %p168
        %p264 = pneg %p165
        %p265 = pneg %p194
        %p266 = pneg %p191
        %s267 = sand.u32 %s181, 1
        %s268 = scalar_lea.sflag [#allocation3], %s267
        %s269 = sand.u32 %s181, 1
        %s270 = smul.addr %s269, 64
        %s271 = scalar_lea.vmem [#allocation2], %s270
        %p272 = scmp.lt.s32.totalorder %s21, 1
        %s273 = scalar_select %p272, %s21, 1
        %s274 = smul.addr %s273, 8
        %s275 = smul.addr %s274, 8
        %s276 = scalar_lea.vmem %s0, %s275
        %v277 = vld [vmem:[%s276] sm:$0xff]
        %v278 = vld [vmem:[%s276 + $0x8] sm:$0xff]
        %v279 = vld [vmem:[%s276 + $0x10] sm:$0xff]
        %v280 = vld [vmem:[%s276 + $0x18] sm:$0xff]
        %v281 = vld [vmem:[%s276 + $0x20] sm:$0xff]
        %v282 = vld [vmem:[%s276 + $0x28] sm:$0xff]
        %v283 = vld [vmem:[%s276 + $0x30] sm:$0xff]
        %v284 = vld [vmem:[%s276 + $0x38] sm:$0xff]
        %v285 = vld [vmem:[%s1] sm:$0xff]
        %v286 = vld [vmem:[%s1 + $0x8] sm:$0xff]
        %v287 = vld [vmem:[%s1 + $0x10] sm:$0xff]
        %v288 = vld [vmem:[%s1 + $0x18] sm:$0xff]
        %v289 = vld [vmem:[%s1 + $0x20] sm:$0xff]
        %v290 = vld [vmem:[%s1 + $0x28] sm:$0xff]
        %v291 = vld [vmem:[%s1 + $0x30] sm:$0xff]
        %v292 = vld [vmem:[%s1 + $0x38] sm:$0xff]
        %v293 = vld [vmem:[%s2] sm:$0xff]
        %v294 = vld [vmem:[%s2 + $0x8] sm:$0xff]
        %v295 = vld [vmem:[%s2 + $0x10] sm:$0xff]
        %v296 = vld [vmem:[%s2 + $0x18] sm:$0xff]
        %v297 = vld [vmem:[%s2 + $0x20] sm:$0xff]
        %v298 = vld [vmem:[%s2 + $0x28] sm:$0xff]
        %v299 = vld [vmem:[%s2 + $0x30] sm:$0xff]
        %v300 = vld [vmem:[%s2 + $0x38] sm:$0xff]
        %302 = vset.pattern.permute.xlu0 0
        %303 = vperm.xlu0 %302, %v293
        %v304 = vpop.permute.xlu0 %303
        %307 = vset.pattern.permute.xlu0 0
        %308 = vperm.xlu0 %307, %v294
        %v309 = vpop.permute.xlu0 %308
        %312 = vset.pattern.permute.xlu0 0
        %313 = vperm.xlu0 %312, %v295
        %v314 = vpop.permute.xlu0 %313
        %317 = vset.pattern.permute.xlu0 0
        %318 = vperm.xlu0 %317, %v296
        %v319 = vpop.permute.xlu0 %318
        %322 = vset.pattern.permute.xlu0 0
        %323 = vperm.xlu0 %322, %v297
        %v324 = vpop.permute.xlu0 %323
        %327 = vset.pattern.permute.xlu0 0
        %328 = vperm.xlu0 %327, %v298
        %v329 = vpop.permute.xlu0 %328
        %332 = vset.pattern.permute.xlu0 0
        %333 = vperm.xlu0 %332, %v299
        %v334 = vpop.permute.xlu0 %333
        %337 = vset.pattern.permute.xlu0 0
        %338 = vperm.xlu0 %337, %v300
        %v339 = vpop.permute.xlu0 %338
        %vm341 = vcmask 261120
        %v343 = vsel %vm341, %v285, 0
        %v346 = vsel %vm341, %v286, 0
        %v349 = vsel %vm341, %v287, 0
        %v352 = vsel %vm341, %v288, 0
        %v355 = vsel %vm341, %v289, 0
        %v358 = vsel %vm341, %v290, 0
        %v361 = vsel %vm341, %v291, 0
        %v364 = vsel %vm341, %v292, 0
        %366 = vmatprep.subr.mxu0 0.0
        %367 = vmatpush1.msra.mxu0 0.0
        %368 = vmatprep.subr.mxu0 0.0
        %369 = vmatpush1.msra.mxu0 0.0
        %370 = vmatprep.subr.mxu0 0.0
        %371 = vmatpush1.msra.mxu0 0.0
        %372 = vmatprep.subr.mxu0 0.0
        %373 = vmatpush1.msra.mxu0 0.0
        %374 = vmatprep.subr.mxu0 0.0
        %375 = vmatpush1.msra.mxu0 0.0
        %376 = vmatprep.subr.mxu0 0.0
        %377 = vmatpush1.msra.mxu0 0.0
        %378 = vmatprep.subr.mxu0 0.0
        %379 = vmatpush1.msra.mxu0 0.0
        %380 = vmatprep.subr.mxu0 0.0
        %381 = vmatpush1.msra.mxu0 0.0
        %382 = vmatprep.subr.mxu0 0.0
        %383 = vmatpush1.msra.mxu0 0.0
        %384 = vmatprep.subr.mxu0 0.0
        %385 = vmatpush1.msra.mxu0 0.0
        %386 = vmatprep.subr.mxu0 0.0
        %387 = vmatpush1.msra.mxu0 0.0
        %388 = vmatprep.subr.mxu0 0.0
        %389 = vmatpush1.msra.mxu0 0.0
        %390 = vmatprep.subr.mxu0 %v284
        %391 = vmatpush1.msra.mxu0 %v283
        %392 = vmatprep.subr.mxu0 %v282
        %393 = vmatpush1.msra.mxu0 %v281
        %394 = vmatprep.subr.mxu0 %v280
        %395 = vmatpush1.msra.mxu0 %v279
        %396 = vmatprep.subr.mxu0 %v278
        %397 = vmatpush1.msra.mxu0 %v277
        %398 = vmatprep.subr.mxu0 0.0
        %399 = vmatpush2.msra.mxu0 0.0
        %400 = vmatprep.subr.mxu0 0.0
        %401 = vmatpush2.msra.mxu0 0.0
        %402 = vmatprep.subr.mxu0 0.0
        %403 = vmatpush2.msra.mxu0 0.0
        %404 = vmatprep.subr.mxu0 0.0
        %405 = vmatpush2.msra.mxu0 0.0
        %406 = vmatprep.subr.mxu0 0.0
        %407 = vmatpush2.msra.mxu0 0.0
        %408 = vmatprep.subr.mxu0 0.0
        %409 = vmatpush2.msra.mxu0 0.0
        %410 = vmatprep.subr.mxu0 0.0
        %411 = vmatpush2.msra.mxu0 0.0
        %412 = vmatprep.subr.mxu0 0.0
        %413 = vmatpush2.msra.mxu0 0.0
        %414 = vmatprep.subr.mxu0 0.0
        %415 = vmatpush2.msra.mxu0 0.0
        %416 = vmatprep.subr.mxu0 0.0
        %417 = vmatpush2.msra.mxu0 0.0
        %418 = vmatprep.subr.mxu0 0.0
        %419 = vmatpush2.msra.mxu0 0.0
        %420 = vmatprep.subr.mxu0 0.0
        %421 = vmatpush2.msra.mxu0 0.0
        %422 = vmatprep.subr.mxu0 0.0
        %423 = vmatpush2.msra.mxu0 0.0
        %424 = vmatprep.subr.mxu0 0.0
        %425 = vmatpush2.msra.mxu0 0.0
        %426 = vmatprep.subr.mxu0 0.0
        %427 = vmatpush2.msra.mxu0 0.0
        %428 = vmatprep.subr.mxu0 0.0
        %429 = vmatpush2.msra.mxu0 0.0
        %430 = vmatprep.mubr.f32.mxu0 0.0
        %431 = vmatmul.mubr.f32.gmra.mxu0 %v343
        %v432 = vpop.f32.mrf.mxu0
        %v433 = vadd.f32 %v304, %v432
        %v434 = vpop.f32.mrf.mxu0
        %v435 = vadd.f32 %v304, %v434
        %436 = vmatprep.mubr.f32.mxu0 0.0
        %437 = vmatmul.mubr.f32.gmra.mxu0 %v346
        %v438 = vpop.f32.mrf.mxu0
        %v439 = vadd.f32 %v309, %v438
        %v440 = vpop.f32.mrf.mxu0
        %v441 = vadd.f32 %v309, %v440
        %442 = vmatprep.mubr.f32.mxu0 0.0
        %443 = vmatmul.mubr.f32.gmra.mxu0 %v349
        %v444 = vpop.f32.mrf.mxu0
        %v445 = vadd.f32 %v314, %v444
        %v446 = vpop.f32.mrf.mxu0
        %v447 = vadd.f32 %v314, %v446
        %448 = vmatprep.mubr.f32.mxu0 0.0
        %449 = vmatmul.mubr.f32.gmra.mxu0 %v352
        %v450 = vpop.f32.mrf.mxu0
        %v451 = vadd.f32 %v319, %v450
        %v452 = vpop.f32.mrf.mxu0
        %v453 = vadd.f32 %v319, %v452
        %454 = vmatprep.mubr.f32.mxu0 0.0
        %455 = vmatmul.mubr.f32.gmra.mxu0 %v355
        %v456 = vpop.f32.mrf.mxu0
        %v457 = vadd.f32 %v324, %v456
        %v458 = vpop.f32.mrf.mxu0
        %v459 = vadd.f32 %v324, %v458
        %460 = vmatprep.mubr.f32.mxu0 0.0
        %461 = vmatmul.mubr.f32.gmra.mxu0 %v358
        %v462 = vpop.f32.mrf.mxu0
        %v463 = vadd.f32 %v329, %v462
        %v464 = vpop.f32.mrf.mxu0
        %v465 = vadd.f32 %v329, %v464
        %466 = vmatprep.mubr.f32.mxu0 0.0
        %467 = vmatmul.mubr.f32.gmra.mxu0 %v361
        %v468 = vpop.f32.mrf.mxu0
        %v469 = vadd.f32 %v334, %v468
        %v470 = vpop.f32.mrf.mxu0
        %v471 = vadd.f32 %v334, %v470
        %472 = vmatprep.mubr.f32.mxu0 0.0
        %473 = vmatmul.mubr.f32.gmra.mxu0 %v364
        %v474 = vpop.f32.mrf.mxu0
        %v475 = vadd.f32 %v339, %v474
        %v476 = vpop.f32.mrf.mxu0
        %v477 = vadd.f32 %v339, %v476
        %478 = vdwg.mxu0
        %v483 = vcombine.low %v433, %v435
        %v484 = vcombine.high %v433, %v435
        %v486 = vunpack.c.l.s4 1983009808
        %v487 = vunpack.c.0.s8 %v486
        %v488 = vlaneseq
        %v489 = vshrl.u32 %v488, 7
        %v490 = vsub.s32 %v487, %v489
        %v491 = vrot.slane %v483, %v490
        %v493 = vunpack.c.l.s4 1983009808
        %v494 = vunpack.c.0.s8 %v493
        %v495 = vlaneseq
        %v496 = vshrl.u32 %v495, 7
        %v497 = vsub.s32 %v494, %v496
        %v498 = vrot.slane %v484, %v497
        %v499 = vcombine.high %v491, %v491
        %v500 = vcombine.high %v498, %v498
        %v501 = vcombine.low %v439, %v441
        %v502 = vcombine.high %v439, %v441
        %v504 = vunpack.c.l.s4 1983009808
        %v505 = vunpack.c.0.s8 %v504
        %v506 = vlaneseq
        %v507 = vshrl.u32 %v506, 7
        %v508 = vsub.s32 %v505, %v507
        %v509 = vrot.slane %v501, %v508
        %v511 = vunpack.c.l.s4 1983009808
        %v512 = vunpack.c.0.s8 %v511
        %v513 = vlaneseq
        %v514 = vshrl.u32 %v513, 7
        %v515 = vsub.s32 %v512, %v514
        %v516 = vrot.slane %v502, %v515
        %v517 = vcombine.high %v509, %v509
        %v518 = vcombine.high %v516, %v516
        %v523 = vcombine.low %v445, %v447
        %v524 = vcombine.high %v445, %v447
        %v526 = vunpack.c.l.s4 1983009808
        %v527 = vunpack.c.0.s8 %v526
        %v528 = vlaneseq
        %v529 = vshrl.u32 %v528, 7
        %v530 = vsub.s32 %v527, %v529
        %v531 = vrot.slane %v523, %v530
        %v533 = vunpack.c.l.s4 1983009808
        %v534 = vunpack.c.0.s8 %v533
        %v535 = vlaneseq
        %v536 = vshrl.u32 %v535, 7
        %v537 = vsub.s32 %v534, %v536
        %v538 = vrot.slane %v524, %v537
        %v539 = vcombine.high %v531, %v531
        %v540 = vcombine.high %v538, %v538
        %v541 = vcombine.low %v451, %v453
        %v542 = vcombine.high %v451, %v453
        %v544 = vunpack.c.l.s4 1983009808
        %v545 = vunpack.c.0.s8 %v544
        %v546 = vlaneseq
        %v547 = vshrl.u32 %v546, 7
        %v548 = vsub.s32 %v545, %v547
        %v549 = vrot.slane %v541, %v548
        %v551 = vunpack.c.l.s4 1983009808
        %v552 = vunpack.c.0.s8 %v551
        %v553 = vlaneseq
        %v554 = vshrl.u32 %v553, 7
        %v555 = vsub.s32 %v552, %v554
        %v556 = vrot.slane %v542, %v555
        %v557 = vcombine.high %v549, %v549
        %v558 = vcombine.high %v556, %v556
        %v567 = vcombine.low %v457, %v459
        %v568 = vcombine.high %v457, %v459
        %v569 = vcombine.low %v463, %v465
        %v570 = vcombine.high %v463, %v465
        %v571 = vcombine.low %v469, %v471
        %v572 = vcombine.high %v469, %v471
        %v573 = vcombine.low %v475, %v477
        %v574 = vcombine.high %v475, %v477
        %v584 = vunpack.c.l.s4 1983009808
        %v585 = vunpack.c.0.s8 %v584
        %v586 = vlaneseq
        %v587 = vshrl.u32 %v586, 7
        %v588 = vsub.s32 %v585, %v587
        %v589 = vrot.slane %v531, %v588
        %v590 = vcombine.high %v589, %v589
        %593 = vxpose.xlu0.b32.start [1/16] %v589, 128
        %594 = vxpose.xlu0.b32.cont [2/16] 0.0, 128
        %595 = vxpose.xlu0.b32.cont [3/16] 0.0, 128
        %596 = vxpose.xlu0.b32.cont [4/16] 0.0, 128
        %597 = vxpose.xlu0.b32.cont [5/16] 0.0, 128
        %598 = vxpose.xlu0.b32.cont [6/16] 0.0, 128
        %599 = vxpose.xlu0.b32.cont [7/16] 0.0, 128
        %600 = vxpose.xlu0.b32.cont [8/16] 0.0, 128
        %601 = vxpose.xlu0.b32.cont [9/16] 0.0, 128
        %602 = vxpose.xlu0.b32.cont [10/16] 0.0, 128
        %603 = vxpose.xlu0.b32.cont [11/16] 0.0, 128
        %604 = vxpose.xlu0.b32.cont [12/16] 0.0, 128
        %605 = vxpose.xlu0.b32.cont [13/16] 0.0, 128
        %606 = vxpose.xlu0.b32.cont [14/16] 0.0, 128
        %607 = vxpose.xlu0.b32.cont [15/16] 0.0, 128
        %608 = vxpose.xlu0.b32.end [16/16] 0.0, 128
        %v609 = vpop.trf.xlu0
        %v610 = vpop.trf.xlu0
        %v611 = vpop.trf.xlu0
        %v612 = vpop.trf.xlu0
        %v613 = vpop.trf.xlu0
        %v614 = vpop.trf.xlu0
        %v615 = vpop.trf.xlu0
        %v616 = vpop.trf.xlu0
        %v617 = vpop.trf.xlu0
        %v618 = vpop.trf.xlu0
        %v619 = vpop.trf.xlu0
        %v620 = vpop.trf.xlu0
        %v621 = vpop.trf.xlu0
        %v622 = vpop.trf.xlu0
        %v623 = vpop.trf.xlu0
        %v624 = vpop.trf.xlu0
        %625 = vxpose.xlu0.b32.start [1/16] %v590, 128
        %626 = vxpose.xlu0.b32.cont [2/16] 0.0, 128
        %627 = vxpose.xlu0.b32.cont [3/16] 0.0, 128
        %628 = vxpose.xlu0.b32.cont [4/16] 0.0, 128
        %629 = vxpose.xlu0.b32.cont [5/16] 0.0, 128
        %630 = vxpose.xlu0.b32.cont [6/16] 0.0, 128
        %631 = vxpose.xlu0.b32.cont [7/16] 0.0, 128
        %632 = vxpose.xlu0.b32.cont [8/16] 0.0, 128
        %633 = vxpose.xlu0.b32.cont [9/16] 0.0, 128
        %634 = vxpose.xlu0.b32.cont [10/16] 0.0, 128
        %635 = vxpose.xlu0.b32.cont [11/16] 0.0, 128
        %636 = vxpose.xlu0.b32.cont [12/16] 0.0, 128
        %637 = vxpose.xlu0.b32.cont [13/16] 0.0, 128
        %638 = vxpose.xlu0.b32.cont [14/16] 0.0, 128
        %639 = vxpose.xlu0.b32.cont [15/16] 0.0, 128
        %640 = vxpose.xlu0.b32.end [16/16] 0.0, 128
        %v641 = vpop.trf.xlu0
        %v642 = vpop.trf.xlu0
        %v643 = vpop.trf.xlu0
        %v644 = vpop.trf.xlu0
        %v645 = vpop.trf.xlu0
        %v646 = vpop.trf.xlu0
        %v647 = vpop.trf.xlu0
        %v648 = vpop.trf.xlu0
        %v649 = vpop.trf.xlu0
        %v650 = vpop.trf.xlu0
        %v651 = vpop.trf.xlu0
        %v652 = vpop.trf.xlu0
        %v653 = vpop.trf.xlu0
        %v654 = vpop.trf.xlu0
        %v655 = vpop.trf.xlu0
        %v656 = vpop.trf.xlu0
        %v658 = vunpack.c.l.s4 1983009808
        %v659 = vunpack.c.0.s8 %v658
        %v660 = vlaneseq
        %v661 = vshrl.u32 %v660, 7
        %v662 = vsub.s32 %v659, %v661
        %v663 = vrot.slane %v491, %v662
        %v664 = vcombine.high %v663, %v663
        %vm665 = vcmask 15360
        %v667 = vsel %vm665, %v609, 0
        %v670 = vsel %vm665, %v610, 0
        %v673 = vsel %vm665, %v611, 0
        %v676 = vsel %vm665, %v612, 0
        %v679 = vsel %vm665, %v613, 0
        %v682 = vsel %vm665, %v614, 0
        %v685 = vsel %vm665, %v615, 0
        %v688 = vsel %vm665, %v616, 0
        %v691 = vsel %vm665, %v617, 0
        %v694 = vsel %vm665, %v618, 0
        %v697 = vsel %vm665, %v619, 0
        %v700 = vsel %vm665, %v620, 0
        %v703 = vsel %vm665, %v621, 0
        %v706 = vsel %vm665, %v622, 0
        %v709 = vsel %vm665, %v623, 0
        %v712 = vsel %vm665, %v624, 0
        %v715 = vsel %vm665, %v641, 0
        %v718 = vsel %vm665, %v642, 0
        %v721 = vsel %vm665, %v643, 0
        %v724 = vsel %vm665, %v644, 0
        %v727 = vsel %vm665, %v645, 0
        %v730 = vsel %vm665, %v646, 0
        %v733 = vsel %vm665, %v647, 0
        %v736 = vsel %vm665, %v648, 0
        %v739 = vsel %vm665, %v649, 0
        %v742 = vsel %vm665, %v650, 0
        %v745 = vsel %vm665, %v651, 0
        %v748 = vsel %vm665, %v652, 0
        %v751 = vsel %vm665, %v653, 0
        %v754 = vsel %vm665, %v654, 0
        %v757 = vsel %vm665, %v655, 0
        %v760 = vsel %vm665, %v656, 0
        %vm762 = vcmask 1041408
        %v763 = vsel %vm762, %v663, 0
        %v765 = vsel %vm762, %v664, 0
        %767 = vmatprep.subr.mxu0 0.0
        %768 = vmatpush1.msra.mxu0 0.0
        %769 = vmatprep.subr.mxu0 0.0
        %770 = vmatpush1.msra.mxu0 0.0
        %771 = vmatprep.subr.mxu0 0.0
        %772 = vmatpush1.msra.mxu0 0.0
        %773 = vmatprep.subr.mxu0 0.0
        %774 = vmatpush1.msra.mxu0 0.0
        %775 = vmatprep.subr.mxu0 0.0
        %776 = vmatpush1.msra.mxu0 0.0
        %777 = vmatprep.subr.mxu0 0.0
        %778 = vmatpush1.msra.mxu0 0.0
        %779 = vmatprep.subr.mxu0 0.0
        %780 = vmatpush1.msra.mxu0 0.0
        %781 = vmatprep.subr.mxu0 0.0
        %782 = vmatpush1.msra.mxu0 0.0
        %783 = vmatprep.subr.mxu0 0.0
        %784 = vmatpush1.msra.mxu0 0.0
        %785 = vmatprep.subr.mxu0 0.0
        %786 = vmatpush1.msra.mxu0 0.0
        %787 = vmatprep.subr.mxu0 0.0
        %788 = vmatpush1.msra.mxu0 0.0
        %789 = vmatprep.subr.mxu0 0.0
        %790 = vmatpush1.msra.mxu0 0.0
        %791 = vmatprep.subr.mxu0 0.0
        %792 = vmatpush1.msra.mxu0 0.0
        %793 = vmatprep.subr.mxu0 0.0
        %794 = vmatpush1.msra.mxu0 0.0
        %795 = vmatprep.subr.mxu0 0.0
        %796 = vmatpush1.msra.mxu0 0.0
        %797 = vmatprep.subr.mxu0 %v765
        %798 = vmatpush1.msra.mxu0 %v763
        %799 = vmatprep.subr.mxu0 0.0
        %800 = vmatpush2.msra.mxu0 0.0
        %801 = vmatprep.subr.mxu0 0.0
        %802 = vmatpush2.msra.mxu0 0.0
        %803 = vmatprep.subr.mxu0 0.0
        %804 = vmatpush2.msra.mxu0 0.0
        %805 = vmatprep.subr.mxu0 0.0
        %806 = vmatpush2.msra.mxu0 0.0
        %807 = vmatprep.subr.mxu0 0.0
        %808 = vmatpush2.msra.mxu0 0.0
        %809 = vmatprep.subr.mxu0 0.0
        %810 = vmatpush2.msra.mxu0 0.0
        %811 = vmatprep.subr.mxu0 0.0
        %812 = vmatpush2.msra.mxu0 0.0
        %813 = vmatprep.subr.mxu0 0.0
        %814 = vmatpush2.msra.mxu0 0.0
        %815 = vmatprep.subr.mxu0 0.0
        %816 = vmatpush2.msra.mxu0 0.0
        %817 = vmatprep.subr.mxu0 0.0
        %818 = vmatpush2.msra.mxu0 0.0
        %819 = vmatprep.subr.mxu0 0.0
        %820 = vmatpush2.msra.mxu0 0.0
        %821 = vmatprep.subr.mxu0 0.0
        %822 = vmatpush2.msra.mxu0 0.0
        %823 = vmatprep.subr.mxu0 0.0
        %824 = vmatpush2.msra.mxu0 0.0
        %825 = vmatprep.subr.mxu0 0.0
        %826 = vmatpush2.msra.mxu0 0.0
        %827 = vmatprep.subr.mxu0 0.0
        %828 = vmatpush2.msra.mxu0 0.0
        %829 = vmatprep.subr.mxu0 0.0
        %830 = vmatpush2.msra.mxu0 0.0
        %831 = vmatprep.mubr.f32.mxu0 0.0
        %832 = vmatmul.mubr.f32.gmra.mxu0 %v667
        %v833 = vpop.f32.mrf.mxu0
        %v834 = vadd.f32 0.0, %v833
        %v835 = vpop.f32.mrf.mxu0
        %v836 = vadd.f32 0.0, %v835
        %837 = vmatprep.mubr.f32.mxu0 0.0
        %838 = vmatmul.mubr.f32.gmra.mxu0 %v670
        %v839 = vpop.f32.mrf.mxu0
        %v840 = vadd.f32 0.0, %v839
        %v841 = vpop.f32.mrf.mxu0
        %v842 = vadd.f32 0.0, %v841
        %843 = vmatprep.mubr.f32.mxu0 0.0
        %844 = vmatmul.mubr.f32.gmra.mxu0 %v673
        %v845 = vpop.f32.mrf.mxu0
        %v846 = vadd.f32 0.0, %v845
        %v847 = vpop.f32.mrf.mxu0
        %v848 = vadd.f32 0.0, %v847
        %849 = vmatprep.mubr.f32.mxu0 0.0
        %850 = vmatmul.mubr.f32.gmra.mxu0 %v676
        %v851 = vpop.f32.mrf.mxu0
        %v852 = vadd.f32 0.0, %v851
        %v853 = vpop.f32.mrf.mxu0
        %v854 = vadd.f32 0.0, %v853
        %855 = vmatprep.mubr.f32.mxu0 0.0
        %856 = vmatmul.mubr.f32.gmra.mxu0 %v679
        %v857 = vpop.f32.mrf.mxu0
        %v858 = vadd.f32 0.0, %v857
        %v859 = vpop.f32.mrf.mxu0
        %v860 = vadd.f32 0.0, %v859
        %861 = vmatprep.mubr.f32.mxu0 0.0
        %862 = vmatmul.mubr.f32.gmra.mxu0 %v682
        %v863 = vpop.f32.mrf.mxu0
        %v864 = vadd.f32 0.0, %v863
        %v865 = vpop.f32.mrf.mxu0
        %v866 = vadd.f32 0.0, %v865
        %867 = vmatprep.mubr.f32.mxu0 0.0
        %868 = vmatmul.mubr.f32.gmra.mxu0 %v685
        %v869 = vpop.f32.mrf.mxu0
        %v870 = vadd.f32 0.0, %v869
        %v871 = vpop.f32.mrf.mxu0
        %v872 = vadd.f32 0.0, %v871
        %873 = vmatprep.mubr.f32.mxu0 0.0
        %874 = vmatmul.mubr.f32.gmra.mxu0 %v688
        %v875 = vpop.f32.mrf.mxu0
        %v876 = vadd.f32 0.0, %v875
        %v877 = vpop.f32.mrf.mxu0
        %v878 = vadd.f32 0.0, %v877
        %879 = vmatprep.mubr.f32.mxu0 0.0
        %880 = vmatmul.mubr.f32.gmra.mxu0 %v691
        %v881 = vpop.f32.mrf.mxu0
        %v882 = vadd.f32 0.0, %v881
        %v883 = vpop.f32.mrf.mxu0
        %v884 = vadd.f32 0.0, %v883
        %885 = vmatprep.mubr.f32.mxu0 0.0
        %886 = vmatmul.mubr.f32.gmra.mxu0 %v694
        %v887 = vpop.f32.mrf.mxu0
        %v888 = vadd.f32 0.0, %v887
        %v889 = vpop.f32.mrf.mxu0
        %v890 = vadd.f32 0.0, %v889
        %891 = vmatprep.mubr.f32.mxu0 0.0
        %892 = vmatmul.mubr.f32.gmra.mxu0 %v697
        %v893 = vpop.f32.mrf.mxu0
        %v894 = vadd.f32 0.0, %v893
        %v895 = vpop.f32.mrf.mxu0
        %v896 = vadd.f32 0.0, %v895
        %897 = vmatprep.mubr.f32.mxu0 0.0
        %898 = vmatmul.mubr.f32.gmra.mxu0 %v700
        %v899 = vpop.f32.mrf.mxu0
        %v900 = vadd.f32 0.0, %v899
        %v901 = vpop.f32.mrf.mxu0
        %v902 = vadd.f32 0.0, %v901
        %903 = vmatprep.mubr.f32.mxu0 0.0
        %904 = vmatmul.mubr.f32.gmra.mxu0 %v703
        %v905 = vpop.f32.mrf.mxu0
        %v906 = vadd.f32 0.0, %v905
        %v907 = vpop.f32.mrf.mxu0
        %v908 = vadd.f32 0.0, %v907
        %909 = vmatprep.mubr.f32.mxu0 0.0
        %910 = vmatmul.mubr.f32.gmra.mxu0 %v706
        %v911 = vpop.f32.mrf.mxu0
        %v912 = vadd.f32 0.0, %v911
        %v913 = vpop.f32.mrf.mxu0
        %v914 = vadd.f32 0.0, %v913
        %915 = vmatprep.mubr.f32.mxu0 0.0
        %916 = vmatmul.mubr.f32.gmra.mxu0 %v709
        %v917 = vpop.f32.mrf.mxu0
        %v918 = vadd.f32 0.0, %v917
        %v919 = vpop.f32.mrf.mxu0
        %v920 = vadd.f32 0.0, %v919
        %921 = vmatprep.mubr.f32.mxu0 0.0
        %922 = vmatmul.mubr.f32.gmra.mxu0 %v712
        %v923 = vpop.f32.mrf.mxu0
        %v924 = vadd.f32 0.0, %v923
        %v925 = vpop.f32.mrf.mxu0
        %v926 = vadd.f32 0.0, %v925
        %927 = vmatprep.mubr.f32.mxu0 0.0
        %928 = vmatmul.mubr.f32.gmra.mxu0 %v715
        %v929 = vpop.f32.mrf.mxu0
        %v930 = vadd.f32 0.0, %v929
        %v931 = vpop.f32.mrf.mxu0
        %v932 = vadd.f32 0.0, %v931
        %933 = vmatprep.mubr.f32.mxu0 0.0
        %934 = vmatmul.mubr.f32.gmra.mxu0 %v718
        %v935 = vpop.f32.mrf.mxu0
        %v936 = vadd.f32 0.0, %v935
        %v937 = vpop.f32.mrf.mxu0
        %v938 = vadd.f32 0.0, %v937
        %939 = vmatprep.mubr.f32.mxu0 0.0
        %940 = vmatmul.mubr.f32.gmra.mxu0 %v721
        %v941 = vpop.f32.mrf.mxu0
        %v942 = vadd.f32 0.0, %v941
        %v943 = vpop.f32.mrf.mxu0
        %v944 = vadd.f32 0.0, %v943
        %945 = vmatprep.mubr.f32.mxu0 0.0
        %946 = vmatmul.mubr.f32.gmra.mxu0 %v724
        %v947 = vpop.f32.mrf.mxu0
        %v948 = vadd.f32 0.0, %v947
        %v949 = vpop.f32.mrf.mxu0
        %v950 = vadd.f32 0.0, %v949
        %951 = vmatprep.mubr.f32.mxu0 0.0
        %952 = vmatmul.mubr.f32.gmra.mxu0 %v727
        %v953 = vpop.f32.mrf.mxu0
        %v954 = vadd.f32 0.0, %v953
        %v955 = vpop.f32.mrf.mxu0
        %v956 = vadd.f32 0.0, %v955
        %957 = vmatprep.mubr.f32.mxu0 0.0
        %958 = vmatmul.mubr.f32.gmra.mxu0 %v730
        %v959 = vpop.f32.mrf.mxu0
        %v960 = vadd.f32 0.0, %v959
        %v961 = vpop.f32.mrf.mxu0
        %v962 = vadd.f32 0.0, %v961
        %963 = vmatprep.mubr.f32.mxu0 0.0
        %964 = vmatmul.mubr.f32.gmra.mxu0 %v733
        %v965 = vpop.f32.mrf.mxu0
        %v966 = vadd.f32 0.0, %v965
        %v967 = vpop.f32.mrf.mxu0
        %v968 = vadd.f32 0.0, %v967
        %969 = vmatprep.mubr.f32.mxu0 0.0
        %970 = vmatmul.mubr.f32.gmra.mxu0 %v736
        %v971 = vpop.f32.mrf.mxu0
        %v972 = vadd.f32 0.0, %v971
        %v973 = vpop.f32.mrf.mxu0
        %v974 = vadd.f32 0.0, %v973
        %975 = vmatprep.mubr.f32.mxu0 0.0
        %976 = vmatmul.mubr.f32.gmra.mxu0 %v739
        %v977 = vpop.f32.mrf.mxu0
        %v978 = vadd.f32 0.0, %v977
        %v979 = vpop.f32.mrf.mxu0
        %v980 = vadd.f32 0.0, %v979
        %981 = vmatprep.mubr.f32.mxu0 0.0
        %982 = vmatmul.mubr.f32.gmra.mxu0 %v742
        %v983 = vpop.f32.mrf.mxu0
        %v984 = vadd.f32 0.0, %v983
        %v985 = vpop.f32.mrf.mxu0
        %v986 = vadd.f32 0.0, %v985
        %987 = vmatprep.mubr.f32.mxu0 0.0
        %988 = vmatmul.mubr.f32.gmra.mxu0 %v745
        %v989 = vpop.f32.mrf.mxu0
        %v990 = vadd.f32 0.0, %v989
        %v991 = vpop.f32.mrf.mxu0
        %v992 = vadd.f32 0.0, %v991
        %993 = vmatprep.mubr.f32.mxu0 0.0
        %994 = vmatmul.mubr.f32.gmra.mxu0 %v748
        %v995 = vpop.f32.mrf.mxu0
        %v996 = vadd.f32 0.0, %v995
        %v997 = vpop.f32.mrf.mxu0
        %v998 = vadd.f32 0.0, %v997
        %999 = vmatprep.mubr.f32.mxu0 0.0
        %1000 = vmatmul.mubr.f32.gmra.mxu0 %v751
        %v1001 = vpop.f32.mrf.mxu0
        %v1002 = vadd.f32 0.0, %v1001
        %v1003 = vpop.f32.mrf.mxu0
        %v1004 = vadd.f32 0.0, %v1003
        %1005 = vmatprep.mubr.f32.mxu0 0.0
        %1006 = vmatmul.mubr.f32.gmra.mxu0 %v754
        %v1007 = vpop.f32.mrf.mxu0
        %v1008 = vadd.f32 0.0, %v1007
        %v1009 = vpop.f32.mrf.mxu0
        %v1010 = vadd.f32 0.0, %v1009
        %1011 = vmatprep.mubr.f32.mxu0 0.0
        %1012 = vmatmul.mubr.f32.gmra.mxu0 %v757
        %v1013 = vpop.f32.mrf.mxu0
        %v1014 = vadd.f32 0.0, %v1013
        %v1015 = vpop.f32.mrf.mxu0
        %v1016 = vadd.f32 0.0, %v1015
        %1017 = vmatprep.mubr.f32.mxu0 0.0
        %1018 = vmatmul.mubr.f32.gmra.mxu0 %v760
        %v1019 = vpop.f32.mrf.mxu0
        %v1020 = vadd.f32 0.0, %v1019
        %v1021 = vpop.f32.mrf.mxu0
        %v1022 = vadd.f32 0.0, %v1021
        %1023 = vdwg.mxu0
        %v1025 = vunpack.c.l.s4 1983009808
        %v1026 = vunpack.c.0.s8 %v1025
        %v1027 = vlaneseq
        %v1028 = vshrl.u32 %v1027, 7
        %v1029 = vsub.s32 %v1026, %v1028
        %v1030 = vrot.slane %v539, %v1029
        %v1031 = vcombine.high %v1030, %v1030
        %1034 = vxpose.xlu0.b32.start [1/16] %v1030, 128
        %1035 = vxpose.xlu0.b32.cont [2/16] 0.0, 128
        %1036 = vxpose.xlu0.b32.cont [3/16] 0.0, 128
        %1037 = vxpose.xlu0.b32.cont [4/16] 0.0, 128
        %1038 = vxpose.xlu0.b32.cont [5/16] 0.0, 128
        %1039 = vxpose.xlu0.b32.cont [6/16] 0.0, 128
        %1040 = vxpose.xlu0.b32.cont [7/16] 0.0, 128
        %1041 = vxpose.xlu0.b32.cont [8/16] 0.0, 128
        %1042 = vxpose.xlu0.b32.cont [9/16] 0.0, 128
        %1043 = vxpose.xlu0.b32.cont [10/16] 0.0, 128
        %1044 = vxpose.xlu0.b32.cont [11/16] 0.0, 128
        %1045 = vxpose.xlu0.b32.cont [12/16] 0.0, 128
        %1046 = vxpose.xlu0.b32.cont [13/16] 0.0, 128
        %1047 = vxpose.xlu0.b32.cont [14/16] 0.0, 128
        %1048 = vxpose.xlu0.b32.cont [15/16] 0.0, 128
        %1049 = vxpose.xlu0.b32.end [16/16] 0.0, 128
        %v1050 = vpop.trf.xlu0
        %v1051 = vpop.trf.xlu0
        %v1052 = vpop.trf.xlu0
        %v1053 = vpop.trf.xlu0
        %v1054 = vpop.trf.xlu0
        %v1055 = vpop.trf.xlu0
        %v1056 = vpop.trf.xlu0
        %v1057 = vpop.trf.xlu0
        %v1058 = vpop.trf.xlu0
        %v1059 = vpop.trf.xlu0
        %v1060 = vpop.trf.xlu0
        %v1061 = vpop.trf.xlu0
        %v1062 = vpop.trf.xlu0
        %v1063 = vpop.trf.xlu0
        %v1064 = vpop.trf.xlu0
        %v1065 = vpop.trf.xlu0
        %1066 = vxpose.xlu0.b32.start [1/16] %v1031, 128
        %1067 = vxpose.xlu0.b32.cont [2/16] 0.0, 128
        %1068 = vxpose.xlu0.b32.cont [3/16] 0.0, 128
        %1069 = vxpose.xlu0.b32.cont [4/16] 0.0, 128
        %1070 = vxpose.xlu0.b32.cont [5/16] 0.0, 128
        %1071 = vxpose.xlu0.b32.cont [6/16] 0.0, 128
        %1072 = vxpose.xlu0.b32.cont [7/16] 0.0, 128
        %1073 = vxpose.xlu0.b32.cont [8/16] 0.0, 128
        %1074 = vxpose.xlu0.b32.cont [9/16] 0.0, 128
        %1075 = vxpose.xlu0.b32.cont [10/16] 0.0, 128
        %1076 = vxpose.xlu0.b32.cont [11/16] 0.0, 128
        %1077 = vxpose.xlu0.b32.cont [12/16] 0.0, 128
        %1078 = vxpose.xlu0.b32.cont [13/16] 0.0, 128
        %1079 = vxpose.xlu0.b32.cont [14/16] 0.0, 128
        %1080 = vxpose.xlu0.b32.cont [15/16] 0.0, 128
        %1081 = vxpose.xlu0.b32.end [16/16] 0.0, 128
        %v1082 = vpop.trf.xlu0
        %v1083 = vpop.trf.xlu0
        %v1084 = vpop.trf.xlu0
        %v1085 = vpop.trf.xlu0
        %v1086 = vpop.trf.xlu0
        %v1087 = vpop.trf.xlu0
        %v1088 = vpop.trf.xlu0
        %v1089 = vpop.trf.xlu0
        %v1090 = vpop.trf.xlu0
        %v1091 = vpop.trf.xlu0
        %v1092 = vpop.trf.xlu0
        %v1093 = vpop.trf.xlu0
        %v1094 = vpop.trf.xlu0
        %v1095 = vpop.trf.xlu0
        %v1096 = vpop.trf.xlu0
        %v1097 = vpop.trf.xlu0
        %v1099 = vunpack.c.l.s4 1983009808
        %v1100 = vunpack.c.0.s8 %v1099
        %v1101 = vlaneseq
        %v1102 = vshrl.u32 %v1101, 7
        %v1103 = vsub.s32 %v1100, %v1102
        %v1104 = vrot.slane %v499, %v1103
        %v1105 = vcombine.high %v1104, %v1104
        %v1107 = vsel %vm665, %v1050, 0
        %v1110 = vsel %vm665, %v1051, 0
        %v1113 = vsel %vm665, %v1052, 0
        %v1116 = vsel %vm665, %v1053, 0
        %v1119 = vsel %vm665, %v1054, 0
        %v1122 = vsel %vm665, %v1055, 0
        %v1125 = vsel %vm665, %v1056, 0
        %v1128 = vsel %vm665, %v1057, 0
        %v1131 = vsel %vm665, %v1058, 0
        %v1134 = vsel %vm665, %v1059, 0
        %v1137 = vsel %vm665, %v1060, 0
        %v1140 = vsel %vm665, %v1061, 0
        %v1143 = vsel %vm665, %v1062, 0
        %v1146 = vsel %vm665, %v1063, 0
        %v1149 = vsel %vm665, %v1064, 0
        %v1152 = vsel %vm665, %v1065, 0
        %v1155 = vsel %vm665, %v1082, 0
        %v1158 = vsel %vm665, %v1083, 0
        %v1161 = vsel %vm665, %v1084, 0
        %v1164 = vsel %vm665, %v1085, 0
        %v1167 = vsel %vm665, %v1086, 0
        %v1170 = vsel %vm665, %v1087, 0
        %v1173 = vsel %vm665, %v1088, 0
        %v1176 = vsel %vm665, %v1089, 0
        %v1179 = vsel %vm665, %v1090, 0
        %v1182 = vsel %vm665, %v1091, 0
        %v1185 = vsel %vm665, %v1092, 0
        %v1188 = vsel %vm665, %v1093, 0
        %v1191 = vsel %vm665, %v1094, 0
        %v1194 = vsel %vm665, %v1095, 0
        %v1197 = vsel %vm665, %v1096, 0
        %v1200 = vsel %vm665, %v1097, 0
        %v1202 = vsel %vm762, %v1104, 0
        %v1204 = vsel %vm762, %v1105, 0
        %1206 = vmatprep.subr.mxu0 0.0
        %1207 = vmatpush1.msra.mxu0 0.0
        %1208 = vmatprep.subr.mxu0 0.0
        %1209 = vmatpush1.msra.mxu0 0.0
        %1210 = vmatprep.subr.mxu0 0.0
        %1211 = vmatpush1.msra.mxu0 0.0
        %1212 = vmatprep.subr.mxu0 0.0
        %1213 = vmatpush1.msra.mxu0 0.0
        %1214 = vmatprep.subr.mxu0 0.0
        %1215 = vmatpush1.msra.mxu0 0.0
        %1216 = vmatprep.subr.mxu0 0.0
        %1217 = vmatpush1.msra.mxu0 0.0
        %1218 = vmatprep.subr.mxu0 0.0
        %1219 = vmatpush1.msra.mxu0 0.0
        %1220 = vmatprep.subr.mxu0 0.0
        %1221 = vmatpush1.msra.mxu0 0.0
        %1222 = vmatprep.subr.mxu0 0.0
        %1223 = vmatpush1.msra.mxu0 0.0
        %1224 = vmatprep.subr.mxu0 0.0
        %1225 = vmatpush1.msra.mxu0 0.0
        %1226 = vmatprep.subr.mxu0 0.0
        %1227 = vmatpush1.msra.mxu0 0.0
        %1228 = vmatprep.subr.mxu0 0.0
        %1229 = vmatpush1.msra.mxu0 0.0
        %1230 = vmatprep.subr.mxu0 0.0
        %1231 = vmatpush1.msra.mxu0 0.0
        %1232 = vmatprep.subr.mxu0 0.0
        %1233 = vmatpush1.msra.mxu0 0.0
        %1234 = vmatprep.subr.mxu0 0.0
        %1235 = vmatpush1.msra.mxu0 0.0
        %1236 = vmatprep.subr.mxu0 %v1204
        %1237 = vmatpush1.msra.mxu0 %v1202
        %1238 = vmatprep.subr.mxu0 0.0
        %1239 = vmatpush2.msra.mxu0 0.0
        %1240 = vmatprep.subr.mxu0 0.0
        %1241 = vmatpush2.msra.mxu0 0.0
        %1242 = vmatprep.subr.mxu0 0.0
        %1243 = vmatpush2.msra.mxu0 0.0
        %1244 = vmatprep.subr.mxu0 0.0
        %1245 = vmatpush2.msra.mxu0 0.0
        %1246 = vmatprep.subr.mxu0 0.0
        %1247 = vmatpush2.msra.mxu0 0.0
        %1248 = vmatprep.subr.mxu0 0.0
        %1249 = vmatpush2.msra.mxu0 0.0
        %1250 = vmatprep.subr.mxu0 0.0
        %1251 = vmatpush2.msra.mxu0 0.0
        %1252 = vmatprep.subr.mxu0 0.0
        %1253 = vmatpush2.msra.mxu0 0.0
        %1254 = vmatprep.subr.mxu0 0.0
        %1255 = vmatpush2.msra.mxu0 0.0
        %1256 = vmatprep.subr.mxu0 0.0
        %1257 = vmatpush2.msra.mxu0 0.0
        %1258 = vmatprep.subr.mxu0 0.0
        %1259 = vmatpush2.msra.mxu0 0.0
        %1260 = vmatprep.subr.mxu0 0.0
        %1261 = vmatpush2.msra.mxu0 0.0
        %1262 = vmatprep.subr.mxu0 0.0
        %1263 = vmatpush2.msra.mxu0 0.0
        %1264 = vmatprep.subr.mxu0 0.0
        %1265 = vmatpush2.msra.mxu0 0.0
        %1266 = vmatprep.subr.mxu0 0.0
        %1267 = vmatpush2.msra.mxu0 0.0
        %1268 = vmatprep.subr.mxu0 0.0
        %1269 = vmatpush2.msra.mxu0 0.0
        %1270 = vmatprep.mubr.f32.mxu0 0.0
        %1271 = vmatmul.mubr.f32.gmra.mxu0 %v1107
        %v1272 = vpop.f32.mrf.mxu0
        %v1273 = vadd.f32 0.0, %v1272
        %v1274 = vpop.f32.mrf.mxu0
        %v1275 = vadd.f32 0.0, %v1274
        %1276 = vmatprep.mubr.f32.mxu0 0.0
        %1277 = vmatmul.mubr.f32.gmra.mxu0 %v1110
        %v1278 = vpop.f32.mrf.mxu0
        %v1279 = vadd.f32 0.0, %v1278
        %v1280 = vpop.f32.mrf.mxu0
        %v1281 = vadd.f32 0.0, %v1280
        %1282 = vmatprep.mubr.f32.mxu0 0.0
        %1283 = vmatmul.mubr.f32.gmra.mxu0 %v1113
        %v1284 = vpop.f32.mrf.mxu0
        %v1285 = vadd.f32 0.0, %v1284
        %v1286 = vpop.f32.mrf.mxu0
        %v1287 = vadd.f32 0.0, %v1286
        %1288 = vmatprep.mubr.f32.mxu0 0.0
        %1289 = vmatmul.mubr.f32.gmra.mxu0 %v1116
        %v1290 = vpop.f32.mrf.mxu0
        %v1291 = vadd.f32 0.0, %v1290
        %v1292 = vpop.f32.mrf.mxu0
        %v1293 = vadd.f32 0.0, %v1292
        %1294 = vmatprep.mubr.f32.mxu0 0.0
        %1295 = vmatmul.mubr.f32.gmra.mxu0 %v1119
        %v1296 = vpop.f32.mrf.mxu0
        %v1297 = vadd.f32 0.0, %v1296
        %v1298 = vpop.f32.mrf.mxu0
        %v1299 = vadd.f32 0.0, %v1298
        %1300 = vmatprep.mubr.f32.mxu0 0.0
        %1301 = vmatmul.mubr.f32.gmra.mxu0 %v1122
        %v1302 = vpop.f32.mrf.mxu0
        %v1303 = vadd.f32 0.0, %v1302
        %v1304 = vpop.f32.mrf.mxu0
        %v1305 = vadd.f32 0.0, %v1304
        %1306 = vmatprep.mubr.f32.mxu0 0.0
        %1307 = vmatmul.mubr.f32.gmra.mxu0 %v1125
        %v1308 = vpop.f32.mrf.mxu0
        %v1309 = vadd.f32 0.0, %v1308
        %v1310 = vpop.f32.mrf.mxu0
        %v1311 = vadd.f32 0.0, %v1310
        %1312 = vmatprep.mubr.f32.mxu0 0.0
        %1313 = vmatmul.mubr.f32.gmra.mxu0 %v1128
        %v1314 = vpop.f32.mrf.mxu0
        %v1315 = vadd.f32 0.0, %v1314
        %v1316 = vpop.f32.mrf.mxu0
        %v1317 = vadd.f32 0.0, %v1316
        %1318 = vmatprep.mubr.f32.mxu0 0.0
        %1319 = vmatmul.mubr.f32.gmra.mxu0 %v1131
        %v1320 = vpop.f32.mrf.mxu0
        %v1321 = vadd.f32 0.0, %v1320
        %v1322 = vpop.f32.mrf.mxu0
        %v1323 = vadd.f32 0.0, %v1322
        %1324 = vmatprep.mubr.f32.mxu0 0.0
        %1325 = vmatmul.mubr.f32.gmra.mxu0 %v1134
        %v1326 = vpop.f32.mrf.mxu0
        %v1327 = vadd.f32 0.0, %v1326
        %v1328 = vpop.f32.mrf.mxu0
        %v1329 = vadd.f32 0.0, %v1328
        %1330 = vmatprep.mubr.f32.mxu0 0.0
        %1331 = vmatmul.mubr.f32.gmra.mxu0 %v1137
        %v1332 = vpop.f32.mrf.mxu0
        %v1333 = vadd.f32 0.0, %v1332
        %v1334 = vpop.f32.mrf.mxu0
        %v1335 = vadd.f32 0.0, %v1334
        %1336 = vmatprep.mubr.f32.mxu0 0.0
        %1337 = vmatmul.mubr.f32.gmra.mxu0 %v1140
        %v1338 = vpop.f32.mrf.mxu0
        %v1339 = vadd.f32 0.0, %v1338
        %v1340 = vpop.f32.mrf.mxu0
        %v1341 = vadd.f32 0.0, %v1340
        %1342 = vmatprep.mubr.f32.mxu0 0.0
        %1343 = vmatmul.mubr.f32.gmra.mxu0 %v1143
        %v1344 = vpop.f32.mrf.mxu0
        %v1345 = vadd.f32 0.0, %v1344
        %v1346 = vpop.f32.mrf.mxu0
        %v1347 = vadd.f32 0.0, %v1346
        %1348 = vmatprep.mubr.f32.mxu0 0.0
        %1349 = vmatmul.mubr.f32.gmra.mxu0 %v1146
        %v1350 = vpop.f32.mrf.mxu0
        %v1351 = vadd.f32 0.0, %v1350
        %v1352 = vpop.f32.mrf.mxu0
        %v1353 = vadd.f32 0.0, %v1352
        %1354 = vmatprep.mubr.f32.mxu0 0.0
        %1355 = vmatmul.mubr.f32.gmra.mxu0 %v1149
        %v1356 = vpop.f32.mrf.mxu0
        %v1357 = vadd.f32 0.0, %v1356
        %v1358 = vpop.f32.mrf.mxu0
        %v1359 = vadd.f32 0.0, %v1358
        %1360 = vmatprep.mubr.f32.mxu0 0.0
        %1361 = vmatmul.mubr.f32.gmra.mxu0 %v1152
        %v1362 = vpop.f32.mrf.mxu0
        %v1363 = vadd.f32 0.0, %v1362
        %v1364 = vpop.f32.mrf.mxu0
        %v1365 = vadd.f32 0.0, %v1364
        %1366 = vmatprep.mubr.f32.mxu0 0.0
        %1367 = vmatmul.mubr.f32.gmra.mxu0 %v1155
        %v1368 = vpop.f32.mrf.mxu0
        %v1369 = vadd.f32 0.0, %v1368
        %v1370 = vpop.f32.mrf.mxu0
        %v1371 = vadd.f32 0.0, %v1370
        %1372 = vmatprep.mubr.f32.mxu0 0.0
        %1373 = vmatmul.mubr.f32.gmra.mxu0 %v1158
        %v1374 = vpop.f32.mrf.mxu0
        %v1375 = vadd.f32 0.0, %v1374
        %v1376 = vpop.f32.mrf.mxu0
        %v1377 = vadd.f32 0.0, %v1376
        %1378 = vmatprep.mubr.f32.mxu0 0.0
        %1379 = vmatmul.mubr.f32.gmra.mxu0 %v1161
        %v1380 = vpop.f32.mrf.mxu0
        %v1381 = vadd.f32 0.0, %v1380
        %v1382 = vpop.f32.mrf.mxu0
        %v1383 = vadd.f32 0.0, %v1382
        %1384 = vmatprep.mubr.f32.mxu0 0.0
        %1385 = vmatmul.mubr.f32.gmra.mxu0 %v1164
        %v1386 = vpop.f32.mrf.mxu0
        %v1387 = vadd.f32 0.0, %v1386
        %v1388 = vpop.f32.mrf.mxu0
        %v1389 = vadd.f32 0.0, %v1388
        %1390 = vmatprep.mubr.f32.mxu0 0.0
        %1391 = vmatmul.mubr.f32.gmra.mxu0 %v1167
        %v1392 = vpop.f32.mrf.mxu0
        %v1393 = vadd.f32 0.0, %v1392
        %v1394 = vpop.f32.mrf.mxu0
        %v1395 = vadd.f32 0.0, %v1394
        %1396 = vmatprep.mubr.f32.mxu0 0.0
        %1397 = vmatmul.mubr.f32.gmra.mxu0 %v1170
        %v1398 = vpop.f32.mrf.mxu0
        %v1399 = vadd.f32 0.0, %v1398
        %v1400 = vpop.f32.mrf.mxu0
        %v1401 = vadd.f32 0.0, %v1400
        %1402 = vmatprep.mubr.f32.mxu0 0.0
        %1403 = vmatmul.mubr.f32.gmra.mxu0 %v1173
        %v1404 = vpop.f32.mrf.mxu0
        %v1405 = vadd.f32 0.0, %v1404
        %v1406 = vpop.f32.mrf.mxu0
        %v1407 = vadd.f32 0.0, %v1406
        %1408 = vmatprep.mubr.f32.mxu0 0.0
        %1409 = vmatmul.mubr.f32.gmra.mxu0 %v1176
        %v1410 = vpop.f32.mrf.mxu0
        %v1411 = vadd.f32 0.0, %v1410
        %v1412 = vpop.f32.mrf.mxu0
        %v1413 = vadd.f32 0.0, %v1412
        %1414 = vmatprep.mubr.f32.mxu0 0.0
        %1415 = vmatmul.mubr.f32.gmra.mxu0 %v1179
        %v1416 = vpop.f32.mrf.mxu0
        %v1417 = vadd.f32 0.0, %v1416
        %v1418 = vpop.f32.mrf.mxu0
        %v1419 = vadd.f32 0.0, %v1418
        %1420 = vmatprep.mubr.f32.mxu0 0.0
        %1421 = vmatmul.mubr.f32.gmra.mxu0 %v1182
        %v1422 = vpop.f32.mrf.mxu0
        %v1423 = vadd.f32 0.0, %v1422
        %v1424 = vpop.f32.mrf.mxu0
        %v1425 = vadd.f32 0.0, %v1424
        %1426 = vmatprep.mubr.f32.mxu0 0.0
        %1427 = vmatmul.mubr.f32.gmra.mxu0 %v1185
        %v1428 = vpop.f32.mrf.mxu0
        %v1429 = vadd.f32 0.0, %v1428
        %v1430 = vpop.f32.mrf.mxu0
        %v1431 = vadd.f32 0.0, %v1430
        %1432 = vmatprep.mubr.f32.mxu0 0.0
        %1433 = vmatmul.mubr.f32.gmra.mxu0 %v1188
        %v1434 = vpop.f32.mrf.mxu0
        %v1435 = vadd.f32 0.0, %v1434
        %v1436 = vpop.f32.mrf.mxu0
        %v1437 = vadd.f32 0.0, %v1436
        %1438 = vmatprep.mubr.f32.mxu0 0.0
        %1439 = vmatmul.mubr.f32.gmra.mxu0 %v1191
        %v1440 = vpop.f32.mrf.mxu0
        %v1441 = vadd.f32 0.0, %v1440
        %v1442 = vpop.f32.mrf.mxu0
        %v1443 = vadd.f32 0.0, %v1442
        %1444 = vmatprep.mubr.f32.mxu0 0.0
        %1445 = vmatmul.mubr.f32.gmra.mxu0 %v1194
        %v1446 = vpop.f32.mrf.mxu0
        %v1447 = vadd.f32 0.0, %v1446
        %v1448 = vpop.f32.mrf.mxu0
        %v1449 = vadd.f32 0.0, %v1448
        %1450 = vmatprep.mubr.f32.mxu0 0.0
        %1451 = vmatmul.mubr.f32.gmra.mxu0 %v1197
        %v1452 = vpop.f32.mrf.mxu0
        %v1453 = vadd.f32 0.0, %v1452
        %v1454 = vpop.f32.mrf.mxu0
        %v1455 = vadd.f32 0.0, %v1454
        %1456 = vmatprep.mubr.f32.mxu0 0.0
        %1457 = vmatmul.mubr.f32.gmra.mxu0 %v1200
        %v1458 = vpop.f32.mrf.mxu0
        %v1459 = vadd.f32 0.0, %v1458
        %v1460 = vpop.f32.mrf.mxu0
        %v1461 = vadd.f32 0.0, %v1460
        %1462 = vdwg.mxu0
        %v1464 = vunpack.c.l.s4 1983009808
        %v1465 = vunpack.c.0.s8 %v1464
        %v1466 = vlaneseq
        %v1467 = vshrl.u32 %v1466, 7
        %v1468 = vsub.s32 %v1465, %v1467
        %v1469 = vrot.slane %v538, %v1468
        %v1470 = vcombine.high %v1469, %v1469
        %1473 = vxpose.xlu0.b32.start [1/16] %v1469, 128
        %1474 = vxpose.xlu0.b32.cont [2/16] 0.0, 128
        %1475 = vxpose.xlu0.b32.cont [3/16] 0.0, 128
        %1476 = vxpose.xlu0.b32.cont [4/16] 0.0, 128
        %1477 = vxpose.xlu0.b32.cont [5/16] 0.0, 128
        %1478 = vxpose.xlu0.b32.cont [6/16] 0.0, 128
        %1479 = vxpose.xlu0.b32.cont [7/16] 0.0, 128
        %1480 = vxpose.xlu0.b32.cont [8/16] 0.0, 128
        %1481 = vxpose.xlu0.b32.cont [9/16] 0.0, 128
        %1482 = vxpose.xlu0.b32.cont [10/16] 0.0, 128
        %1483 = vxpose.xlu0.b32.cont [11/16] 0.0, 128
        %1484 = vxpose.xlu0.b32.cont [12/16] 0.0, 128
        %1485 = vxpose.xlu0.b32.cont [13/16] 0.0, 128
        %1486 = vxpose.xlu0.b32.cont [14/16] 0.0, 128
        %1487 = vxpose.xlu0.b32.cont [15/16] 0.0, 128
        %1488 = vxpose.xlu0.b32.end [16/16] 0.0, 128
        %v1489 = vpop.trf.xlu0
        %v1490 = vpop.trf.xlu0
        %v1491 = vpop.trf.xlu0
        %v1492 = vpop.trf.xlu0
        %v1493 = vpop.trf.xlu0
        %v1494 = vpop.trf.xlu0
        %v1495 = vpop.trf.xlu0
        %v1496 = vpop.trf.xlu0
        %v1497 = vpop.trf.xlu0
        %v1498 = vpop.trf.xlu0
        %v1499 = vpop.trf.xlu0
        %v1500 = vpop.trf.xlu0
        %v1501 = vpop.trf.xlu0
        %v1502 = vpop.trf.xlu0
        %v1503 = vpop.trf.xlu0
        %v1504 = vpop.trf.xlu0
        %1505 = vxpose.xlu0.b32.start [1/16] %v1470, 128
        %1506 = vxpose.xlu0.b32.cont [2/16] 0.0, 128
        %1507 = vxpose.xlu0.b32.cont [3/16] 0.0, 128
        %1508 = vxpose.xlu0.b32.cont [4/16] 0.0, 128
        %1509 = vxpose.xlu0.b32.cont [5/16] 0.0, 128
        %1510 = vxpose.xlu0.b32.cont [6/16] 0.0, 128
        %1511 = vxpose.xlu0.b32.cont [7/16] 0.0, 128
        %1512 = vxpose.xlu0.b32.cont [8/16] 0.0, 128
        %1513 = vxpose.xlu0.b32.cont [9/16] 0.0, 128
        %1514 = vxpose.xlu0.b32.cont [10/16] 0.0, 128
        %1515 = vxpose.xlu0.b32.cont [11/16] 0.0, 128
        %1516 = vxpose.xlu0.b32.cont [12/16] 0.0, 128
        %1517 = vxpose.xlu0.b32.cont [13/16] 0.0, 128
        %1518 = vxpose.xlu0.b32.cont [14/16] 0.0, 128
        %1519 = vxpose.xlu0.b32.cont [15/16] 0.0, 128
        %1520 = vxpose.xlu0.b32.end [16/16] 0.0, 128
        %v1521 = vpop.trf.xlu0
        %v1522 = vpop.trf.xlu0
        %v1523 = vpop.trf.xlu0
        %v1524 = vpop.trf.xlu0
        %v1525 = vpop.trf.xlu0
        %v1526 = vpop.trf.xlu0
        %v1527 = vpop.trf.xlu0
        %v1528 = vpop.trf.xlu0
        %v1529 = vpop.trf.xlu0
        %v1530 = vpop.trf.xlu0
        %v1531 = vpop.trf.xlu0
        %v1532 = vpop.trf.xlu0
        %v1533 = vpop.trf.xlu0
        %v1534 = vpop.trf.xlu0
        %v1535 = vpop.trf.xlu0
        %v1536 = vpop.trf.xlu0
        %v1538 = vunpack.c.l.s4 1983009808
        %v1539 = vunpack.c.0.s8 %v1538
        %v1540 = vlaneseq
        %v1541 = vshrl.u32 %v1540, 7
        %v1542 = vsub.s32 %v1539, %v1541
        %v1543 = vrot.slane %v498, %v1542
        %v1544 = vcombine.high %v1543, %v1543
        %v1546 = vsel %vm665, %v1489, 0
        %v1549 = vsel %vm665, %v1490, 0
        %v1552 = vsel %vm665, %v1491, 0
        %v1555 = vsel %vm665, %v1492, 0
        %v1558 = vsel %vm665, %v1493, 0
        %v1561 = vsel %vm665, %v1494, 0
        %v1564 = vsel %vm665, %v1495, 0
        %v1567 = vsel %vm665, %v1496, 0
        %v1570 = vsel %vm665, %v1497, 0
        %v1573 = vsel %vm665, %v1498, 0
        %v1576 = vsel %vm665, %v1499, 0
        %v1579 = vsel %vm665, %v1500, 0
        %v1582 = vsel %vm665, %v1501, 0
        %v1585 = vsel %vm665, %v1502, 0
        %v1588 = vsel %vm665, %v1503, 0
        %v1591 = vsel %vm665, %v1504, 0
        %v1594 = vsel %vm665, %v1521, 0
        %v1597 = vsel %vm665, %v1522, 0
        %v1600 = vsel %vm665, %v1523, 0
        %v1603 = vsel %vm665, %v1524, 0
        %v1606 = vsel %vm665, %v1525, 0
        %v1609 = vsel %vm665, %v1526, 0
        %v1612 = vsel %vm665, %v1527, 0
        %v1615 = vsel %vm665, %v1528, 0
        %v1618 = vsel %vm665, %v1529, 0
        %v1621 = vsel %vm665, %v1530, 0
        %v1624 = vsel %vm665, %v1531, 0
        %v1627 = vsel %vm665, %v1532, 0
        %v1630 = vsel %vm665, %v1533, 0
        %v1633 = vsel %vm665, %v1534, 0
        %v1636 = vsel %vm665, %v1535, 0
        %v1639 = vsel %vm665, %v1536, 0
        %v1641 = vsel %vm762, %v1543, 0
        %v1643 = vsel %vm762, %v1544, 0
        %1645 = vmatprep.subr.mxu0 0.0
        %1646 = vmatpush1.msra.mxu0 0.0
        %1647 = vmatprep.subr.mxu0 0.0
        %1648 = vmatpush1.msra.mxu0 0.0
        %1649 = vmatprep.subr.mxu0 0.0
        %1650 = vmatpush1.msra.mxu0 0.0
        %1651 = vmatprep.subr.mxu0 0.0
        %1652 = vmatpush1.msra.mxu0 0.0
        %1653 = vmatprep.subr.mxu0 0.0
        %1654 = vmatpush1.msra.mxu0 0.0
        %1655 = vmatprep.subr.mxu0 0.0
        %1656 = vmatpush1.msra.mxu0 0.0
        %1657 = vmatprep.subr.mxu0 0.0
        %1658 = vmatpush1.msra.mxu0 0.0
        %1659 = vmatprep.subr.mxu0 0.0
        %1660 = vmatpush1.msra.mxu0 0.0
        %1661 = vmatprep.subr.mxu0 0.0
        %1662 = vmatpush1.msra.mxu0 0.0
        %1663 = vmatprep.subr.mxu0 0.0
        %1664 = vmatpush1.msra.mxu0 0.0
        %1665 = vmatprep.subr.mxu0 0.0
        %1666 = vmatpush1.msra.mxu0 0.0
        %1667 = vmatprep.subr.mxu0 0.0
        %1668 = vmatpush1.msra.mxu0 0.0
        %1669 = vmatprep.subr.mxu0 0.0
        %1670 = vmatpush1.msra.mxu0 0.0
        %1671 = vmatprep.subr.mxu0 0.0
        %1672 = vmatpush1.msra.mxu0 0.0
        %1673 = vmatprep.subr.mxu0 0.0
        %1674 = vmatpush1.msra.mxu0 0.0
        %1675 = vmatprep.subr.mxu0 %v1643
        %1676 = vmatpush1.msra.mxu0 %v1641
        %1677 = vmatprep.subr.mxu0 0.0
        %1678 = vmatpush2.msra.mxu0 0.0
        %1679 = vmatprep.subr.mxu0 0.0
        %1680 = vmatpush2.msra.mxu0 0.0
        %1681 = vmatprep.subr.mxu0 0.0
        %1682 = vmatpush2.msra.mxu0 0.0
        %1683 = vmatprep.subr.mxu0 0.0
        %1684 = vmatpush2.msra.mxu0 0.0
        %1685 = vmatprep.subr.mxu0 0.0
        %1686 = vmatpush2.msra.mxu0 0.0
        %1687 = vmatprep.subr.mxu0 0.0
        %1688 = vmatpush2.msra.mxu0 0.0
        %1689 = vmatprep.subr.mxu0 0.0
        %1690 = vmatpush2.msra.mxu0 0.0
        %1691 = vmatprep.subr.mxu0 0.0
        %1692 = vmatpush2.msra.mxu0 0.0
        %1693 = vmatprep.subr.mxu0 0.0
        %1694 = vmatpush2.msra.mxu0 0.0
        %1695 = vmatprep.subr.mxu0 0.0
        %1696 = vmatpush2.msra.mxu0 0.0
        %1697 = vmatprep.subr.mxu0 0.0
        %1698 = vmatpush2.msra.mxu0 0.0
        %1699 = vmatprep.subr.mxu0 0.0
        %1700 = vmatpush2.msra.mxu0 0.0
        %1701 = vmatprep.subr.mxu0 0.0
        %1702 = vmatpush2.msra.mxu0 0.0
        %1703 = vmatprep.subr.mxu0 0.0
        %1704 = vmatpush2.msra.mxu0 0.0
        %1705 = vmatprep.subr.mxu0 0.0
        %1706 = vmatpush2.msra.mxu0 0.0
        %1707 = vmatprep.subr.mxu0 0.0
        %1708 = vmatpush2.msra.mxu0 0.0
        %1709 = vmatprep.mubr.f32.mxu0 0.0
        %1710 = vmatmul.mubr.f32.gmra.mxu0 %v1546
        %v1711 = vpop.f32.mrf.mxu0
        %v1712 = vadd.f32 0.0, %v1711
        %v1713 = vpop.f32.mrf.mxu0
        %v1714 = vadd.f32 0.0, %v1713
        %1715 = vmatprep.mubr.f32.mxu0 0.0
        %1716 = vmatmul.mubr.f32.gmra.mxu0 %v1549
        %v1717 = vpop.f32.mrf.mxu0
        %v1718 = vadd.f32 0.0, %v1717
        %v1719 = vpop.f32.mrf.mxu0
        %v1720 = vadd.f32 0.0, %v1719
        %1721 = vmatprep.mubr.f32.mxu0 0.0
        %1722 = vmatmul.mubr.f32.gmra.mxu0 %v1552
        %v1723 = vpop.f32.mrf.mxu0
        %v1724 = vadd.f32 0.0, %v1723
        %v1725 = vpop.f32.mrf.mxu0
        %v1726 = vadd.f32 0.0, %v1725
        %1727 = vmatprep.mubr.f32.mxu0 0.0
        %1728 = vmatmul.mubr.f32.gmra.mxu0 %v1555
        %v1729 = vpop.f32.mrf.mxu0
        %v1730 = vadd.f32 0.0, %v1729
        %v1731 = vpop.f32.mrf.mxu0
        %v1732 = vadd.f32 0.0, %v1731
        %1733 = vmatprep.mubr.f32.mxu0 0.0
        %1734 = vmatmul.mubr.f32.gmra.mxu0 %v1558
        %v1735 = vpop.f32.mrf.mxu0
        %v1736 = vadd.f32 0.0, %v1735
        %v1737 = vpop.f32.mrf.mxu0
        %v1738 = vadd.f32 0.0, %v1737
        %1739 = vmatprep.mubr.f32.mxu0 0.0
        %1740 = vmatmul.mubr.f32.gmra.mxu0 %v1561
        %v1741 = vpop.f32.mrf.mxu0
        %v1742 = vadd.f32 0.0, %v1741
        %v1743 = vpop.f32.mrf.mxu0
        %v1744 = vadd.f32 0.0, %v1743
        %1745 = vmatprep.mubr.f32.mxu0 0.0
        %1746 = vmatmul.mubr.f32.gmra.mxu0 %v1564
        %v1747 = vpop.f32.mrf.mxu0
        %v1748 = vadd.f32 0.0, %v1747
        %v1749 = vpop.f32.mrf.mxu0
        %v1750 = vadd.f32 0.0, %v1749
        %1751 = vmatprep.mubr.f32.mxu0 0.0
        %1752 = vmatmul.mubr.f32.gmra.mxu0 %v1567
        %v1753 = vpop.f32.mrf.mxu0
        %v1754 = vadd.f32 0.0, %v1753
        %v1755 = vpop.f32.mrf.mxu0
        %v1756 = vadd.f32 0.0, %v1755
        %1757 = vmatprep.mubr.f32.mxu0 0.0
        %1758 = vmatmul.mubr.f32.gmra.mxu0 %v1570
        %v1759 = vpop.f32.mrf.mxu0
        %v1760 = vadd.f32 0.0, %v1759
        %v1761 = vpop.f32.mrf.mxu0
        %v1762 = vadd.f32 0.0, %v1761
        %1763 = vmatprep.mubr.f32.mxu0 0.0
        %1764 = vmatmul.mubr.f32.gmra.mxu0 %v1573
        %v1765 = vpop.f32.mrf.mxu0
        %v1766 = vadd.f32 0.0, %v1765
        %v1767 = vpop.f32.mrf.mxu0
        %v1768 = vadd.f32 0.0, %v1767
        %1769 = vmatprep.mubr.f32.mxu0 0.0
        %1770 = vmatmul.mubr.f32.gmra.mxu0 %v1576
        %v1771 = vpop.f32.mrf.mxu0
        %v1772 = vadd.f32 0.0, %v1771
        %v1773 = vpop.f32.mrf.mxu0
        %v1774 = vadd.f32 0.0, %v1773
        %1775 = vmatprep.mubr.f32.mxu0 0.0
        %1776 = vmatmul.mubr.f32.gmra.mxu0 %v1579
        %v1777 = vpop.f32.mrf.mxu0
        %v1778 = vadd.f32 0.0, %v1777
        %v1779 = vpop.f32.mrf.mxu0
        %v1780 = vadd.f32 0.0, %v1779
        %1781 = vmatprep.mubr.f32.mxu0 0.0
        %1782 = vmatmul.mubr.f32.gmra.mxu0 %v1582
        %v1783 = vpop.f32.mrf.mxu0
        %v1784 = vadd.f32 0.0, %v1783
        %v1785 = vpop.f32.mrf.mxu0
        %v1786 = vadd.f32 0.0, %v1785
        %1787 = vmatprep.mubr.f32.mxu0 0.0
        %1788 = vmatmul.mubr.f32.gmra.mxu0 %v1585
        %v1789 = vpop.f32.mrf.mxu0
        %v1790 = vadd.f32 0.0, %v1789
        %v1791 = vpop.f32.mrf.mxu0
        %v1792 = vadd.f32 0.0, %v1791
        %1793 = vmatprep.mubr.f32.mxu0 0.0
        %1794 = vmatmul.mubr.f32.gmra.mxu0 %v1588
        %v1795 = vpop.f32.mrf.mxu0
        %v1796 = vadd.f32 0.0, %v1795
        %v1797 = vpop.f32.mrf.mxu0
        %v1798 = vadd.f32 0.0, %v1797
        %1799 = vmatprep.mubr.f32.mxu0 0.0
        %1800 = vmatmul.mubr.f32.gmra.mxu0 %v1591
        %v1801 = vpop.f32.mrf.mxu0
        %v1802 = vadd.f32 0.0, %v1801
        %v1803 = vpop.f32.mrf.mxu0
        %v1804 = vadd.f32 0.0, %v1803
        %1805 = vmatprep.mubr.f32.mxu0 0.0
        %1806 = vmatmul.mubr.f32.gmra.mxu0 %v1594
        %v1807 = vpop.f32.mrf.mxu0
        %v1808 = vadd.f32 0.0, %v1807
        %v1809 = vpop.f32.mrf.mxu0
        %v1810 = vadd.f32 0.0, %v1809
        %1811 = vmatprep.mubr.f32.mxu0 0.0
        %1812 = vmatmul.mubr.f32.gmra.mxu0 %v1597
        %v1813 = vpop.f32.mrf.mxu0
        %v1814 = vadd.f32 0.0, %v1813
        %v1815 = vpop.f32.mrf.mxu0
        %v1816 = vadd.f32 0.0, %v1815
        %1817 = vmatprep.mubr.f32.mxu0 0.0
        %1818 = vmatmul.mubr.f32.gmra.mxu0 %v1600
        %v1819 = vpop.f32.mrf.mxu0
        %v1820 = vadd.f32 0.0, %v1819
        %v1821 = vpop.f32.mrf.mxu0
        %v1822 = vadd.f32 0.0, %v1821
        %1823 = vmatprep.mubr.f32.mxu0 0.0
        %1824 = vmatmul.mubr.f32.gmra.mxu0 %v1603
        %v1825 = vpop.f32.mrf.mxu0
        %v1826 = vadd.f32 0.0, %v1825
        %v1827 = vpop.f32.mrf.mxu0
        %v1828 = vadd.f32 0.0, %v1827
        %1829 = vmatprep.mubr.f32.mxu0 0.0
        %1830 = vmatmul.mubr.f32.gmra.mxu0 %v1606
        %v1831 = vpop.f32.mrf.mxu0
        %v1832 = vadd.f32 0.0, %v1831
        %v1833 = vpop.f32.mrf.mxu0
        %v1834 = vadd.f32 0.0, %v1833
        %1835 = vmatprep.mubr.f32.mxu0 0.0
        %1836 = vmatmul.mubr.f32.gmra.mxu0 %v1609
        %v1837 = vpop.f32.mrf.mxu0
        %v1838 = vadd.f32 0.0, %v1837
        %v1839 = vpop.f32.mrf.mxu0
        %v1840 = vadd.f32 0.0, %v1839
        %1841 = vmatprep.mubr.f32.mxu0 0.0
        %1842 = vmatmul.mubr.f32.gmra.mxu0 %v1612
        %v1843 = vpop.f32.mrf.mxu0
        %v1844 = vadd.f32 0.0, %v1843
        %v1845 = vpop.f32.mrf.mxu0
        %v1846 = vadd.f32 0.0, %v1845
        %1847 = vmatprep.mubr.f32.mxu0 0.0
        %1848 = vmatmul.mubr.f32.gmra.mxu0 %v1615
        %v1849 = vpop.f32.mrf.mxu0
        %v1850 = vadd.f32 0.0, %v1849
        %v1851 = vpop.f32.mrf.mxu0
        %v1852 = vadd.f32 0.0, %v1851
        %1853 = vmatprep.mubr.f32.mxu0 0.0
        %1854 = vmatmul.mubr.f32.gmra.mxu0 %v1618
        %v1855 = vpop.f32.mrf.mxu0
        %v1856 = vadd.f32 0.0, %v1855
        %v1857 = vpop.f32.mrf.mxu0
        %v1858 = vadd.f32 0.0, %v1857
        %1859 = vmatprep.mubr.f32.mxu0 0.0
        %1860 = vmatmul.mubr.f32.gmra.mxu0 %v1621
        %v1861 = vpop.f32.mrf.mxu0
        %v1862 = vadd.f32 0.0, %v1861
        %v1863 = vpop.f32.mrf.mxu0
        %v1864 = vadd.f32 0.0, %v1863
        %1865 = vmatprep.mubr.f32.mxu0 0.0
        %1866 = vmatmul.mubr.f32.gmra.mxu0 %v1624
        %v1867 = vpop.f32.mrf.mxu0
        %v1868 = vadd.f32 0.0, %v1867
        %v1869 = vpop.f32.mrf.mxu0
        %v1870 = vadd.f32 0.0, %v1869
        %1871 = vmatprep.mubr.f32.mxu0 0.0
        %1872 = vmatmul.mubr.f32.gmra.mxu0 %v1627
        %v1873 = vpop.f32.mrf.mxu0
        %v1874 = vadd.f32 0.0, %v1873
        %v1875 = vpop.f32.mrf.mxu0
        %v1876 = vadd.f32 0.0, %v1875
        %1877 = vmatprep.mubr.f32.mxu0 0.0
        %1878 = vmatmul.mubr.f32.gmra.mxu0 %v1630
        %v1879 = vpop.f32.mrf.mxu0
        %v1880 = vadd.f32 0.0, %v1879
        %v1881 = vpop.f32.mrf.mxu0
        %v1882 = vadd.f32 0.0, %v1881
        %1883 = vmatprep.mubr.f32.mxu0 0.0
        %1884 = vmatmul.mubr.f32.gmra.mxu0 %v1633
        %v1885 = vpop.f32.mrf.mxu0
        %v1886 = vadd.f32 0.0, %v1885
        %v1887 = vpop.f32.mrf.mxu0
        %v1888 = vadd.f32 0.0, %v1887
        %1889 = vmatprep.mubr.f32.mxu0 0.0
        %1890 = vmatmul.mubr.f32.gmra.mxu0 %v1636
        %v1891 = vpop.f32.mrf.mxu0
        %v1892 = vadd.f32 0.0, %v1891
        %v1893 = vpop.f32.mrf.mxu0
        %v1894 = vadd.f32 0.0, %v1893
        %1895 = vmatprep.mubr.f32.mxu0 0.0
        %1896 = vmatmul.mubr.f32.gmra.mxu0 %v1639
        %v1897 = vpop.f32.mrf.mxu0
        %v1898 = vadd.f32 0.0, %v1897
        %v1899 = vpop.f32.mrf.mxu0
        %v1900 = vadd.f32 0.0, %v1899
        %1901 = vdwg.mxu0
        %v1903 = vunpack.c.l.s4 1983009808
        %v1904 = vunpack.c.0.s8 %v1903
        %v1905 = vlaneseq
        %v1906 = vshrl.u32 %v1905, 7
        %v1907 = vsub.s32 %v1904, %v1906
        %v1908 = vrot.slane %v540, %v1907
        %v1909 = vcombine.high %v1908, %v1908
        %1912 = vxpose.xlu0.b32.start [1/16] %v1908, 128
        %1913 = vxpose.xlu0.b32.cont [2/16] 0.0, 128
        %1914 = vxpose.xlu0.b32.cont [3/16] 0.0, 128
        %1915 = vxpose.xlu0.b32.cont [4/16] 0.0, 128
        %1916 = vxpose.xlu0.b32.cont [5/16] 0.0, 128
        %1917 = vxpose.xlu0.b32.cont [6/16] 0.0, 128
        %1918 = vxpose.xlu0.b32.cont [7/16] 0.0, 128
        %1919 = vxpose.xlu0.b32.cont [8/16] 0.0, 128
        %1920 = vxpose.xlu0.b32.cont [9/16] 0.0, 128
        %1921 = vxpose.xlu0.b32.cont [10/16] 0.0, 128
        %1922 = vxpose.xlu0.b32.cont [11/16] 0.0, 128
        %1923 = vxpose.xlu0.b32.cont [12/16] 0.0, 128
        %1924 = vxpose.xlu0.b32.cont [13/16] 0.0, 128
        %1925 = vxpose.xlu0.b32.cont [14/16] 0.0, 128
        %1926 = vxpose.xlu0.b32.cont [15/16] 0.0, 128
        %1927 = vxpose.xlu0.b32.end [16/16] 0.0, 128
        %v1928 = vpop.trf.xlu0
        %v1929 = vpop.trf.xlu0
        %v1930 = vpop.trf.xlu0
        %v1931 = vpop.trf.xlu0
        %v1932 = vpop.trf.xlu0
        %v1933 = vpop.trf.xlu0
        %v1934 = vpop.trf.xlu0
        %v1935 = vpop.trf.xlu0
        %v1936 = vpop.trf.xlu0
        %v1937 = vpop.trf.xlu0
        %v1938 = vpop.trf.xlu0
        %v1939 = vpop.trf.xlu0
        %v1940 = vpop.trf.xlu0
        %v1941 = vpop.trf.xlu0
        %v1942 = vpop.trf.xlu0
        %v1943 = vpop.trf.xlu0
        %1944 = vxpose.xlu0.b32.start [1/16] %v1909, 128
        %1945 = vxpose.xlu0.b32.cont [2/16] 0.0, 128
        %1946 = vxpose.xlu0.b32.cont [3/16] 0.0, 128
        %1947 = vxpose.xlu0.b32.cont [4/16] 0.0, 128
        %1948 = vxpose.xlu0.b32.cont [5/16] 0.0, 128
        %1949 = vxpose.xlu0.b32.cont [6/16] 0.0, 128
        %1950 = vxpose.xlu0.b32.cont [7/16] 0.0, 128
        %1951 = vxpose.xlu0.b32.cont [8/16] 0.0, 128
        %1952 = vxpose.xlu0.b32.cont [9/16] 0.0, 128
        %1953 = vxpose.xlu0.b32.cont [10/16] 0.0, 128
        %1954 = vxpose.xlu0.b32.cont [11/16] 0.0, 128
        %1955 = vxpose.xlu0.b32.cont [12/16] 0.0, 128
        %1956 = vxpose.xlu0.b32.cont [13/16] 0.0, 128
        %1957 = vxpose.xlu0.b32.cont [14/16] 0.0, 128
        %1958 = vxpose.xlu0.b32.cont [15/16] 0.0, 128
        %1959 = vxpose.xlu0.b32.end [16/16] 0.0, 128
        %v1960 = vpop.trf.xlu0
        %v1961 = vpop.trf.xlu0
        %v1962 = vpop.trf.xlu0
        %v1963 = vpop.trf.xlu0
        %v1964 = vpop.trf.xlu0
        %v1965 = vpop.trf.xlu0
        %v1966 = vpop.trf.xlu0
        %v1967 = vpop.trf.xlu0
        %v1968 = vpop.trf.xlu0
        %v1969 = vpop.trf.xlu0
        %v1970 = vpop.trf.xlu0
        %v1971 = vpop.trf.xlu0
        %v1972 = vpop.trf.xlu0
        %v1973 = vpop.trf.xlu0
        %v1974 = vpop.trf.xlu0
        %v1975 = vpop.trf.xlu0
        %v1977 = vunpack.c.l.s4 1983009808
        %v1978 = vunpack.c.0.s8 %v1977
        %v1979 = vlaneseq
        %v1980 = vshrl.u32 %v1979, 7
        %v1981 = vsub.s32 %v1978, %v1980
        %v1982 = vrot.slane %v500, %v1981
        %v1983 = vcombine.high %v1982, %v1982
        %v1985 = vsel %vm665, %v1928, 0
        %v1988 = vsel %vm665, %v1929, 0
        %v1991 = vsel %vm665, %v1930, 0
        %v1994 = vsel %vm665, %v1931, 0
        %v1997 = vsel %vm665, %v1932, 0
        %v2000 = vsel %vm665, %v1933, 0
        %v2003 = vsel %vm665, %v1934, 0
        %v2006 = vsel %vm665, %v1935, 0
        %v2009 = vsel %vm665, %v1936, 0
        %v2012 = vsel %vm665, %v1937, 0
        %v2015 = vsel %vm665, %v1938, 0
        %v2018 = vsel %vm665, %v1939, 0
        %v2021 = vsel %vm665, %v1940, 0
        %v2024 = vsel %vm665, %v1941, 0
        %v2027 = vsel %vm665, %v1942, 0
        %v2030 = vsel %vm665, %v1943, 0
        %v2033 = vsel %vm665, %v1960, 0
        %v2036 = vsel %vm665, %v1961, 0
        %v2039 = vsel %vm665, %v1962, 0
        %v2042 = vsel %vm665, %v1963, 0
        %v2045 = vsel %vm665, %v1964, 0
        %v2048 = vsel %vm665, %v1965, 0
        %v2051 = vsel %vm665, %v1966, 0
        %v2054 = vsel %vm665, %v1967, 0
        %v2057 = vsel %vm665, %v1968, 0
        %v2060 = vsel %vm665, %v1969, 0
        %v2063 = vsel %vm665, %v1970, 0
        %v2066 = vsel %vm665, %v1971, 0
        %v2069 = vsel %vm665, %v1972, 0
        %v2072 = vsel %vm665, %v1973, 0
        %v2075 = vsel %vm665, %v1974, 0
        %v2078 = vsel %vm665, %v1975, 0
        %v2080 = vsel %vm762, %v1982, 0
        %v2082 = vsel %vm762, %v1983, 0
        %2084 = vmatprep.subr.mxu0 0.0
        %2085 = vmatpush1.msra.mxu0 0.0
        %2086 = vmatprep.subr.mxu0 0.0
        %2087 = vmatpush1.msra.mxu0 0.0
        %2088 = vmatprep.subr.mxu0 0.0
        %2089 = vmatpush1.msra.mxu0 0.0
        %2090 = vmatprep.subr.mxu0 0.0
        %2091 = vmatpush1.msra.mxu0 0.0
        %2092 = vmatprep.subr.mxu0 0.0
        %2093 = vmatpush1.msra.mxu0 0.0
        %2094 = vmatprep.subr.mxu0 0.0
        %2095 = vmatpush1.msra.mxu0 0.0
        %2096 = vmatprep.subr.mxu0 0.0
        %2097 = vmatpush1.msra.mxu0 0.0
        %2098 = vmatprep.subr.mxu0 0.0
        %2099 = vmatpush1.msra.mxu0 0.0
        %2100 = vmatprep.subr.mxu0 0.0
        %2101 = vmatpush1.msra.mxu0 0.0
        %2102 = vmatprep.subr.mxu0 0.0
        %2103 = vmatpush1.msra.mxu0 0.0
        %2104 = vmatprep.subr.mxu0 0.0
        %2105 = vmatpush1.msra.mxu0 0.0
        %2106 = vmatprep.subr.mxu0 0.0
        %2107 = vmatpush1.msra.mxu0 0.0
        %2108 = vmatprep.subr.mxu0 0.0
        %2109 = vmatpush1.msra.mxu0 0.0
        %2110 = vmatprep.subr.mxu0 0.0
        %2111 = vmatpush1.msra.mxu0 0.0
        %2112 = vmatprep.subr.mxu0 0.0
        %2113 = vmatpush1.msra.mxu0 0.0
        %2114 = vmatprep.subr.mxu0 %v2082
        %2115 = vmatpush1.msra.mxu0 %v2080
        %2116 = vmatprep.subr.mxu0 0.0
        %2117 = vmatpush2.msra.mxu0 0.0
        %2118 = vmatprep.subr.mxu0 0.0
        %2119 = vmatpush2.msra.mxu0 0.0
        %2120 = vmatprep.subr.mxu0 0.0
        %2121 = vmatpush2.msra.mxu0 0.0
        %2122 = vmatprep.subr.mxu0 0.0
        %2123 = vmatpush2.msra.mxu0 0.0
        %2124 = vmatprep.subr.mxu0 0.0
        %2125 = vmatpush2.msra.mxu0 0.0
        %2126 = vmatprep.subr.mxu0 0.0
        %2127 = vmatpush2.msra.mxu0 0.0
        %2128 = vmatprep.subr.mxu0 0.0
        %2129 = vmatpush2.msra.mxu0 0.0
        %2130 = vmatprep.subr.mxu0 0.0
        %2131 = vmatpush2.msra.mxu0 0.0
        %2132 = vmatprep.subr.mxu0 0.0
        %2133 = vmatpush2.msra.mxu0 0.0
        %2134 = vmatprep.subr.mxu0 0.0
        %2135 = vmatpush2.msra.mxu0 0.0
        %2136 = vmatprep.subr.mxu0 0.0
        %2137 = vmatpush2.msra.mxu0 0.0
        %2138 = vmatprep.subr.mxu0 0.0
        %2139 = vmatpush2.msra.mxu0 0.0
        %2140 = vmatprep.subr.mxu0 0.0
        %2141 = vmatpush2.msra.mxu0 0.0
        %2142 = vmatprep.subr.mxu0 0.0
        %2143 = vmatpush2.msra.mxu0 0.0
        %2144 = vmatprep.subr.mxu0 0.0
        %2145 = vmatpush2.msra.mxu0 0.0
        %2146 = vmatprep.subr.mxu0 0.0
        %2147 = vmatpush2.msra.mxu0 0.0
        %2148 = vmatprep.mubr.f32.mxu0 0.0
        %2149 = vmatmul.mubr.f32.gmra.mxu0 %v1985
        %v2150 = vpop.f32.mrf.mxu0
        %v2151 = vadd.f32 0.0, %v2150
        %v2152 = vpop.f32.mrf.mxu0
        %v2153 = vadd.f32 0.0, %v2152
        %2154 = vmatprep.mubr.f32.mxu0 0.0
        %2155 = vmatmul.mubr.f32.gmra.mxu0 %v1988
        %v2156 = vpop.f32.mrf.mxu0
        %v2157 = vadd.f32 0.0, %v2156
        %v2158 = vpop.f32.mrf.mxu0
        %v2159 = vadd.f32 0.0, %v2158
        %2160 = vmatprep.mubr.f32.mxu0 0.0
        %2161 = vmatmul.mubr.f32.gmra.mxu0 %v1991
        %v2162 = vpop.f32.mrf.mxu0
        %v2163 = vadd.f32 0.0, %v2162
        %v2164 = vpop.f32.mrf.mxu0
        %v2165 = vadd.f32 0.0, %v2164
        %2166 = vmatprep.mubr.f32.mxu0 0.0
        %2167 = vmatmul.mubr.f32.gmra.mxu0 %v1994
        %v2168 = vpop.f32.mrf.mxu0
        %v2169 = vadd.f32 0.0, %v2168
        %v2170 = vpop.f32.mrf.mxu0
        %v2171 = vadd.f32 0.0, %v2170
        %2172 = vmatprep.mubr.f32.mxu0 0.0
        %2173 = vmatmul.mubr.f32.gmra.mxu0 %v1997
        %v2174 = vpop.f32.mrf.mxu0
        %v2175 = vadd.f32 0.0, %v2174
        %v2176 = vpop.f32.mrf.mxu0
        %v2177 = vadd.f32 0.0, %v2176
        %2178 = vmatprep.mubr.f32.mxu0 0.0
        %2179 = vmatmul.mubr.f32.gmra.mxu0 %v2000
        %v2180 = vpop.f32.mrf.mxu0
        %v2181 = vadd.f32 0.0, %v2180
        %v2182 = vpop.f32.mrf.mxu0
        %v2183 = vadd.f32 0.0, %v2182
        %2184 = vmatprep.mubr.f32.mxu0 0.0
        %2185 = vmatmul.mubr.f32.gmra.mxu0 %v2003
        %v2186 = vpop.f32.mrf.mxu0
        %v2187 = vadd.f32 0.0, %v2186
        %v2188 = vpop.f32.mrf.mxu0
        %v2189 = vadd.f32 0.0, %v2188
        %2190 = vmatprep.mubr.f32.mxu0 0.0
        %2191 = vmatmul.mubr.f32.gmra.mxu0 %v2006
        %v2192 = vpop.f32.mrf.mxu0
        %v2193 = vadd.f32 0.0, %v2192
        %v2194 = vpop.f32.mrf.mxu0
        %v2195 = vadd.f32 0.0, %v2194
        %2196 = vmatprep.mubr.f32.mxu0 0.0
        %2197 = vmatmul.mubr.f32.gmra.mxu0 %v2009
        %v2198 = vpop.f32.mrf.mxu0
        %v2199 = vadd.f32 0.0, %v2198
        %v2200 = vpop.f32.mrf.mxu0
        %v2201 = vadd.f32 0.0, %v2200
        %2202 = vmatprep.mubr.f32.mxu0 0.0
        %2203 = vmatmul.mubr.f32.gmra.mxu0 %v2012
        %v2204 = vpop.f32.mrf.mxu0
        %v2205 = vadd.f32 0.0, %v2204
        %v2206 = vpop.f32.mrf.mxu0
        %v2207 = vadd.f32 0.0, %v2206
        %2208 = vmatprep.mubr.f32.mxu0 0.0
        %2209 = vmatmul.mubr.f32.gmra.mxu0 %v2015
        %v2210 = vpop.f32.mrf.mxu0
        %v2211 = vadd.f32 0.0, %v2210
        %v2212 = vpop.f32.mrf.mxu0
        %v2213 = vadd.f32 0.0, %v2212
        %2214 = vmatprep.mubr.f32.mxu0 0.0
        %2215 = vmatmul.mubr.f32.gmra.mxu0 %v2018
        %v2216 = vpop.f32.mrf.mxu0
        %v2217 = vadd.f32 0.0, %v2216
        %v2218 = vpop.f32.mrf.mxu0
        %v2219 = vadd.f32 0.0, %v2218
        %2220 = vmatprep.mubr.f32.mxu0 0.0
        %2221 = vmatmul.mubr.f32.gmra.mxu0 %v2021
        %v2222 = vpop.f32.mrf.mxu0
        %v2223 = vadd.f32 0.0, %v2222
        %v2224 = vpop.f32.mrf.mxu0
        %v2225 = vadd.f32 0.0, %v2224
        %2226 = vmatprep.mubr.f32.mxu0 0.0
        %2227 = vmatmul.mubr.f32.gmra.mxu0 %v2024
        %v2228 = vpop.f32.mrf.mxu0
        %v2229 = vadd.f32 0.0, %v2228
        %v2230 = vpop.f32.mrf.mxu0
        %v2231 = vadd.f32 0.0, %v2230
        %2232 = vmatprep.mubr.f32.mxu0 0.0
        %2233 = vmatmul.mubr.f32.gmra.mxu0 %v2027
        %v2234 = vpop.f32.mrf.mxu0
        %v2235 = vadd.f32 0.0, %v2234
        %v2236 = vpop.f32.mrf.mxu0
        %v2237 = vadd.f32 0.0, %v2236
        %2238 = vmatprep.mubr.f32.mxu0 0.0
        %2239 = vmatmul.mubr.f32.gmra.mxu0 %v2030
        %v2240 = vpop.f32.mrf.mxu0
        %v2241 = vadd.f32 0.0, %v2240
        %v2242 = vpop.f32.mrf.mxu0
        %v2243 = vadd.f32 0.0, %v2242
        %2244 = vmatprep.mubr.f32.mxu0 0.0
        %2245 = vmatmul.mubr.f32.gmra.mxu0 %v2033
        %v2246 = vpop.f32.mrf.mxu0
        %v2247 = vadd.f32 0.0, %v2246
        %v2248 = vpop.f32.mrf.mxu0
        %v2249 = vadd.f32 0.0, %v2248
        %2250 = vmatprep.mubr.f32.mxu0 0.0
        %2251 = vmatmul.mubr.f32.gmra.mxu0 %v2036
        %v2252 = vpop.f32.mrf.mxu0
        %v2253 = vadd.f32 0.0, %v2252
        %v2254 = vpop.f32.mrf.mxu0
        %v2255 = vadd.f32 0.0, %v2254
        %2256 = vmatprep.mubr.f32.mxu0 0.0
        %2257 = vmatmul.mubr.f32.gmra.mxu0 %v2039
        %v2258 = vpop.f32.mrf.mxu0
        %v2259 = vadd.f32 0.0, %v2258
        %v2260 = vpop.f32.mrf.mxu0
        %v2261 = vadd.f32 0.0, %v2260
        %2262 = vmatprep.mubr.f32.mxu0 0.0
        %2263 = vmatmul.mubr.f32.gmra.mxu0 %v2042
        %v2264 = vpop.f32.mrf.mxu0
        %v2265 = vadd.f32 0.0, %v2264
        %v2266 = vpop.f32.mrf.mxu0
        %v2267 = vadd.f32 0.0, %v2266
        %2268 = vmatprep.mubr.f32.mxu0 0.0
        %2269 = vmatmul.mubr.f32.gmra.mxu0 %v2045
        %v2270 = vpop.f32.mrf.mxu0
        %v2271 = vadd.f32 0.0, %v2270
        %v2272 = vpop.f32.mrf.mxu0
        %v2273 = vadd.f32 0.0, %v2272
        %2274 = vmatprep.mubr.f32.mxu0 0.0
        %2275 = vmatmul.mubr.f32.gmra.mxu0 %v2048
        %v2276 = vpop.f32.mrf.mxu0
        %v2277 = vadd.f32 0.0, %v2276
        %v2278 = vpop.f32.mrf.mxu0
        %v2279 = vadd.f32 0.0, %v2278
        %2280 = vmatprep.mubr.f32.mxu0 0.0
        %2281 = vmatmul.mubr.f32.gmra.mxu0 %v2051
        %v2282 = vpop.f32.mrf.mxu0
        %v2283 = vadd.f32 0.0, %v2282
        %v2284 = vpop.f32.mrf.mxu0
        %v2285 = vadd.f32 0.0, %v2284
        %2286 = vmatprep.mubr.f32.mxu0 0.0
        %2287 = vmatmul.mubr.f32.gmra.mxu0 %v2054
        %v2288 = vpop.f32.mrf.mxu0
        %v2289 = vadd.f32 0.0, %v2288
        %v2290 = vpop.f32.mrf.mxu0
        %v2291 = vadd.f32 0.0, %v2290
        %2292 = vmatprep.mubr.f32.mxu0 0.0
        %2293 = vmatmul.mubr.f32.gmra.mxu0 %v2057
        %v2294 = vpop.f32.mrf.mxu0
        %v2295 = vadd.f32 0.0, %v2294
        %v2296 = vpop.f32.mrf.mxu0
        %v2297 = vadd.f32 0.0, %v2296
        %2298 = vmatprep.mubr.f32.mxu0 0.0
        %2299 = vmatmul.mubr.f32.gmra.mxu0 %v2060
        %v2300 = vpop.f32.mrf.mxu0
        %v2301 = vadd.f32 0.0, %v2300
        %v2302 = vpop.f32.mrf.mxu0
        %v2303 = vadd.f32 0.0, %v2302
        %2304 = vmatprep.mubr.f32.mxu0 0.0
        %2305 = vmatmul.mubr.f32.gmra.mxu0 %v2063
        %v2306 = vpop.f32.mrf.mxu0
        %v2307 = vadd.f32 0.0, %v2306
        %v2308 = vpop.f32.mrf.mxu0
        %v2309 = vadd.f32 0.0, %v2308
        %2310 = vmatprep.mubr.f32.mxu0 0.0
        %2311 = vmatmul.mubr.f32.gmra.mxu0 %v2066
        %v2312 = vpop.f32.mrf.mxu0
        %v2313 = vadd.f32 0.0, %v2312
        %v2314 = vpop.f32.mrf.mxu0
        %v2315 = vadd.f32 0.0, %v2314
        %2316 = vmatprep.mubr.f32.mxu0 0.0
        %2317 = vmatmul.mubr.f32.gmra.mxu0 %v2069
        %v2318 = vpop.f32.mrf.mxu0
        %v2319 = vadd.f32 0.0, %v2318
        %v2320 = vpop.f32.mrf.mxu0
        %v2321 = vadd.f32 0.0, %v2320
        %2322 = vmatprep.mubr.f32.mxu0 0.0
        %2323 = vmatmul.mubr.f32.gmra.mxu0 %v2072
        %v2324 = vpop.f32.mrf.mxu0
        %v2325 = vadd.f32 0.0, %v2324
        %v2326 = vpop.f32.mrf.mxu0
        %v2327 = vadd.f32 0.0, %v2326
        %2328 = vmatprep.mubr.f32.mxu0 0.0
        %2329 = vmatmul.mubr.f32.gmra.mxu0 %v2075
        %v2330 = vpop.f32.mrf.mxu0
        %v2331 = vadd.f32 0.0, %v2330
        %v2332 = vpop.f32.mrf.mxu0
        %v2333 = vadd.f32 0.0, %v2332
        %2334 = vmatprep.mubr.f32.mxu0 0.0
        %2335 = vmatmul.mubr.f32.gmra.mxu0 %v2078
        %v2336 = vpop.f32.mrf.mxu0
        %v2337 = vadd.f32 0.0, %v2336
        %v2338 = vpop.f32.mrf.mxu0
        %v2339 = vadd.f32 0.0, %v2338
        %2340 = vdwg.mxu0
        %v2342 = vunpack.c.l.s4 1983009808
        %v2343 = vunpack.c.0.s8 %v2342
        %v2344 = vlaneseq
        %v2345 = vshrl.u32 %v2344, 7
        %v2346 = vsub.s32 %v2343, %v2345
        %v2347 = vrot.slane %v549, %v2346
        %v2348 = vcombine.high %v2347, %v2347
        %2351 = vxpose.xlu0.b32.start [1/16] %v2347, 128
        %2352 = vxpose.xlu0.b32.cont [2/16] 0.0, 128
        %2353 = vxpose.xlu0.b32.cont [3/16] 0.0, 128
        %2354 = vxpose.xlu0.b32.cont [4/16] 0.0, 128
        %2355 = vxpose.xlu0.b32.cont [5/16] 0.0, 128
        %2356 = vxpose.xlu0.b32.cont [6/16] 0.0, 128
        %2357 = vxpose.xlu0.b32.cont [7/16] 0.0, 128
        %2358 = vxpose.xlu0.b32.cont [8/16] 0.0, 128
        %2359 = vxpose.xlu0.b32.cont [9/16] 0.0, 128
        %2360 = vxpose.xlu0.b32.cont [10/16] 0.0, 128
        %2361 = vxpose.xlu0.b32.cont [11/16] 0.0, 128
        %2362 = vxpose.xlu0.b32.cont [12/16] 0.0, 128
        %2363 = vxpose.xlu0.b32.cont [13/16] 0.0, 128
        %2364 = vxpose.xlu0.b32.cont [14/16] 0.0, 128
        %2365 = vxpose.xlu0.b32.cont [15/16] 0.0, 128
        %2366 = vxpose.xlu0.b32.end [16/16] 0.0, 128
        %v2367 = vpop.trf.xlu0
        %v2368 = vpop.trf.xlu0
        %v2369 = vpop.trf.xlu0
        %v2370 = vpop.trf.xlu0
        %v2371 = vpop.trf.xlu0
        %v2372 = vpop.trf.xlu0
        %v2373 = vpop.trf.xlu0
        %v2374 = vpop.trf.xlu0
        %v2375 = vpop.trf.xlu0
        %v2376 = vpop.trf.xlu0
        %v2377 = vpop.trf.xlu0
        %v2378 = vpop.trf.xlu0
        %v2379 = vpop.trf.xlu0
        %v2380 = vpop.trf.xlu0
        %v2381 = vpop.trf.xlu0
        %v2382 = vpop.trf.xlu0
        %2383 = vxpose.xlu0.b32.start [1/16] %v2348, 128
        %2384 = vxpose.xlu0.b32.cont [2/16] 0.0, 128
        %2385 = vxpose.xlu0.b32.cont [3/16] 0.0, 128
        %2386 = vxpose.xlu0.b32.cont [4/16] 0.0, 128
        %2387 = vxpose.xlu0.b32.cont [5/16] 0.0, 128
        %2388 = vxpose.xlu0.b32.cont [6/16] 0.0, 128
        %2389 = vxpose.xlu0.b32.cont [7/16] 0.0, 128
        %2390 = vxpose.xlu0.b32.cont [8/16] 0.0, 128
        %2391 = vxpose.xlu0.b32.cont [9/16] 0.0, 128
        %2392 = vxpose.xlu0.b32.cont [10/16] 0.0, 128
        %2393 = vxpose.xlu0.b32.cont [11/16] 0.0, 128
        %2394 = vxpose.xlu0.b32.cont [12/16] 0.0, 128
        %2395 = vxpose.xlu0.b32.cont [13/16] 0.0, 128
        %2396 = vxpose.xlu0.b32.cont [14/16] 0.0, 128
        %2397 = vxpose.xlu0.b32.cont [15/16] 0.0, 128
        %2398 = vxpose.xlu0.b32.end [16/16] 0.0, 128
        %v2399 = vpop.trf.xlu0
        %v2400 = vpop.trf.xlu0
        %v2401 = vpop.trf.xlu0
        %v2402 = vpop.trf.xlu0
        %v2403 = vpop.trf.xlu0
        %v2404 = vpop.trf.xlu0
        %v2405 = vpop.trf.xlu0
        %v2406 = vpop.trf.xlu0
        %v2407 = vpop.trf.xlu0
        %v2408 = vpop.trf.xlu0
        %v2409 = vpop.trf.xlu0
        %v2410 = vpop.trf.xlu0
        %v2411 = vpop.trf.xlu0
        %v2412 = vpop.trf.xlu0
        %v2413 = vpop.trf.xlu0
        %v2414 = vpop.trf.xlu0
        %v2416 = vunpack.c.l.s4 1983009808
        %v2417 = vunpack.c.0.s8 %v2416
        %v2418 = vlaneseq
        %v2419 = vshrl.u32 %v2418, 7
        %v2420 = vsub.s32 %v2417, %v2419
        %v2421 = vrot.slane %v509, %v2420
        %v2422 = vcombine.high %v2421, %v2421
        %v2424 = vsel %vm665, %v2367, 0
        %v2427 = vsel %vm665, %v2368, 0
        %v2430 = vsel %vm665, %v2369, 0
        %v2433 = vsel %vm665, %v2370, 0
        %v2436 = vsel %vm665, %v2371, 0
        %v2439 = vsel %vm665, %v2372, 0
        %v2442 = vsel %vm665, %v2373, 0
        %v2445 = vsel %vm665, %v2374, 0
        %v2448 = vsel %vm665, %v2375, 0
        %v2451 = vsel %vm665, %v2376, 0
        %v2454 = vsel %vm665, %v2377, 0
        %v2457 = vsel %vm665, %v2378, 0
        %v2460 = vsel %vm665, %v2379, 0
        %v2463 = vsel %vm665, %v2380, 0
        %v2466 = vsel %vm665, %v2381, 0
        %v2469 = vsel %vm665, %v2382, 0
        %v2472 = vsel %vm665, %v2399, 0
        %v2475 = vsel %vm665, %v2400, 0
        %v2478 = vsel %vm665, %v2401, 0
        %v2481 = vsel %vm665, %v2402, 0
        %v2484 = vsel %vm665, %v2403, 0
        %v2487 = vsel %vm665, %v2404, 0
        %v2490 = vsel %vm665, %v2405, 0
        %v2493 = vsel %vm665, %v2406, 0
        %v2496 = vsel %vm665, %v2407, 0
        %v2499 = vsel %vm665, %v2408, 0
        %v2502 = vsel %vm665, %v2409, 0
        %v2505 = vsel %vm665, %v2410, 0
        %v2508 = vsel %vm665, %v2411, 0
        %v2511 = vsel %vm665, %v2412, 0
        %v2514 = vsel %vm665, %v2413, 0
        %v2517 = vsel %vm665, %v2414, 0
        %v2519 = vsel %vm762, %v2421, 0
        %v2521 = vsel %vm762, %v2422, 0
        %2523 = vmatprep.subr.mxu0 0.0
        %2524 = vmatpush1.msra.mxu0 0.0
        %2525 = vmatprep.subr.mxu0 0.0
        %2526 = vmatpush1.msra.mxu0 0.0
        %2527 = vmatprep.subr.mxu0 0.0
        %2528 = vmatpush1.msra.mxu0 0.0
        %2529 = vmatprep.subr.mxu0 0.0
        %2530 = vmatpush1.msra.mxu0 0.0
        %2531 = vmatprep.subr.mxu0 0.0
        %2532 = vmatpush1.msra.mxu0 0.0
        %2533 = vmatprep.subr.mxu0 0.0
        %2534 = vmatpush1.msra.mxu0 0.0
        %2535 = vmatprep.subr.mxu0 0.0
        %2536 = vmatpush1.msra.mxu0 0.0
        %2537 = vmatprep.subr.mxu0 0.0
        %2538 = vmatpush1.msra.mxu0 0.0
        %2539 = vmatprep.subr.mxu0 0.0
        %2540 = vmatpush1.msra.mxu0 0.0
        %2541 = vmatprep.subr.mxu0 0.0
        %2542 = vmatpush1.msra.mxu0 0.0
        %2543 = vmatprep.subr.mxu0 0.0
        %2544 = vmatpush1.msra.mxu0 0.0
        %2545 = vmatprep.subr.mxu0 0.0
        %2546 = vmatpush1.msra.mxu0 0.0
        %2547 = vmatprep.subr.mxu0 0.0
        %2548 = vmatpush1.msra.mxu0 0.0
        %2549 = vmatprep.subr.mxu0 0.0
        %2550 = vmatpush1.msra.mxu0 0.0
        %2551 = vmatprep.subr.mxu0 0.0
        %2552 = vmatpush1.msra.mxu0 0.0
        %2553 = vmatprep.subr.mxu0 %v2521
        %2554 = vmatpush1.msra.mxu0 %v2519
        %2555 = vmatprep.subr.mxu0 0.0
        %2556 = vmatpush2.msra.mxu0 0.0
        %2557 = vmatprep.subr.mxu0 0.0
        %2558 = vmatpush2.msra.mxu0 0.0
        %2559 = vmatprep.subr.mxu0 0.0
        %2560 = vmatpush2.msra.mxu0 0.0
        %2561 = vmatprep.subr.mxu0 0.0
        %2562 = vmatpush2.msra.mxu0 0.0
        %2563 = vmatprep.subr.mxu0 0.0
        %2564 = vmatpush2.msra.mxu0 0.0
        %2565 = vmatprep.subr.mxu0 0.0
        %2566 = vmatpush2.msra.mxu0 0.0
        %2567 = vmatprep.subr.mxu0 0.0
        %2568 = vmatpush2.msra.mxu0 0.0
        %2569 = vmatprep.subr.mxu0 0.0
        %2570 = vmatpush2.msra.mxu0 0.0
        %2571 = vmatprep.subr.mxu0 0.0
        %2572 = vmatpush2.msra.mxu0 0.0
        %2573 = vmatprep.subr.mxu0 0.0
        %2574 = vmatpush2.msra.mxu0 0.0
        %2575 = vmatprep.subr.mxu0 0.0
        %2576 = vmatpush2.msra.mxu0 0.0
        %2577 = vmatprep.subr.mxu0 0.0
        %2578 = vmatpush2.msra.mxu0 0.0
        %2579 = vmatprep.subr.mxu0 0.0
        %2580 = vmatpush2.msra.mxu0 0.0
        %2581 = vmatprep.subr.mxu0 0.0
        %2582 = vmatpush2.msra.mxu0 0.0
        %2583 = vmatprep.subr.mxu0 0.0
        %2584 = vmatpush2.msra.mxu0 0.0
        %2585 = vmatprep.subr.mxu0 0.0
        %2586 = vmatpush2.msra.mxu0 0.0
        %2587 = vmatprep.mubr.f32.mxu0 0.0
        %2588 = vmatmul.mubr.f32.gmra.mxu0 %v2424
        %v2589 = vpop.f32.mrf.mxu0
        %v2590 = vadd.f32 0.0, %v2589
        %v2591 = vpop.f32.mrf.mxu0
        %v2592 = vadd.f32 0.0, %v2591
        %2593 = vmatprep.mubr.f32.mxu0 0.0
        %2594 = vmatmul.mubr.f32.gmra.mxu0 %v2427
        %v2595 = vpop.f32.mrf.mxu0
        %v2596 = vadd.f32 0.0, %v2595
        %v2597 = vpop.f32.mrf.mxu0
        %v2598 = vadd.f32 0.0, %v2597
        %2599 = vmatprep.mubr.f32.mxu0 0.0
        %2600 = vmatmul.mubr.f32.gmra.mxu0 %v2430
        %v2601 = vpop.f32.mrf.mxu0
        %v2602 = vadd.f32 0.0, %v2601
        %v2603 = vpop.f32.mrf.mxu0
        %v2604 = vadd.f32 0.0, %v2603
        %2605 = vmatprep.mubr.f32.mxu0 0.0
        %2606 = vmatmul.mubr.f32.gmra.mxu0 %v2433
        %v2607 = vpop.f32.mrf.mxu0
        %v2608 = vadd.f32 0.0, %v2607
        %v2609 = vpop.f32.mrf.mxu0
        %v2610 = vadd.f32 0.0, %v2609
        %2611 = vmatprep.mubr.f32.mxu0 0.0
        %2612 = vmatmul.mubr.f32.gmra.mxu0 %v2436
        %v2613 = vpop.f32.mrf.mxu0
        %v2614 = vadd.f32 0.0, %v2613
        %v2615 = vpop.f32.mrf.mxu0
        %v2616 = vadd.f32 0.0, %v2615
        %2617 = vmatprep.mubr.f32.mxu0 0.0
        %2618 = vmatmul.mubr.f32.gmra.mxu0 %v2439
        %v2619 = vpop.f32.mrf.mxu0
        %v2620 = vadd.f32 0.0, %v2619
        %v2621 = vpop.f32.mrf.mxu0
        %v2622 = vadd.f32 0.0, %v2621
        %2623 = vmatprep.mubr.f32.mxu0 0.0
        %2624 = vmatmul.mubr.f32.gmra.mxu0 %v2442
        %v2625 = vpop.f32.mrf.mxu0
        %v2626 = vadd.f32 0.0, %v2625
        %v2627 = vpop.f32.mrf.mxu0
        %v2628 = vadd.f32 0.0, %v2627
        %2629 = vmatprep.mubr.f32.mxu0 0.0
        %2630 = vmatmul.mubr.f32.gmra.mxu0 %v2445
        %v2631 = vpop.f32.mrf.mxu0
        %v2632 = vadd.f32 0.0, %v2631
        %v2633 = vpop.f32.mrf.mxu0
        %v2634 = vadd.f32 0.0, %v2633
        %2635 = vmatprep.mubr.f32.mxu0 0.0
        %2636 = vmatmul.mubr.f32.gmra.mxu0 %v2448
        %v2637 = vpop.f32.mrf.mxu0
        %v2638 = vadd.f32 0.0, %v2637
        %v2639 = vpop.f32.mrf.mxu0
        %v2640 = vadd.f32 0.0, %v2639
        %2641 = vmatprep.mubr.f32.mxu0 0.0
        %2642 = vmatmul.mubr.f32.gmra.mxu0 %v2451
        %v2643 = vpop.f32.mrf.mxu0
        %v2644 = vadd.f32 0.0, %v2643
        %v2645 = vpop.f32.mrf.mxu0
        %v2646 = vadd.f32 0.0, %v2645
        %2647 = vmatprep.mubr.f32.mxu0 0.0
        %2648 = vmatmul.mubr.f32.gmra.mxu0 %v2454
        %v2649 = vpop.f32.mrf.mxu0
        %v2650 = vadd.f32 0.0, %v2649
        %v2651 = vpop.f32.mrf.mxu0
        %v2652 = vadd.f32 0.0, %v2651
        %2653 = vmatprep.mubr.f32.mxu0 0.0
        %2654 = vmatmul.mubr.f32.gmra.mxu0 %v2457
        %v2655 = vpop.f32.mrf.mxu0
        %v2656 = vadd.f32 0.0, %v2655
        %v2657 = vpop.f32.mrf.mxu0
        %v2658 = vadd.f32 0.0, %v2657
        %2659 = vmatprep.mubr.f32.mxu0 0.0
        %2660 = vmatmul.mubr.f32.gmra.mxu0 %v2460
        %v2661 = vpop.f32.mrf.mxu0
        %v2662 = vadd.f32 0.0, %v2661
        %v2663 = vpop.f32.mrf.mxu0
        %v2664 = vadd.f32 0.0, %v2663
        %2665 = vmatprep.mubr.f32.mxu0 0.0
        %2666 = vmatmul.mubr.f32.gmra.mxu0 %v2463
        %v2667 = vpop.f32.mrf.mxu0
        %v2668 = vadd.f32 0.0, %v2667
        %v2669 = vpop.f32.mrf.mxu0
        %v2670 = vadd.f32 0.0, %v2669
        %2671 = vmatprep.mubr.f32.mxu0 0.0
        %2672 = vmatmul.mubr.f32.gmra.mxu0 %v2466
        %v2673 = vpop.f32.mrf.mxu0
        %v2674 = vadd.f32 0.0, %v2673
        %v2675 = vpop.f32.mrf.mxu0
        %v2676 = vadd.f32 0.0, %v2675
        %2677 = vmatprep.mubr.f32.mxu0 0.0
        %2678 = vmatmul.mubr.f32.gmra.mxu0 %v2469
        %v2679 = vpop.f32.mrf.mxu0
        %v2680 = vadd.f32 0.0, %v2679
        %v2681 = vpop.f32.mrf.mxu0
        %v2682 = vadd.f32 0.0, %v2681
        %2683 = vmatprep.mubr.f32.mxu0 0.0
        %2684 = vmatmul.mubr.f32.gmra.mxu0 %v2472
        %v2685 = vpop.f32.mrf.mxu0
        %v2686 = vadd.f32 0.0, %v2685
        %v2687 = vpop.f32.mrf.mxu0
        %v2688 = vadd.f32 0.0, %v2687
        %2689 = vmatprep.mubr.f32.mxu0 0.0
        %2690 = vmatmul.mubr.f32.gmra.mxu0 %v2475
        %v2691 = vpop.f32.mrf.mxu0
        %v2692 = vadd.f32 0.0, %v2691
        %v2693 = vpop.f32.mrf.mxu0
        %v2694 = vadd.f32 0.0, %v2693
        %2695 = vmatprep.mubr.f32.mxu0 0.0
        %2696 = vmatmul.mubr.f32.gmra.mxu0 %v2478
        %v2697 = vpop.f32.mrf.mxu0
        %v2698 = vadd.f32 0.0, %v2697
        %v2699 = vpop.f32.mrf.mxu0
        %v2700 = vadd.f32 0.0, %v2699
        %2701 = vmatprep.mubr.f32.mxu0 0.0
        %2702 = vmatmul.mubr.f32.gmra.mxu0 %v2481
        %v2703 = vpop.f32.mrf.mxu0
        %v2704 = vadd.f32 0.0, %v2703
        %v2705 = vpop.f32.mrf.mxu0
        %v2706 = vadd.f32 0.0, %v2705
        %2707 = vmatprep.mubr.f32.mxu0 0.0
        %2708 = vmatmul.mubr.f32.gmra.mxu0 %v2484
        %v2709 = vpop.f32.mrf.mxu0
        %v2710 = vadd.f32 0.0, %v2709
        %v2711 = vpop.f32.mrf.mxu0
        %v2712 = vadd.f32 0.0, %v2711
        %2713 = vmatprep.mubr.f32.mxu0 0.0
        %2714 = vmatmul.mubr.f32.gmra.mxu0 %v2487
        %v2715 = vpop.f32.mrf.mxu0
        %v2716 = vadd.f32 0.0, %v2715
        %v2717 = vpop.f32.mrf.mxu0
        %v2718 = vadd.f32 0.0, %v2717
        %2719 = vmatprep.mubr.f32.mxu0 0.0
        %2720 = vmatmul.mubr.f32.gmra.mxu0 %v2490
        %v2721 = vpop.f32.mrf.mxu0
        %v2722 = vadd.f32 0.0, %v2721
        %v2723 = vpop.f32.mrf.mxu0
        %v2724 = vadd.f32 0.0, %v2723
        %2725 = vmatprep.mubr.f32.mxu0 0.0
        %2726 = vmatmul.mubr.f32.gmra.mxu0 %v2493
        %v2727 = vpop.f32.mrf.mxu0
        %v2728 = vadd.f32 0.0, %v2727
        %v2729 = vpop.f32.mrf.mxu0
        %v2730 = vadd.f32 0.0, %v2729
        %2731 = vmatprep.mubr.f32.mxu0 0.0
        %2732 = vmatmul.mubr.f32.gmra.mxu0 %v2496
        %v2733 = vpop.f32.mrf.mxu0
        %v2734 = vadd.f32 0.0, %v2733
        %v2735 = vpop.f32.mrf.mxu0
        %v2736 = vadd.f32 0.0, %v2735
        %2737 = vmatprep.mubr.f32.mxu0 0.0
        %2738 = vmatmul.mubr.f32.gmra.mxu0 %v2499
        %v2739 = vpop.f32.mrf.mxu0
        %v2740 = vadd.f32 0.0, %v2739
        %v2741 = vpop.f32.mrf.mxu0
        %v2742 = vadd.f32 0.0, %v2741
        %2743 = vmatprep.mubr.f32.mxu0 0.0
        %2744 = vmatmul.mubr.f32.gmra.mxu0 %v2502
        %v2745 = vpop.f32.mrf.mxu0
        %v2746 = vadd.f32 0.0, %v2745
        %v2747 = vpop.f32.mrf.mxu0
        %v2748 = vadd.f32 0.0, %v2747
        %2749 = vmatprep.mubr.f32.mxu0 0.0
        %2750 = vmatmul.mubr.f32.gmra.mxu0 %v2505
        %v2751 = vpop.f32.mrf.mxu0
        %v2752 = vadd.f32 0.0, %v2751
        %v2753 = vpop.f32.mrf.mxu0
        %v2754 = vadd.f32 0.0, %v2753
        %2755 = vmatprep.mubr.f32.mxu0 0.0
        %2756 = vmatmul.mubr.f32.gmra.mxu0 %v2508
        %v2757 = vpop.f32.mrf.mxu0
        %v2758 = vadd.f32 0.0, %v2757
        %v2759 = vpop.f32.mrf.mxu0
        %v2760 = vadd.f32 0.0, %v2759
        %2761 = vmatprep.mubr.f32.mxu0 0.0
        %2762 = vmatmul.mubr.f32.gmra.mxu0 %v2511
        %v2763 = vpop.f32.mrf.mxu0
        %v2764 = vadd.f32 0.0, %v2763
        %v2765 = vpop.f32.mrf.mxu0
        %v2766 = vadd.f32 0.0, %v2765
        %2767 = vmatprep.mubr.f32.mxu0 0.0
        %2768 = vmatmul.mubr.f32.gmra.mxu0 %v2514
        %v2769 = vpop.f32.mrf.mxu0
        %v2770 = vadd.f32 0.0, %v2769
        %v2771 = vpop.f32.mrf.mxu0
        %v2772 = vadd.f32 0.0, %v2771
        %2773 = vmatprep.mubr.f32.mxu0 0.0
        %2774 = vmatmul.mubr.f32.gmra.mxu0 %v2517
        %v2775 = vpop.f32.mrf.mxu0
        %v2776 = vadd.f32 0.0, %v2775
        %v2777 = vpop.f32.mrf.mxu0
        %v2778 = vadd.f32 0.0, %v2777
        %2779 = vdwg.mxu0
        %v2781 = vunpack.c.l.s4 1983009808
        %v2782 = vunpack.c.0.s8 %v2781
        %v2783 = vlaneseq
        %v2784 = vshrl.u32 %v2783, 7
        %v2785 = vsub.s32 %v2782, %v2784
        %v2786 = vrot.slane %v557, %v2785
        %v2787 = vcombine.high %v2786, %v2786
        %2790 = vxpose.xlu0.b32.start [1/16] %v2786, 128
        %2791 = vxpose.xlu0.b32.cont [2/16] 0.0, 128
        %2792 = vxpose.xlu0.b32.cont [3/16] 0.0, 128
        %2793 = vxpose.xlu0.b32.cont [4/16] 0.0, 128
        %2794 = vxpose.xlu0.b32.cont [5/16] 0.0, 128
        %2795 = vxpose.xlu0.b32.cont [6/16] 0.0, 128
        %2796 = vxpose.xlu0.b32.cont [7/16] 0.0, 128
        %2797 = vxpose.xlu0.b32.cont [8/16] 0.0, 128
        %2798 = vxpose.xlu0.b32.cont [9/16] 0.0, 128
        %2799 = vxpose.xlu0.b32.cont [10/16] 0.0, 128
        %2800 = vxpose.xlu0.b32.cont [11/16] 0.0, 128
        %2801 = vxpose.xlu0.b32.cont [12/16] 0.0, 128
        %2802 = vxpose.xlu0.b32.cont [13/16] 0.0, 128
        %2803 = vxpose.xlu0.b32.cont [14/16] 0.0, 128
        %2804 = vxpose.xlu0.b32.cont [15/16] 0.0, 128
        %2805 = vxpose.xlu0.b32.end [16/16] 0.0, 128
        %v2806 = vpop.trf.xlu0
        %v2807 = vpop.trf.xlu0
        %v2808 = vpop.trf.xlu0
        %v2809 = vpop.trf.xlu0
        %v2810 = vpop.trf.xlu0
        %v2811 = vpop.trf.xlu0
        %v2812 = vpop.trf.xlu0
        %v2813 = vpop.trf.xlu0
        %v2814 = vpop.trf.xlu0
        %v2815 = vpop.trf.xlu0
        %v2816 = vpop.trf.xlu0
        %v2817 = vpop.trf.xlu0
        %v2818 = vpop.trf.xlu0
        %v2819 = vpop.trf.xlu0
        %v2820 = vpop.trf.xlu0
        %v2821 = vpop.trf.xlu0
        %2822 = vxpose.xlu0.b32.start [1/16] %v2787, 128
        %2823 = vxpose.xlu0.b32.cont [2/16] 0.0, 128
        %2824 = vxpose.xlu0.b32.cont [3/16] 0.0, 128
        %2825 = vxpose.xlu0.b32.cont [4/16] 0.0, 128
        %2826 = vxpose.xlu0.b32.cont [5/16] 0.0, 128
        %2827 = vxpose.xlu0.b32.cont [6/16] 0.0, 128
        %2828 = vxpose.xlu0.b32.cont [7/16] 0.0, 128
        %2829 = vxpose.xlu0.b32.cont [8/16] 0.0, 128
        %2830 = vxpose.xlu0.b32.cont [9/16] 0.0, 128
        %2831 = vxpose.xlu0.b32.cont [10/16] 0.0, 128
        %2832 = vxpose.xlu0.b32.cont [11/16] 0.0, 128
        %2833 = vxpose.xlu0.b32.cont [12/16] 0.0, 128
        %2834 = vxpose.xlu0.b32.cont [13/16] 0.0, 128
        %2835 = vxpose.xlu0.b32.cont [14/16] 0.0, 128
        %2836 = vxpose.xlu0.b32.cont [15/16] 0.0, 128
        %2837 = vxpose.xlu0.b32.end [16/16] 0.0, 128
        %v2838 = vpop.trf.xlu0
        %v2839 = vpop.trf.xlu0
        %v2840 = vpop.trf.xlu0
        %v2841 = vpop.trf.xlu0
        %v2842 = vpop.trf.xlu0
        %v2843 = vpop.trf.xlu0
        %v2844 = vpop.trf.xlu0
        %v2845 = vpop.trf.xlu0
        %v2846 = vpop.trf.xlu0
        %v2847 = vpop.trf.xlu0
        %v2848 = vpop.trf.xlu0
        %v2849 = vpop.trf.xlu0
        %v2850 = vpop.trf.xlu0
        %v2851 = vpop.trf.xlu0
        %v2852 = vpop.trf.xlu0
        %v2853 = vpop.trf.xlu0
        %v2855 = vunpack.c.l.s4 1983009808
        %v2856 = vunpack.c.0.s8 %v2855
        %v2857 = vlaneseq
        %v2858 = vshrl.u32 %v2857, 7
        %v2859 = vsub.s32 %v2856, %v2858
        %v2860 = vrot.slane %v517, %v2859
        %v2861 = vcombine.high %v2860, %v2860
        %v2863 = vsel %vm665, %v2806, 0
        %v2866 = vsel %vm665, %v2807, 0
        %v2869 = vsel %vm665, %v2808, 0
        %v2872 = vsel %vm665, %v2809, 0
        %v2875 = vsel %vm665, %v2810, 0
        %v2878 = vsel %vm665, %v2811, 0
        %v2881 = vsel %vm665, %v2812, 0
        %v2884 = vsel %vm665, %v2813, 0
        %v2887 = vsel %vm665, %v2814, 0
        %v2890 = vsel %vm665, %v2815, 0
        %v2893 = vsel %vm665, %v2816, 0
        %v2896 = vsel %vm665, %v2817, 0
        %v2899 = vsel %vm665, %v2818, 0
        %v2902 = vsel %vm665, %v2819, 0
        %v2905 = vsel %vm665, %v2820, 0
        %v2908 = vsel %vm665, %v2821, 0
        %v2911 = vsel %vm665, %v2838, 0
        %v2914 = vsel %vm665, %v2839, 0
        %v2917 = vsel %vm665, %v2840, 0
        %v2920 = vsel %vm665, %v2841, 0
        %v2923 = vsel %vm665, %v2842, 0
        %v2926 = vsel %vm665, %v2843, 0
        %v2929 = vsel %vm665, %v2844, 0
        %v2932 = vsel %vm665, %v2845, 0
        %v2935 = vsel %vm665, %v2846, 0
        %v2938 = vsel %vm665, %v2847, 0
        %v2941 = vsel %vm665, %v2848, 0
        %v2944 = vsel %vm665, %v2849, 0
        %v2947 = vsel %vm665, %v2850, 0
        %v2950 = vsel %vm665, %v2851, 0
        %v2953 = vsel %vm665, %v2852, 0
        %v2956 = vsel %vm665, %v2853, 0
        %v2958 = vsel %vm762, %v2860, 0
        %v2960 = vsel %vm762, %v2861, 0
        %2962 = vmatprep.subr.mxu0 0.0
        %2963 = vmatpush1.msra.mxu0 0.0
        %2964 = vmatprep.subr.mxu0 0.0
        %2965 = vmatpush1.msra.mxu0 0.0
        %2966 = vmatprep.subr.mxu0 0.0
        %2967 = vmatpush1.msra.mxu0 0.0
        %2968 = vmatprep.subr.mxu0 0.0
        %2969 = vmatpush1.msra.mxu0 0.0
        %2970 = vmatprep.subr.mxu0 0.0
        %2971 = vmatpush1.msra.mxu0 0.0
        %2972 = vmatprep.subr.mxu0 0.0
        %2973 = vmatpush1.msra.mxu0 0.0
        %2974 = vmatprep.subr.mxu0 0.0
        %2975 = vmatpush1.msra.mxu0 0.0
        %2976 = vmatprep.subr.mxu0 0.0
        %2977 = vmatpush1.msra.mxu0 0.0
        %2978 = vmatprep.subr.mxu0 0.0
        %2979 = vmatpush1.msra.mxu0 0.0
        %2980 = vmatprep.subr.mxu0 0.0
        %2981 = vmatpush1.msra.mxu0 0.0
        %2982 = vmatprep.subr.mxu0 0.0
        %2983 = vmatpush1.msra.mxu0 0.0
        %2984 = vmatprep.subr.mxu0 0.0
        %2985 = vmatpush1.msra.mxu0 0.0
        %2986 = vmatprep.subr.mxu0 0.0
        %2987 = vmatpush1.msra.mxu0 0.0
        %2988 = vmatprep.subr.mxu0 0.0
        %2989 = vmatpush1.msra.mxu0 0.0
        %2990 = vmatprep.subr.mxu0 0.0
        %2991 = vmatpush1.msra.mxu0 0.0
        %2992 = vmatprep.subr.mxu0 %v2960
        %2993 = vmatpush1.msra.mxu0 %v2958
        %2994 = vmatprep.subr.mxu0 0.0
        %2995 = vmatpush2.msra.mxu0 0.0
        %2996 = vmatprep.subr.mxu0 0.0
        %2997 = vmatpush2.msra.mxu0 0.0
        %2998 = vmatprep.subr.mxu0 0.0
        %2999 = vmatpush2.msra.mxu0 0.0
        %3000 = vmatprep.subr.mxu0 0.0
        %3001 = vmatpush2.msra.mxu0 0.0
        %3002 = vmatprep.subr.mxu0 0.0
        %3003 = vmatpush2.msra.mxu0 0.0
        %3004 = vmatprep.subr.mxu0 0.0
        %3005 = vmatpush2.msra.mxu0 0.0
        %3006 = vmatprep.subr.mxu0 0.0
        %3007 = vmatpush2.msra.mxu0 0.0
        %3008 = vmatprep.subr.mxu0 0.0
        %3009 = vmatpush2.msra.mxu0 0.0
        %3010 = vmatprep.subr.mxu0 0.0
        %3011 = vmatpush2.msra.mxu0 0.0
        %3012 = vmatprep.subr.mxu0 0.0
        %3013 = vmatpush2.msra.mxu0 0.0
        %3014 = vmatprep.subr.mxu0 0.0
        %3015 = vmatpush2.msra.mxu0 0.0
        %3016 = vmatprep.subr.mxu0 0.0
        %3017 = vmatpush2.msra.mxu0 0.0
        %3018 = vmatprep.subr.mxu0 0.0
        %3019 = vmatpush2.msra.mxu0 0.0
        %3020 = vmatprep.subr.mxu0 0.0
        %3021 = vmatpush2.msra.mxu0 0.0
        %3022 = vmatprep.subr.mxu0 0.0
        %3023 = vmatpush2.msra.mxu0 0.0
        %3024 = vmatprep.subr.mxu0 0.0
        %3025 = vmatpush2.msra.mxu0 0.0
        %3026 = vmatprep.mubr.f32.mxu0 0.0
        %3027 = vmatmul.mubr.f32.gmra.mxu0 %v2863
        %v3028 = vpop.f32.mrf.mxu0
        %v3029 = vadd.f32 0.0, %v3028
        %v3030 = vpop.f32.mrf.mxu0
        %v3031 = vadd.f32 0.0, %v3030
        %3032 = vmatprep.mubr.f32.mxu0 0.0
        %3033 = vmatmul.mubr.f32.gmra.mxu0 %v2866
        %v3034 = vpop.f32.mrf.mxu0
        %v3035 = vadd.f32 0.0, %v3034
        %v3036 = vpop.f32.mrf.mxu0
        %v3037 = vadd.f32 0.0, %v3036
        %3038 = vmatprep.mubr.f32.mxu0 0.0
        %3039 = vmatmul.mubr.f32.gmra.mxu0 %v2869
        %v3040 = vpop.f32.mrf.mxu0
        %v3041 = vadd.f32 0.0, %v3040
        %v3042 = vpop.f32.mrf.mxu0
        %v3043 = vadd.f32 0.0, %v3042
        %3044 = vmatprep.mubr.f32.mxu0 0.0
        %3045 = vmatmul.mubr.f32.gmra.mxu0 %v2872
        %v3046 = vpop.f32.mrf.mxu0
        %v3047 = vadd.f32 0.0, %v3046
        %v3048 = vpop.f32.mrf.mxu0
        %v3049 = vadd.f32 0.0, %v3048
        %3050 = vmatprep.mubr.f32.mxu0 0.0
        %3051 = vmatmul.mubr.f32.gmra.mxu0 %v2875
        %v3052 = vpop.f32.mrf.mxu0
        %v3053 = vadd.f32 0.0, %v3052
        %v3054 = vpop.f32.mrf.mxu0
        %v3055 = vadd.f32 0.0, %v3054
        %3056 = vmatprep.mubr.f32.mxu0 0.0
        %3057 = vmatmul.mubr.f32.gmra.mxu0 %v2878
        %v3058 = vpop.f32.mrf.mxu0
        %v3059 = vadd.f32 0.0, %v3058
        %v3060 = vpop.f32.mrf.mxu0
        %v3061 = vadd.f32 0.0, %v3060
        %3062 = vmatprep.mubr.f32.mxu0 0.0
        %3063 = vmatmul.mubr.f32.gmra.mxu0 %v2881
        %v3064 = vpop.f32.mrf.mxu0
        %v3065 = vadd.f32 0.0, %v3064
        %v3066 = vpop.f32.mrf.mxu0
        %v3067 = vadd.f32 0.0, %v3066
        %3068 = vmatprep.mubr.f32.mxu0 0.0
        %3069 = vmatmul.mubr.f32.gmra.mxu0 %v2884
        %v3070 = vpop.f32.mrf.mxu0
        %v3071 = vadd.f32 0.0, %v3070
        %v3072 = vpop.f32.mrf.mxu0
        %v3073 = vadd.f32 0.0, %v3072
        %3074 = vmatprep.mubr.f32.mxu0 0.0
        %3075 = vmatmul.mubr.f32.gmra.mxu0 %v2887
        %v3076 = vpop.f32.mrf.mxu0
        %v3077 = vadd.f32 0.0, %v3076
        %v3078 = vpop.f32.mrf.mxu0
        %v3079 = vadd.f32 0.0, %v3078
        %3080 = vmatprep.mubr.f32.mxu0 0.0
        %3081 = vmatmul.mubr.f32.gmra.mxu0 %v2890
        %v3082 = vpop.f32.mrf.mxu0
        %v3083 = vadd.f32 0.0, %v3082
        %v3084 = vpop.f32.mrf.mxu0
        %v3085 = vadd.f32 0.0, %v3084
        %3086 = vmatprep.mubr.f32.mxu0 0.0
        %3087 = vmatmul.mubr.f32.gmra.mxu0 %v2893
        %v3088 = vpop.f32.mrf.mxu0
        %v3089 = vadd.f32 0.0, %v3088
        %v3090 = vpop.f32.mrf.mxu0
        %v3091 = vadd.f32 0.0, %v3090
        %3092 = vmatprep.mubr.f32.mxu0 0.0
        %3093 = vmatmul.mubr.f32.gmra.mxu0 %v2896
        %v3094 = vpop.f32.mrf.mxu0
        %v3095 = vadd.f32 0.0, %v3094
        %v3096 = vpop.f32.mrf.mxu0
        %v3097 = vadd.f32 0.0, %v3096
        %3098 = vmatprep.mubr.f32.mxu0 0.0
        %3099 = vmatmul.mubr.f32.gmra.mxu0 %v2899
        %v3100 = vpop.f32.mrf.mxu0
        %v3101 = vadd.f32 0.0, %v3100
        %v3102 = vpop.f32.mrf.mxu0
        %v3103 = vadd.f32 0.0, %v3102
        %3104 = vmatprep.mubr.f32.mxu0 0.0
        %3105 = vmatmul.mubr.f32.gmra.mxu0 %v2902
        %v3106 = vpop.f32.mrf.mxu0
        %v3107 = vadd.f32 0.0, %v3106
        %v3108 = vpop.f32.mrf.mxu0
        %v3109 = vadd.f32 0.0, %v3108
        %3110 = vmatprep.mubr.f32.mxu0 0.0
        %3111 = vmatmul.mubr.f32.gmra.mxu0 %v2905
        %v3112 = vpop.f32.mrf.mxu0
        %v3113 = vadd.f32 0.0, %v3112
        %v3114 = vpop.f32.mrf.mxu0
        %v3115 = vadd.f32 0.0, %v3114
        %3116 = vmatprep.mubr.f32.mxu0 0.0
        %3117 = vmatmul.mubr.f32.gmra.mxu0 %v2908
        %v3118 = vpop.f32.mrf.mxu0
        %v3119 = vadd.f32 0.0, %v3118
        %v3120 = vpop.f32.mrf.mxu0
        %v3121 = vadd.f32 0.0, %v3120
        %3122 = vmatprep.mubr.f32.mxu0 0.0
        %3123 = vmatmul.mubr.f32.gmra.mxu0 %v2911
        %v3124 = vpop.f32.mrf.mxu0
        %v3125 = vadd.f32 0.0, %v3124
        %v3126 = vpop.f32.mrf.mxu0
        %v3127 = vadd.f32 0.0, %v3126
        %3128 = vmatprep.mubr.f32.mxu0 0.0
        %3129 = vmatmul.mubr.f32.gmra.mxu0 %v2914
        %v3130 = vpop.f32.mrf.mxu0
        %v3131 = vadd.f32 0.0, %v3130
        %v3132 = vpop.f32.mrf.mxu0
        %v3133 = vadd.f32 0.0, %v3132
        %3134 = vmatprep.mubr.f32.mxu0 0.0
        %3135 = vmatmul.mubr.f32.gmra.mxu0 %v2917
        %v3136 = vpop.f32.mrf.mxu0
        %v3137 = vadd.f32 0.0, %v3136
        %v3138 = vpop.f32.mrf.mxu0
        %v3139 = vadd.f32 0.0, %v3138
        %3140 = vmatprep.mubr.f32.mxu0 0.0
        %3141 = vmatmul.mubr.f32.gmra.mxu0 %v2920
        %v3142 = vpop.f32.mrf.mxu0
        %v3143 = vadd.f32 0.0, %v3142
        %v3144 = vpop.f32.mrf.mxu0
        %v3145 = vadd.f32 0.0, %v3144
        %3146 = vmatprep.mubr.f32.mxu0 0.0
        %3147 = vmatmul.mubr.f32.gmra.mxu0 %v2923
        %v3148 = vpop.f32.mrf.mxu0
        %v3149 = vadd.f32 0.0, %v3148
        %v3150 = vpop.f32.mrf.mxu0
        %v3151 = vadd.f32 0.0, %v3150
        %3152 = vmatprep.mubr.f32.mxu0 0.0
        %3153 = vmatmul.mubr.f32.gmra.mxu0 %v2926
        %v3154 = vpop.f32.mrf.mxu0
        %v3155 = vadd.f32 0.0, %v3154
        %v3156 = vpop.f32.mrf.mxu0
        %v3157 = vadd.f32 0.0, %v3156
        %3158 = vmatprep.mubr.f32.mxu0 0.0
        %3159 = vmatmul.mubr.f32.gmra.mxu0 %v2929
        %v3160 = vpop.f32.mrf.mxu0
        %v3161 = vadd.f32 0.0, %v3160
        %v3162 = vpop.f32.mrf.mxu0
        %v3163 = vadd.f32 0.0, %v3162
        %3164 = vmatprep.mubr.f32.mxu0 0.0
        %3165 = vmatmul.mubr.f32.gmra.mxu0 %v2932
        %v3166 = vpop.f32.mrf.mxu0
        %v3167 = vadd.f32 0.0, %v3166
        %v3168 = vpop.f32.mrf.mxu0
        %v3169 = vadd.f32 0.0, %v3168
        %3170 = vmatprep.mubr.f32.mxu0 0.0
        %3171 = vmatmul.mubr.f32.gmra.mxu0 %v2935
        %v3172 = vpop.f32.mrf.mxu0
        %v3173 = vadd.f32 0.0, %v3172
        %v3174 = vpop.f32.mrf.mxu0
        %v3175 = vadd.f32 0.0, %v3174
        %3176 = vmatprep.mubr.f32.mxu0 0.0
        %3177 = vmatmul.mubr.f32.gmra.mxu0 %v2938
        %v3178 = vpop.f32.mrf.mxu0
        %v3179 = vadd.f32 0.0, %v3178
        %v3180 = vpop.f32.mrf.mxu0
        %v3181 = vadd.f32 0.0, %v3180
        %3182 = vmatprep.mubr.f32.mxu0 0.0
        %3183 = vmatmul.mubr.f32.gmra.mxu0 %v2941
        %v3184 = vpop.f32.mrf.mxu0
        %v3185 = vadd.f32 0.0, %v3184
        %v3186 = vpop.f32.mrf.mxu0
        %v3187 = vadd.f32 0.0, %v3186
        %3188 = vmatprep.mubr.f32.mxu0 0.0
        %3189 = vmatmul.mubr.f32.gmra.mxu0 %v2944
        %v3190 = vpop.f32.mrf.mxu0
        %v3191 = vadd.f32 0.0, %v3190
        %v3192 = vpop.f32.mrf.mxu0
        %v3193 = vadd.f32 0.0, %v3192
        %3194 = vmatprep.mubr.f32.mxu0 0.0
        %3195 = vmatmul.mubr.f32.gmra.mxu0 %v2947
        %v3196 = vpop.f32.mrf.mxu0
        %v3197 = vadd.f32 0.0, %v3196
        %v3198 = vpop.f32.mrf.mxu0
        %v3199 = vadd.f32 0.0, %v3198
        %3200 = vmatprep.mubr.f32.mxu0 0.0
        %3201 = vmatmul.mubr.f32.gmra.mxu0 %v2950
        %v3202 = vpop.f32.mrf.mxu0
        %v3203 = vadd.f32 0.0, %v3202
        %v3204 = vpop.f32.mrf.mxu0
        %v3205 = vadd.f32 0.0, %v3204
        %3206 = vmatprep.mubr.f32.mxu0 0.0
        %3207 = vmatmul.mubr.f32.gmra.mxu0 %v2953
        %v3208 = vpop.f32.mrf.mxu0
        %v3209 = vadd.f32 0.0, %v3208
        %v3210 = vpop.f32.mrf.mxu0
        %v3211 = vadd.f32 0.0, %v3210
        %3212 = vmatprep.mubr.f32.mxu0 0.0
        %3213 = vmatmul.mubr.f32.gmra.mxu0 %v2956
        %v3214 = vpop.f32.mrf.mxu0
        %v3215 = vadd.f32 0.0, %v3214
        %v3216 = vpop.f32.mrf.mxu0
        %v3217 = vadd.f32 0.0, %v3216
        %3218 = vdwg.mxu0
        %v3220 = vunpack.c.l.s4 1983009808
        %v3221 = vunpack.c.0.s8 %v3220
        %v3222 = vlaneseq
        %v3223 = vshrl.u32 %v3222, 7
        %v3224 = vsub.s32 %v3221, %v3223
        %v3225 = vrot.slane %v556, %v3224
        %v3226 = vcombine.high %v3225, %v3225
        %3229 = vxpose.xlu0.b32.start [1/16] %v3225, 128
        %3230 = vxpose.xlu0.b32.cont [2/16] 0.0, 128
        %3231 = vxpose.xlu0.b32.cont [3/16] 0.0, 128
        %3232 = vxpose.xlu0.b32.cont [4/16] 0.0, 128
        %3233 = vxpose.xlu0.b32.cont [5/16] 0.0, 128
        %3234 = vxpose.xlu0.b32.cont [6/16] 0.0, 128
        %3235 = vxpose.xlu0.b32.cont [7/16] 0.0, 128
        %3236 = vxpose.xlu0.b32.cont [8/16] 0.0, 128
        %3237 = vxpose.xlu0.b32.cont [9/16] 0.0, 128
        %3238 = vxpose.xlu0.b32.cont [10/16] 0.0, 128
        %3239 = vxpose.xlu0.b32.cont [11/16] 0.0, 128
        %3240 = vxpose.xlu0.b32.cont [12/16] 0.0, 128
        %3241 = vxpose.xlu0.b32.cont [13/16] 0.0, 128
        %3242 = vxpose.xlu0.b32.cont [14/16] 0.0, 128
        %3243 = vxpose.xlu0.b32.cont [15/16] 0.0, 128
        %3244 = vxpose.xlu0.b32.end [16/16] 0.0, 128
        %v3245 = vpop.trf.xlu0
        %v3246 = vpop.trf.xlu0
        %v3247 = vpop.trf.xlu0
        %v3248 = vpop.trf.xlu0
        %v3249 = vpop.trf.xlu0
        %v3250 = vpop.trf.xlu0
        %v3251 = vpop.trf.xlu0
        %v3252 = vpop.trf.xlu0
        %v3253 = vpop.trf.xlu0
        %v3254 = vpop.trf.xlu0
        %v3255 = vpop.trf.xlu0
        %v3256 = vpop.trf.xlu0
        %v3257 = vpop.trf.xlu0
        %v3258 = vpop.trf.xlu0
        %v3259 = vpop.trf.xlu0
        %v3260 = vpop.trf.xlu0
        %3261 = vxpose.xlu0.b32.start [1/16] %v3226, 128
        %3262 = vxpose.xlu0.b32.cont [2/16] 0.0, 128
        %3263 = vxpose.xlu0.b32.cont [3/16] 0.0, 128
        %3264 = vxpose.xlu0.b32.cont [4/16] 0.0, 128
        %3265 = vxpose.xlu0.b32.cont [5/16] 0.0, 128
        %3266 = vxpose.xlu0.b32.cont [6/16] 0.0, 128
        %3267 = vxpose.xlu0.b32.cont [7/16] 0.0, 128
        %3268 = vxpose.xlu0.b32.cont [8/16] 0.0, 128
        %3269 = vxpose.xlu0.b32.cont [9/16] 0.0, 128
        %3270 = vxpose.xlu0.b32.cont [10/16] 0.0, 128
        %3271 = vxpose.xlu0.b32.cont [11/16] 0.0, 128
        %3272 = vxpose.xlu0.b32.cont [12/16] 0.0, 128
        %3273 = vxpose.xlu0.b32.cont [13/16] 0.0, 128
        %3274 = vxpose.xlu0.b32.cont [14/16] 0.0, 128
        %3275 = vxpose.xlu0.b32.cont [15/16] 0.0, 128
        %3276 = vxpose.xlu0.b32.end [16/16] 0.0, 128
        %v3277 = vpop.trf.xlu0
        %v3278 = vpop.trf.xlu0
        %v3279 = vpop.trf.xlu0
        %v3280 = vpop.trf.xlu0
        %v3281 = vpop.trf.xlu0
        %v3282 = vpop.trf.xlu0
        %v3283 = vpop.trf.xlu0
        %v3284 = vpop.trf.xlu0
        %v3285 = vpop.trf.xlu0
        %v3286 = vpop.trf.xlu0
        %v3287 = vpop.trf.xlu0
        %v3288 = vpop.trf.xlu0
        %v3289 = vpop.trf.xlu0
        %v3290 = vpop.trf.xlu0
        %v3291 = vpop.trf.xlu0
        %v3292 = vpop.trf.xlu0
        %v3294 = vunpack.c.l.s4 1983009808
        %v3295 = vunpack.c.0.s8 %v3294
        %v3296 = vlaneseq
        %v3297 = vshrl.u32 %v3296, 7
        %v3298 = vsub.s32 %v3295, %v3297
        %v3299 = vrot.slane %v516, %v3298
        %v3300 = vcombine.high %v3299, %v3299
        %v3302 = vsel %vm665, %v3245, 0
        %v3305 = vsel %vm665, %v3246, 0
        %v3308 = vsel %vm665, %v3247, 0
        %v3311 = vsel %vm665, %v3248, 0
        %v3314 = vsel %vm665, %v3249, 0
        %v3317 = vsel %vm665, %v3250, 0
        %v3320 = vsel %vm665, %v3251, 0
        %v3323 = vsel %vm665, %v3252, 0
        %v3326 = vsel %vm665, %v3253, 0
        %v3329 = vsel %vm665, %v3254, 0
        %v3332 = vsel %vm665, %v3255, 0
        %v3335 = vsel %vm665, %v3256, 0
        %v3338 = vsel %vm665, %v3257, 0
        %v3341 = vsel %vm665, %v3258, 0
        %v3344 = vsel %vm665, %v3259, 0
        %v3347 = vsel %vm665, %v3260, 0
        %v3350 = vsel %vm665, %v3277, 0
        %v3353 = vsel %vm665, %v3278, 0
        %v3356 = vsel %vm665, %v3279, 0
        %v3359 = vsel %vm665, %v3280, 0
        %v3362 = vsel %vm665, %v3281, 0
        %v3365 = vsel %vm665, %v3282, 0
        %v3368 = vsel %vm665, %v3283, 0
        %v3371 = vsel %vm665, %v3284, 0
        %v3374 = vsel %vm665, %v3285, 0
        %v3377 = vsel %vm665, %v3286, 0
        %v3380 = vsel %vm665, %v3287, 0
        %v3383 = vsel %vm665, %v3288, 0
        %v3386 = vsel %vm665, %v3289, 0
        %v3389 = vsel %vm665, %v3290, 0
        %v3392 = vsel %vm665, %v3291, 0
        %v3395 = vsel %vm665, %v3292, 0
        %v3397 = vsel %vm762, %v3299, 0
        %v3399 = vsel %vm762, %v3300, 0
        %3401 = vmatprep.subr.mxu0 0.0
        %3402 = vmatpush1.msra.mxu0 0.0
        %3403 = vmatprep.subr.mxu0 0.0
        %3404 = vmatpush1.msra.mxu0 0.0
        %3405 = vmatprep.subr.mxu0 0.0
        %3406 = vmatpush1.msra.mxu0 0.0
        %3407 = vmatprep.subr.mxu0 0.0
        %3408 = vmatpush1.msra.mxu0 0.0
        %3409 = vmatprep.subr.mxu0 0.0
        %3410 = vmatpush1.msra.mxu0 0.0
        %3411 = vmatprep.subr.mxu0 0.0
        %3412 = vmatpush1.msra.mxu0 0.0
        %3413 = vmatprep.subr.mxu0 0.0
        %3414 = vmatpush1.msra.mxu0 0.0
        %3415 = vmatprep.subr.mxu0 0.0
        %3416 = vmatpush1.msra.mxu0 0.0
        %3417 = vmatprep.subr.mxu0 0.0
        %3418 = vmatpush1.msra.mxu0 0.0
        %3419 = vmatprep.subr.mxu0 0.0
        %3420 = vmatpush1.msra.mxu0 0.0
        %3421 = vmatprep.subr.mxu0 0.0
        %3422 = vmatpush1.msra.mxu0 0.0
        %3423 = vmatprep.subr.mxu0 0.0
        %3424 = vmatpush1.msra.mxu0 0.0
        %3425 = vmatprep.subr.mxu0 0.0
        %3426 = vmatpush1.msra.mxu0 0.0
        %3427 = vmatprep.subr.mxu0 0.0
        %3428 = vmatpush1.msra.mxu0 0.0
        %3429 = vmatprep.subr.mxu0 0.0
        %3430 = vmatpush1.msra.mxu0 0.0
        %3431 = vmatprep.subr.mxu0 %v3399
        %3432 = vmatpush1.msra.mxu0 %v3397
        %3433 = vmatprep.subr.mxu0 0.0
        %3434 = vmatpush2.msra.mxu0 0.0
        %3435 = vmatprep.subr.mxu0 0.0
        %3436 = vmatpush2.msra.mxu0 0.0
        %3437 = vmatprep.subr.mxu0 0.0
        %3438 = vmatpush2.msra.mxu0 0.0
        %3439 = vmatprep.subr.mxu0 0.0
        %3440 = vmatpush2.msra.mxu0 0.0
        %3441 = vmatprep.subr.mxu0 0.0
        %3442 = vmatpush2.msra.mxu0 0.0
        %3443 = vmatprep.subr.mxu0 0.0
        %3444 = vmatpush2.msra.mxu0 0.0
        %3445 = vmatprep.subr.mxu0 0.0
        %3446 = vmatpush2.msra.mxu0 0.0
        %3447 = vmatprep.subr.mxu0 0.0
        %3448 = vmatpush2.msra.mxu0 0.0
        %3449 = vmatprep.subr.mxu0 0.0
        %3450 = vmatpush2.msra.mxu0 0.0
        %3451 = vmatprep.subr.mxu0 0.0
        %3452 = vmatpush2.msra.mxu0 0.0
        %3453 = vmatprep.subr.mxu0 0.0
        %3454 = vmatpush2.msra.mxu0 0.0
        %3455 = vmatprep.subr.mxu0 0.0
        %3456 = vmatpush2.msra.mxu0 0.0
        %3457 = vmatprep.subr.mxu0 0.0
        %3458 = vmatpush2.msra.mxu0 0.0
        %3459 = vmatprep.subr.mxu0 0.0
        %3460 = vmatpush2.msra.mxu0 0.0
        %3461 = vmatprep.subr.mxu0 0.0
        %3462 = vmatpush2.msra.mxu0 0.0
        %3463 = vmatprep.subr.mxu0 0.0
        %3464 = vmatpush2.msra.mxu0 0.0
        %3465 = vmatprep.mubr.f32.mxu0 0.0
        %3466 = vmatmul.mubr.f32.gmra.mxu0 %v3302
        %v3467 = vpop.f32.mrf.mxu0
        %v3468 = vadd.f32 0.0, %v3467
        %v3469 = vpop.f32.mrf.mxu0
        %v3470 = vadd.f32 0.0, %v3469
        %3471 = vmatprep.mubr.f32.mxu0 0.0
        %3472 = vmatmul.mubr.f32.gmra.mxu0 %v3305
        %v3473 = vpop.f32.mrf.mxu0
        %v3474 = vadd.f32 0.0, %v3473
        %v3475 = vpop.f32.mrf.mxu0
        %v3476 = vadd.f32 0.0, %v3475
        %3477 = vmatprep.mubr.f32.mxu0 0.0
        %3478 = vmatmul.mubr.f32.gmra.mxu0 %v3308
        %v3479 = vpop.f32.mrf.mxu0
        %v3480 = vadd.f32 0.0, %v3479
        %v3481 = vpop.f32.mrf.mxu0
        %v3482 = vadd.f32 0.0, %v3481
        %3483 = vmatprep.mubr.f32.mxu0 0.0
        %3484 = vmatmul.mubr.f32.gmra.mxu0 %v3311
        %v3485 = vpop.f32.mrf.mxu0
        %v3486 = vadd.f32 0.0, %v3485
        %v3487 = vpop.f32.mrf.mxu0
        %v3488 = vadd.f32 0.0, %v3487
        %3489 = vmatprep.mubr.f32.mxu0 0.0
        %3490 = vmatmul.mubr.f32.gmra.mxu0 %v3314
        %v3491 = vpop.f32.mrf.mxu0
        %v3492 = vadd.f32 0.0, %v3491
        %v3493 = vpop.f32.mrf.mxu0
        %v3494 = vadd.f32 0.0, %v3493
        %3495 = vmatprep.mubr.f32.mxu0 0.0
        %3496 = vmatmul.mubr.f32.gmra.mxu0 %v3317
        %v3497 = vpop.f32.mrf.mxu0
        %v3498 = vadd.f32 0.0, %v3497
        %v3499 = vpop.f32.mrf.mxu0
        %v3500 = vadd.f32 0.0, %v3499
        %3501 = vmatprep.mubr.f32.mxu0 0.0
        %3502 = vmatmul.mubr.f32.gmra.mxu0 %v3320
        %v3503 = vpop.f32.mrf.mxu0
        %v3504 = vadd.f32 0.0, %v3503
        %v3505 = vpop.f32.mrf.mxu0
        %v3506 = vadd.f32 0.0, %v3505
        %3507 = vmatprep.mubr.f32.mxu0 0.0
        %3508 = vmatmul.mubr.f32.gmra.mxu0 %v3323
        %v3509 = vpop.f32.mrf.mxu0
        %v3510 = vadd.f32 0.0, %v3509
        %v3511 = vpop.f32.mrf.mxu0
        %v3512 = vadd.f32 0.0, %v3511
        %3513 = vmatprep.mubr.f32.mxu0 0.0
        %3514 = vmatmul.mubr.f32.gmra.mxu0 %v3326
        %v3515 = vpop.f32.mrf.mxu0
        %v3516 = vadd.f32 0.0, %v3515
        %v3517 = vpop.f32.mrf.mxu0
        %v3518 = vadd.f32 0.0, %v3517
        %3519 = vmatprep.mubr.f32.mxu0 0.0
        %3520 = vmatmul.mubr.f32.gmra.mxu0 %v3329
        %v3521 = vpop.f32.mrf.mxu0
        %v3522 = vadd.f32 0.0, %v3521
        %v3523 = vpop.f32.mrf.mxu0
        %v3524 = vadd.f32 0.0, %v3523
        %3525 = vmatprep.mubr.f32.mxu0 0.0
        %3526 = vmatmul.mubr.f32.gmra.mxu0 %v3332
        %v3527 = vpop.f32.mrf.mxu0
        %v3528 = vadd.f32 0.0, %v3527
        %v3529 = vpop.f32.mrf.mxu0
        %v3530 = vadd.f32 0.0, %v3529
        %3531 = vmatprep.mubr.f32.mxu0 0.0
        %3532 = vmatmul.mubr.f32.gmra.mxu0 %v3335
        %v3533 = vpop.f32.mrf.mxu0
        %v3534 = vadd.f32 0.0, %v3533
        %v3535 = vpop.f32.mrf.mxu0
        %v3536 = vadd.f32 0.0, %v3535
        %3537 = vmatprep.mubr.f32.mxu0 0.0
        %3538 = vmatmul.mubr.f32.gmra.mxu0 %v3338
        %v3539 = vpop.f32.mrf.mxu0
        %v3540 = vadd.f32 0.0, %v3539
        %v3541 = vpop.f32.mrf.mxu0
        %v3542 = vadd.f32 0.0, %v3541
        %3543 = vmatprep.mubr.f32.mxu0 0.0
        %3544 = vmatmul.mubr.f32.gmra.mxu0 %v3341
        %v3545 = vpop.f32.mrf.mxu0
        %v3546 = vadd.f32 0.0, %v3545
        %v3547 = vpop.f32.mrf.mxu0
        %v3548 = vadd.f32 0.0, %v3547
        %3549 = vmatprep.mubr.f32.mxu0 0.0
        %3550 = vmatmul.mubr.f32.gmra.mxu0 %v3344
        %v3551 = vpop.f32.mrf.mxu0
        %v3552 = vadd.f32 0.0, %v3551
        %v3553 = vpop.f32.mrf.mxu0
        %v3554 = vadd.f32 0.0, %v3553
        %3555 = vmatprep.mubr.f32.mxu0 0.0
        %3556 = vmatmul.mubr.f32.gmra.mxu0 %v3347
        %v3557 = vpop.f32.mrf.mxu0
        %v3558 = vadd.f32 0.0, %v3557
        %v3559 = vpop.f32.mrf.mxu0
        %v3560 = vadd.f32 0.0, %v3559
        %3561 = vmatprep.mubr.f32.mxu0 0.0
        %3562 = vmatmul.mubr.f32.gmra.mxu0 %v3350
        %v3563 = vpop.f32.mrf.mxu0
        %v3564 = vadd.f32 0.0, %v3563
        %v3565 = vpop.f32.mrf.mxu0
        %v3566 = vadd.f32 0.0, %v3565
        %3567 = vmatprep.mubr.f32.mxu0 0.0
        %3568 = vmatmul.mubr.f32.gmra.mxu0 %v3353
        %v3569 = vpop.f32.mrf.mxu0
        %v3570 = vadd.f32 0.0, %v3569
        %v3571 = vpop.f32.mrf.mxu0
        %v3572 = vadd.f32 0.0, %v3571
        %3573 = vmatprep.mubr.f32.mxu0 0.0
        %3574 = vmatmul.mubr.f32.gmra.mxu0 %v3356
        %v3575 = vpop.f32.mrf.mxu0
        %v3576 = vadd.f32 0.0, %v3575
        %v3577 = vpop.f32.mrf.mxu0
        %v3578 = vadd.f32 0.0, %v3577
        %3579 = vmatprep.mubr.f32.mxu0 0.0
        %3580 = vmatmul.mubr.f32.gmra.mxu0 %v3359
        %v3581 = vpop.f32.mrf.mxu0
        %v3582 = vadd.f32 0.0, %v3581
        %v3583 = vpop.f32.mrf.mxu0
        %v3584 = vadd.f32 0.0, %v3583
        %3585 = vmatprep.mubr.f32.mxu0 0.0
        %3586 = vmatmul.mubr.f32.gmra.mxu0 %v3362
        %v3587 = vpop.f32.mrf.mxu0
        %v3588 = vadd.f32 0.0, %v3587
        %v3589 = vpop.f32.mrf.mxu0
        %v3590 = vadd.f32 0.0, %v3589
        %3591 = vmatprep.mubr.f32.mxu0 0.0
        %3592 = vmatmul.mubr.f32.gmra.mxu0 %v3365
        %v3593 = vpop.f32.mrf.mxu0
        %v3594 = vadd.f32 0.0, %v3593
        %v3595 = vpop.f32.mrf.mxu0
        %v3596 = vadd.f32 0.0, %v3595
        %3597 = vmatprep.mubr.f32.mxu0 0.0
        %3598 = vmatmul.mubr.f32.gmra.mxu0 %v3368
        %v3599 = vpop.f32.mrf.mxu0
        %v3600 = vadd.f32 0.0, %v3599
        %v3601 = vpop.f32.mrf.mxu0
        %v3602 = vadd.f32 0.0, %v3601
        %3603 = vmatprep.mubr.f32.mxu0 0.0
        %3604 = vmatmul.mubr.f32.gmra.mxu0 %v3371
        %v3605 = vpop.f32.mrf.mxu0
        %v3606 = vadd.f32 0.0, %v3605
        %v3607 = vpop.f32.mrf.mxu0
        %v3608 = vadd.f32 0.0, %v3607
        %3609 = vmatprep.mubr.f32.mxu0 0.0
        %3610 = vmatmul.mubr.f32.gmra.mxu0 %v3374
        %v3611 = vpop.f32.mrf.mxu0
        %v3612 = vadd.f32 0.0, %v3611
        %v3613 = vpop.f32.mrf.mxu0
        %v3614 = vadd.f32 0.0, %v3613
        %3615 = vmatprep.mubr.f32.mxu0 0.0
        %3616 = vmatmul.mubr.f32.gmra.mxu0 %v3377
        %v3617 = vpop.f32.mrf.mxu0
        %v3618 = vadd.f32 0.0, %v3617
        %v3619 = vpop.f32.mrf.mxu0
        %v3620 = vadd.f32 0.0, %v3619
        %3621 = vmatprep.mubr.f32.mxu0 0.0
        %3622 = vmatmul.mubr.f32.gmra.mxu0 %v3380
        %v3623 = vpop.f32.mrf.mxu0
        %v3624 = vadd.f32 0.0, %v3623
        %v3625 = vpop.f32.mrf.mxu0
        %v3626 = vadd.f32 0.0, %v3625
        %3627 = vmatprep.mubr.f32.mxu0 0.0
        %3628 = vmatmul.mubr.f32.gmra.mxu0 %v3383
        %v3629 = vpop.f32.mrf.mxu0
        %v3630 = vadd.f32 0.0, %v3629
        %v3631 = vpop.f32.mrf.mxu0
        %v3632 = vadd.f32 0.0, %v3631
        %3633 = vmatprep.mubr.f32.mxu0 0.0
        %3634 = vmatmul.mubr.f32.gmra.mxu0 %v3386
        %v3635 = vpop.f32.mrf.mxu0
        %v3636 = vadd.f32 0.0, %v3635
        %v3637 = vpop.f32.mrf.mxu0
        %v3638 = vadd.f32 0.0, %v3637
        %3639 = vmatprep.mubr.f32.mxu0 0.0
        %3640 = vmatmul.mubr.f32.gmra.mxu0 %v3389
        %v3641 = vpop.f32.mrf.mxu0
        %v3642 = vadd.f32 0.0, %v3641
        %v3643 = vpop.f32.mrf.mxu0
        %v3644 = vadd.f32 0.0, %v3643
        %3645 = vmatprep.mubr.f32.mxu0 0.0
        %3646 = vmatmul.mubr.f32.gmra.mxu0 %v3392
        %v3647 = vpop.f32.mrf.mxu0
        %v3648 = vadd.f32 0.0, %v3647
        %v3649 = vpop.f32.mrf.mxu0
        %v3650 = vadd.f32 0.0, %v3649
        %3651 = vmatprep.mubr.f32.mxu0 0.0
        %3652 = vmatmul.mubr.f32.gmra.mxu0 %v3395
        %v3653 = vpop.f32.mrf.mxu0
        %v3654 = vadd.f32 0.0, %v3653
        %v3655 = vpop.f32.mrf.mxu0
        %v3656 = vadd.f32 0.0, %v3655
        %3657 = vdwg.mxu0
        %v3659 = vunpack.c.l.s4 1983009808
        %v3660 = vunpack.c.0.s8 %v3659
        %v3661 = vlaneseq
        %v3662 = vshrl.u32 %v3661, 7
        %v3663 = vsub.s32 %v3660, %v3662
        %v3664 = vrot.slane %v558, %v3663
        %v3665 = vcombine.high %v3664, %v3664
        %3668 = vxpose.xlu0.b32.start [1/16] %v3664, 128
        %3669 = vxpose.xlu0.b32.cont [2/16] 0.0, 128
        %3670 = vxpose.xlu0.b32.cont [3/16] 0.0, 128
        %3671 = vxpose.xlu0.b32.cont [4/16] 0.0, 128
        %3672 = vxpose.xlu0.b32.cont [5/16] 0.0, 128
        %3673 = vxpose.xlu0.b32.cont [6/16] 0.0, 128
        %3674 = vxpose.xlu0.b32.cont [7/16] 0.0, 128
        %3675 = vxpose.xlu0.b32.cont [8/16] 0.0, 128
        %3676 = vxpose.xlu0.b32.cont [9/16] 0.0, 128
        %3677 = vxpose.xlu0.b32.cont [10/16] 0.0, 128
        %3678 = vxpose.xlu0.b32.cont [11/16] 0.0, 128
        %3679 = vxpose.xlu0.b32.cont [12/16] 0.0, 128
        %3680 = vxpose.xlu0.b32.cont [13/16] 0.0, 128
        %3681 = vxpose.xlu0.b32.cont [14/16] 0.0, 128
        %3682 = vxpose.xlu0.b32.cont [15/16] 0.0, 128
        %3683 = vxpose.xlu0.b32.end [16/16] 0.0, 128
        %v3684 = vpop.trf.xlu0
        %v3685 = vpop.trf.xlu0
        %v3686 = vpop.trf.xlu0
        %v3687 = vpop.trf.xlu0
        %v3688 = vpop.trf.xlu0
        %v3689 = vpop.trf.xlu0
        %v3690 = vpop.trf.xlu0
        %v3691 = vpop.trf.xlu0
        %v3692 = vpop.trf.xlu0
        %v3693 = vpop.trf.xlu0
        %v3694 = vpop.trf.xlu0
        %v3695 = vpop.trf.xlu0
        %v3696 = vpop.trf.xlu0
        %v3697 = vpop.trf.xlu0
        %v3698 = vpop.trf.xlu0
        %v3699 = vpop.trf.xlu0
        %3700 = vxpose.xlu0.b32.start [1/16] %v3665, 128
        %3701 = vxpose.xlu0.b32.cont [2/16] 0.0, 128
        %3702 = vxpose.xlu0.b32.cont [3/16] 0.0, 128
        %3703 = vxpose.xlu0.b32.cont [4/16] 0.0, 128
        %3704 = vxpose.xlu0.b32.cont [5/16] 0.0, 128
        %3705 = vxpose.xlu0.b32.cont [6/16] 0.0, 128
        %3706 = vxpose.xlu0.b32.cont [7/16] 0.0, 128
        %3707 = vxpose.xlu0.b32.cont [8/16] 0.0, 128
        %3708 = vxpose.xlu0.b32.cont [9/16] 0.0, 128
        %3709 = vxpose.xlu0.b32.cont [10/16] 0.0, 128
        %3710 = vxpose.xlu0.b32.cont [11/16] 0.0, 128
        %3711 = vxpose.xlu0.b32.cont [12/16] 0.0, 128
        %3712 = vxpose.xlu0.b32.cont [13/16] 0.0, 128
        %3713 = vxpose.xlu0.b32.cont [14/16] 0.0, 128
        %3714 = vxpose.xlu0.b32.cont [15/16] 0.0, 128
        %3715 = vxpose.xlu0.b32.end [16/16] 0.0, 128
        %v3716 = vpop.trf.xlu0
        %v3717 = vpop.trf.xlu0
        %v3718 = vpop.trf.xlu0
        %v3719 = vpop.trf.xlu0
        %v3720 = vpop.trf.xlu0
        %v3721 = vpop.trf.xlu0
        %v3722 = vpop.trf.xlu0
        %v3723 = vpop.trf.xlu0
        %v3724 = vpop.trf.xlu0
        %v3725 = vpop.trf.xlu0
        %v3726 = vpop.trf.xlu0
        %v3727 = vpop.trf.xlu0
        %v3728 = vpop.trf.xlu0
        %v3729 = vpop.trf.xlu0
        %v3730 = vpop.trf.xlu0
        %v3731 = vpop.trf.xlu0
        %v3733 = vunpack.c.l.s4 1983009808
        %v3734 = vunpack.c.0.s8 %v3733
        %v3735 = vlaneseq
        %v3736 = vshrl.u32 %v3735, 7
        %v3737 = vsub.s32 %v3734, %v3736
        %v3738 = vrot.slane %v518, %v3737
        %v3739 = vcombine.high %v3738, %v3738
        %v3741 = vsel %vm665, %v3684, 0
        %v3744 = vsel %vm665, %v3685, 0
        %v3747 = vsel %vm665, %v3686, 0
        %v3750 = vsel %vm665, %v3687, 0
        %v3753 = vsel %vm665, %v3688, 0
        %v3756 = vsel %vm665, %v3689, 0
        %v3759 = vsel %vm665, %v3690, 0
        %v3762 = vsel %vm665, %v3691, 0
        %v3765 = vsel %vm665, %v3692, 0
        %v3768 = vsel %vm665, %v3693, 0
        %v3771 = vsel %vm665, %v3694, 0
        %v3774 = vsel %vm665, %v3695, 0
        %v3777 = vsel %vm665, %v3696, 0
        %v3780 = vsel %vm665, %v3697, 0
        %v3783 = vsel %vm665, %v3698, 0
        %v3786 = vsel %vm665, %v3699, 0
        %v3789 = vsel %vm665, %v3716, 0
        %v3792 = vsel %vm665, %v3717, 0
        %v3795 = vsel %vm665, %v3718, 0
        %v3798 = vsel %vm665, %v3719, 0
        %v3801 = vsel %vm665, %v3720, 0
        %v3804 = vsel %vm665, %v3721, 0
        %v3807 = vsel %vm665, %v3722, 0
        %v3810 = vsel %vm665, %v3723, 0
        %v3813 = vsel %vm665, %v3724, 0
        %v3816 = vsel %vm665, %v3725, 0
        %v3819 = vsel %vm665, %v3726, 0
        %v3822 = vsel %vm665, %v3727, 0
        %v3825 = vsel %vm665, %v3728, 0
        %v3828 = vsel %vm665, %v3729, 0
        %v3831 = vsel %vm665, %v3730, 0
        %v3834 = vsel %vm665, %v3731, 0
        %v3836 = vsel %vm762, %v3738, 0
        %v3838 = vsel %vm762, %v3739, 0
        %3840 = vmatprep.subr.mxu0 0.0
        %3841 = vmatpush1.msra.mxu0 0.0
        %3842 = vmatprep.subr.mxu0 0.0
        %3843 = vmatpush1.msra.mxu0 0.0
        %3844 = vmatprep.subr.mxu0 0.0
        %3845 = vmatpush1.msra.mxu0 0.0
        %3846 = vmatprep.subr.mxu0 0.0
        %3847 = vmatpush1.msra.mxu0 0.0
        %3848 = vmatprep.subr.mxu0 0.0
        %3849 = vmatpush1.msra.mxu0 0.0
        %3850 = vmatprep.subr.mxu0 0.0
        %3851 = vmatpush1.msra.mxu0 0.0
        %3852 = vmatprep.subr.mxu0 0.0
        %3853 = vmatpush1.msra.mxu0 0.0
        %3854 = vmatprep.subr.mxu0 0.0
        %3855 = vmatpush1.msra.mxu0 0.0
        %3856 = vmatprep.subr.mxu0 0.0
        %3857 = vmatpush1.msra.mxu0 0.0
        %3858 = vmatprep.subr.mxu0 0.0
        %3859 = vmatpush1.msra.mxu0 0.0
        %3860 = vmatprep.subr.mxu0 0.0
        %3861 = vmatpush1.msra.mxu0 0.0
        %3862 = vmatprep.subr.mxu0 0.0
        %3863 = vmatpush1.msra.mxu0 0.0
        %3864 = vmatprep.subr.mxu0 0.0
        %3865 = vmatpush1.msra.mxu0 0.0
        %3866 = vmatprep.subr.mxu0 0.0
        %3867 = vmatpush1.msra.mxu0 0.0
        %3868 = vmatprep.subr.mxu0 0.0
        %3869 = vmatpush1.msra.mxu0 0.0
        %3870 = vmatprep.subr.mxu0 %v3838
        %3871 = vmatpush1.msra.mxu0 %v3836
        %3872 = vmatprep.subr.mxu0 0.0
        %3873 = vmatpush2.msra.mxu0 0.0
        %3874 = vmatprep.subr.mxu0 0.0
        %3875 = vmatpush2.msra.mxu0 0.0
        %3876 = vmatprep.subr.mxu0 0.0
        %3877 = vmatpush2.msra.mxu0 0.0
        %3878 = vmatprep.subr.mxu0 0.0
        %3879 = vmatpush2.msra.mxu0 0.0
        %3880 = vmatprep.subr.mxu0 0.0
        %3881 = vmatpush2.msra.mxu0 0.0
        %3882 = vmatprep.subr.mxu0 0.0
        %3883 = vmatpush2.msra.mxu0 0.0
        %3884 = vmatprep.subr.mxu0 0.0
        %3885 = vmatpush2.msra.mxu0 0.0
        %3886 = vmatprep.subr.mxu0 0.0
        %3887 = vmatpush2.msra.mxu0 0.0
        %3888 = vmatprep.subr.mxu0 0.0
        %3889 = vmatpush2.msra.mxu0 0.0
        %3890 = vmatprep.subr.mxu0 0.0
        %3891 = vmatpush2.msra.mxu0 0.0
        %3892 = vmatprep.subr.mxu0 0.0
        %3893 = vmatpush2.msra.mxu0 0.0
        %3894 = vmatprep.subr.mxu0 0.0
        %3895 = vmatpush2.msra.mxu0 0.0
        %3896 = vmatprep.subr.mxu0 0.0
        %3897 = vmatpush2.msra.mxu0 0.0
        %3898 = vmatprep.subr.mxu0 0.0
        %3899 = vmatpush2.msra.mxu0 0.0
        %3900 = vmatprep.subr.mxu0 0.0
        %3901 = vmatpush2.msra.mxu0 0.0
        %3902 = vmatprep.subr.mxu0 0.0
        %3903 = vmatpush2.msra.mxu0 0.0
        %3904 = vmatprep.mubr.f32.mxu0 0.0
        %3905 = vmatmul.mubr.f32.gmra.mxu0 %v3741
        %v3906 = vpop.f32.mrf.mxu0
        %v3907 = vadd.f32 0.0, %v3906
        %v3908 = vpop.f32.mrf.mxu0
        %v3909 = vadd.f32 0.0, %v3908
        %3910 = vmatprep.mubr.f32.mxu0 0.0
        %3911 = vmatmul.mubr.f32.gmra.mxu0 %v3744
        %v3912 = vpop.f32.mrf.mxu0
        %v3913 = vadd.f32 0.0, %v3912
        %v3914 = vpop.f32.mrf.mxu0
        %v3915 = vadd.f32 0.0, %v3914
        %3916 = vmatprep.mubr.f32.mxu0 0.0
        %3917 = vmatmul.mubr.f32.gmra.mxu0 %v3747
        %v3918 = vpop.f32.mrf.mxu0
        %v3919 = vadd.f32 0.0, %v3918
        %v3920 = vpop.f32.mrf.mxu0
        %v3921 = vadd.f32 0.0, %v3920
        %3922 = vmatprep.mubr.f32.mxu0 0.0
        %3923 = vmatmul.mubr.f32.gmra.mxu0 %v3750
        %v3924 = vpop.f32.mrf.mxu0
        %v3925 = vadd.f32 0.0, %v3924
        %v3926 = vpop.f32.mrf.mxu0
        %v3927 = vadd.f32 0.0, %v3926
        %3928 = vmatprep.mubr.f32.mxu0 0.0
        %3929 = vmatmul.mubr.f32.gmra.mxu0 %v3753
        %v3930 = vpop.f32.mrf.mxu0
        %v3931 = vadd.f32 0.0, %v3930
        %v3932 = vpop.f32.mrf.mxu0
        %v3933 = vadd.f32 0.0, %v3932
        %3934 = vmatprep.mubr.f32.mxu0 0.0
        %3935 = vmatmul.mubr.f32.gmra.mxu0 %v3756
        %v3936 = vpop.f32.mrf.mxu0
        %v3937 = vadd.f32 0.0, %v3936
        %v3938 = vpop.f32.mrf.mxu0
        %v3939 = vadd.f32 0.0, %v3938
        %3940 = vmatprep.mubr.f32.mxu0 0.0
        %3941 = vmatmul.mubr.f32.gmra.mxu0 %v3759
        %v3942 = vpop.f32.mrf.mxu0
        %v3943 = vadd.f32 0.0, %v3942
        %v3944 = vpop.f32.mrf.mxu0
        %v3945 = vadd.f32 0.0, %v3944
        %3946 = vmatprep.mubr.f32.mxu0 0.0
        %3947 = vmatmul.mubr.f32.gmra.mxu0 %v3762
        %v3948 = vpop.f32.mrf.mxu0
        %v3949 = vadd.f32 0.0, %v3948
        %v3950 = vpop.f32.mrf.mxu0
        %v3951 = vadd.f32 0.0, %v3950
        %3952 = vmatprep.mubr.f32.mxu0 0.0
        %3953 = vmatmul.mubr.f32.gmra.mxu0 %v3765
        %v3954 = vpop.f32.mrf.mxu0
        %v3955 = vadd.f32 0.0, %v3954
        %v3956 = vpop.f32.mrf.mxu0
        %v3957 = vadd.f32 0.0, %v3956
        %3958 = vmatprep.mubr.f32.mxu0 0.0
        %3959 = vmatmul.mubr.f32.gmra.mxu0 %v3768
        %v3960 = vpop.f32.mrf.mxu0
        %v3961 = vadd.f32 0.0, %v3960
        %v3962 = vpop.f32.mrf.mxu0
        %v3963 = vadd.f32 0.0, %v3962
        %3964 = vmatprep.mubr.f32.mxu0 0.0
        %3965 = vmatmul.mubr.f32.gmra.mxu0 %v3771
        %v3966 = vpop.f32.mrf.mxu0
        %v3967 = vadd.f32 0.0, %v3966
        %v3968 = vpop.f32.mrf.mxu0
        %v3969 = vadd.f32 0.0, %v3968
        %3970 = vmatprep.mubr.f32.mxu0 0.0
        %3971 = vmatmul.mubr.f32.gmra.mxu0 %v3774
        %v3972 = vpop.f32.mrf.mxu0
        %v3973 = vadd.f32 0.0, %v3972
        %v3974 = vpop.f32.mrf.mxu0
        %v3975 = vadd.f32 0.0, %v3974
        %3976 = vmatprep.mubr.f32.mxu0 0.0
        %3977 = vmatmul.mubr.f32.gmra.mxu0 %v3777
        %v3978 = vpop.f32.mrf.mxu0
        %v3979 = vadd.f32 0.0, %v3978
        %v3980 = vpop.f32.mrf.mxu0
        %v3981 = vadd.f32 0.0, %v3980
        %3982 = vmatprep.mubr.f32.mxu0 0.0
        %3983 = vmatmul.mubr.f32.gmra.mxu0 %v3780
        %v3984 = vpop.f32.mrf.mxu0
        %v3985 = vadd.f32 0.0, %v3984
        %v3986 = vpop.f32.mrf.mxu0
        %v3987 = vadd.f32 0.0, %v3986
        %3988 = vmatprep.mubr.f32.mxu0 0.0
        %3989 = vmatmul.mubr.f32.gmra.mxu0 %v3783
        %v3990 = vpop.f32.mrf.mxu0
        %v3991 = vadd.f32 0.0, %v3990
        %v3992 = vpop.f32.mrf.mxu0
        %v3993 = vadd.f32 0.0, %v3992
        %3994 = vmatprep.mubr.f32.mxu0 0.0
        %3995 = vmatmul.mubr.f32.gmra.mxu0 %v3786
        %v3996 = vpop.f32.mrf.mxu0
        %v3997 = vadd.f32 0.0, %v3996
        %v3998 = vpop.f32.mrf.mxu0
        %v3999 = vadd.f32 0.0, %v3998
        %4000 = vmatprep.mubr.f32.mxu0 0.0
        %4001 = vmatmul.mubr.f32.gmra.mxu0 %v3789
        %v4002 = vpop.f32.mrf.mxu0
        %v4003 = vadd.f32 0.0, %v4002
        %v4004 = vpop.f32.mrf.mxu0
        %v4005 = vadd.f32 0.0, %v4004
        %4006 = vmatprep.mubr.f32.mxu0 0.0
        %4007 = vmatmul.mubr.f32.gmra.mxu0 %v3792
        %v4008 = vpop.f32.mrf.mxu0
        %v4009 = vadd.f32 0.0, %v4008
        %v4010 = vpop.f32.mrf.mxu0
        %v4011 = vadd.f32 0.0, %v4010
        %4012 = vmatprep.mubr.f32.mxu0 0.0
        %4013 = vmatmul.mubr.f32.gmra.mxu0 %v3795
        %v4014 = vpop.f32.mrf.mxu0
        %v4015 = vadd.f32 0.0, %v4014
        %v4016 = vpop.f32.mrf.mxu0
        %v4017 = vadd.f32 0.0, %v4016
        %4018 = vmatprep.mubr.f32.mxu0 0.0
        %4019 = vmatmul.mubr.f32.gmra.mxu0 %v3798
        %v4020 = vpop.f32.mrf.mxu0
        %v4021 = vadd.f32 0.0, %v4020
        %v4022 = vpop.f32.mrf.mxu0
        %v4023 = vadd.f32 0.0, %v4022
        %4024 = vmatprep.mubr.f32.mxu0 0.0
        %4025 = vmatmul.mubr.f32.gmra.mxu0 %v3801
        %v4026 = vpop.f32.mrf.mxu0
        %v4027 = vadd.f32 0.0, %v4026
        %v4028 = vpop.f32.mrf.mxu0
        %v4029 = vadd.f32 0.0, %v4028
        %4030 = vmatprep.mubr.f32.mxu0 0.0
        %4031 = vmatmul.mubr.f32.gmra.mxu0 %v3804
        %v4032 = vpop.f32.mrf.mxu0
        %v4033 = vadd.f32 0.0, %v4032
        %v4034 = vpop.f32.mrf.mxu0
        %v4035 = vadd.f32 0.0, %v4034
        %4036 = vmatprep.mubr.f32.mxu0 0.0
        %4037 = vmatmul.mubr.f32.gmra.mxu0 %v3807
        %v4038 = vpop.f32.mrf.mxu0
        %v4039 = vadd.f32 0.0, %v4038
        %v4040 = vpop.f32.mrf.mxu0
        %v4041 = vadd.f32 0.0, %v4040
        %4042 = vmatprep.mubr.f32.mxu0 0.0
        %4043 = vmatmul.mubr.f32.gmra.mxu0 %v3810
        %v4044 = vpop.f32.mrf.mxu0
        %v4045 = vadd.f32 0.0, %v4044
        %v4046 = vpop.f32.mrf.mxu0
        %v4047 = vadd.f32 0.0, %v4046
        %4048 = vmatprep.mubr.f32.mxu0 0.0
        %4049 = vmatmul.mubr.f32.gmra.mxu0 %v3813
        %v4050 = vpop.f32.mrf.mxu0
        %v4051 = vadd.f32 0.0, %v4050
        %v4052 = vpop.f32.mrf.mxu0
        %v4053 = vadd.f32 0.0, %v4052
        %4054 = vmatprep.mubr.f32.mxu0 0.0
        %4055 = vmatmul.mubr.f32.gmra.mxu0 %v3816
        %v4056 = vpop.f32.mrf.mxu0
        %v4057 = vadd.f32 0.0, %v4056
        %v4058 = vpop.f32.mrf.mxu0
        %v4059 = vadd.f32 0.0, %v4058
        %4060 = vmatprep.mubr.f32.mxu0 0.0
        %4061 = vmatmul.mubr.f32.gmra.mxu0 %v3819
        %v4062 = vpop.f32.mrf.mxu0
        %v4063 = vadd.f32 0.0, %v4062
        %v4064 = vpop.f32.mrf.mxu0
        %v4065 = vadd.f32 0.0, %v4064
        %4066 = vmatprep.mubr.f32.mxu0 0.0
        %4067 = vmatmul.mubr.f32.gmra.mxu0 %v3822
        %v4068 = vpop.f32.mrf.mxu0
        %v4069 = vadd.f32 0.0, %v4068
        %v4070 = vpop.f32.mrf.mxu0
        %v4071 = vadd.f32 0.0, %v4070
        %4072 = vmatprep.mubr.f32.mxu0 0.0
        %4073 = vmatmul.mubr.f32.gmra.mxu0 %v3825
        %v4074 = vpop.f32.mrf.mxu0
        %v4075 = vadd.f32 0.0, %v4074
        %v4076 = vpop.f32.mrf.mxu0
        %v4077 = vadd.f32 0.0, %v4076
        %4078 = vmatprep.mubr.f32.mxu0 0.0
        %4079 = vmatmul.mubr.f32.gmra.mxu0 %v3828
        %v4080 = vpop.f32.mrf.mxu0
        %v4081 = vadd.f32 0.0, %v4080
        %v4082 = vpop.f32.mrf.mxu0
        %v4083 = vadd.f32 0.0, %v4082
        %4084 = vmatprep.mubr.f32.mxu0 0.0
        %4085 = vmatmul.mubr.f32.gmra.mxu0 %v3831
        %v4086 = vpop.f32.mrf.mxu0
        %v4087 = vadd.f32 0.0, %v4086
        %v4088 = vpop.f32.mrf.mxu0
        %v4089 = vadd.f32 0.0, %v4088
        %4090 = vmatprep.mubr.f32.mxu0 0.0
        %4091 = vmatmul.mubr.f32.gmra.mxu0 %v3834
        %v4092 = vpop.f32.mrf.mxu0
        %v4093 = vadd.f32 0.0, %v4092
        %v4094 = vpop.f32.mrf.mxu0
        %v4095 = vadd.f32 0.0, %v4094
        %4096 = vdwg.mxu0
        %v4097 = vmax.f32 %v834, %v840
        %v4098 = vmax.f32 %v4097, %v846
        %v4099 = vmax.f32 %v4098, %v852
        %v4100 = vmax.f32 %v4099, %v858
        %v4101 = vmax.f32 %v4100, %v864
        %v4102 = vmax.f32 %v4101, %v870
        %v4103 = vmax.f32 %v4102, %v876
        %v4104 = vmax.f32 %v4103, %v882
        %v4105 = vmax.f32 %v4104, %v888
        %v4106 = vmax.f32 %v4105, %v894
        %v4107 = vmax.f32 %v4106, %v900
        %v4108 = vmax.f32 %v4107, %v906
        %v4109 = vmax.f32 %v4108, %v912
        %v4110 = vmax.f32 %v4109, %v918
        %v4111 = vmax.f32 %v4110, %v924
        %v4112 = vmax.f32 %v4111, %v930
        %v4113 = vmax.f32 %v4112, %v936
        %v4114 = vmax.f32 %v4113, %v942
        %v4115 = vmax.f32 %v4114, %v948
        %v4116 = vmax.f32 %v4115, %v954
        %v4117 = vmax.f32 %v4116, %v960
        %v4118 = vmax.f32 %v4117, %v966
        %v4119 = vmax.f32 %v4118, %v972
        %v4120 = vmax.f32 %v4119, %v978
        %v4121 = vmax.f32 %v4120, %v984
        %v4122 = vmax.f32 %v4121, %v990
        %v4123 = vmax.f32 %v4122, %v996
        %v4124 = vmax.f32 %v4123, %v1002
        %v4125 = vmax.f32 %v4124, %v1008
        %v4126 = vmax.f32 %v4125, %v1014
        %v4127 = vmax.f32 %v4126, %v1020
        %v4128 = vrot.slane %v4127, 4
        %v4129 = vmax.f32 %v4127, %v4128
        %v4130 = vrot.slane %v4129, 2
        %v4131 = vmax.f32 %v4129, %v4130
        %v4132 = vrot.slane %v4131, 1
        %v4133 = vmax.f32 %v4131, %v4132
        %v4134 = vmax.f32 %v836, %v842
        %v4135 = vmax.f32 %v4134, %v848
        %v4136 = vmax.f32 %v4135, %v854
        %v4137 = vmax.f32 %v4136, %v860
        %v4138 = vmax.f32 %v4137, %v866
        %v4139 = vmax.f32 %v4138, %v872
        %v4140 = vmax.f32 %v4139, %v878
        %v4141 = vmax.f32 %v4140, %v884
        %v4142 = vmax.f32 %v4141, %v890
        %v4143 = vmax.f32 %v4142, %v896
        %v4144 = vmax.f32 %v4143, %v902
        %v4145 = vmax.f32 %v4144, %v908
        %v4146 = vmax.f32 %v4145, %v914
        %v4147 = vmax.f32 %v4146, %v920
        %v4148 = vmax.f32 %v4147, %v926
        %v4149 = vmax.f32 %v4148, %v932
        %v4150 = vmax.f32 %v4149, %v938
        %v4151 = vmax.f32 %v4150, %v944
        %v4152 = vmax.f32 %v4151, %v950
        %v4153 = vmax.f32 %v4152, %v956
        %v4154 = vmax.f32 %v4153, %v962
        %v4155 = vmax.f32 %v4154, %v968
        %v4156 = vmax.f32 %v4155, %v974
        %v4157 = vmax.f32 %v4156, %v980
        %v4158 = vmax.f32 %v4157, %v986
        %v4159 = vmax.f32 %v4158, %v992
        %v4160 = vmax.f32 %v4159, %v998
        %v4161 = vmax.f32 %v4160, %v1004
        %v4162 = vmax.f32 %v4161, %v1010
        %v4163 = vmax.f32 %v4162, %v1016
        %v4164 = vmax.f32 %v4163, %v1022
        %v4165 = vrot.slane %v4164, 4
        %v4166 = vmax.f32 %v4164, %v4165
        %v4167 = vrot.slane %v4166, 2
        %v4168 = vmax.f32 %v4166, %v4167
        %v4169 = vrot.slane %v4168, 1
        %v4170 = vmax.f32 %v4168, %v4169
        %v4171 = vmax.f32 %v1273, %v1279
        %v4172 = vmax.f32 %v4171, %v1285
        %v4173 = vmax.f32 %v4172, %v1291
        %v4174 = vmax.f32 %v4173, %v1297
        %v4175 = vmax.f32 %v4174, %v1303
        %v4176 = vmax.f32 %v4175, %v1309
        %v4177 = vmax.f32 %v4176, %v1315
        %v4178 = vmax.f32 %v4177, %v1321
        %v4179 = vmax.f32 %v4178, %v1327
        %v4180 = vmax.f32 %v4179, %v1333
        %v4181 = vmax.f32 %v4180, %v1339
        %v4182 = vmax.f32 %v4181, %v1345
        %v4183 = vmax.f32 %v4182, %v1351
        %v4184 = vmax.f32 %v4183, %v1357
        %v4185 = vmax.f32 %v4184, %v1363
        %v4186 = vmax.f32 %v4185, %v1369
        %v4187 = vmax.f32 %v4186, %v1375
        %v4188 = vmax.f32 %v4187, %v1381
        %v4189 = vmax.f32 %v4188, %v1387
        %v4190 = vmax.f32 %v4189, %v1393
        %v4191 = vmax.f32 %v4190, %v1399
        %v4192 = vmax.f32 %v4191, %v1405
        %v4193 = vmax.f32 %v4192, %v1411
        %v4194 = vmax.f32 %v4193, %v1417
        %v4195 = vmax.f32 %v4194, %v1423
        %v4196 = vmax.f32 %v4195, %v1429
        %v4197 = vmax.f32 %v4196, %v1435
        %v4198 = vmax.f32 %v4197, %v1441
        %v4199 = vmax.f32 %v4198, %v1447
        %v4200 = vmax.f32 %v4199, %v1453
        %v4201 = vmax.f32 %v4200, %v1459
        %v4202 = vrot.slane %v4201, 4
        %v4203 = vmax.f32 %v4201, %v4202
        %v4204 = vrot.slane %v4203, 2
        %v4205 = vmax.f32 %v4203, %v4204
        %v4206 = vrot.slane %v4205, 1
        %v4207 = vmax.f32 %v4205, %v4206
        %v4208 = vmax.f32 %v1275, %v1281
        %v4209 = vmax.f32 %v4208, %v1287
        %v4210 = vmax.f32 %v4209, %v1293
        %v4211 = vmax.f32 %v4210, %v1299
        %v4212 = vmax.f32 %v4211, %v1305
        %v4213 = vmax.f32 %v4212, %v1311
        %v4214 = vmax.f32 %v4213, %v1317
        %v4215 = vmax.f32 %v4214, %v1323
        %v4216 = vmax.f32 %v4215, %v1329
        %v4217 = vmax.f32 %v4216, %v1335
        %v4218 = vmax.f32 %v4217, %v1341
        %v4219 = vmax.f32 %v4218, %v1347
        %v4220 = vmax.f32 %v4219, %v1353
        %v4221 = vmax.f32 %v4220, %v1359
        %v4222 = vmax.f32 %v4221, %v1365
        %v4223 = vmax.f32 %v4222, %v1371
        %v4224 = vmax.f32 %v4223, %v1377
        %v4225 = vmax.f32 %v4224, %v1383
        %v4226 = vmax.f32 %v4225, %v1389
        %v4227 = vmax.f32 %v4226, %v1395
        %v4228 = vmax.f32 %v4227, %v1401
        %v4229 = vmax.f32 %v4228, %v1407
        %v4230 = vmax.f32 %v4229, %v1413
        %v4231 = vmax.f32 %v4230, %v1419
        %v4232 = vmax.f32 %v4231, %v1425
        %v4233 = vmax.f32 %v4232, %v1431
        %v4234 = vmax.f32 %v4233, %v1437
        %v4235 = vmax.f32 %v4234, %v1443
        %v4236 = vmax.f32 %v4235, %v1449
        %v4237 = vmax.f32 %v4236, %v1455
        %v4238 = vmax.f32 %v4237, %v1461
        %v4239 = vrot.slane %v4238, 4
        %v4240 = vmax.f32 %v4238, %v4239
        %v4241 = vrot.slane %v4240, 2
        %v4242 = vmax.f32 %v4240, %v4241
        %v4243 = vrot.slane %v4242, 1
        %v4244 = vmax.f32 %v4242, %v4243
        %v4245 = vmax.f32 %v1712, %v1718
        %v4246 = vmax.f32 %v4245, %v1724
        %v4247 = vmax.f32 %v4246, %v1730
        %v4248 = vmax.f32 %v4247, %v1736
        %v4249 = vmax.f32 %v4248, %v1742
        %v4250 = vmax.f32 %v4249, %v1748
        %v4251 = vmax.f32 %v4250, %v1754
        %v4252 = vmax.f32 %v4251, %v1760
        %v4253 = vmax.f32 %v4252, %v1766
        %v4254 = vmax.f32 %v4253, %v1772
        %v4255 = vmax.f32 %v4254, %v1778
        %v4256 = vmax.f32 %v4255, %v1784
        %v4257 = vmax.f32 %v4256, %v1790
        %v4258 = vmax.f32 %v4257, %v1796
        %v4259 = vmax.f32 %v4258, %v1802
        %v4260 = vmax.f32 %v4259, %v1808
        %v4261 = vmax.f32 %v4260, %v1814
        %v4262 = vmax.f32 %v4261, %v1820
        %v4263 = vmax.f32 %v4262, %v1826
        %v4264 = vmax.f32 %v4263, %v1832
        %v4265 = vmax.f32 %v4264, %v1838
        %v4266 = vmax.f32 %v4265, %v1844
        %v4267 = vmax.f32 %v4266, %v1850
        %v4268 = vmax.f32 %v4267, %v1856
        %v4269 = vmax.f32 %v4268, %v1862
        %v4270 = vmax.f32 %v4269, %v1868
        %v4271 = vmax.f32 %v4270, %v1874
        %v4272 = vmax.f32 %v4271, %v1880
        %v4273 = vmax.f32 %v4272, %v1886
        %v4274 = vmax.f32 %v4273, %v1892
        %v4275 = vmax.f32 %v4274, %v1898
        %v4276 = vrot.slane %v4275, 4
        %v4277 = vmax.f32 %v4275, %v4276
        %v4278 = vrot.slane %v4277, 2
        %v4279 = vmax.f32 %v4277, %v4278
        %v4280 = vrot.slane %v4279, 1
        %v4281 = vmax.f32 %v4279, %v4280
        %v4282 = vmax.f32 %v1714, %v1720
        %v4283 = vmax.f32 %v4282, %v1726
        %v4284 = vmax.f32 %v4283, %v1732
        %v4285 = vmax.f32 %v4284, %v1738
        %v4286 = vmax.f32 %v4285, %v1744
        %v4287 = vmax.f32 %v4286, %v1750
        %v4288 = vmax.f32 %v4287, %v1756
        %v4289 = vmax.f32 %v4288, %v1762
        %v4290 = vmax.f32 %v4289, %v1768
        %v4291 = vmax.f32 %v4290, %v1774
        %v4292 = vmax.f32 %v4291, %v1780
        %v4293 = vmax.f32 %v4292, %v1786
        %v4294 = vmax.f32 %v4293, %v1792
        %v4295 = vmax.f32 %v4294, %v1798
        %v4296 = vmax.f32 %v4295, %v1804
        %v4297 = vmax.f32 %v4296, %v1810
        %v4298 = vmax.f32 %v4297, %v1816
        %v4299 = vmax.f32 %v4298, %v1822
        %v4300 = vmax.f32 %v4299, %v1828
        %v4301 = vmax.f32 %v4300, %v1834
        %v4302 = vmax.f32 %v4301, %v1840
        %v4303 = vmax.f32 %v4302, %v1846
        %v4304 = vmax.f32 %v4303, %v1852
        %v4305 = vmax.f32 %v4304, %v1858
        %v4306 = vmax.f32 %v4305, %v1864
        %v4307 = vmax.f32 %v4306, %v1870
        %v4308 = vmax.f32 %v4307, %v1876
        %v4309 = vmax.f32 %v4308, %v1882
        %v4310 = vmax.f32 %v4309, %v1888
        %v4311 = vmax.f32 %v4310, %v1894
        %v4312 = vmax.f32 %v4311, %v1900
        %v4313 = vrot.slane %v4312, 4
        %v4314 = vmax.f32 %v4312, %v4313
        %v4315 = vrot.slane %v4314, 2
        %v4316 = vmax.f32 %v4314, %v4315
        %v4317 = vrot.slane %v4316, 1
        %v4318 = vmax.f32 %v4316, %v4317
        %v4319 = vmax.f32 %v2151, %v2157
        %v4320 = vmax.f32 %v4319, %v2163
        %v4321 = vmax.f32 %v4320, %v2169
        %v4322 = vmax.f32 %v4321, %v2175
        %v4323 = vmax.f32 %v4322, %v2181
        %v4324 = vmax.f32 %v4323, %v2187
        %v4325 = vmax.f32 %v4324, %v2193
        %v4326 = vmax.f32 %v4325, %v2199
        %v4327 = vmax.f32 %v4326, %v2205
        %v4328 = vmax.f32 %v4327, %v2211
        %v4329 = vmax.f32 %v4328, %v2217
        %v4330 = vmax.f32 %v4329, %v2223
        %v4331 = vmax.f32 %v4330, %v2229
        %v4332 = vmax.f32 %v4331, %v2235
        %v4333 = vmax.f32 %v4332, %v2241
        %v4334 = vmax.f32 %v4333, %v2247
        %v4335 = vmax.f32 %v4334, %v2253
        %v4336 = vmax.f32 %v4335, %v2259
        %v4337 = vmax.f32 %v4336, %v2265
        %v4338 = vmax.f32 %v4337, %v2271
        %v4339 = vmax.f32 %v4338, %v2277
        %v4340 = vmax.f32 %v4339, %v2283
        %v4341 = vmax.f32 %v4340, %v2289
        %v4342 = vmax.f32 %v4341, %v2295
        %v4343 = vmax.f32 %v4342, %v2301
        %v4344 = vmax.f32 %v4343, %v2307
        %v4345 = vmax.f32 %v4344, %v2313
        %v4346 = vmax.f32 %v4345, %v2319
        %v4347 = vmax.f32 %v4346, %v2325
        %v4348 = vmax.f32 %v4347, %v2331
        %v4349 = vmax.f32 %v4348, %v2337
        %v4350 = vrot.slane %v4349, 4
        %v4351 = vmax.f32 %v4349, %v4350
        %v4352 = vrot.slane %v4351, 2
        %v4353 = vmax.f32 %v4351, %v4352
        %v4354 = vrot.slane %v4353, 1
        %v4355 = vmax.f32 %v4353, %v4354
        %v4356 = vmax.f32 %v2153, %v2159
        %v4357 = vmax.f32 %v4356, %v2165
        %v4358 = vmax.f32 %v4357, %v2171
        %v4359 = vmax.f32 %v4358, %v2177
        %v4360 = vmax.f32 %v4359, %v2183
        %v4361 = vmax.f32 %v4360, %v2189
        %v4362 = vmax.f32 %v4361, %v2195
        %v4363 = vmax.f32 %v4362, %v2201
        %v4364 = vmax.f32 %v4363, %v2207
        %v4365 = vmax.f32 %v4364, %v2213
        %v4366 = vmax.f32 %v4365, %v2219
        %v4367 = vmax.f32 %v4366, %v2225
        %v4368 = vmax.f32 %v4367, %v2231
        %v4369 = vmax.f32 %v4368, %v2237
        %v4370 = vmax.f32 %v4369, %v2243
        %v4371 = vmax.f32 %v4370, %v2249
        %v4372 = vmax.f32 %v4371, %v2255
        %v4373 = vmax.f32 %v4372, %v2261
        %v4374 = vmax.f32 %v4373, %v2267
        %v4375 = vmax.f32 %v4374, %v2273
        %v4376 = vmax.f32 %v4375, %v2279
        %v4377 = vmax.f32 %v4376, %v2285
        %v4378 = vmax.f32 %v4377, %v2291
        %v4379 = vmax.f32 %v4378, %v2297
        %v4380 = vmax.f32 %v4379, %v2303
        %v4381 = vmax.f32 %v4380, %v2309
        %v4382 = vmax.f32 %v4381, %v2315
        %v4383 = vmax.f32 %v4382, %v2321
        %v4384 = vmax.f32 %v4383, %v2327
        %v4385 = vmax.f32 %v4384, %v2333
        %v4386 = vmax.f32 %v4385, %v2339
        %v4387 = vrot.slane %v4386, 4
        %v4388 = vmax.f32 %v4386, %v4387
        %v4389 = vrot.slane %v4388, 2
        %v4390 = vmax.f32 %v4388, %v4389
        %v4391 = vrot.slane %v4390, 1
        %v4392 = vmax.f32 %v4390, %v4391
        %v4393 = vmax.f32 %v2590, %v2596
        %v4394 = vmax.f32 %v4393, %v2602
        %v4395 = vmax.f32 %v4394, %v2608
        %v4396 = vmax.f32 %v4395, %v2614
        %v4397 = vmax.f32 %v4396, %v2620
        %v4398 = vmax.f32 %v4397, %v2626
        %v4399 = vmax.f32 %v4398, %v2632
        %v4400 = vmax.f32 %v4399, %v2638
        %v4401 = vmax.f32 %v4400, %v2644
        %v4402 = vmax.f32 %v4401, %v2650
        %v4403 = vmax.f32 %v4402, %v2656
        %v4404 = vmax.f32 %v4403, %v2662
        %v4405 = vmax.f32 %v4404, %v2668
        %v4406 = vmax.f32 %v4405, %v2674
        %v4407 = vmax.f32 %v4406, %v2680
        %v4408 = vmax.f32 %v4407, %v2686
        %v4409 = vmax.f32 %v4408, %v2692
        %v4410 = vmax.f32 %v4409, %v2698
        %v4411 = vmax.f32 %v4410, %v2704
        %v4412 = vmax.f32 %v4411, %v2710
        %v4413 = vmax.f32 %v4412, %v2716
        %v4414 = vmax.f32 %v4413, %v2722
        %v4415 = vmax.f32 %v4414, %v2728
        %v4416 = vmax.f32 %v4415, %v2734
        %v4417 = vmax.f32 %v4416, %v2740
        %v4418 = vmax.f32 %v4417, %v2746
        %v4419 = vmax.f32 %v4418, %v2752
        %v4420 = vmax.f32 %v4419, %v2758
        %v4421 = vmax.f32 %v4420, %v2764
        %v4422 = vmax.f32 %v4421, %v2770
        %v4423 = vmax.f32 %v4422, %v2776
        %v4424 = vrot.slane %v4423, 4
        %v4425 = vmax.f32 %v4423, %v4424
        %v4426 = vrot.slane %v4425, 2
        %v4427 = vmax.f32 %v4425, %v4426
        %v4428 = vrot.slane %v4427, 1
        %v4429 = vmax.f32 %v4427, %v4428
        %v4430 = vmax.f32 %v2592, %v2598
        %v4431 = vmax.f32 %v4430, %v2604
        %v4432 = vmax.f32 %v4431, %v2610
        %v4433 = vmax.f32 %v4432, %v2616
        %v4434 = vmax.f32 %v4433, %v2622
        %v4435 = vmax.f32 %v4434, %v2628
        %v4436 = vmax.f32 %v4435, %v2634
        %v4437 = vmax.f32 %v4436, %v2640
        %v4438 = vmax.f32 %v4437, %v2646
        %v4439 = vmax.f32 %v4438, %v2652
        %v4440 = vmax.f32 %v4439, %v2658
        %v4441 = vmax.f32 %v4440, %v2664
        %v4442 = vmax.f32 %v4441, %v2670
        %v4443 = vmax.f32 %v4442, %v2676
        %v4444 = vmax.f32 %v4443, %v2682
        %v4445 = vmax.f32 %v4444, %v2688
        %v4446 = vmax.f32 %v4445, %v2694
        %v4447 = vmax.f32 %v4446, %v2700
        %v4448 = vmax.f32 %v4447, %v2706
        %v4449 = vmax.f32 %v4448, %v2712
        %v4450 = vmax.f32 %v4449, %v2718
        %v4451 = vmax.f32 %v4450, %v2724
        %v4452 = vmax.f32 %v4451, %v2730
        %v4453 = vmax.f32 %v4452, %v2736
        %v4454 = vmax.f32 %v4453, %v2742
        %v4455 = vmax.f32 %v4454, %v2748
        %v4456 = vmax.f32 %v4455, %v2754
        %v4457 = vmax.f32 %v4456, %v2760
        %v4458 = vmax.f32 %v4457, %v2766
        %v4459 = vmax.f32 %v4458, %v2772
        %v4460 = vmax.f32 %v4459, %v2778
        %v4461 = vrot.slane %v4460, 4
        %v4462 = vmax.f32 %v4460, %v4461
        %v4463 = vrot.slane %v4462, 2
        %v4464 = vmax.f32 %v4462, %v4463
        %v4465 = vrot.slane %v4464, 1
        %v4466 = vmax.f32 %v4464, %v4465
        %v4467 = vmax.f32 %v3029, %v3035
        %v4468 = vmax.f32 %v4467, %v3041
        %v4469 = vmax.f32 %v4468, %v3047
        %v4470 = vmax.f32 %v4469, %v3053
        %v4471 = vmax.f32 %v4470, %v3059
        %v4472 = vmax.f32 %v4471, %v3065
        %v4473 = vmax.f32 %v4472, %v3071
        %v4474 = vmax.f32 %v4473, %v3077
        %v4475 = vmax.f32 %v4474, %v3083
        %v4476 = vmax.f32 %v4475, %v3089
        %v4477 = vmax.f32 %v4476, %v3095
        %v4478 = vmax.f32 %v4477, %v3101
        %v4479 = vmax.f32 %v4478, %v3107
        %v4480 = vmax.f32 %v4479, %v3113
        %v4481 = vmax.f32 %v4480, %v3119
        %v4482 = vmax.f32 %v4481, %v3125
        %v4483 = vmax.f32 %v4482, %v3131
        %v4484 = vmax.f32 %v4483, %v3137
        %v4485 = vmax.f32 %v4484, %v3143
        %v4486 = vmax.f32 %v4485, %v3149
        %v4487 = vmax.f32 %v4486, %v3155
        %v4488 = vmax.f32 %v4487, %v3161
        %v4489 = vmax.f32 %v4488, %v3167
        %v4490 = vmax.f32 %v4489, %v3173
        %v4491 = vmax.f32 %v4490, %v3179
        %v4492 = vmax.f32 %v4491, %v3185
        %v4493 = vmax.f32 %v4492, %v3191
        %v4494 = vmax.f32 %v4493, %v3197
        %v4495 = vmax.f32 %v4494, %v3203
        %v4496 = vmax.f32 %v4495, %v3209
        %v4497 = vmax.f32 %v4496, %v3215
        %v4498 = vrot.slane %v4497, 4
        %v4499 = vmax.f32 %v4497, %v4498
        %v4500 = vrot.slane %v4499, 2
        %v4501 = vmax.f32 %v4499, %v4500
        %v4502 = vrot.slane %v4501, 1
        %v4503 = vmax.f32 %v4501, %v4502
        %v4504 = vmax.f32 %v3031, %v3037
        %v4505 = vmax.f32 %v4504, %v3043
        %v4506 = vmax.f32 %v4505, %v3049
        %v4507 = vmax.f32 %v4506, %v3055
        %v4508 = vmax.f32 %v4507, %v3061
        %v4509 = vmax.f32 %v4508, %v3067
        %v4510 = vmax.f32 %v4509, %v3073
        %v4511 = vmax.f32 %v4510, %v3079
        %v4512 = vmax.f32 %v4511, %v3085
        %v4513 = vmax.f32 %v4512, %v3091
        %v4514 = vmax.f32 %v4513, %v3097
        %v4515 = vmax.f32 %v4514, %v3103
        %v4516 = vmax.f32 %v4515, %v3109
        %v4517 = vmax.f32 %v4516, %v3115
        %v4518 = vmax.f32 %v4517, %v3121
        %v4519 = vmax.f32 %v4518, %v3127
        %v4520 = vmax.f32 %v4519, %v3133
        %v4521 = vmax.f32 %v4520, %v3139
        %v4522 = vmax.f32 %v4521, %v3145
        %v4523 = vmax.f32 %v4522, %v3151
        %v4524 = vmax.f32 %v4523, %v3157
        %v4525 = vmax.f32 %v4524, %v3163
        %v4526 = vmax.f32 %v4525, %v3169
        %v4527 = vmax.f32 %v4526, %v3175
        %v4528 = vmax.f32 %v4527, %v3181
        %v4529 = vmax.f32 %v4528, %v3187
        %v4530 = vmax.f32 %v4529, %v3193
        %v4531 = vmax.f32 %v4530, %v3199
        %v4532 = vmax.f32 %v4531, %v3205
        %v4533 = vmax.f32 %v4532, %v3211
        %v4534 = vmax.f32 %v4533, %v3217
        %v4535 = vrot.slane %v4534, 4
        %v4536 = vmax.f32 %v4534, %v4535
        %v4537 = vrot.slane %v4536, 2
        %v4538 = vmax.f32 %v4536, %v4537
        %v4539 = vrot.slane %v4538, 1
        %v4540 = vmax.f32 %v4538, %v4539
        %v4541 = vmax.f32 %v3468, %v3474
        %v4542 = vmax.f32 %v4541, %v3480
        %v4543 = vmax.f32 %v4542, %v3486
        %v4544 = vmax.f32 %v4543, %v3492
        %v4545 = vmax.f32 %v4544, %v3498
        %v4546 = vmax.f32 %v4545, %v3504
        %v4547 = vmax.f32 %v4546, %v3510
        %v4548 = vmax.f32 %v4547, %v3516
        %v4549 = vmax.f32 %v4548, %v3522
        %v4550 = vmax.f32 %v4549, %v3528
        %v4551 = vmax.f32 %v4550, %v3534
        %v4552 = vmax.f32 %v4551, %v3540
        %v4553 = vmax.f32 %v4552, %v3546
        %v4554 = vmax.f32 %v4553, %v3552
        %v4555 = vmax.f32 %v4554, %v3558
        %v4556 = vmax.f32 %v4555, %v3564
        %v4557 = vmax.f32 %v4556, %v3570
        %v4558 = vmax.f32 %v4557, %v3576
        %v4559 = vmax.f32 %v4558, %v3582
        %v4560 = vmax.f32 %v4559, %v3588
        %v4561 = vmax.f32 %v4560, %v3594
        %v4562 = vmax.f32 %v4561, %v3600
        %v4563 = vmax.f32 %v4562, %v3606
        %v4564 = vmax.f32 %v4563, %v3612
        %v4565 = vmax.f32 %v4564, %v3618
        %v4566 = vmax.f32 %v4565, %v3624
        %v4567 = vmax.f32 %v4566, %v3630
        %v4568 = vmax.f32 %v4567, %v3636
        %v4569 = vmax.f32 %v4568, %v3642
        %v4570 = vmax.f32 %v4569, %v3648
        %v4571 = vmax.f32 %v4570, %v3654
        %v4572 = vrot.slane %v4571, 4
        %v4573 = vmax.f32 %v4571, %v4572
        %v4574 = vrot.slane %v4573, 2
        %v4575 = vmax.f32 %v4573, %v4574
        %v4576 = vrot.slane %v4575, 1
        %v4577 = vmax.f32 %v4575, %v4576
        %v4578 = vmax.f32 %v3470, %v3476
        %v4579 = vmax.f32 %v4578, %v3482
        %v4580 = vmax.f32 %v4579, %v3488
        %v4581 = vmax.f32 %v4580, %v3494
        %v4582 = vmax.f32 %v4581, %v3500
        %v4583 = vmax.f32 %v4582, %v3506
        %v4584 = vmax.f32 %v4583, %v3512
        %v4585 = vmax.f32 %v4584, %v3518
        %v4586 = vmax.f32 %v4585, %v3524
        %v4587 = vmax.f32 %v4586, %v3530
        %v4588 = vmax.f32 %v4587, %v3536
        %v4589 = vmax.f32 %v4588, %v3542
        %v4590 = vmax.f32 %v4589, %v3548
        %v4591 = vmax.f32 %v4590, %v3554
        %v4592 = vmax.f32 %v4591, %v3560
        %v4593 = vmax.f32 %v4592, %v3566
        %v4594 = vmax.f32 %v4593, %v3572
        %v4595 = vmax.f32 %v4594, %v3578
        %v4596 = vmax.f32 %v4595, %v3584
        %v4597 = vmax.f32 %v4596, %v3590
        %v4598 = vmax.f32 %v4597, %v3596
        %v4599 = vmax.f32 %v4598, %v3602
        %v4600 = vmax.f32 %v4599, %v3608
        %v4601 = vmax.f32 %v4600, %v3614
        %v4602 = vmax.f32 %v4601, %v3620
        %v4603 = vmax.f32 %v4602, %v3626
        %v4604 = vmax.f32 %v4603, %v3632
        %v4605 = vmax.f32 %v4604, %v3638
        %v4606 = vmax.f32 %v4605, %v3644
        %v4607 = vmax.f32 %v4606, %v3650
        %v4608 = vmax.f32 %v4607, %v3656
        %v4609 = vrot.slane %v4608, 4
        %v4610 = vmax.f32 %v4608, %v4609
        %v4611 = vrot.slane %v4610, 2
        %v4612 = vmax.f32 %v4610, %v4611
        %v4613 = vrot.slane %v4612, 1
        %v4614 = vmax.f32 %v4612, %v4613
        %v4615 = vmax.f32 %v3907, %v3913
        %v4616 = vmax.f32 %v4615, %v3919
        %v4617 = vmax.f32 %v4616, %v3925
        %v4618 = vmax.f32 %v4617, %v3931
        %v4619 = vmax.f32 %v4618, %v3937
        %v4620 = vmax.f32 %v4619, %v3943
        %v4621 = vmax.f32 %v4620, %v3949
        %v4622 = vmax.f32 %v4621, %v3955
        %v4623 = vmax.f32 %v4622, %v3961
        %v4624 = vmax.f32 %v4623, %v3967
        %v4625 = vmax.f32 %v4624, %v3973
        %v4626 = vmax.f32 %v4625, %v3979
        %v4627 = vmax.f32 %v4626, %v3985
        %v4628 = vmax.f32 %v4627, %v3991
        %v4629 = vmax.f32 %v4628, %v3997
        %v4630 = vmax.f32 %v4629, %v4003
        %v4631 = vmax.f32 %v4630, %v4009
        %v4632 = vmax.f32 %v4631, %v4015
        %v4633 = vmax.f32 %v4632, %v4021
        %v4634 = vmax.f32 %v4633, %v4027
        %v4635 = vmax.f32 %v4634, %v4033
        %v4636 = vmax.f32 %v4635, %v4039
        %v4637 = vmax.f32 %v4636, %v4045
        %v4638 = vmax.f32 %v4637, %v4051
        %v4639 = vmax.f32 %v4638, %v4057
        %v4640 = vmax.f32 %v4639, %v4063
        %v4641 = vmax.f32 %v4640, %v4069
        %v4642 = vmax.f32 %v4641, %v4075
        %v4643 = vmax.f32 %v4642, %v4081
        %v4644 = vmax.f32 %v4643, %v4087
        %v4645 = vmax.f32 %v4644, %v4093
        %v4646 = vrot.slane %v4645, 4
        %v4647 = vmax.f32 %v4645, %v4646
        %v4648 = vrot.slane %v4647, 2
        %v4649 = vmax.f32 %v4647, %v4648
        %v4650 = vrot.slane %v4649, 1
        %v4651 = vmax.f32 %v4649, %v4650
        %v4652 = vmax.f32 %v3909, %v3915
        %v4653 = vmax.f32 %v4652, %v3921
        %v4654 = vmax.f32 %v4653, %v3927
        %v4655 = vmax.f32 %v4654, %v3933
        %v4656 = vmax.f32 %v4655, %v3939
        %v4657 = vmax.f32 %v4656, %v3945
        %v4658 = vmax.f32 %v4657, %v3951
        %v4659 = vmax.f32 %v4658, %v3957
        %v4660 = vmax.f32 %v4659, %v3963
        %v4661 = vmax.f32 %v4660, %v3969
        %v4662 = vmax.f32 %v4661, %v3975
        %v4663 = vmax.f32 %v4662, %v3981
        %v4664 = vmax.f32 %v4663, %v3987
        %v4665 = vmax.f32 %v4664, %v3993
        %v4666 = vmax.f32 %v4665, %v3999
        %v4667 = vmax.f32 %v4666, %v4005
        %v4668 = vmax.f32 %v4667, %v4011
        %v4669 = vmax.f32 %v4668, %v4017
        %v4670 = vmax.f32 %v4669, %v4023
        %v4671 = vmax.f32 %v4670, %v4029
        %v4672 = vmax.f32 %v4671, %v4035
        %v4673 = vmax.f32 %v4672, %v4041
        %v4674 = vmax.f32 %v4673, %v4047
        %v4675 = vmax.f32 %v4674, %v4053
        %v4676 = vmax.f32 %v4675, %v4059
        %v4677 = vmax.f32 %v4676, %v4065
        %v4678 = vmax.f32 %v4677, %v4071
        %v4679 = vmax.f32 %v4678, %v4077
        %v4680 = vmax.f32 %v4679, %v4083
        %v4681 = vmax.f32 %v4680, %v4089
        %v4682 = vmax.f32 %v4681, %v4095
        %v4683 = vrot.slane %v4682, 4
        %v4684 = vmax.f32 %v4682, %v4683
        %v4685 = vrot.slane %v4684, 2
        %v4686 = vmax.f32 %v4684, %v4685
        %v4687 = vrot.slane %v4686, 1
        %v4688 = vmax.f32 %v4686, %v4687
        %v4689 = vsub.f32 %v834, %v4133
        %v4690 = vsub.f32 %v836, %v4170
        %v4691 = vsub.f32 %v840, %v4133
        %v4692 = vsub.f32 %v842, %v4170
        %v4693 = vsub.f32 %v846, %v4133
        %v4694 = vsub.f32 %v848, %v4170
        %v4695 = vsub.f32 %v852, %v4133
        %v4696 = vsub.f32 %v854, %v4170
        %v4697 = vsub.f32 %v858, %v4133
        %v4698 = vsub.f32 %v860, %v4170
        %v4699 = vsub.f32 %v864, %v4133
        %v4700 = vsub.f32 %v866, %v4170
        %v4701 = vsub.f32 %v870, %v4133
        %v4702 = vsub.f32 %v872, %v4170
        %v4703 = vsub.f32 %v876, %v4133
        %v4704 = vsub.f32 %v878, %v4170
        %v4705 = vsub.f32 %v882, %v4133
        %v4706 = vsub.f32 %v884, %v4170
        %v4707 = vsub.f32 %v888, %v4133
        %v4708 = vsub.f32 %v890, %v4170
        %v4709 = vsub.f32 %v894, %v4133
        %v4710 = vsub.f32 %v896, %v4170
        %v4711 = vsub.f32 %v900, %v4133
        %v4712 = vsub.f32 %v902, %v4170
        %v4713 = vsub.f32 %v906, %v4133
        %v4714 = vsub.f32 %v908, %v4170
        %v4715 = vsub.f32 %v912, %v4133
        %v4716 = vsub.f32 %v914, %v4170
        %v4717 = vsub.f32 %v918, %v4133
        %v4718 = vsub.f32 %v920, %v4170
        %v4719 = vsub.f32 %v924, %v4133
        %v4720 = vsub.f32 %v926, %v4170
        %v4721 = vsub.f32 %v930, %v4133
        %v4722 = vsub.f32 %v932, %v4170
        %v4723 = vsub.f32 %v936, %v4133
        %v4724 = vsub.f32 %v938, %v4170
        %v4725 = vsub.f32 %v942, %v4133
        %v4726 = vsub.f32 %v944, %v4170
        %v4727 = vsub.f32 %v948, %v4133
        %v4728 = vsub.f32 %v950, %v4170
        %v4729 = vsub.f32 %v954, %v4133
        %v4730 = vsub.f32 %v956, %v4170
        %v4731 = vsub.f32 %v960, %v4133
        %v4732 = vsub.f32 %v962, %v4170
        %v4733 = vsub.f32 %v966, %v4133
        %v4734 = vsub.f32 %v968, %v4170
        %v4735 = vsub.f32 %v972, %v4133
        %v4736 = vsub.f32 %v974, %v4170
        %v4737 = vsub.f32 %v978, %v4133
        %v4738 = vsub.f32 %v980, %v4170
        %v4739 = vsub.f32 %v984, %v4133
        %v4740 = vsub.f32 %v986, %v4170
        %v4741 = vsub.f32 %v990, %v4133
        %v4742 = vsub.f32 %v992, %v4170
        %v4743 = vsub.f32 %v996, %v4133
        %v4744 = vsub.f32 %v998, %v4170
        %v4745 = vsub.f32 %v1002, %v4133
        %v4746 = vsub.f32 %v1004, %v4170
        %v4747 = vsub.f32 %v1008, %v4133
        %v4748 = vsub.f32 %v1010, %v4170
        %v4749 = vsub.f32 %v1014, %v4133
        %v4750 = vsub.f32 %v1016, %v4170
        %v4751 = vsub.f32 %v1020, %v4133
        %v4752 = vsub.f32 %v1022, %v4170
        %v4753 = vsub.f32 %v1273, %v4207
        %v4754 = vsub.f32 %v1275, %v4244
        %v4755 = vsub.f32 %v1279, %v4207
        %v4756 = vsub.f32 %v1281, %v4244
        %v4757 = vsub.f32 %v1285, %v4207
        %v4758 = vsub.f32 %v1287, %v4244
        %v4759 = vsub.f32 %v1291, %v4207
        %v4760 = vsub.f32 %v1293, %v4244
        %v4761 = vsub.f32 %v1297, %v4207
        %v4762 = vsub.f32 %v1299, %v4244
        %v4763 = vsub.f32 %v1303, %v4207
        %v4764 = vsub.f32 %v1305, %v4244
        %v4765 = vsub.f32 %v1309, %v4207
        %v4766 = vsub.f32 %v1311, %v4244
        %v4767 = vsub.f32 %v1315, %v4207
        %v4768 = vsub.f32 %v1317, %v4244
        %v4769 = vsub.f32 %v1321, %v4207
        %v4770 = vsub.f32 %v1323, %v4244
        %v4771 = vsub.f32 %v1327, %v4207
        %v4772 = vsub.f32 %v1329, %v4244
        %v4773 = vsub.f32 %v1333, %v4207
        %v4774 = vsub.f32 %v1335, %v4244
        %v4775 = vsub.f32 %v1339, %v4207
        %v4776 = vsub.f32 %v1341, %v4244
        %v4777 = vsub.f32 %v1345, %v4207
        %v4778 = vsub.f32 %v1347, %v4244
        %v4779 = vsub.f32 %v1351, %v4207
        %v4780 = vsub.f32 %v1353, %v4244
        %v4781 = vsub.f32 %v1357, %v4207
        %v4782 = vsub.f32 %v1359, %v4244
        %v4783 = vsub.f32 %v1363, %v4207
        %v4784 = vsub.f32 %v1365, %v4244
        %v4785 = vsub.f32 %v1369, %v4207
        %v4786 = vsub.f32 %v1371, %v4244
        %v4787 = vsub.f32 %v1375, %v4207
        %v4788 = vsub.f32 %v1377, %v4244
        %v4789 = vsub.f32 %v1381, %v4207
        %v4790 = vsub.f32 %v1383, %v4244
        %v4791 = vsub.f32 %v1387, %v4207
        %v4792 = vsub.f32 %v1389, %v4244
        %v4793 = vsub.f32 %v1393, %v4207
        %v4794 = vsub.f32 %v1395, %v4244
        %v4795 = vsub.f32 %v1399, %v4207
        %v4796 = vsub.f32 %v1401, %v4244
        %v4797 = vsub.f32 %v1405, %v4207
        %v4798 = vsub.f32 %v1407, %v4244
        %v4799 = vsub.f32 %v1411, %v4207
        %v4800 = vsub.f32 %v1413, %v4244
        %v4801 = vsub.f32 %v1417, %v4207
        %v4802 = vsub.f32 %v1419, %v4244
        %v4803 = vsub.f32 %v1423, %v4207
        %v4804 = vsub.f32 %v1425, %v4244
        %v4805 = vsub.f32 %v1429, %v4207
        %v4806 = vsub.f32 %v1431, %v4244
        %v4807 = vsub.f32 %v1435, %v4207
        %v4808 = vsub.f32 %v1437, %v4244
        %v4809 = vsub.f32 %v1441, %v4207
        %v4810 = vsub.f32 %v1443, %v4244
        %v4811 = vsub.f32 %v1447, %v4207
        %v4812 = vsub.f32 %v1449, %v4244
        %v4813 = vsub.f32 %v1453, %v4207
        %v4814 = vsub.f32 %v1455, %v4244
        %v4815 = vsub.f32 %v1459, %v4207
        %v4816 = vsub.f32 %v1461, %v4244
        %v4817 = vsub.f32 %v1712, %v4281
        %v4818 = vsub.f32 %v1714, %v4318
        %v4819 = vsub.f32 %v1718, %v4281
        %v4820 = vsub.f32 %v1720, %v4318
        %v4821 = vsub.f32 %v1724, %v4281
        %v4822 = vsub.f32 %v1726, %v4318
        %v4823 = vsub.f32 %v1730, %v4281
        %v4824 = vsub.f32 %v1732, %v4318
        %v4825 = vsub.f32 %v1736, %v4281
        %v4826 = vsub.f32 %v1738, %v4318
        %v4827 = vsub.f32 %v1742, %v4281
        %v4828 = vsub.f32 %v1744, %v4318
        %v4829 = vsub.f32 %v1748, %v4281
        %v4830 = vsub.f32 %v1750, %v4318
        %v4831 = vsub.f32 %v1754, %v4281
        %v4832 = vsub.f32 %v1756, %v4318
        %v4833 = vsub.f32 %v1760, %v4281
        %v4834 = vsub.f32 %v1762, %v4318
        %v4835 = vsub.f32 %v1766, %v4281
        %v4836 = vsub.f32 %v1768, %v4318
        %v4837 = vsub.f32 %v1772, %v4281
        %v4838 = vsub.f32 %v1774, %v4318
        %v4839 = vsub.f32 %v1778, %v4281
        %v4840 = vsub.f32 %v1780, %v4318
        %v4841 = vsub.f32 %v1784, %v4281
        %v4842 = vsub.f32 %v1786, %v4318
        %v4843 = vsub.f32 %v1790, %v4281
        %v4844 = vsub.f32 %v1792, %v4318
        %v4845 = vsub.f32 %v1796, %v4281
        %v4846 = vsub.f32 %v1798, %v4318
        %v4847 = vsub.f32 %v1802, %v4281
        %v4848 = vsub.f32 %v1804, %v4318
        %v4849 = vsub.f32 %v1808, %v4281
        %v4850 = vsub.f32 %v1810, %v4318
        %v4851 = vsub.f32 %v1814, %v4281
        %v4852 = vsub.f32 %v1816, %v4318
        %v4853 = vsub.f32 %v1820, %v4281
        %v4854 = vsub.f32 %v1822, %v4318
        %v4855 = vsub.f32 %v1826, %v4281
        %v4856 = vsub.f32 %v1828, %v4318
        %v4857 = vsub.f32 %v1832, %v4281
        %v4858 = vsub.f32 %v1834, %v4318
        %v4859 = vsub.f32 %v1838, %v4281
        %v4860 = vsub.f32 %v1840, %v4318
        %v4861 = vsub.f32 %v1844, %v4281
        %v4862 = vsub.f32 %v1846, %v4318
        %v4863 = vsub.f32 %v1850, %v4281
        %v4864 = vsub.f32 %v1852, %v4318
        %v4865 = vsub.f32 %v1856, %v4281
        %v4866 = vsub.f32 %v1858, %v4318
        %v4867 = vsub.f32 %v1862, %v4281
        %v4868 = vsub.f32 %v1864, %v4318
        %v4869 = vsub.f32 %v1868, %v4281
        %v4870 = vsub.f32 %v1870, %v4318
        %v4871 = vsub.f32 %v1874, %v4281
        %v4872 = vsub.f32 %v1876, %v4318
        %v4873 = vsub.f32 %v1880, %v4281
        %v4874 = vsub.f32 %v1882, %v4318
        %v4875 = vsub.f32 %v1886, %v4281
        %v4876 = vsub.f32 %v1888, %v4318
        %v4877 = vsub.f32 %v1892, %v4281
        %v4878 = vsub.f32 %v1894, %v4318
        %v4879 = vsub.f32 %v1898, %v4281
        %v4880 = vsub.f32 %v1900, %v4318
        %v4881 = vsub.f32 %v2151, %v4355
        %v4882 = vsub.f32 %v2153, %v4392
        %v4883 = vsub.f32 %v2157, %v4355
        %v4884 = vsub.f32 %v2159, %v4392
        %v4885 = vsub.f32 %v2163, %v4355
        %v4886 = vsub.f32 %v2165, %v4392
        %v4887 = vsub.f32 %v2169, %v4355
        %v4888 = vsub.f32 %v2171, %v4392
        %v4889 = vsub.f32 %v2175, %v4355
        %v4890 = vsub.f32 %v2177, %v4392
        %v4891 = vsub.f32 %v2181, %v4355
        %v4892 = vsub.f32 %v2183, %v4392
        %v4893 = vsub.f32 %v2187, %v4355
        %v4894 = vsub.f32 %v2189, %v4392
        %v4895 = vsub.f32 %v2193, %v4355
        %v4896 = vsub.f32 %v2195, %v4392
        %v4897 = vsub.f32 %v2199, %v4355
        %v4898 = vsub.f32 %v2201, %v4392
        %v4899 = vsub.f32 %v2205, %v4355
        %v4900 = vsub.f32 %v2207, %v4392
        %v4901 = vsub.f32 %v2211, %v4355
        %v4902 = vsub.f32 %v2213, %v4392
        %v4903 = vsub.f32 %v2217, %v4355
        %v4904 = vsub.f32 %v2219, %v4392
        %v4905 = vsub.f32 %v2223, %v4355
        %v4906 = vsub.f32 %v2225, %v4392
        %v4907 = vsub.f32 %v2229, %v4355
        %v4908 = vsub.f32 %v2231, %v4392
        %v4909 = vsub.f32 %v2235, %v4355
        %v4910 = vsub.f32 %v2237, %v4392
        %v4911 = vsub.f32 %v2241, %v4355
        %v4912 = vsub.f32 %v2243, %v4392
        %v4913 = vsub.f32 %v2247, %v4355
        %v4914 = vsub.f32 %v2249, %v4392
        %v4915 = vsub.f32 %v2253, %v4355
        %v4916 = vsub.f32 %v2255, %v4392
        %v4917 = vsub.f32 %v2259, %v4355
        %v4918 = vsub.f32 %v2261, %v4392
        %v4919 = vsub.f32 %v2265, %v4355
        %v4920 = vsub.f32 %v2267, %v4392
        %v4921 = vsub.f32 %v2271, %v4355
        %v4922 = vsub.f32 %v2273, %v4392
        %v4923 = vsub.f32 %v2277, %v4355
        %v4924 = vsub.f32 %v2279, %v4392
        %v4925 = vsub.f32 %v2283, %v4355
        %v4926 = vsub.f32 %v2285, %v4392
        %v4927 = vsub.f32 %v2289, %v4355
        %v4928 = vsub.f32 %v2291, %v4392
        %v4929 = vsub.f32 %v2295, %v4355
        %v4930 = vsub.f32 %v2297, %v4392
        %v4931 = vsub.f32 %v2301, %v4355
        %v4932 = vsub.f32 %v2303, %v4392
        %v4933 = vsub.f32 %v2307, %v4355
        %v4934 = vsub.f32 %v2309, %v4392
        %v4935 = vsub.f32 %v2313, %v4355
        %v4936 = vsub.f32 %v2315, %v4392
        %v4937 = vsub.f32 %v2319, %v4355
        %v4938 = vsub.f32 %v2321, %v4392
        %v4939 = vsub.f32 %v2325, %v4355
        %v4940 = vsub.f32 %v2327, %v4392
        %v4941 = vsub.f32 %v2331, %v4355
        %v4942 = vsub.f32 %v2333, %v4392
        %v4943 = vsub.f32 %v2337, %v4355
        %v4944 = vsub.f32 %v2339, %v4392
        %v4945 = vsub.f32 %v2590, %v4429
        %v4946 = vsub.f32 %v2592, %v4466
        %v4947 = vsub.f32 %v2596, %v4429
        %v4948 = vsub.f32 %v2598, %v4466
        %v4949 = vsub.f32 %v2602, %v4429
        %v4950 = vsub.f32 %v2604, %v4466
        %v4951 = vsub.f32 %v2608, %v4429
        %v4952 = vsub.f32 %v2610, %v4466
        %v4953 = vsub.f32 %v2614, %v4429
        %v4954 = vsub.f32 %v2616, %v4466
        %v4955 = vsub.f32 %v2620, %v4429
        %v4956 = vsub.f32 %v2622, %v4466
        %v4957 = vsub.f32 %v2626, %v4429
        %v4958 = vsub.f32 %v2628, %v4466
        %v4959 = vsub.f32 %v2632, %v4429
        %v4960 = vsub.f32 %v2634, %v4466
        %v4961 = vsub.f32 %v2638, %v4429
        %v4962 = vsub.f32 %v2640, %v4466
        %v4963 = vsub.f32 %v2644, %v4429
        %v4964 = vsub.f32 %v2646, %v4466
        %v4965 = vsub.f32 %v2650, %v4429
        %v4966 = vsub.f32 %v2652, %v4466
        %v4967 = vsub.f32 %v2656, %v4429
        %v4968 = vsub.f32 %v2658, %v4466
        %v4969 = vsub.f32 %v2662, %v4429
        %v4970 = vsub.f32 %v2664, %v4466
        %v4971 = vsub.f32 %v2668, %v4429
        %v4972 = vsub.f32 %v2670, %v4466
        %v4973 = vsub.f32 %v2674, %v4429
        %v4974 = vsub.f32 %v2676, %v4466
        %v4975 = vsub.f32 %v2680, %v4429
        %v4976 = vsub.f32 %v2682, %v4466
        %v4977 = vsub.f32 %v2686, %v4429
        %v4978 = vsub.f32 %v2688, %v4466
        %v4979 = vsub.f32 %v2692, %v4429
        %v4980 = vsub.f32 %v2694, %v4466
        %v4981 = vsub.f32 %v2698, %v4429
        %v4982 = vsub.f32 %v2700, %v4466
        %v4983 = vsub.f32 %v2704, %v4429
        %v4984 = vsub.f32 %v2706, %v4466
        %v4985 = vsub.f32 %v2710, %v4429
        %v4986 = vsub.f32 %v2712, %v4466
        %v4987 = vsub.f32 %v2716, %v4429
        %v4988 = vsub.f32 %v2718, %v4466
        %v4989 = vsub.f32 %v2722, %v4429
        %v4990 = vsub.f32 %v2724, %v4466
        %v4991 = vsub.f32 %v2728, %v4429
        %v4992 = vsub.f32 %v2730, %v4466
        %v4993 = vsub.f32 %v2734, %v4429
        %v4994 = vsub.f32 %v2736, %v4466
        %v4995 = vsub.f32 %v2740, %v4429
        %v4996 = vsub.f32 %v2742, %v4466
        %v4997 = vsub.f32 %v2746, %v4429
        %v4998 = vsub.f32 %v2748, %v4466
        %v4999 = vsub.f32 %v2752, %v4429
        %v5000 = vsub.f32 %v2754, %v4466
        %v5001 = vsub.f32 %v2758, %v4429
        %v5002 = vsub.f32 %v2760, %v4466
        %v5003 = vsub.f32 %v2764, %v4429
        %v5004 = vsub.f32 %v2766, %v4466
        %v5005 = vsub.f32 %v2770, %v4429
        %v5006 = vsub.f32 %v2772, %v4466
        %v5007 = vsub.f32 %v2776, %v4429
        %v5008 = vsub.f32 %v2778, %v4466
        %v5009 = vsub.f32 %v3029, %v4503
        %v5010 = vsub.f32 %v3031, %v4540
        %v5011 = vsub.f32 %v3035, %v4503
        %v5012 = vsub.f32 %v3037, %v4540
        %v5013 = vsub.f32 %v3041, %v4503
        %v5014 = vsub.f32 %v3043, %v4540
        %v5015 = vsub.f32 %v3047, %v4503
        %v5016 = vsub.f32 %v3049, %v4540
        %v5017 = vsub.f32 %v3053, %v4503
        %v5018 = vsub.f32 %v3055, %v4540
        %v5019 = vsub.f32 %v3059, %v4503
        %v5020 = vsub.f32 %v3061, %v4540
        %v5021 = vsub.f32 %v3065, %v4503
        %v5022 = vsub.f32 %v3067, %v4540
        %v5023 = vsub.f32 %v3071, %v4503
        %v5024 = vsub.f32 %v3073, %v4540
        %v5025 = vsub.f32 %v3077, %v4503
        %v5026 = vsub.f32 %v3079, %v4540
        %v5027 = vsub.f32 %v3083, %v4503
        %v5028 = vsub.f32 %v3085, %v4540
        %v5029 = vsub.f32 %v3089, %v4503
        %v5030 = vsub.f32 %v3091, %v4540
        %v5031 = vsub.f32 %v3095, %v4503
        %v5032 = vsub.f32 %v3097, %v4540
        %v5033 = vsub.f32 %v3101, %v4503
        %v5034 = vsub.f32 %v3103, %v4540
        %v5035 = vsub.f32 %v3107, %v4503
        %v5036 = vsub.f32 %v3109, %v4540
        %v5037 = vsub.f32 %v3113, %v4503
        %v5038 = vsub.f32 %v3115, %v4540
        %v5039 = vsub.f32 %v3119, %v4503
        %v5040 = vsub.f32 %v3121, %v4540
        %v5041 = vsub.f32 %v3125, %v4503
        %v5042 = vsub.f32 %v3127, %v4540
        %v5043 = vsub.f32 %v3131, %v4503
        %v5044 = vsub.f32 %v3133, %v4540
        %v5045 = vsub.f32 %v3137, %v4503
        %v5046 = vsub.f32 %v3139, %v4540
        %v5047 = vsub.f32 %v3143, %v4503
        %v5048 = vsub.f32 %v3145, %v4540
        %v5049 = vsub.f32 %v3149, %v4503
        %v5050 = vsub.f32 %v3151, %v4540
        %v5051 = vsub.f32 %v3155, %v4503
        %v5052 = vsub.f32 %v3157, %v4540
        %v5053 = vsub.f32 %v3161, %v4503
        %v5054 = vsub.f32 %v3163, %v4540
        %v5055 = vsub.f32 %v3167, %v4503
        %v5056 = vsub.f32 %v3169, %v4540
        %v5057 = vsub.f32 %v3173, %v4503
        %v5058 = vsub.f32 %v3175, %v4540
        %v5059 = vsub.f32 %v3179, %v4503
        %v5060 = vsub.f32 %v3181, %v4540
        %v5061 = vsub.f32 %v3185, %v4503
        %v5062 = vsub.f32 %v3187, %v4540
        %v5063 = vsub.f32 %v3191, %v4503
        %v5064 = vsub.f32 %v3193, %v4540
        %v5065 = vsub.f32 %v3197, %v4503
        %v5066 = vsub.f32 %v3199, %v4540
        %v5067 = vsub.f32 %v3203, %v4503
        %v5068 = vsub.f32 %v3205, %v4540
        %v5069 = vsub.f32 %v3209, %v4503
        %v5070 = vsub.f32 %v3211, %v4540
        %v5071 = vsub.f32 %v3215, %v4503
        %v5072 = vsub.f32 %v3217, %v4540
        %v5073 = vsub.f32 %v3468, %v4577
        %v5074 = vsub.f32 %v3470, %v4614
        %v5075 = vsub.f32 %v3474, %v4577
        %v5076 = vsub.f32 %v3476, %v4614
        %v5077 = vsub.f32 %v3480, %v4577
        %v5078 = vsub.f32 %v3482, %v4614
        %v5079 = vsub.f32 %v3486, %v4577
        %v5080 = vsub.f32 %v3488, %v4614
        %v5081 = vsub.f32 %v3492, %v4577
        %v5082 = vsub.f32 %v3494, %v4614
        %v5083 = vsub.f32 %v3498, %v4577
        %v5084 = vsub.f32 %v3500, %v4614
        %v5085 = vsub.f32 %v3504, %v4577
        %v5086 = vsub.f32 %v3506, %v4614
        %v5087 = vsub.f32 %v3510, %v4577
        %v5088 = vsub.f32 %v3512, %v4614
        %v5089 = vsub.f32 %v3516, %v4577
        %v5090 = vsub.f32 %v3518, %v4614
        %v5091 = vsub.f32 %v3522, %v4577
        %v5092 = vsub.f32 %v3524, %v4614
        %v5093 = vsub.f32 %v3528, %v4577
        %v5094 = vsub.f32 %v3530, %v4614
        %v5095 = vsub.f32 %v3534, %v4577
        %v5096 = vsub.f32 %v3536, %v4614
        %v5097 = vsub.f32 %v3540, %v4577
        %v5098 = vsub.f32 %v3542, %v4614
        %v5099 = vsub.f32 %v3546, %v4577
        %v5100 = vsub.f32 %v3548, %v4614
        %v5101 = vsub.f32 %v3552, %v4577
        %v5102 = vsub.f32 %v3554, %v4614
        %v5103 = vsub.f32 %v3558, %v4577
        %v5104 = vsub.f32 %v3560, %v4614
        %v5105 = vsub.f32 %v3564, %v4577
        %v5106 = vsub.f32 %v3566, %v4614
        %v5107 = vsub.f32 %v3570, %v4577
        %v5108 = vsub.f32 %v3572, %v4614
        %v5109 = vsub.f32 %v3576, %v4577
        %v5110 = vsub.f32 %v3578, %v4614
        %v5111 = vsub.f32 %v3582, %v4577
        %v5112 = vsub.f32 %v3584, %v4614
        %v5113 = vsub.f32 %v3588, %v4577
        %v5114 = vsub.f32 %v3590, %v4614
        %v5115 = vsub.f32 %v3594, %v4577
        %v5116 = vsub.f32 %v3596, %v4614
        %v5117 = vsub.f32 %v3600, %v4577
        %v5118 = vsub.f32 %v3602, %v4614
        %v5119 = vsub.f32 %v3606, %v4577
        %v5120 = vsub.f32 %v3608, %v4614
        %v5121 = vsub.f32 %v3612, %v4577
        %v5122 = vsub.f32 %v3614, %v4614
        %v5123 = vsub.f32 %v3618, %v4577
        %v5124 = vsub.f32 %v3620, %v4614
        %v5125 = vsub.f32 %v3624, %v4577
        %v5126 = vsub.f32 %v3626, %v4614
        %v5127 = vsub.f32 %v3630, %v4577
        %v5128 = vsub.f32 %v3632, %v4614
        %v5129 = vsub.f32 %v3636, %v4577
        %v5130 = vsub.f32 %v3638, %v4614
        %v5131 = vsub.f32 %v3642, %v4577
        %v5132 = vsub.f32 %v3644, %v4614
        %v5133 = vsub.f32 %v3648, %v4577
        %v5134 = vsub.f32 %v3650, %v4614
        %v5135 = vsub.f32 %v3654, %v4577
        %v5136 = vsub.f32 %v3656, %v4614
        %v5137 = vsub.f32 %v3907, %v4651
        %v5138 = vsub.f32 %v3909, %v4688
        %v5139 = vsub.f32 %v3913, %v4651
        %v5140 = vsub.f32 %v3915, %v4688
        %v5141 = vsub.f32 %v3919, %v4651
        %v5142 = vsub.f32 %v3921, %v4688
        %v5143 = vsub.f32 %v3925, %v4651
        %v5144 = vsub.f32 %v3927, %v4688
        %v5145 = vsub.f32 %v3931, %v4651
        %v5146 = vsub.f32 %v3933, %v4688
        %v5147 = vsub.f32 %v3937, %v4651
        %v5148 = vsub.f32 %v3939, %v4688
        %v5149 = vsub.f32 %v3943, %v4651
        %v5150 = vsub.f32 %v3945, %v4688
        %v5151 = vsub.f32 %v3949, %v4651
        %v5152 = vsub.f32 %v3951, %v4688
        %v5153 = vsub.f32 %v3955, %v4651
        %v5154 = vsub.f32 %v3957, %v4688
        %v5155 = vsub.f32 %v3961, %v4651
        %v5156 = vsub.f32 %v3963, %v4688
        %v5157 = vsub.f32 %v3967, %v4651
        %v5158 = vsub.f32 %v3969, %v4688
        %v5159 = vsub.f32 %v3973, %v4651
        %v5160 = vsub.f32 %v3975, %v4688
        %v5161 = vsub.f32 %v3979, %v4651
        %v5162 = vsub.f32 %v3981, %v4688
        %v5163 = vsub.f32 %v3985, %v4651
        %v5164 = vsub.f32 %v3987, %v4688
        %v5165 = vsub.f32 %v3991, %v4651
        %v5166 = vsub.f32 %v3993, %v4688
        %v5167 = vsub.f32 %v3997, %v4651
        %v5168 = vsub.f32 %v3999, %v4688
        %v5169 = vsub.f32 %v4003, %v4651
        %v5170 = vsub.f32 %v4005, %v4688
        %v5171 = vsub.f32 %v4009, %v4651
        %v5172 = vsub.f32 %v4011, %v4688
        %v5173 = vsub.f32 %v4015, %v4651
        %v5174 = vsub.f32 %v4017, %v4688
        %v5175 = vsub.f32 %v4021, %v4651
        %v5176 = vsub.f32 %v4023, %v4688
        %v5177 = vsub.f32 %v4027, %v4651
        %v5178 = vsub.f32 %v4029, %v4688
        %v5179 = vsub.f32 %v4033, %v4651
        %v5180 = vsub.f32 %v4035, %v4688
        %v5181 = vsub.f32 %v4039, %v4651
        %v5182 = vsub.f32 %v4041, %v4688
        %v5183 = vsub.f32 %v4045, %v4651
        %v5184 = vsub.f32 %v4047, %v4688
        %v5185 = vsub.f32 %v4051, %v4651
        %v5186 = vsub.f32 %v4053, %v4688
        %v5187 = vsub.f32 %v4057, %v4651
        %v5188 = vsub.f32 %v4059, %v4688
        %v5189 = vsub.f32 %v4063, %v4651
        %v5190 = vsub.f32 %v4065, %v4688
        %v5191 = vsub.f32 %v4069, %v4651
        %v5192 = vsub.f32 %v4071, %v4688
        %v5193 = vsub.f32 %v4075, %v4651
        %v5194 = vsub.f32 %v4077, %v4688
        %v5195 = vsub.f32 %v4081, %v4651
        %v5196 = vsub.f32 %v4083, %v4688
        %v5197 = vsub.f32 %v4087, %v4651
        %v5198 = vsub.f32 %v4089, %v4688
        %v5199 = vsub.f32 %v4093, %v4651
        %v5200 = vsub.f32 %v4095, %v4688
        %v5201 = vmul.f32 %v4689, 1.442695
        %v5202 = vpow.pop %v5201
        %v5203 = vmul.f32 %v4690, 1.442695
        %v5204 = vpow.pop %v5203
        %v5205 = vmul.f32 %v4691, 1.442695
        %v5206 = vpow.pop %v5205
        %v5207 = vmul.f32 %v4692, 1.442695
        %v5208 = vpow.pop %v5207
        %v5209 = vmul.f32 %v4693, 1.442695
        %v5210 = vpow.pop %v5209
        %v5211 = vmul.f32 %v4694, 1.442695
        %v5212 = vpow.pop %v5211
        %v5213 = vmul.f32 %v4695, 1.442695
        %v5214 = vpow.pop %v5213
        %v5215 = vmul.f32 %v4696, 1.442695
        %v5216 = vpow.pop %v5215
        %v5217 = vmul.f32 %v4697, 1.442695
        %v5218 = vpow.pop %v5217
        %v5219 = vmul.f32 %v4698, 1.442695
        %v5220 = vpow.pop %v5219
        %v5221 = vmul.f32 %v4699, 1.442695
        %v5222 = vpow.pop %v5221
        %v5223 = vmul.f32 %v4700, 1.442695
        %v5224 = vpow.pop %v5223
        %v5225 = vmul.f32 %v4701, 1.442695
        %v5226 = vpow.pop %v5225
        %v5227 = vmul.f32 %v4702, 1.442695
        %v5228 = vpow.pop %v5227
        %v5229 = vmul.f32 %v4703, 1.442695
        %v5230 = vpow.pop %v5229
        %v5231 = vmul.f32 %v4704, 1.442695
        %v5232 = vpow.pop %v5231
        %v5233 = vmul.f32 %v4705, 1.442695
        %v5234 = vpow.pop %v5233
        %v5235 = vmul.f32 %v4706, 1.442695
        %v5236 = vpow.pop %v5235
        %v5237 = vmul.f32 %v4707, 1.442695
        %v5238 = vpow.pop %v5237
        %v5239 = vmul.f32 %v4708, 1.442695
        %v5240 = vpow.pop %v5239
        %v5241 = vmul.f32 %v4709, 1.442695
        %v5242 = vpow.pop %v5241
        %v5243 = vmul.f32 %v4710, 1.442695
        %v5244 = vpow.pop %v5243
        %v5245 = vmul.f32 %v4711, 1.442695
        %v5246 = vpow.pop %v5245
        %v5247 = vmul.f32 %v4712, 1.442695
        %v5248 = vpow.pop %v5247
        %v5249 = vmul.f32 %v4713, 1.442695
        %v5250 = vpow.pop %v5249
        %v5251 = vmul.f32 %v4714, 1.442695
        %v5252 = vpow.pop %v5251
        %v5253 = vmul.f32 %v4715, 1.442695
        %v5254 = vpow.pop %v5253
        %v5255 = vmul.f32 %v4716, 1.442695
        %v5256 = vpow.pop %v5255
        %v5257 = vmul.f32 %v4717, 1.442695
        %v5258 = vpow.pop %v5257
        %v5259 = vmul.f32 %v4718, 1.442695
        %v5260 = vpow.pop %v5259
        %v5261 = vmul.f32 %v4719, 1.442695
        %v5262 = vpow.pop %v5261
        %v5263 = vmul.f32 %v4720, 1.442695
        %v5264 = vpow.pop %v5263
        %v5265 = vmul.f32 %v4721, 1.442695
        %v5266 = vpow.pop %v5265
        %v5267 = vmul.f32 %v4722, 1.442695
        %v5268 = vpow.pop %v5267
        %v5269 = vmul.f32 %v4723, 1.442695
        %v5270 = vpow.pop %v5269
        %v5271 = vmul.f32 %v4724, 1.442695
        %v5272 = vpow.pop %v5271
        %v5273 = vmul.f32 %v4725, 1.442695
        %v5274 = vpow.pop %v5273
        %v5275 = vmul.f32 %v4726, 1.442695
        %v5276 = vpow.pop %v5275
        %v5277 = vmul.f32 %v4727, 1.442695
        %v5278 = vpow.pop %v5277
        %v5279 = vmul.f32 %v4728, 1.442695
        %v5280 = vpow.pop %v5279
        %v5281 = vmul.f32 %v4729, 1.442695
        %v5282 = vpow.pop %v5281
        %v5283 = vmul.f32 %v4730, 1.442695
        %v5284 = vpow.pop %v5283
        %v5285 = vmul.f32 %v4731, 1.442695
        %v5286 = vpow.pop %v5285
        %v5287 = vmul.f32 %v4732, 1.442695
        %v5288 = vpow.pop %v5287
        %v5289 = vmul.f32 %v4733, 1.442695
        %v5290 = vpow.pop %v5289
        %v5291 = vmul.f32 %v4734, 1.442695
        %v5292 = vpow.pop %v5291
        %v5293 = vmul.f32 %v4735, 1.442695
        %v5294 = vpow.pop %v5293
        %v5295 = vmul.f32 %v4736, 1.442695
        %v5296 = vpow.pop %v5295
        %v5297 = vmul.f32 %v4737, 1.442695
        %v5298 = vpow.pop %v5297
        %v5299 = vmul.f32 %v4738, 1.442695
        %v5300 = vpow.pop %v5299
        %v5301 = vmul.f32 %v4739, 1.442695
        %v5302 = vpow.pop %v5301
        %v5303 = vmul.f32 %v4740, 1.442695
        %v5304 = vpow.pop %v5303
        %v5305 = vmul.f32 %v4741, 1.442695
        %v5306 = vpow.pop %v5305
        %v5307 = vmul.f32 %v4742, 1.442695
        %v5308 = vpow.pop %v5307
        %v5309 = vmul.f32 %v4743, 1.442695
        %v5310 = vpow.pop %v5309
        %v5311 = vmul.f32 %v4744, 1.442695
        %v5312 = vpow.pop %v5311
        %v5313 = vmul.f32 %v4745, 1.442695
        %v5314 = vpow.pop %v5313
        %v5315 = vmul.f32 %v4746, 1.442695
        %v5316 = vpow.pop %v5315
        %v5317 = vmul.f32 %v4747, 1.442695
        %v5318 = vpow.pop %v5317
        %v5319 = vmul.f32 %v4748, 1.442695
        %v5320 = vpow.pop %v5319
        %v5321 = vmul.f32 %v4749, 1.442695
        %v5322 = vpow.pop %v5321
        %v5323 = vmul.f32 %v4750, 1.442695
        %v5324 = vpow.pop %v5323
        %v5325 = vmul.f32 %v4751, 1.442695
        %v5326 = vpow.pop %v5325
        %v5327 = vmul.f32 %v4752, 1.442695
        %v5328 = vpow.pop %v5327
        %v5329 = vmul.f32 %v4753, 1.442695
        %v5330 = vpow.pop %v5329
        %v5331 = vmul.f32 %v4754, 1.442695
        %v5332 = vpow.pop %v5331
        %v5333 = vmul.f32 %v4755, 1.442695
        %v5334 = vpow.pop %v5333
        %v5335 = vmul.f32 %v4756, 1.442695
        %v5336 = vpow.pop %v5335
        %v5337 = vmul.f32 %v4757, 1.442695
        %v5338 = vpow.pop %v5337
        %v5339 = vmul.f32 %v4758, 1.442695
        %v5340 = vpow.pop %v5339
        %v5341 = vmul.f32 %v4759, 1.442695
        %v5342 = vpow.pop %v5341
        %v5343 = vmul.f32 %v4760, 1.442695
        %v5344 = vpow.pop %v5343
        %v5345 = vmul.f32 %v4761, 1.442695
        %v5346 = vpow.pop %v5345
        %v5347 = vmul.f32 %v4762, 1.442695
        %v5348 = vpow.pop %v5347
        %v5349 = vmul.f32 %v4763, 1.442695
        %v5350 = vpow.pop %v5349
        %v5351 = vmul.f32 %v4764, 1.442695
        %v5352 = vpow.pop %v5351
        %v5353 = vmul.f32 %v4765, 1.442695
        %v5354 = vpow.pop %v5353
        %v5355 = vmul.f32 %v4766, 1.442695
        %v5356 = vpow.pop %v5355
        %v5357 = vmul.f32 %v4767, 1.442695
        %v5358 = vpow.pop %v5357
        %v5359 = vmul.f32 %v4768, 1.442695
        %v5360 = vpow.pop %v5359
        %v5361 = vmul.f32 %v4769, 1.442695
        %v5362 = vpow.pop %v5361
        %v5363 = vmul.f32 %v4770, 1.442695
        %v5364 = vpow.pop %v5363
        %v5365 = vmul.f32 %v4771, 1.442695
        %v5366 = vpow.pop %v5365
        %v5367 = vmul.f32 %v4772, 1.442695
        %v5368 = vpow.pop %v5367
        %v5369 = vmul.f32 %v4773, 1.442695
        %v5370 = vpow.pop %v5369
        %v5371 = vmul.f32 %v4774, 1.442695
        %v5372 = vpow.pop %v5371
        %v5373 = vmul.f32 %v4775, 1.442695
        %v5374 = vpow.pop %v5373
        %v5375 = vmul.f32 %v4776, 1.442695
        %v5376 = vpow.pop %v5375
        %v5377 = vmul.f32 %v4777, 1.442695
        %v5378 = vpow.pop %v5377
        %v5379 = vmul.f32 %v4778, 1.442695
        %v5380 = vpow.pop %v5379
        %v5381 = vmul.f32 %v4779, 1.442695
        %v5382 = vpow.pop %v5381
        %v5383 = vmul.f32 %v4780, 1.442695
        %v5384 = vpow.pop %v5383
        %v5385 = vmul.f32 %v4781, 1.442695
        %v5386 = vpow.pop %v5385
        %v5387 = vmul.f32 %v4782, 1.442695
        %v5388 = vpow.pop %v5387
        %v5389 = vmul.f32 %v4783, 1.442695
        %v5390 = vpow.pop %v5389
        %v5391 = vmul.f32 %v4784, 1.442695
        %v5392 = vpow.pop %v5391
        %v5393 = vmul.f32 %v4785, 1.442695
        %v5394 = vpow.pop %v5393
        %v5395 = vmul.f32 %v4786, 1.442695
        %v5396 = vpow.pop %v5395
        %v5397 = vmul.f32 %v4787, 1.442695
        %v5398 = vpow.pop %v5397
        %v5399 = vmul.f32 %v4788, 1.442695
        %v5400 = vpow.pop %v5399
        %v5401 = vmul.f32 %v4789, 1.442695
        %v5402 = vpow.pop %v5401
        %v5403 = vmul.f32 %v4790, 1.442695
        %v5404 = vpow.pop %v5403
        %v5405 = vmul.f32 %v4791, 1.442695
        %v5406 = vpow.pop %v5405
        %v5407 = vmul.f32 %v4792, 1.442695
        %v5408 = vpow.pop %v5407
        %v5409 = vmul.f32 %v4793, 1.442695
        %v5410 = vpow.pop %v5409
        %v5411 = vmul.f32 %v4794, 1.442695
        %v5412 = vpow.pop %v5411
        %v5413 = vmul.f32 %v4795, 1.442695
        %v5414 = vpow.pop %v5413
        %v5415 = vmul.f32 %v4796, 1.442695
        %v5416 = vpow.pop %v5415
        %v5417 = vmul.f32 %v4797, 1.442695
        %v5418 = vpow.pop %v5417
        %v5419 = vmul.f32 %v4798, 1.442695
        %v5420 = vpow.pop %v5419
        %v5421 = vmul.f32 %v4799, 1.442695
        %v5422 = vpow.pop %v5421
        %v5423 = vmul.f32 %v4800, 1.442695
        %v5424 = vpow.pop %v5423
        %v5425 = vmul.f32 %v4801, 1.442695
        %v5426 = vpow.pop %v5425
        %v5427 = vmul.f32 %v4802, 1.442695
        %v5428 = vpow.pop %v5427
        %v5429 = vmul.f32 %v4803, 1.442695
        %v5430 = vpow.pop %v5429
        %v5431 = vmul.f32 %v4804, 1.442695
        %v5432 = vpow.pop %v5431
        %v5433 = vmul.f32 %v4805, 1.442695
        %v5434 = vpow.pop %v5433
        %v5435 = vmul.f32 %v4806, 1.442695
        %v5436 = vpow.pop %v5435
        %v5437 = vmul.f32 %v4807, 1.442695
        %v5438 = vpow.pop %v5437
        %v5439 = vmul.f32 %v4808, 1.442695
        %v5440 = vpow.pop %v5439
        %v5441 = vmul.f32 %v4809, 1.442695
        %v5442 = vpow.pop %v5441
        %v5443 = vmul.f32 %v4810, 1.442695
        %v5444 = vpow.pop %v5443
        %v5445 = vmul.f32 %v4811, 1.442695
        %v5446 = vpow.pop %v5445
        %v5447 = vmul.f32 %v4812, 1.442695
        %v5448 = vpow.pop %v5447
        %v5449 = vmul.f32 %v4813, 1.442695
        %v5450 = vpow.pop %v5449
        %v5451 = vmul.f32 %v4814, 1.442695
        %v5452 = vpow.pop %v5451
        %v5453 = vmul.f32 %v4815, 1.442695
        %v5454 = vpow.pop %v5453
        %v5455 = vmul.f32 %v4816, 1.442695
        %v5456 = vpow.pop %v5455
        %v5457 = vmul.f32 %v4817, 1.442695
        %v5458 = vpow.pop %v5457
        %v5459 = vmul.f32 %v4818, 1.442695
        %v5460 = vpow.pop %v5459
        %v5461 = vmul.f32 %v4819, 1.442695
        %v5462 = vpow.pop %v5461
        %v5463 = vmul.f32 %v4820, 1.442695
        %v5464 = vpow.pop %v5463
        %v5465 = vmul.f32 %v4821, 1.442695
        %v5466 = vpow.pop %v5465
        %v5467 = vmul.f32 %v4822, 1.442695
        %v5468 = vpow.pop %v5467
        %v5469 = vmul.f32 %v4823, 1.442695
        %v5470 = vpow.pop %v5469
        %v5471 = vmul.f32 %v4824, 1.442695
        %v5472 = vpow.pop %v5471
        %v5473 = vmul.f32 %v4825, 1.442695
        %v5474 = vpow.pop %v5473
        %v5475 = vmul.f32 %v4826, 1.442695
        %v5476 = vpow.pop %v5475
        %v5477 = vmul.f32 %v4827, 1.442695
        %v5478 = vpow.pop %v5477
        %v5479 = vmul.f32 %v4828, 1.442695
        %v5480 = vpow.pop %v5479
        %v5481 = vmul.f32 %v4829, 1.442695
        %v5482 = vpow.pop %v5481
        %v5483 = vmul.f32 %v4830, 1.442695
        %v5484 = vpow.pop %v5483
        %v5485 = vmul.f32 %v4831, 1.442695
        %v5486 = vpow.pop %v5485
        %v5487 = vmul.f32 %v4832, 1.442695
        %v5488 = vpow.pop %v5487
        %v5489 = vmul.f32 %v4833, 1.442695
        %v5490 = vpow.pop %v5489
        %v5491 = vmul.f32 %v4834, 1.442695
        %v5492 = vpow.pop %v5491
        %v5493 = vmul.f32 %v4835, 1.442695
        %v5494 = vpow.pop %v5493
        %v5495 = vmul.f32 %v4836, 1.442695
        %v5496 = vpow.pop %v5495
        %v5497 = vmul.f32 %v4837, 1.442695
        %v5498 = vpow.pop %v5497
        %v5499 = vmul.f32 %v4838, 1.442695
        %v5500 = vpow.pop %v5499
        %v5501 = vmul.f32 %v4839, 1.442695
        %v5502 = vpow.pop %v5501
        %v5503 = vmul.f32 %v4840, 1.442695
        %v5504 = vpow.pop %v5503
        %v5505 = vmul.f32 %v4841, 1.442695
        %v5506 = vpow.pop %v5505
        %v5507 = vmul.f32 %v4842, 1.442695
        %v5508 = vpow.pop %v5507
        %v5509 = vmul.f32 %v4843, 1.442695
        %v5510 = vpow.pop %v5509
        %v5511 = vmul.f32 %v4844, 1.442695
        %v5512 = vpow.pop %v5511
        %v5513 = vmul.f32 %v4845, 1.442695
        %v5514 = vpow.pop %v5513
        %v5515 = vmul.f32 %v4846, 1.442695
        %v5516 = vpow.pop %v5515
        %v5517 = vmul.f32 %v4847, 1.442695
        %v5518 = vpow.pop %v5517
        %v5519 = vmul.f32 %v4848, 1.442695
        %v5520 = vpow.pop %v5519
        %v5521 = vmul.f32 %v4849, 1.442695
        %v5522 = vpow.pop %v5521
        %v5523 = vmul.f32 %v4850, 1.442695
        %v5524 = vpow.pop %v5523
        %v5525 = vmul.f32 %v4851, 1.442695
        %v5526 = vpow.pop %v5525
        %v5527 = vmul.f32 %v4852, 1.442695
        %v5528 = vpow.pop %v5527
        %v5529 = vmul.f32 %v4853, 1.442695
        %v5530 = vpow.pop %v5529
        %v5531 = vmul.f32 %v4854, 1.442695
        %v5532 = vpow.pop %v5531
        %v5533 = vmul.f32 %v4855, 1.442695
        %v5534 = vpow.pop %v5533
        %v5535 = vmul.f32 %v4856, 1.442695
        %v5536 = vpow.pop %v5535
        %v5537 = vmul.f32 %v4857, 1.442695
        %v5538 = vpow.pop %v5537
        %v5539 = vmul.f32 %v4858, 1.442695
        %v5540 = vpow.pop %v5539
        %v5541 = vmul.f32 %v4859, 1.442695
        %v5542 = vpow.pop %v5541
        %v5543 = vmul.f32 %v4860, 1.442695
        %v5544 = vpow.pop %v5543
        %v5545 = vmul.f32 %v4861, 1.442695
        %v5546 = vpow.pop %v5545
        %v5547 = vmul.f32 %v4862, 1.442695
        %v5548 = vpow.pop %v5547
        %v5549 = vmul.f32 %v4863, 1.442695
        %v5550 = vpow.pop %v5549
        %v5551 = vmul.f32 %v4864, 1.442695
        %v5552 = vpow.pop %v5551
        %v5553 = vmul.f32 %v4865, 1.442695
        %v5554 = vpow.pop %v5553
        %v5555 = vmul.f32 %v4866, 1.442695
        %v5556 = vpow.pop %v5555
        %v5557 = vmul.f32 %v4867, 1.442695
        %v5558 = vpow.pop %v5557
        %v5559 = vmul.f32 %v4868, 1.442695
        %v5560 = vpow.pop %v5559
        %v5561 = vmul.f32 %v4869, 1.442695
        %v5562 = vpow.pop %v5561
        %v5563 = vmul.f32 %v4870, 1.442695
        %v5564 = vpow.pop %v5563
        %v5565 = vmul.f32 %v4871, 1.442695
        %v5566 = vpow.pop %v5565
        %v5567 = vmul.f32 %v4872, 1.442695
        %v5568 = vpow.pop %v5567
        %v5569 = vmul.f32 %v4873, 1.442695
        %v5570 = vpow.pop %v5569
        %v5571 = vmul.f32 %v4874, 1.442695
        %v5572 = vpow.pop %v5571
        %v5573 = vmul.f32 %v4875, 1.442695
        %v5574 = vpow.pop %v5573
        %v5575 = vmul.f32 %v4876, 1.442695
        %v5576 = vpow.pop %v5575
        %v5577 = vmul.f32 %v4877, 1.442695
        %v5578 = vpow.pop %v5577
        %v5579 = vmul.f32 %v4878, 1.442695
        %v5580 = vpow.pop %v5579
        %v5581 = vmul.f32 %v4879, 1.442695
        %v5582 = vpow.pop %v5581
        %v5583 = vmul.f32 %v4880, 1.442695
        %v5584 = vpow.pop %v5583
        %v5585 = vmul.f32 %v4881, 1.442695
        %v5586 = vpow.pop %v5585
        %v5587 = vmul.f32 %v4882, 1.442695
        %v5588 = vpow.pop %v5587
        %v5589 = vmul.f32 %v4883, 1.442695
        %v5590 = vpow.pop %v5589
        %v5591 = vmul.f32 %v4884, 1.442695
        %v5592 = vpow.pop %v5591
        %v5593 = vmul.f32 %v4885, 1.442695
        %v5594 = vpow.pop %v5593
        %v5595 = vmul.f32 %v4886, 1.442695
        %v5596 = vpow.pop %v5595
        %v5597 = vmul.f32 %v4887, 1.442695
        %v5598 = vpow.pop %v5597
        %v5599 = vmul.f32 %v4888, 1.442695
        %v5600 = vpow.pop %v5599
        %v5601 = vmul.f32 %v4889, 1.442695
        %v5602 = vpow.pop %v5601
        %v5603 = vmul.f32 %v4890, 1.442695
        %v5604 = vpow.pop %v5603
        %v5605 = vmul.f32 %v4891, 1.442695
        %v5606 = vpow.pop %v5605
        %v5607 = vmul.f32 %v4892, 1.442695
        %v5608 = vpow.pop %v5607
        %v5609 = vmul.f32 %v4893, 1.442695
        %v5610 = vpow.pop %v5609
        %v5611 = vmul.f32 %v4894, 1.442695
        %v5612 = vpow.pop %v5611
        %v5613 = vmul.f32 %v4895, 1.442695
        %v5614 = vpow.pop %v5613
        %v5615 = vmul.f32 %v4896, 1.442695
        %v5616 = vpow.pop %v5615
        %v5617 = vmul.f32 %v4897, 1.442695
        %v5618 = vpow.pop %v5617
        %v5619 = vmul.f32 %v4898, 1.442695
        %v5620 = vpow.pop %v5619
        %v5621 = vmul.f32 %v4899, 1.442695
        %v5622 = vpow.pop %v5621
        %v5623 = vmul.f32 %v4900, 1.442695
        %v5624 = vpow.pop %v5623
        %v5625 = vmul.f32 %v4901, 1.442695
        %v5626 = vpow.pop %v5625
        %v5627 = vmul.f32 %v4902, 1.442695
        %v5628 = vpow.pop %v5627
        %v5629 = vmul.f32 %v4903, 1.442695
        %v5630 = vpow.pop %v5629
        %v5631 = vmul.f32 %v4904, 1.442695
        %v5632 = vpow.pop %v5631
        %v5633 = vmul.f32 %v4905, 1.442695
        %v5634 = vpow.pop %v5633
        %v5635 = vmul.f32 %v4906, 1.442695
        %v5636 = vpow.pop %v5635
        %v5637 = vmul.f32 %v4907, 1.442695
        %v5638 = vpow.pop %v5637
        %v5639 = vmul.f32 %v4908, 1.442695
        %v5640 = vpow.pop %v5639
        %v5641 = vmul.f32 %v4909, 1.442695
        %v5642 = vpow.pop %v5641
        %v5643 = vmul.f32 %v4910, 1.442695
        %v5644 = vpow.pop %v5643
        %v5645 = vmul.f32 %v4911, 1.442695
        %v5646 = vpow.pop %v5645
        %v5647 = vmul.f32 %v4912, 1.442695
        %v5648 = vpow.pop %v5647
        %v5649 = vmul.f32 %v4913, 1.442695
        %v5650 = vpow.pop %v5649
        %v5651 = vmul.f32 %v4914, 1.442695
        %v5652 = vpow.pop %v5651
        %v5653 = vmul.f32 %v4915, 1.442695
        %v5654 = vpow.pop %v5653
        %v5655 = vmul.f32 %v4916, 1.442695
        %v5656 = vpow.pop %v5655
        %v5657 = vmul.f32 %v4917, 1.442695
        %v5658 = vpow.pop %v5657
        %v5659 = vmul.f32 %v4918, 1.442695
        %v5660 = vpow.pop %v5659
        %v5661 = vmul.f32 %v4919, 1.442695
        %v5662 = vpow.pop %v5661
        %v5663 = vmul.f32 %v4920, 1.442695
        %v5664 = vpow.pop %v5663
        %v5665 = vmul.f32 %v4921, 1.442695
        %v5666 = vpow.pop %v5665
        %v5667 = vmul.f32 %v4922, 1.442695
        %v5668 = vpow.pop %v5667
        %v5669 = vmul.f32 %v4923, 1.442695
        %v5670 = vpow.pop %v5669
        %v5671 = vmul.f32 %v4924, 1.442695
        %v5672 = vpow.pop %v5671
        %v5673 = vmul.f32 %v4925, 1.442695
        %v5674 = vpow.pop %v5673
        %v5675 = vmul.f32 %v4926, 1.442695
        %v5676 = vpow.pop %v5675
        %v5677 = vmul.f32 %v4927, 1.442695
        %v5678 = vpow.pop %v5677
        %v5679 = vmul.f32 %v4928, 1.442695
        %v5680 = vpow.pop %v5679
        %v5681 = vmul.f32 %v4929, 1.442695
        %v5682 = vpow.pop %v5681
        %v5683 = vmul.f32 %v4930, 1.442695
        %v5684 = vpow.pop %v5683
        %v5685 = vmul.f32 %v4931, 1.442695
        %v5686 = vpow.pop %v5685
        %v5687 = vmul.f32 %v4932, 1.442695
        %v5688 = vpow.pop %v5687
        %v5689 = vmul.f32 %v4933, 1.442695
        %v5690 = vpow.pop %v5689
        %v5691 = vmul.f32 %v4934, 1.442695
        %v5692 = vpow.pop %v5691
        %v5693 = vmul.f32 %v4935, 1.442695
        %v5694 = vpow.pop %v5693
        %v5695 = vmul.f32 %v4936, 1.442695
        %v5696 = vpow.pop %v5695
        %v5697 = vmul.f32 %v4937, 1.442695
        %v5698 = vpow.pop %v5697
        %v5699 = vmul.f32 %v4938, 1.442695
        %v5700 = vpow.pop %v5699
        %v5701 = vmul.f32 %v4939, 1.442695
        %v5702 = vpow.pop %v5701
        %v5703 = vmul.f32 %v4940, 1.442695
        %v5704 = vpow.pop %v5703
        %v5705 = vmul.f32 %v4941, 1.442695
        %v5706 = vpow.pop %v5705
        %v5707 = vmul.f32 %v4942, 1.442695
        %v5708 = vpow.pop %v5707
        %v5709 = vmul.f32 %v4943, 1.442695
        %v5710 = vpow.pop %v5709
        %v5711 = vmul.f32 %v4944, 1.442695
        %v5712 = vpow.pop %v5711
        %v5713 = vmul.f32 %v4945, 1.442695
        %v5714 = vpow.pop %v5713
        %v5715 = vmul.f32 %v4946, 1.442695
        %v5716 = vpow.pop %v5715
        %v5717 = vmul.f32 %v4947, 1.442695
        %v5718 = vpow.pop %v5717
        %v5719 = vmul.f32 %v4948, 1.442695
        %v5720 = vpow.pop %v5719
        %v5721 = vmul.f32 %v4949, 1.442695
        %v5722 = vpow.pop %v5721
        %v5723 = vmul.f32 %v4950, 1.442695
        %v5724 = vpow.pop %v5723
        %v5725 = vmul.f32 %v4951, 1.442695
        %v5726 = vpow.pop %v5725
        %v5727 = vmul.f32 %v4952, 1.442695
        %v5728 = vpow.pop %v5727
        %v5729 = vmul.f32 %v4953, 1.442695
        %v5730 = vpow.pop %v5729
        %v5731 = vmul.f32 %v4954, 1.442695
        %v5732 = vpow.pop %v5731
        %v5733 = vmul.f32 %v4955, 1.442695
        %v5734 = vpow.pop %v5733
        %v5735 = vmul.f32 %v4956, 1.442695
        %v5736 = vpow.pop %v5735
        %v5737 = vmul.f32 %v4957, 1.442695
        %v5738 = vpow.pop %v5737
        %v5739 = vmul.f32 %v4958, 1.442695
        %v5740 = vpow.pop %v5739
        %v5741 = vmul.f32 %v4959, 1.442695
        %v5742 = vpow.pop %v5741
        %v5743 = vmul.f32 %v4960, 1.442695
        %v5744 = vpow.pop %v5743
        %v5745 = vmul.f32 %v4961, 1.442695
        %v5746 = vpow.pop %v5745
        %v5747 = vmul.f32 %v4962, 1.442695
        %v5748 = vpow.pop %v5747
        %v5749 = vmul.f32 %v4963, 1.442695
        %v5750 = vpow.pop %v5749
        %v5751 = vmul.f32 %v4964, 1.442695
        %v5752 = vpow.pop %v5751
        %v5753 = vmul.f32 %v4965, 1.442695
        %v5754 = vpow.pop %v5753
        %v5755 = vmul.f32 %v4966, 1.442695
        %v5756 = vpow.pop %v5755
        %v5757 = vmul.f32 %v4967, 1.442695
        %v5758 = vpow.pop %v5757
        %v5759 = vmul.f32 %v4968, 1.442695
        %v5760 = vpow.pop %v5759
        %v5761 = vmul.f32 %v4969, 1.442695
        %v5762 = vpow.pop %v5761
        %v5763 = vmul.f32 %v4970, 1.442695
        %v5764 = vpow.pop %v5763
        %v5765 = vmul.f32 %v4971, 1.442695
        %v5766 = vpow.pop %v5765
        %v5767 = vmul.f32 %v4972, 1.442695
        %v5768 = vpow.pop %v5767
        %v5769 = vmul.f32 %v4973, 1.442695
        %v5770 = vpow.pop %v5769
        %v5771 = vmul.f32 %v4974, 1.442695
        %v5772 = vpow.pop %v5771
        %v5773 = vmul.f32 %v4975, 1.442695
        %v5774 = vpow.pop %v5773
        %v5775 = vmul.f32 %v4976, 1.442695
        %v5776 = vpow.pop %v5775
        %v5777 = vmul.f32 %v4977, 1.442695
        %v5778 = vpow.pop %v5777
        %v5779 = vmul.f32 %v4978, 1.442695
        %v5780 = vpow.pop %v5779
        %v5781 = vmul.f32 %v4979, 1.442695
        %v5782 = vpow.pop %v5781
        %v5783 = vmul.f32 %v4980, 1.442695
        %v5784 = vpow.pop %v5783
        %v5785 = vmul.f32 %v4981, 1.442695
        %v5786 = vpow.pop %v5785
        %v5787 = vmul.f32 %v4982, 1.442695
        %v5788 = vpow.pop %v5787
        %v5789 = vmul.f32 %v4983, 1.442695
        %v5790 = vpow.pop %v5789
        %v5791 = vmul.f32 %v4984, 1.442695
        %v5792 = vpow.pop %v5791
        %v5793 = vmul.f32 %v4985, 1.442695
        %v5794 = vpow.pop %v5793
        %v5795 = vmul.f32 %v4986, 1.442695
        %v5796 = vpow.pop %v5795
        %v5797 = vmul.f32 %v4987, 1.442695
        %v5798 = vpow.pop %v5797
        %v5799 = vmul.f32 %v4988, 1.442695
        %v5800 = vpow.pop %v5799
        %v5801 = vmul.f32 %v4989, 1.442695
        %v5802 = vpow.pop %v5801
        %v5803 = vmul.f32 %v4990, 1.442695
        %v5804 = vpow.pop %v5803
        %v5805 = vmul.f32 %v4991, 1.442695
        %v5806 = vpow.pop %v5805
        %v5807 = vmul.f32 %v4992, 1.442695
        %v5808 = vpow.pop %v5807
        %v5809 = vmul.f32 %v4993, 1.442695
        %v5810 = vpow.pop %v5809
        %v5811 = vmul.f32 %v4994, 1.442695
        %v5812 = vpow.pop %v5811
        %v5813 = vmul.f32 %v4995, 1.442695
        %v5814 = vpow.pop %v5813
        %v5815 = vmul.f32 %v4996, 1.442695
        %v5816 = vpow.pop %v5815
        %v5817 = vmul.f32 %v4997, 1.442695
        %v5818 = vpow.pop %v5817
        %v5819 = vmul.f32 %v4998, 1.442695
        %v5820 = vpow.pop %v5819
        %v5821 = vmul.f32 %v4999, 1.442695
        %v5822 = vpow.pop %v5821
        %v5823 = vmul.f32 %v5000, 1.442695
        %v5824 = vpow.pop %v5823
        %v5825 = vmul.f32 %v5001, 1.442695
        %v5826 = vpow.pop %v5825
        %v5827 = vmul.f32 %v5002, 1.442695
        %v5828 = vpow.pop %v5827
        %v5829 = vmul.f32 %v5003, 1.442695
        %v5830 = vpow.pop %v5829
        %v5831 = vmul.f32 %v5004, 1.442695
        %v5832 = vpow.pop %v5831
        %v5833 = vmul.f32 %v5005, 1.442695
        %v5834 = vpow.pop %v5833
        %v5835 = vmul.f32 %v5006, 1.442695
        %v5836 = vpow.pop %v5835
        %v5837 = vmul.f32 %v5007, 1.442695
        %v5838 = vpow.pop %v5837
        %v5839 = vmul.f32 %v5008, 1.442695
        %v5840 = vpow.pop %v5839
        %v5841 = vmul.f32 %v5009, 1.442695
        %v5842 = vpow.pop %v5841
        %v5843 = vmul.f32 %v5010, 1.442695
        %v5844 = vpow.pop %v5843
        %v5845 = vmul.f32 %v5011, 1.442695
        %v5846 = vpow.pop %v5845
        %v5847 = vmul.f32 %v5012, 1.442695
        %v5848 = vpow.pop %v5847
        %v5849 = vmul.f32 %v5013, 1.442695
        %v5850 = vpow.pop %v5849
        %v5851 = vmul.f32 %v5014, 1.442695
        %v5852 = vpow.pop %v5851
        %v5853 = vmul.f32 %v5015, 1.442695
        %v5854 = vpow.pop %v5853
        %v5855 = vmul.f32 %v5016, 1.442695
        %v5856 = vpow.pop %v5855
        %v5857 = vmul.f32 %v5017, 1.442695
        %v5858 = vpow.pop %v5857
        %v5859 = vmul.f32 %v5018, 1.442695
        %v5860 = vpow.pop %v5859
        %v5861 = vmul.f32 %v5019, 1.442695
        %v5862 = vpow.pop %v5861
        %v5863 = vmul.f32 %v5020, 1.442695
        %v5864 = vpow.pop %v5863
        %v5865 = vmul.f32 %v5021, 1.442695
        %v5866 = vpow.pop %v5865
        %v5867 = vmul.f32 %v5022, 1.442695
        %v5868 = vpow.pop %v5867
        %v5869 = vmul.f32 %v5023, 1.442695
        %v5870 = vpow.pop %v5869
        %v5871 = vmul.f32 %v5024, 1.442695
        %v5872 = vpow.pop %v5871
        %v5873 = vmul.f32 %v5025, 1.442695
        %v5874 = vpow.pop %v5873
        %v5875 = vmul.f32 %v5026, 1.442695
        %v5876 = vpow.pop %v5875
        %v5877 = vmul.f32 %v5027, 1.442695
        %v5878 = vpow.pop %v5877
        %v5879 = vmul.f32 %v5028, 1.442695
        %v5880 = vpow.pop %v5879
        %v5881 = vmul.f32 %v5029, 1.442695
        %v5882 = vpow.pop %v5881
        %v5883 = vmul.f32 %v5030, 1.442695
        %v5884 = vpow.pop %v5883
        %v5885 = vmul.f32 %v5031, 1.442695
        %v5886 = vpow.pop %v5885
        %v5887 = vmul.f32 %v5032, 1.442695
        %v5888 = vpow.pop %v5887
        %v5889 = vmul.f32 %v5033, 1.442695
        %v5890 = vpow.pop %v5889
        %v5891 = vmul.f32 %v5034, 1.442695
        %v5892 = vpow.pop %v5891
        %v5893 = vmul.f32 %v5035, 1.442695
        %v5894 = vpow.pop %v5893
        %v5895 = vmul.f32 %v5036, 1.442695
        %v5896 = vpow.pop %v5895
        %v5897 = vmul.f32 %v5037, 1.442695
        %v5898 = vpow.pop %v5897
        %v5899 = vmul.f32 %v5038, 1.442695
        %v5900 = vpow.pop %v5899
        %v5901 = vmul.f32 %v5039, 1.442695
        %v5902 = vpow.pop %v5901
        %v5903 = vmul.f32 %v5040, 1.442695
        %v5904 = vpow.pop %v5903
        %v5905 = vmul.f32 %v5041, 1.442695
        %v5906 = vpow.pop %v5905
        %v5907 = vmul.f32 %v5042, 1.442695
        %v5908 = vpow.pop %v5907
        %v5909 = vmul.f32 %v5043, 1.442695
        %v5910 = vpow.pop %v5909
        %v5911 = vmul.f32 %v5044, 1.442695
        %v5912 = vpow.pop %v5911
        %v5913 = vmul.f32 %v5045, 1.442695
        %v5914 = vpow.pop %v5913
        %v5915 = vmul.f32 %v5046, 1.442695
        %v5916 = vpow.pop %v5915
        %v5917 = vmul.f32 %v5047, 1.442695
        %v5918 = vpow.pop %v5917
        %v5919 = vmul.f32 %v5048, 1.442695
        %v5920 = vpow.pop %v5919
        %v5921 = vmul.f32 %v5049, 1.442695
        %v5922 = vpow.pop %v5921
        %v5923 = vmul.f32 %v5050, 1.442695
        %v5924 = vpow.pop %v5923
        %v5925 = vmul.f32 %v5051, 1.442695
        %v5926 = vpow.pop %v5925
        %v5927 = vmul.f32 %v5052, 1.442695
        %v5928 = vpow.pop %v5927
        %v5929 = vmul.f32 %v5053, 1.442695
        %v5930 = vpow.pop %v5929
        %v5931 = vmul.f32 %v5054, 1.442695
        %v5932 = vpow.pop %v5931
        %v5933 = vmul.f32 %v5055, 1.442695
        %v5934 = vpow.pop %v5933
        %v5935 = vmul.f32 %v5056, 1.442695
        %v5936 = vpow.pop %v5935
        %v5937 = vmul.f32 %v5057, 1.442695
        %v5938 = vpow.pop %v5937
        %v5939 = vmul.f32 %v5058, 1.442695
        %v5940 = vpow.pop %v5939
        %v5941 = vmul.f32 %v5059, 1.442695
        %v5942 = vpow.pop %v5941
        %v5943 = vmul.f32 %v5060, 1.442695
        %v5944 = vpow.pop %v5943
        %v5945 = vmul.f32 %v5061, 1.442695
        %v5946 = vpow.pop %v5945
        %v5947 = vmul.f32 %v5062, 1.442695
        %v5948 = vpow.pop %v5947
        %v5949 = vmul.f32 %v5063, 1.442695
        %v5950 = vpow.pop %v5949
        %v5951 = vmul.f32 %v5064, 1.442695
        %v5952 = vpow.pop %v5951
        %v5953 = vmul.f32 %v5065, 1.442695
        %v5954 = vpow.pop %v5953
        %v5955 = vmul.f32 %v5066, 1.442695
        %v5956 = vpow.pop %v5955
        %v5957 = vmul.f32 %v5067, 1.442695
        %v5958 = vpow.pop %v5957
        %v5959 = vmul.f32 %v5068, 1.442695
        %v5960 = vpow.pop %v5959
        %v5961 = vmul.f32 %v5069, 1.442695
        %v5962 = vpow.pop %v5961
        %v5963 = vmul.f32 %v5070, 1.442695
        %v5964 = vpow.pop %v5963
        %v5965 = vmul.f32 %v5071, 1.442695
        %v5966 = vpow.pop %v5965
        %v5967 = vmul.f32 %v5072, 1.442695
        %v5968 = vpow.pop %v5967
        %v5969 = vmul.f32 %v5073, 1.442695
        %v5970 = vpow.pop %v5969
        %v5971 = vmul.f32 %v5074, 1.442695
        %v5972 = vpow.pop %v5971
        %v5973 = vmul.f32 %v5075, 1.442695
        %v5974 = vpow.pop %v5973
        %v5975 = vmul.f32 %v5076, 1.442695
        %v5976 = vpow.pop %v5975
        %v5977 = vmul.f32 %v5077, 1.442695
        %v5978 = vpow.pop %v5977
        %v5979 = vmul.f32 %v5078, 1.442695
        %v5980 = vpow.pop %v5979
        %v5981 = vmul.f32 %v5079, 1.442695
        %v5982 = vpow.pop %v5981
        %v5983 = vmul.f32 %v5080, 1.442695
        %v5984 = vpow.pop %v5983
        %v5985 = vmul.f32 %v5081, 1.442695
        %v5986 = vpow.pop %v5985
        %v5987 = vmul.f32 %v5082, 1.442695
        %v5988 = vpow.pop %v5987
        %v5989 = vmul.f32 %v5083, 1.442695
        %v5990 = vpow.pop %v5989
        %v5991 = vmul.f32 %v5084, 1.442695
        %v5992 = vpow.pop %v5991
        %v5993 = vmul.f32 %v5085, 1.442695
        %v5994 = vpow.pop %v5993
        %v5995 = vmul.f32 %v5086, 1.442695
        %v5996 = vpow.pop %v5995
        %v5997 = vmul.f32 %v5087, 1.442695
        %v5998 = vpow.pop %v5997
        %v5999 = vmul.f32 %v5088, 1.442695
        %v6000 = vpow.pop %v5999
        %v6001 = vmul.f32 %v5089, 1.442695
        %v6002 = vpow.pop %v6001
        %v6003 = vmul.f32 %v5090, 1.442695
        %v6004 = vpow.pop %v6003
        %v6005 = vmul.f32 %v5091, 1.442695
        %v6006 = vpow.pop %v6005
        %v6007 = vmul.f32 %v5092, 1.442695
        %v6008 = vpow.pop %v6007
        %v6009 = vmul.f32 %v5093, 1.442695
        %v6010 = vpow.pop %v6009
        %v6011 = vmul.f32 %v5094, 1.442695
        %v6012 = vpow.pop %v6011
        %v6013 = vmul.f32 %v5095, 1.442695
        %v6014 = vpow.pop %v6013
        %v6015 = vmul.f32 %v5096, 1.442695
        %v6016 = vpow.pop %v6015
        %v6017 = vmul.f32 %v5097, 1.442695
        %v6018 = vpow.pop %v6017
        %v6019 = vmul.f32 %v5098, 1.442695
        %v6020 = vpow.pop %v6019
        %v6021 = vmul.f32 %v5099, 1.442695
        %v6022 = vpow.pop %v6021
        %v6023 = vmul.f32 %v5100, 1.442695
        %v6024 = vpow.pop %v6023
        %v6025 = vmul.f32 %v5101, 1.442695
        %v6026 = vpow.pop %v6025
        %v6027 = vmul.f32 %v5102, 1.442695
        %v6028 = vpow.pop %v6027
        %v6029 = vmul.f32 %v5103, 1.442695
        %v6030 = vpow.pop %v6029
        %v6031 = vmul.f32 %v5104, 1.442695
        %v6032 = vpow.pop %v6031
        %v6033 = vmul.f32 %v5105, 1.442695
        %v6034 = vpow.pop %v6033
        %v6035 = vmul.f32 %v5106, 1.442695
        %v6036 = vpow.pop %v6035
        %v6037 = vmul.f32 %v5107, 1.442695
        %v6038 = vpow.pop %v6037
        %v6039 = vmul.f32 %v5108, 1.442695
        %v6040 = vpow.pop %v6039
        %v6041 = vmul.f32 %v5109, 1.442695
        %v6042 = vpow.pop %v6041
        %v6043 = vmul.f32 %v5110, 1.442695
        %v6044 = vpow.pop %v6043
        %v6045 = vmul.f32 %v5111, 1.442695
        %v6046 = vpow.pop %v6045
        %v6047 = vmul.f32 %v5112, 1.442695
        %v6048 = vpow.pop %v6047
        %v6049 = vmul.f32 %v5113, 1.442695
        %v6050 = vpow.pop %v6049
        %v6051 = vmul.f32 %v5114, 1.442695
        %v6052 = vpow.pop %v6051
        %v6053 = vmul.f32 %v5115, 1.442695
        %v6054 = vpow.pop %v6053
        %v6055 = vmul.f32 %v5116, 1.442695
        %v6056 = vpow.pop %v6055
        %v6057 = vmul.f32 %v5117, 1.442695
        %v6058 = vpow.pop %v6057
        %v6059 = vmul.f32 %v5118, 1.442695
        %v6060 = vpow.pop %v6059
        %v6061 = vmul.f32 %v5119, 1.442695
        %v6062 = vpow.pop %v6061
        %v6063 = vmul.f32 %v5120, 1.442695
        %v6064 = vpow.pop %v6063
        %v6065 = vmul.f32 %v5121, 1.442695
        %v6066 = vpow.pop %v6065
        %v6067 = vmul.f32 %v5122, 1.442695
        %v6068 = vpow.pop %v6067
        %v6069 = vmul.f32 %v5123, 1.442695
        %v6070 = vpow.pop %v6069
        %v6071 = vmul.f32 %v5124, 1.442695
        %v6072 = vpow.pop %v6071
        %v6073 = vmul.f32 %v5125, 1.442695
        %v6074 = vpow.pop %v6073
        %v6075 = vmul.f32 %v5126, 1.442695
        %v6076 = vpow.pop %v6075
        %v6077 = vmul.f32 %v5127, 1.442695
        %v6078 = vpow.pop %v6077
        %v6079 = vmul.f32 %v5128, 1.442695
        %v6080 = vpow.pop %v6079
        %v6081 = vmul.f32 %v5129, 1.442695
        %v6082 = vpow.pop %v6081
        %v6083 = vmul.f32 %v5130, 1.442695
        %v6084 = vpow.pop %v6083
        %v6085 = vmul.f32 %v5131, 1.442695
        %v6086 = vpow.pop %v6085
        %v6087 = vmul.f32 %v5132, 1.442695
        %v6088 = vpow.pop %v6087
        %v6089 = vmul.f32 %v5133, 1.442695
        %v6090 = vpow.pop %v6089
        %v6091 = vmul.f32 %v5134, 1.442695
        %v6092 = vpow.pop %v6091
        %v6093 = vmul.f32 %v5135, 1.442695
        %v6094 = vpow.pop %v6093
        %v6095 = vmul.f32 %v5136, 1.442695
        %v6096 = vpow.pop %v6095
        %v6097 = vmul.f32 %v5137, 1.442695
        %v6098 = vpow.pop %v6097
        %v6099 = vmul.f32 %v5138, 1.442695
        %v6100 = vpow.pop %v6099
        %v6101 = vmul.f32 %v5139, 1.442695
        %v6102 = vpow.pop %v6101
        %v6103 = vmul.f32 %v5140, 1.442695
        %v6104 = vpow.pop %v6103
        %v6105 = vmul.f32 %v5141, 1.442695
        %v6106 = vpow.pop %v6105
        %v6107 = vmul.f32 %v5142, 1.442695
        %v6108 = vpow.pop %v6107
        %v6109 = vmul.f32 %v5143, 1.442695
        %v6110 = vpow.pop %v6109
        %v6111 = vmul.f32 %v5144, 1.442695
        %v6112 = vpow.pop %v6111
        %v6113 = vmul.f32 %v5145, 1.442695
        %v6114 = vpow.pop %v6113
        %v6115 = vmul.f32 %v5146, 1.442695
        %v6116 = vpow.pop %v6115
        %v6117 = vmul.f32 %v5147, 1.442695
        %v6118 = vpow.pop %v6117
        %v6119 = vmul.f32 %v5148, 1.442695
        %v6120 = vpow.pop %v6119
        %v6121 = vmul.f32 %v5149, 1.442695
        %v6122 = vpow.pop %v6121
        %v6123 = vmul.f32 %v5150, 1.442695
        %v6124 = vpow.pop %v6123
        %v6125 = vmul.f32 %v5151, 1.442695
        %v6126 = vpow.pop %v6125
        %v6127 = vmul.f32 %v5152, 1.442695
        %v6128 = vpow.pop %v6127
        %v6129 = vmul.f32 %v5153, 1.442695
        %v6130 = vpow.pop %v6129
        %v6131 = vmul.f32 %v5154, 1.442695
        %v6132 = vpow.pop %v6131
        %v6133 = vmul.f32 %v5155, 1.442695
        %v6134 = vpow.pop %v6133
        %v6135 = vmul.f32 %v5156, 1.442695
        %v6136 = vpow.pop %v6135
        %v6137 = vmul.f32 %v5157, 1.442695
        %v6138 = vpow.pop %v6137
        %v6139 = vmul.f32 %v5158, 1.442695
        %v6140 = vpow.pop %v6139
        %v6141 = vmul.f32 %v5159, 1.442695
        %v6142 = vpow.pop %v6141
        %v6143 = vmul.f32 %v5160, 1.442695
        %v6144 = vpow.pop %v6143
        %v6145 = vmul.f32 %v5161, 1.442695
        %v6146 = vpow.pop %v6145
        %v6147 = vmul.f32 %v5162, 1.442695
        %v6148 = vpow.pop %v6147
        %v6149 = vmul.f32 %v5163, 1.442695
        %v6150 = vpow.pop %v6149
        %v6151 = vmul.f32 %v5164, 1.442695
        %v6152 = vpow.pop %v6151
        %v6153 = vmul.f32 %v5165, 1.442695
        %v6154 = vpow.pop %v6153
        %v6155 = vmul.f32 %v5166, 1.442695
        %v6156 = vpow.pop %v6155
        %v6157 = vmul.f32 %v5167, 1.442695
        %v6158 = vpow.pop %v6157
        %v6159 = vmul.f32 %v5168, 1.442695
        %v6160 = vpow.pop %v6159
        %v6161 = vmul.f32 %v5169, 1.442695
        %v6162 = vpow.pop %v6161
        %v6163 = vmul.f32 %v5170, 1.442695
        %v6164 = vpow.pop %v6163
        %v6165 = vmul.f32 %v5171, 1.442695
        %v6166 = vpow.pop %v6165
        %v6167 = vmul.f32 %v5172, 1.442695
        %v6168 = vpow.pop %v6167
        %v6169 = vmul.f32 %v5173, 1.442695
        %v6170 = vpow.pop %v6169
        %v6171 = vmul.f32 %v5174, 1.442695
        %v6172 = vpow.pop %v6171
        %v6173 = vmul.f32 %v5175, 1.442695
        %v6174 = vpow.pop %v6173
        %v6175 = vmul.f32 %v5176, 1.442695
        %v6176 = vpow.pop %v6175
        %v6177 = vmul.f32 %v5177, 1.442695
        %v6178 = vpow.pop %v6177
        %v6179 = vmul.f32 %v5178, 1.442695
        %v6180 = vpow.pop %v6179
        %v6181 = vmul.f32 %v5179, 1.442695
        %v6182 = vpow.pop %v6181
        %v6183 = vmul.f32 %v5180, 1.442695
        %v6184 = vpow.pop %v6183
        %v6185 = vmul.f32 %v5181, 1.442695
        %v6186 = vpow.pop %v6185
        %v6187 = vmul.f32 %v5182, 1.442695
        %v6188 = vpow.pop %v6187
        %v6189 = vmul.f32 %v5183, 1.442695
        %v6190 = vpow.pop %v6189
        %v6191 = vmul.f32 %v5184, 1.442695
        %v6192 = vpow.pop %v6191
        %v6193 = vmul.f32 %v5185, 1.442695
        %v6194 = vpow.pop %v6193
        %v6195 = vmul.f32 %v5186, 1.442695
        %v6196 = vpow.pop %v6195
        %v6197 = vmul.f32 %v5187, 1.442695
        %v6198 = vpow.pop %v6197
        %v6199 = vmul.f32 %v5188, 1.442695
        %v6200 = vpow.pop %v6199
        %v6201 = vmul.f32 %v5189, 1.442695
        %v6202 = vpow.pop %v6201
        %v6203 = vmul.f32 %v5190, 1.442695
        %v6204 = vpow.pop %v6203
        %v6205 = vmul.f32 %v5191, 1.442695
        %v6206 = vpow.pop %v6205
        %v6207 = vmul.f32 %v5192, 1.442695
        %v6208 = vpow.pop %v6207
        %v6209 = vmul.f32 %v5193, 1.442695
        %v6210 = vpow.pop %v6209
        %v6211 = vmul.f32 %v5194, 1.442695
        %v6212 = vpow.pop %v6211
        %v6213 = vmul.f32 %v5195, 1.442695
        %v6214 = vpow.pop %v6213
        %v6215 = vmul.f32 %v5196, 1.442695
        %v6216 = vpow.pop %v6215
        %v6217 = vmul.f32 %v5197, 1.442695
        %v6218 = vpow.pop %v6217
        %v6219 = vmul.f32 %v5198, 1.442695
        %v6220 = vpow.pop %v6219
        %v6221 = vmul.f32 %v5199, 1.442695
        %v6222 = vpow.pop %v6221
        %v6223 = vmul.f32 %v5200, 1.442695
        %v6224 = vpow.pop %v6223
        %v6225 = vpack.c.bf16 %v5206, %v5202
        %v6226 = vpack.c.bf16 %v5208, %v5204
        %v6227 = vpack.c.bf16 %v5214, %v5210
        %v6228 = vpack.c.bf16 %v5216, %v5212
        %v6229 = vpack.c.bf16 %v5222, %v5218
        %v6230 = vpack.c.bf16 %v5224, %v5220
        %v6231 = vpack.c.bf16 %v5230, %v5226
        %v6232 = vpack.c.bf16 %v5232, %v5228
        %v6233 = vpack.c.bf16 %v5238, %v5234
        %v6234 = vpack.c.bf16 %v5240, %v5236
        %v6235 = vpack.c.bf16 %v5246, %v5242
        %v6236 = vpack.c.bf16 %v5248, %v5244
        %v6237 = vpack.c.bf16 %v5254, %v5250
        %v6238 = vpack.c.bf16 %v5256, %v5252
        %v6239 = vpack.c.bf16 %v5262, %v5258
        %v6240 = vpack.c.bf16 %v5264, %v5260
        %v6241 = vpack.c.bf16 %v5270, %v5266
        %v6242 = vpack.c.bf16 %v5272, %v5268
        %v6243 = vpack.c.bf16 %v5278, %v5274
        %v6244 = vpack.c.bf16 %v5280, %v5276
        %v6245 = vpack.c.bf16 %v5286, %v5282
        %v6246 = vpack.c.bf16 %v5288, %v5284
        %v6247 = vpack.c.bf16 %v5294, %v5290
        %v6248 = vpack.c.bf16 %v5296, %v5292
        %v6249 = vpack.c.bf16 %v5302, %v5298
        %v6250 = vpack.c.bf16 %v5304, %v5300
        %v6251 = vpack.c.bf16 %v5310, %v5306
        %v6252 = vpack.c.bf16 %v5312, %v5308
        %v6253 = vpack.c.bf16 %v5318, %v5314
        %v6254 = vpack.c.bf16 %v5320, %v5316
        %v6255 = vpack.c.bf16 %v5326, %v5322
        %v6256 = vpack.c.bf16 %v5328, %v5324
        %v6257 = vpack.c.bf16 %v5334, %v5330
        %v6258 = vpack.c.bf16 %v5336, %v5332
        %v6259 = vpack.c.bf16 %v5342, %v5338
        %v6260 = vpack.c.bf16 %v5344, %v5340
        %v6261 = vpack.c.bf16 %v5350, %v5346
        %v6262 = vpack.c.bf16 %v5352, %v5348
        %v6263 = vpack.c.bf16 %v5358, %v5354
        %v6264 = vpack.c.bf16 %v5360, %v5356
        %v6265 = vpack.c.bf16 %v5366, %v5362
        %v6266 = vpack.c.bf16 %v5368, %v5364
        %v6267 = vpack.c.bf16 %v5374, %v5370
        %v6268 = vpack.c.bf16 %v5376, %v5372
        %v6269 = vpack.c.bf16 %v5382, %v5378
        %v6270 = vpack.c.bf16 %v5384, %v5380
        %v6271 = vpack.c.bf16 %v5390, %v5386
        %v6272 = vpack.c.bf16 %v5392, %v5388
        %v6273 = vpack.c.bf16 %v5398, %v5394
        %v6274 = vpack.c.bf16 %v5400, %v5396
        %v6275 = vpack.c.bf16 %v5406, %v5402
        %v6276 = vpack.c.bf16 %v5408, %v5404
        %v6277 = vpack.c.bf16 %v5414, %v5410
        %v6278 = vpack.c.bf16 %v5416, %v5412
        %v6279 = vpack.c.bf16 %v5422, %v5418
        %v6280 = vpack.c.bf16 %v5424, %v5420
        %v6281 = vpack.c.bf16 %v5430, %v5426
        %v6282 = vpack.c.bf16 %v5432, %v5428
        %v6283 = vpack.c.bf16 %v5438, %v5434
        %v6284 = vpack.c.bf16 %v5440, %v5436
        %v6285 = vpack.c.bf16 %v5446, %v5442
        %v6286 = vpack.c.bf16 %v5448, %v5444
        %v6287 = vpack.c.bf16 %v5454, %v5450
        %v6288 = vpack.c.bf16 %v5456, %v5452
        %v6289 = vpack.c.bf16 %v5462, %v5458
        %v6290 = vpack.c.bf16 %v5464, %v5460
        %v6291 = vpack.c.bf16 %v5470, %v5466
        %v6292 = vpack.c.bf16 %v5472, %v5468
        %v6293 = vpack.c.bf16 %v5478, %v5474
        %v6294 = vpack.c.bf16 %v5480, %v5476
        %v6295 = vpack.c.bf16 %v5486, %v5482
        %v6296 = vpack.c.bf16 %v5488, %v5484
        %v6297 = vpack.c.bf16 %v5494, %v5490
        %v6298 = vpack.c.bf16 %v5496, %v5492
        %v6299 = vpack.c.bf16 %v5502, %v5498
        %v6300 = vpack.c.bf16 %v5504, %v5500
        %v6301 = vpack.c.bf16 %v5510, %v5506
        %v6302 = vpack.c.bf16 %v5512, %v5508
        %v6303 = vpack.c.bf16 %v5518, %v5514
        %v6304 = vpack.c.bf16 %v5520, %v5516
        %v6305 = vpack.c.bf16 %v5526, %v5522
        %v6306 = vpack.c.bf16 %v5528, %v5524
        %v6307 = vpack.c.bf16 %v5534, %v5530
        %v6308 = vpack.c.bf16 %v5536, %v5532
        %v6309 = vpack.c.bf16 %v5542, %v5538
        %v6310 = vpack.c.bf16 %v5544, %v5540
        %v6311 = vpack.c.bf16 %v5550, %v5546
        %v6312 = vpack.c.bf16 %v5552, %v5548
        %v6313 = vpack.c.bf16 %v5558, %v5554
        %v6314 = vpack.c.bf16 %v5560, %v5556
        %v6315 = vpack.c.bf16 %v5566, %v5562
        %v6316 = vpack.c.bf16 %v5568, %v5564
        %v6317 = vpack.c.bf16 %v5574, %v5570
        %v6318 = vpack.c.bf16 %v5576, %v5572
        %v6319 = vpack.c.bf16 %v5582, %v5578
        %v6320 = vpack.c.bf16 %v5584, %v5580
        %v6321 = vpack.c.bf16 %v5590, %v5586
        %v6322 = vpack.c.bf16 %v5592, %v5588
        %v6323 = vpack.c.bf16 %v5598, %v5594
        %v6324 = vpack.c.bf16 %v5600, %v5596
        %v6325 = vpack.c.bf16 %v5606, %v5602
        %v6326 = vpack.c.bf16 %v5608, %v5604
        %v6327 = vpack.c.bf16 %v5614, %v5610
        %v6328 = vpack.c.bf16 %v5616, %v5612
        %v6329 = vpack.c.bf16 %v5622, %v5618
        %v6330 = vpack.c.bf16 %v5624, %v5620
        %v6331 = vpack.c.bf16 %v5630, %v5626
        %v6332 = vpack.c.bf16 %v5632, %v5628
        %v6333 = vpack.c.bf16 %v5638, %v5634
        %v6334 = vpack.c.bf16 %v5640, %v5636
        %v6335 = vpack.c.bf16 %v5646, %v5642
        %v6336 = vpack.c.bf16 %v5648, %v5644
        %v6337 = vpack.c.bf16 %v5654, %v5650
        %v6338 = vpack.c.bf16 %v5656, %v5652
        %v6339 = vpack.c.bf16 %v5662, %v5658
        %v6340 = vpack.c.bf16 %v5664, %v5660
        %v6341 = vpack.c.bf16 %v5670, %v5666
        %v6342 = vpack.c.bf16 %v5672, %v5668
        %v6343 = vpack.c.bf16 %v5678, %v5674
        %v6344 = vpack.c.bf16 %v5680, %v5676
        %v6345 = vpack.c.bf16 %v5686, %v5682
        %v6346 = vpack.c.bf16 %v5688, %v5684
        %v6347 = vpack.c.bf16 %v5694, %v5690
        %v6348 = vpack.c.bf16 %v5696, %v5692
        %v6349 = vpack.c.bf16 %v5702, %v5698
        %v6350 = vpack.c.bf16 %v5704, %v5700
        %v6351 = vpack.c.bf16 %v5710, %v5706
        %v6352 = vpack.c.bf16 %v5712, %v5708
        %v6353 = vpack.c.bf16 %v5718, %v5714
        %v6354 = vpack.c.bf16 %v5720, %v5716
        %v6355 = vpack.c.bf16 %v5726, %v5722
        %v6356 = vpack.c.bf16 %v5728, %v5724
        %v6357 = vpack.c.bf16 %v5734, %v5730
        %v6358 = vpack.c.bf16 %v5736, %v5732
        %v6359 = vpack.c.bf16 %v5742, %v5738
        %v6360 = vpack.c.bf16 %v5744, %v5740
        %v6361 = vpack.c.bf16 %v5750, %v5746
        %v6362 = vpack.c.bf16 %v5752, %v5748
        %v6363 = vpack.c.bf16 %v5758, %v5754
        %v6364 = vpack.c.bf16 %v5760, %v5756
        %v6365 = vpack.c.bf16 %v5766, %v5762
        %v6366 = vpack.c.bf16 %v5768, %v5764
        %v6367 = vpack.c.bf16 %v5774, %v5770
        %v6368 = vpack.c.bf16 %v5776, %v5772
        %v6369 = vpack.c.bf16 %v5782, %v5778
        %v6370 = vpack.c.bf16 %v5784, %v5780
        %v6371 = vpack.c.bf16 %v5790, %v5786
        %v6372 = vpack.c.bf16 %v5792, %v5788
        %v6373 = vpack.c.bf16 %v5798, %v5794
        %v6374 = vpack.c.bf16 %v5800, %v5796
        %v6375 = vpack.c.bf16 %v5806, %v5802
        %v6376 = vpack.c.bf16 %v5808, %v5804
        %v6377 = vpack.c.bf16 %v5814, %v5810
        %v6378 = vpack.c.bf16 %v5816, %v5812
        %v6379 = vpack.c.bf16 %v5822, %v5818
        %v6380 = vpack.c.bf16 %v5824, %v5820
        %v6381 = vpack.c.bf16 %v5830, %v5826
        %v6382 = vpack.c.bf16 %v5832, %v5828
        %v6383 = vpack.c.bf16 %v5838, %v5834
        %v6384 = vpack.c.bf16 %v5840, %v5836
        %v6385 = vpack.c.bf16 %v5846, %v5842
        %v6386 = vpack.c.bf16 %v5848, %v5844
        %v6387 = vpack.c.bf16 %v5854, %v5850
        %v6388 = vpack.c.bf16 %v5856, %v5852
        %v6389 = vpack.c.bf16 %v5862, %v5858
        %v6390 = vpack.c.bf16 %v5864, %v5860
        %v6391 = vpack.c.bf16 %v5870, %v5866
        %v6392 = vpack.c.bf16 %v5872, %v5868
        %v6393 = vpack.c.bf16 %v5878, %v5874
        %v6394 = vpack.c.bf16 %v5880, %v5876
        %v6395 = vpack.c.bf16 %v5886, %v5882
        %v6396 = vpack.c.bf16 %v5888, %v5884
        %v6397 = vpack.c.bf16 %v5894, %v5890
        %v6398 = vpack.c.bf16 %v5896, %v5892
        %v6399 = vpack.c.bf16 %v5902, %v5898
        %v6400 = vpack.c.bf16 %v5904, %v5900
        %v6401 = vpack.c.bf16 %v5910, %v5906
        %v6402 = vpack.c.bf16 %v5912, %v5908
        %v6403 = vpack.c.bf16 %v5918, %v5914
        %v6404 = vpack.c.bf16 %v5920, %v5916
        %v6405 = vpack.c.bf16 %v5926, %v5922
        %v6406 = vpack.c.bf16 %v5928, %v5924
        %v6407 = vpack.c.bf16 %v5934, %v5930
        %v6408 = vpack.c.bf16 %v5936, %v5932
        %v6409 = vpack.c.bf16 %v5942, %v5938
        %v6410 = vpack.c.bf16 %v5944, %v5940
        %v6411 = vpack.c.bf16 %v5950, %v5946
        %v6412 = vpack.c.bf16 %v5952, %v5948
        %v6413 = vpack.c.bf16 %v5958, %v5954
        %v6414 = vpack.c.bf16 %v5960, %v5956
        %v6415 = vpack.c.bf16 %v5966, %v5962
        %v6416 = vpack.c.bf16 %v5968, %v5964
        %v6417 = vpack.c.bf16 %v5974, %v5970
        %v6418 = vpack.c.bf16 %v5976, %v5972
        %v6419 = vpack.c.bf16 %v5982, %v5978
        %v6420 = vpack.c.bf16 %v5984, %v5980
        %v6421 = vpack.c.bf16 %v5990, %v5986
        %v6422 = vpack.c.bf16 %v5992, %v5988
        %v6423 = vpack.c.bf16 %v5998, %v5994
        %v6424 = vpack.c.bf16 %v6000, %v5996
        %v6425 = vpack.c.bf16 %v6006, %v6002
        %v6426 = vpack.c.bf16 %v6008, %v6004
        %v6427 = vpack.c.bf16 %v6014, %v6010
        %v6428 = vpack.c.bf16 %v6016, %v6012
        %v6429 = vpack.c.bf16 %v6022, %v6018
        %v6430 = vpack.c.bf16 %v6024, %v6020
        %v6431 = vpack.c.bf16 %v6030, %v6026
        %v6432 = vpack.c.bf16 %v6032, %v6028
        %v6433 = vpack.c.bf16 %v6038, %v6034
        %v6434 = vpack.c.bf16 %v6040, %v6036
        %v6435 = vpack.c.bf16 %v6046, %v6042
        %v6436 = vpack.c.bf16 %v6048, %v6044
        %v6437 = vpack.c.bf16 %v6054, %v6050
        %v6438 = vpack.c.bf16 %v6056, %v6052
        %v6439 = vpack.c.bf16 %v6062, %v6058
        %v6440 = vpack.c.bf16 %v6064, %v6060
        %v6441 = vpack.c.bf16 %v6070, %v6066
        %v6442 = vpack.c.bf16 %v6072, %v6068
        %v6443 = vpack.c.bf16 %v6078, %v6074
        %v6444 = vpack.c.bf16 %v6080, %v6076
        %v6445 = vpack.c.bf16 %v6086, %v6082
        %v6446 = vpack.c.bf16 %v6088, %v6084
        %v6447 = vpack.c.bf16 %v6094, %v6090
        %v6448 = vpack.c.bf16 %v6096, %v6092
        %v6449 = vpack.c.bf16 %v6102, %v6098
        %v6450 = vpack.c.bf16 %v6104, %v6100
        %v6451 = vpack.c.bf16 %v6110, %v6106
        %v6452 = vpack.c.bf16 %v6112, %v6108
        %v6453 = vpack.c.bf16 %v6118, %v6114
        %v6454 = vpack.c.bf16 %v6120, %v6116
        %v6455 = vpack.c.bf16 %v6126, %v6122
        %v6456 = vpack.c.bf16 %v6128, %v6124
        %v6457 = vpack.c.bf16 %v6134, %v6130
        %v6458 = vpack.c.bf16 %v6136, %v6132
        %v6459 = vpack.c.bf16 %v6142, %v6138
        %v6460 = vpack.c.bf16 %v6144, %v6140
        %v6461 = vpack.c.bf16 %v6150, %v6146
        %v6462 = vpack.c.bf16 %v6152, %v6148
        %v6463 = vpack.c.bf16 %v6158, %v6154
        %v6464 = vpack.c.bf16 %v6160, %v6156
        %v6465 = vpack.c.bf16 %v6166, %v6162
        %v6466 = vpack.c.bf16 %v6168, %v6164
        %v6467 = vpack.c.bf16 %v6174, %v6170
        %v6468 = vpack.c.bf16 %v6176, %v6172
        %v6469 = vpack.c.bf16 %v6182, %v6178
        %v6470 = vpack.c.bf16 %v6184, %v6180
        %v6471 = vpack.c.bf16 %v6190, %v6186
        %v6472 = vpack.c.bf16 %v6192, %v6188
        %v6473 = vpack.c.bf16 %v6198, %v6194
        %v6474 = vpack.c.bf16 %v6200, %v6196
        %v6475 = vpack.c.bf16 %v6206, %v6202
        %v6476 = vpack.c.bf16 %v6208, %v6204
        %v6477 = vpack.c.bf16 %v6214, %v6210
        %v6478 = vpack.c.bf16 %v6216, %v6212
        %v6479 = vpack.c.bf16 %v6222, %v6218
        %v6480 = vpack.c.bf16 %v6224, %v6220
        %v6481 = vcombine.high %v567, %v567
        %v6482 = vcombine.high %v568, %v568
        %v6483 = vcombine.high %v569, %v569
        %v6484 = vcombine.high %v570, %v570
        %v6485 = vcombine.high %v571, %v571
        %v6486 = vcombine.high %v572, %v572
        %v6487 = vcombine.high %v573, %v573
        %v6488 = vcombine.high %v574, %v574
        %vm6497 = vcmask 1043456
        %v6498 = vsel %vm6497, %v567, 1.0
        %v6499 = vsel %vm6497, %v6481, 1.0
        %v6500 = vsel %vm6497, %v568, 1.0
        %v6501 = vsel %vm6497, %v6482, 1.0
        %v6502 = vsel %vm6497, %v569, 1.0
        %v6503 = vsel %vm6497, %v6483, 1.0
        %v6504 = vsel %vm6497, %v570, 1.0
        %v6505 = vsel %vm6497, %v6484, 1.0
        %v6506 = vsel %vm6497, %v571, 1.0
        %v6507 = vsel %vm6497, %v6485, 1.0
        %v6508 = vsel %vm6497, %v572, 1.0
        %v6509 = vsel %vm6497, %v6486, 1.0
        %v6510 = vsel %vm6497, %v573, 1.0
        %v6511 = vsel %vm6497, %v6487, 1.0
        %v6512 = vsel %vm6497, %v574, 1.0
        %v6513 = vsel %vm6497, %v6488, 1.0
        %v6514 = vpack.c.bf16 %v6498, %v6498
        %v6515 = vpack.c.bf16 %v6499, %v6499
        %v6516 = vpack.c.bf16 %v6500, %v6500
        %v6517 = vpack.c.bf16 %v6501, %v6501
        %v6518 = vpack.c.bf16 %v6502, %v6502
        %v6519 = vpack.c.bf16 %v6503, %v6503
        %v6520 = vpack.c.bf16 %v6504, %v6504
        %v6521 = vpack.c.bf16 %v6505, %v6505
        %v6522 = vpack.c.bf16 %v6506, %v6506
        %v6523 = vpack.c.bf16 %v6507, %v6507
        %v6524 = vpack.c.bf16 %v6508, %v6508
        %v6525 = vpack.c.bf16 %v6509, %v6509
        %v6526 = vpack.c.bf16 %v6510, %v6510
        %v6527 = vpack.c.bf16 %v6511, %v6511
        %v6528 = vpack.c.bf16 %v6512, %v6512
        %v6529 = vpack.c.bf16 %v6513, %v6513
        %6530 = vmatprep.subr.bf16.mxu0 %v6240
        %6531 = vmatpush1.bf16.msra.mxu0 %v6239
        %6532 = vmatprep.subr.bf16.mxu0 %v6238
        %6533 = vmatpush1.bf16.msra.mxu0 %v6237
        %6534 = vmatprep.subr.bf16.mxu0 %v6236
        %6535 = vmatpush1.bf16.msra.mxu0 %v6235
        %6536 = vmatprep.subr.bf16.mxu0 %v6234
        %6537 = vmatpush1.bf16.msra.mxu0 %v6233
        %6538 = vmatprep.subr.bf16.mxu0 %v6232
        %6539 = vmatpush1.bf16.msra.mxu0 %v6231
        %6540 = vmatprep.subr.bf16.mxu0 %v6230
        %6541 = vmatpush1.bf16.msra.mxu0 %v6229
        %6542 = vmatprep.subr.bf16.mxu0 %v6228
        %6543 = vmatpush1.bf16.msra.mxu0 %v6227
        %6544 = vmatprep.subr.bf16.mxu0 %v6226
        %6545 = vmatpush1.bf16.msra.mxu0 %v6225
        %6546 = vmatprep.subr.bf16.mxu0 %v6256
        %6547 = vmatpush2.bf16.msra.mxu0 %v6255
        %6548 = vmatprep.subr.bf16.mxu0 %v6254
        %6549 = vmatpush2.bf16.msra.mxu0 %v6253
        %6550 = vmatprep.subr.bf16.mxu0 %v6252
        %6551 = vmatpush2.bf16.msra.mxu0 %v6251
        %6552 = vmatprep.subr.bf16.mxu0 %v6250
        %6553 = vmatpush2.bf16.msra.mxu0 %v6249
        %6554 = vmatprep.subr.bf16.mxu0 %v6248
        %6555 = vmatpush2.bf16.msra.mxu0 %v6247
        %6556 = vmatprep.subr.bf16.mxu0 %v6246
        %6557 = vmatpush2.bf16.msra.mxu0 %v6245
        %6558 = vmatprep.subr.bf16.mxu0 %v6244
        %6559 = vmatpush2.bf16.msra.mxu0 %v6243
        %6560 = vmatprep.subr.bf16.mxu0 %v6242
        %6561 = vmatpush2.bf16.msra.mxu0 %v6241
        %6562 = vmatprep.mubr.bf16.mxu0 %v6515
        %6563 = vmatmul.mubr.bf16.gmra.mxu0 %v6514
        %v6564 = vpop.f32.mrf.mxu0
        %v6565 = vadd.f32 0.0, %v6564
        %v6566 = vpop.f32.mrf.mxu0
        %v6567 = vadd.f32 0.0, %v6566
        %v6568 = vpop.f32.mrf.mxu0
        %v6569 = vpop.f32.mrf.mxu0
        %6570 = vdwg.mxu0
        %6571 = vmatprep.subr.bf16.mxu0 %v6272
        %6572 = vmatpush1.bf16.msra.mxu0 %v6271
        %6573 = vmatprep.subr.bf16.mxu0 %v6270
        %6574 = vmatpush1.bf16.msra.mxu0 %v6269
        %6575 = vmatprep.subr.bf16.mxu0 %v6268
        %6576 = vmatpush1.bf16.msra.mxu0 %v6267
        %6577 = vmatprep.subr.bf16.mxu0 %v6266
        %6578 = vmatpush1.bf16.msra.mxu0 %v6265
        %6579 = vmatprep.subr.bf16.mxu0 %v6264
        %6580 = vmatpush1.bf16.msra.mxu0 %v6263
        %6581 = vmatprep.subr.bf16.mxu0 %v6262
        %6582 = vmatpush1.bf16.msra.mxu0 %v6261
        %6583 = vmatprep.subr.bf16.mxu0 %v6260
        %6584 = vmatpush1.bf16.msra.mxu0 %v6259
        %6585 = vmatprep.subr.bf16.mxu0 %v6258
        %6586 = vmatpush1.bf16.msra.mxu0 %v6257
        %6587 = vmatprep.subr.bf16.mxu0 %v6288
        %6588 = vmatpush2.bf16.msra.mxu0 %v6287
        %6589 = vmatprep.subr.bf16.mxu0 %v6286
        %6590 = vmatpush2.bf16.msra.mxu0 %v6285
        %6591 = vmatprep.subr.bf16.mxu0 %v6284
        %6592 = vmatpush2.bf16.msra.mxu0 %v6283
        %6593 = vmatprep.subr.bf16.mxu0 %v6282
        %6594 = vmatpush2.bf16.msra.mxu0 %v6281
        %6595 = vmatprep.subr.bf16.mxu0 %v6280
        %6596 = vmatpush2.bf16.msra.mxu0 %v6279
        %6597 = vmatprep.subr.bf16.mxu0 %v6278
        %6598 = vmatpush2.bf16.msra.mxu0 %v6277
        %6599 = vmatprep.subr.bf16.mxu0 %v6276
        %6600 = vmatpush2.bf16.msra.mxu0 %v6275
        %6601 = vmatprep.subr.bf16.mxu0 %v6274
        %6602 = vmatpush2.bf16.msra.mxu0 %v6273
        %6603 = vmatprep.mubr.bf16.mxu0 %v6517
        %6604 = vmatmul.mubr.bf16.gmra.mxu0 %v6516
        %v6605 = vpop.f32.mrf.mxu0
        %v6606 = vadd.f32 0.0, %v6605
        %v6607 = vpop.f32.mrf.mxu0
        %v6608 = vadd.f32 0.0, %v6607
        %v6609 = vpop.f32.mrf.mxu0
        %v6610 = vpop.f32.mrf.mxu0
        %6611 = vdwg.mxu0
        %6612 = vmatprep.subr.bf16.mxu0 %v6304
        %6613 = vmatpush1.bf16.msra.mxu0 %v6303
        %6614 = vmatprep.subr.bf16.mxu0 %v6302
        %6615 = vmatpush1.bf16.msra.mxu0 %v6301
        %6616 = vmatprep.subr.bf16.mxu0 %v6300
        %6617 = vmatpush1.bf16.msra.mxu0 %v6299
        %6618 = vmatprep.subr.bf16.mxu0 %v6298
        %6619 = vmatpush1.bf16.msra.mxu0 %v6297
        %6620 = vmatprep.subr.bf16.mxu0 %v6296
        %6621 = vmatpush1.bf16.msra.mxu0 %v6295
        %6622 = vmatprep.subr.bf16.mxu0 %v6294
        %6623 = vmatpush1.bf16.msra.mxu0 %v6293
        %6624 = vmatprep.subr.bf16.mxu0 %v6292
        %6625 = vmatpush1.bf16.msra.mxu0 %v6291
        %6626 = vmatprep.subr.bf16.mxu0 %v6290
        %6627 = vmatpush1.bf16.msra.mxu0 %v6289
        %6628 = vmatprep.subr.bf16.mxu0 %v6320
        %6629 = vmatpush2.bf16.msra.mxu0 %v6319
        %6630 = vmatprep.subr.bf16.mxu0 %v6318
        %6631 = vmatpush2.bf16.msra.mxu0 %v6317
        %6632 = vmatprep.subr.bf16.mxu0 %v6316
        %6633 = vmatpush2.bf16.msra.mxu0 %v6315
        %6634 = vmatprep.subr.bf16.mxu0 %v6314
        %6635 = vmatpush2.bf16.msra.mxu0 %v6313
        %6636 = vmatprep.subr.bf16.mxu0 %v6312
        %6637 = vmatpush2.bf16.msra.mxu0 %v6311
        %6638 = vmatprep.subr.bf16.mxu0 %v6310
        %6639 = vmatpush2.bf16.msra.mxu0 %v6309
        %6640 = vmatprep.subr.bf16.mxu0 %v6308
        %6641 = vmatpush2.bf16.msra.mxu0 %v6307
        %6642 = vmatprep.subr.bf16.mxu0 %v6306
        %6643 = vmatpush2.bf16.msra.mxu0 %v6305
        %6644 = vmatprep.mubr.bf16.mxu0 %v6519
        %6645 = vmatmul.mubr.bf16.gmra.mxu0 %v6518
        %v6646 = vpop.f32.mrf.mxu0
        %v6647 = vadd.f32 0.0, %v6646
        %v6648 = vpop.f32.mrf.mxu0
        %v6649 = vadd.f32 0.0, %v6648
        %v6650 = vpop.f32.mrf.mxu0
        %v6651 = vpop.f32.mrf.mxu0
        %6652 = vdwg.mxu0
        %6653 = vmatprep.subr.bf16.mxu0 %v6336
        %6654 = vmatpush1.bf16.msra.mxu0 %v6335
        %6655 = vmatprep.subr.bf16.mxu0 %v6334
        %6656 = vmatpush1.bf16.msra.mxu0 %v6333
        %6657 = vmatprep.subr.bf16.mxu0 %v6332
        %6658 = vmatpush1.bf16.msra.mxu0 %v6331
        %6659 = vmatprep.subr.bf16.mxu0 %v6330
        %6660 = vmatpush1.bf16.msra.mxu0 %v6329
        %6661 = vmatprep.subr.bf16.mxu0 %v6328
        %6662 = vmatpush1.bf16.msra.mxu0 %v6327
        %6663 = vmatprep.subr.bf16.mxu0 %v6326
        %6664 = vmatpush1.bf16.msra.mxu0 %v6325
        %6665 = vmatprep.subr.bf16.mxu0 %v6324
        %6666 = vmatpush1.bf16.msra.mxu0 %v6323
        %6667 = vmatprep.subr.bf16.mxu0 %v6322
        %6668 = vmatpush1.bf16.msra.mxu0 %v6321
        %6669 = vmatprep.subr.bf16.mxu0 %v6352
        %6670 = vmatpush2.bf16.msra.mxu0 %v6351
        %6671 = vmatprep.subr.bf16.mxu0 %v6350
        %6672 = vmatpush2.bf16.msra.mxu0 %v6349
        %6673 = vmatprep.subr.bf16.mxu0 %v6348
        %6674 = vmatpush2.bf16.msra.mxu0 %v6347
        %6675 = vmatprep.subr.bf16.mxu0 %v6346
        %6676 = vmatpush2.bf16.msra.mxu0 %v6345
        %6677 = vmatprep.subr.bf16.mxu0 %v6344
        %6678 = vmatpush2.bf16.msra.mxu0 %v6343
        %6679 = vmatprep.subr.bf16.mxu0 %v6342
        %6680 = vmatpush2.bf16.msra.mxu0 %v6341
        %6681 = vmatprep.subr.bf16.mxu0 %v6340
        %6682 = vmatpush2.bf16.msra.mxu0 %v6339
        %6683 = vmatprep.subr.bf16.mxu0 %v6338
        %6684 = vmatpush2.bf16.msra.mxu0 %v6337
        %6685 = vmatprep.mubr.bf16.mxu0 %v6521
        %6686 = vmatmul.mubr.bf16.gmra.mxu0 %v6520
        %v6687 = vpop.f32.mrf.mxu0
        %v6688 = vadd.f32 0.0, %v6687
        %v6689 = vpop.f32.mrf.mxu0
        %v6690 = vadd.f32 0.0, %v6689
        %v6691 = vpop.f32.mrf.mxu0
        %v6692 = vpop.f32.mrf.mxu0
        %6693 = vdwg.mxu0
        %6694 = vmatprep.subr.bf16.mxu0 %v6368
        %6695 = vmatpush1.bf16.msra.mxu0 %v6367
        %6696 = vmatprep.subr.bf16.mxu0 %v6366
        %6697 = vmatpush1.bf16.msra.mxu0 %v6365
        %6698 = vmatprep.subr.bf16.mxu0 %v6364
        %6699 = vmatpush1.bf16.msra.mxu0 %v6363
        %6700 = vmatprep.subr.bf16.mxu0 %v6362
        %6701 = vmatpush1.bf16.msra.mxu0 %v6361
        %6702 = vmatprep.subr.bf16.mxu0 %v6360
        %6703 = vmatpush1.bf16.msra.mxu0 %v6359
        %6704 = vmatprep.subr.bf16.mxu0 %v6358
        %6705 = vmatpush1.bf16.msra.mxu0 %v6357
        %6706 = vmatprep.subr.bf16.mxu0 %v6356
        %6707 = vmatpush1.bf16.msra.mxu0 %v6355
        %6708 = vmatprep.subr.bf16.mxu0 %v6354
        %6709 = vmatpush1.bf16.msra.mxu0 %v6353
        %6710 = vmatprep.subr.bf16.mxu0 %v6384
        %6711 = vmatpush2.bf16.msra.mxu0 %v6383
        %6712 = vmatprep.subr.bf16.mxu0 %v6382
        %6713 = vmatpush2.bf16.msra.mxu0 %v6381
        %6714 = vmatprep.subr.bf16.mxu0 %v6380
        %6715 = vmatpush2.bf16.msra.mxu0 %v6379
        %6716 = vmatprep.subr.bf16.mxu0 %v6378
        %6717 = vmatpush2.bf16.msra.mxu0 %v6377
        %6718 = vmatprep.subr.bf16.mxu0 %v6376
        %6719 = vmatpush2.bf16.msra.mxu0 %v6375
        %6720 = vmatprep.subr.bf16.mxu0 %v6374
        %6721 = vmatpush2.bf16.msra.mxu0 %v6373
        %6722 = vmatprep.subr.bf16.mxu0 %v6372
        %6723 = vmatpush2.bf16.msra.mxu0 %v6371
        %6724 = vmatprep.subr.bf16.mxu0 %v6370
        %6725 = vmatpush2.bf16.msra.mxu0 %v6369
        %6726 = vmatprep.mubr.bf16.mxu0 %v6523
        %6727 = vmatmul.mubr.bf16.gmra.mxu0 %v6522
        %v6728 = vpop.f32.mrf.mxu0
        %v6729 = vadd.f32 0.0, %v6728
        %v6730 = vpop.f32.mrf.mxu0
        %v6731 = vadd.f32 0.0, %v6730
        %v6732 = vpop.f32.mrf.mxu0
        %v6733 = vpop.f32.mrf.mxu0
        %6734 = vdwg.mxu0
        %6735 = vmatprep.subr.bf16.mxu0 %v6400
        %6736 = vmatpush1.bf16.msra.mxu0 %v6399
        %6737 = vmatprep.subr.bf16.mxu0 %v6398
        %6738 = vmatpush1.bf16.msra.mxu0 %v6397
        %6739 = vmatprep.subr.bf16.mxu0 %v6396
        %6740 = vmatpush1.bf16.msra.mxu0 %v6395
        %6741 = vmatprep.subr.bf16.mxu0 %v6394
        %6742 = vmatpush1.bf16.msra.mxu0 %v6393
        %6743 = vmatprep.subr.bf16.mxu0 %v6392
        %6744 = vmatpush1.bf16.msra.mxu0 %v6391
        %6745 = vmatprep.subr.bf16.mxu0 %v6390
        %6746 = vmatpush1.bf16.msra.mxu0 %v6389
        %6747 = vmatprep.subr.bf16.mxu0 %v6388
        %6748 = vmatpush1.bf16.msra.mxu0 %v6387
        %6749 = vmatprep.subr.bf16.mxu0 %v6386
        %6750 = vmatpush1.bf16.msra.mxu0 %v6385
        %6751 = vmatprep.subr.bf16.mxu0 %v6416
        %6752 = vmatpush2.bf16.msra.mxu0 %v6415
        %6753 = vmatprep.subr.bf16.mxu0 %v6414
        %6754 = vmatpush2.bf16.msra.mxu0 %v6413
        %6755 = vmatprep.subr.bf16.mxu0 %v6412
        %6756 = vmatpush2.bf16.msra.mxu0 %v6411
        %6757 = vmatprep.subr.bf16.mxu0 %v6410
        %6758 = vmatpush2.bf16.msra.mxu0 %v6409
        %6759 = vmatprep.subr.bf16.mxu0 %v6408
        %6760 = vmatpush2.bf16.msra.mxu0 %v6407
        %6761 = vmatprep.subr.bf16.mxu0 %v6406
        %6762 = vmatpush2.bf16.msra.mxu0 %v6405
        %6763 = vmatprep.subr.bf16.mxu0 %v6404
        %6764 = vmatpush2.bf16.msra.mxu0 %v6403
        %6765 = vmatprep.subr.bf16.mxu0 %v6402
        %6766 = vmatpush2.bf16.msra.mxu0 %v6401
        %6767 = vmatprep.mubr.bf16.mxu0 %v6525
        %6768 = vmatmul.mubr.bf16.gmra.mxu0 %v6524
        %v6769 = vpop.f32.mrf.mxu0
        %v6770 = vadd.f32 0.0, %v6769
        %v6771 = vpop.f32.mrf.mxu0
        %v6772 = vadd.f32 0.0, %v6771
        %v6773 = vpop.f32.mrf.mxu0
        %v6774 = vpop.f32.mrf.mxu0
        %6775 = vdwg.mxu0
        %6776 = vmatprep.subr.bf16.mxu0 %v6432
        %6777 = vmatpush1.bf16.msra.mxu0 %v6431
        %6778 = vmatprep.subr.bf16.mxu0 %v6430
        %6779 = vmatpush1.bf16.msra.mxu0 %v6429
        %6780 = vmatprep.subr.bf16.mxu0 %v6428
        %6781 = vmatpush1.bf16.msra.mxu0 %v6427
        %6782 = vmatprep.subr.bf16.mxu0 %v6426
        %6783 = vmatpush1.bf16.msra.mxu0 %v6425
        %6784 = vmatprep.subr.bf16.mxu0 %v6424
        %6785 = vmatpush1.bf16.msra.mxu0 %v6423
        %6786 = vmatprep.subr.bf16.mxu0 %v6422
        %6787 = vmatpush1.bf16.msra.mxu0 %v6421
        %6788 = vmatprep.subr.bf16.mxu0 %v6420
        %6789 = vmatpush1.bf16.msra.mxu0 %v6419
        %6790 = vmatprep.subr.bf16.mxu0 %v6418
        %6791 = vmatpush1.bf16.msra.mxu0 %v6417
        %6792 = vmatprep.subr.bf16.mxu0 %v6448
        %6793 = vmatpush2.bf16.msra.mxu0 %v6447
        %6794 = vmatprep.subr.bf16.mxu0 %v6446
        %6795 = vmatpush2.bf16.msra.mxu0 %v6445
        %6796 = vmatprep.subr.bf16.mxu0 %v6444
        %6797 = vmatpush2.bf16.msra.mxu0 %v6443
        %6798 = vmatprep.subr.bf16.mxu0 %v6442
        %6799 = vmatpush2.bf16.msra.mxu0 %v6441
        %6800 = vmatprep.subr.bf16.mxu0 %v6440
        %6801 = vmatpush2.bf16.msra.mxu0 %v6439
        %6802 = vmatprep.subr.bf16.mxu0 %v6438
        %6803 = vmatpush2.bf16.msra.mxu0 %v6437
        %6804 = vmatprep.subr.bf16.mxu0 %v6436
        %6805 = vmatpush2.bf16.msra.mxu0 %v6435
        %6806 = vmatprep.subr.bf16.mxu0 %v6434
        %6807 = vmatpush2.bf16.msra.mxu0 %v6433
        %6808 = vmatprep.mubr.bf16.mxu0 %v6527
        %6809 = vmatmul.mubr.bf16.gmra.mxu0 %v6526
        %v6810 = vpop.f32.mrf.mxu0
        %v6811 = vadd.f32 0.0, %v6810
        %v6812 = vpop.f32.mrf.mxu0
        %v6813 = vadd.f32 0.0, %v6812
        %v6814 = vpop.f32.mrf.mxu0
        %v6815 = vpop.f32.mrf.mxu0
        %6816 = vdwg.mxu0
        %6817 = vmatprep.subr.bf16.mxu0 %v6464
        %6818 = vmatpush1.bf16.msra.mxu0 %v6463
        %6819 = vmatprep.subr.bf16.mxu0 %v6462
        %6820 = vmatpush1.bf16.msra.mxu0 %v6461
        %6821 = vmatprep.subr.bf16.mxu0 %v6460
        %6822 = vmatpush1.bf16.msra.mxu0 %v6459
        %6823 = vmatprep.subr.bf16.mxu0 %v6458
        %6824 = vmatpush1.bf16.msra.mxu0 %v6457
        %6825 = vmatprep.subr.bf16.mxu0 %v6456
        %6826 = vmatpush1.bf16.msra.mxu0 %v6455
        %6827 = vmatprep.subr.bf16.mxu0 %v6454
        %6828 = vmatpush1.bf16.msra.mxu0 %v6453
        %6829 = vmatprep.subr.bf16.mxu0 %v6452
        %6830 = vmatpush1.bf16.msra.mxu0 %v6451
        %6831 = vmatprep.subr.bf16.mxu0 %v6450
        %6832 = vmatpush1.bf16.msra.mxu0 %v6449
        %6833 = vmatprep.subr.bf16.mxu0 %v6480
        %6834 = vmatpush2.bf16.msra.mxu0 %v6479
        %6835 = vmatprep.subr.bf16.mxu0 %v6478
        %6836 = vmatpush2.bf16.msra.mxu0 %v6477
        %6837 = vmatprep.subr.bf16.mxu0 %v6476
        %6838 = vmatpush2.bf16.msra.mxu0 %v6475
        %6839 = vmatprep.subr.bf16.mxu0 %v6474
        %6840 = vmatpush2.bf16.msra.mxu0 %v6473
        %6841 = vmatprep.subr.bf16.mxu0 %v6472
        %6842 = vmatpush2.bf16.msra.mxu0 %v6471
        %6843 = vmatprep.subr.bf16.mxu0 %v6470
        %6844 = vmatpush2.bf16.msra.mxu0 %v6469
        %6845 = vmatprep.subr.bf16.mxu0 %v6468
        %6846 = vmatpush2.bf16.msra.mxu0 %v6467
        %6847 = vmatprep.subr.bf16.mxu0 %v6466
        %6848 = vmatpush2.bf16.msra.mxu0 %v6465
        %6849 = vmatprep.mubr.bf16.mxu0 %v6529
        %6850 = vmatmul.mubr.bf16.gmra.mxu0 %v6528
        %v6851 = vpop.f32.mrf.mxu0
        %v6852 = vadd.f32 0.0, %v6851
        %v6853 = vpop.f32.mrf.mxu0
        %v6854 = vadd.f32 0.0, %v6853
        %v6855 = vpop.f32.mrf.mxu0
        %v6856 = vpop.f32.mrf.mxu0
        %6857 = vdwg.mxu0
        %v6858 = vlaneseq
        %v6859 = vshrl.u32 %v6858, 7
        %v6860 = vsub.s32 4, %v6859
        %v6861 = vrot.slane %v6565, %v6860
        %v6862 = vlaneseq
        %v6863 = vshrl.u32 %v6862, 7
        %v6864 = vsub.s32 4, %v6863
        %v6865 = vrot.slane %v6567, %v6864
        %v6866 = vlaneseq
        %v6867 = vshrl.u32 %v6866, 7
        %v6868 = vsub.s32 4, %v6867
        %v6869 = vrot.slane %v6606, %v6868
        %v6870 = vlaneseq
        %v6871 = vshrl.u32 %v6870, 7
        %v6872 = vsub.s32 4, %v6871
        %v6873 = vrot.slane %v6608, %v6872
        %v6874 = vlaneseq
        %v6875 = vshrl.u32 %v6874, 7
        %v6876 = vsub.s32 4, %v6875
        %v6877 = vrot.slane %v6647, %v6876
        %v6878 = vlaneseq
        %v6879 = vshrl.u32 %v6878, 7
        %v6880 = vsub.s32 4, %v6879
        %v6881 = vrot.slane %v6649, %v6880
        %v6882 = vlaneseq
        %v6883 = vshrl.u32 %v6882, 7
        %v6884 = vsub.s32 4, %v6883
        %v6885 = vrot.slane %v6688, %v6884
        %v6886 = vlaneseq
        %v6887 = vshrl.u32 %v6886, 7
        %v6888 = vsub.s32 4, %v6887
        %v6889 = vrot.slane %v6690, %v6888
        %v6890 = vlaneseq
        %v6891 = vshrl.u32 %v6890, 7
        %v6892 = vsub.s32 4, %v6891
        %v6893 = vrot.slane %v6729, %v6892
        %v6894 = vlaneseq
        %v6895 = vshrl.u32 %v6894, 7
        %v6896 = vsub.s32 4, %v6895
        %v6897 = vrot.slane %v6731, %v6896
        %v6898 = vlaneseq
        %v6899 = vshrl.u32 %v6898, 7
        %v6900 = vsub.s32 4, %v6899
        %v6901 = vrot.slane %v6770, %v6900
        %v6902 = vlaneseq
        %v6903 = vshrl.u32 %v6902, 7
        %v6904 = vsub.s32 4, %v6903
        %v6905 = vrot.slane %v6772, %v6904
        %v6906 = vlaneseq
        %v6907 = vshrl.u32 %v6906, 7
        %v6908 = vsub.s32 4, %v6907
        %v6909 = vrot.slane %v6811, %v6908
        %v6910 = vlaneseq
        %v6911 = vshrl.u32 %v6910, 7
        %v6912 = vsub.s32 4, %v6911
        %v6913 = vrot.slane %v6813, %v6912
        %v6914 = vlaneseq
        %v6915 = vshrl.u32 %v6914, 7
        %v6916 = vsub.s32 4, %v6915
        %v6917 = vrot.slane %v6852, %v6916
        %v6918 = vlaneseq
        %v6919 = vshrl.u32 %v6918, 7
        %v6920 = vsub.s32 4, %v6919
        %v6921 = vrot.slane %v6854, %v6920
        %v6922 = vrcp.pop %v6861
        %v6923 = vmul.f32 %v6565, %v6922
        %v6924 = vrcp.pop %v6865
        %v6925 = vmul.f32 %v6567, %v6924
        %v6926 = vrcp.pop %v6869
        %v6927 = vmul.f32 %v6606, %v6926
        %v6928 = vrcp.pop %v6873
        %v6929 = vmul.f32 %v6608, %v6928
        %v6930 = vrcp.pop %v6877
        %v6931 = vmul.f32 %v6647, %v6930
        %v6932 = vrcp.pop %v6881
        %v6933 = vmul.f32 %v6649, %v6932
        %v6934 = vrcp.pop %v6885
        %v6935 = vmul.f32 %v6688, %v6934
        %v6936 = vrcp.pop %v6889
        %v6937 = vmul.f32 %v6690, %v6936
        %v6938 = vrcp.pop %v6893
        %v6939 = vmul.f32 %v6729, %v6938
        %v6940 = vrcp.pop %v6897
        %v6941 = vmul.f32 %v6731, %v6940
        %v6942 = vrcp.pop %v6901
        %v6943 = vmul.f32 %v6770, %v6942
        %v6944 = vrcp.pop %v6905
        %v6945 = vmul.f32 %v6772, %v6944
        %v6946 = vrcp.pop %v6909
        %v6947 = vmul.f32 %v6811, %v6946
        %v6948 = vrcp.pop %v6913
        %v6949 = vmul.f32 %v6813, %v6948
        %v6950 = vrcp.pop %v6917
        %v6951 = vmul.f32 %v6852, %v6950
        %v6952 = vrcp.pop %v6921
        %v6953 = vmul.f32 %v6854, %v6952
        %v6970 = vcombine.low %v6923, %v6925
        %v6971 = vcombine.low %v6927, %v6929
        %v6972 = vcombine.low %v6931, %v6933
        %v6973 = vcombine.low %v6935, %v6937
        %v6974 = vcombine.low %v6939, %v6941
        %v6975 = vcombine.low %v6943, %v6945
        %v6976 = vcombine.low %v6947, %v6949
        %v6977 = vcombine.low %v6951, %v6953
        %v6986 = vlaneseq
        %v6987 = vand.u32 %v6986, 127
        %v6988 = vadd.s32 %v6987, 128
        %vm6989 = vcmp.lt.s32.totalorder %v6987, 0
        %v6990 = vsub.s32 0, %v6987
        %v6991 = vsel %vm6989, %v6990, %v6987
        %v6992 = vshrl.u32 %v6991, 4
        %v6993 = vand.u32 %v6991, 15
        %v6994 = vsub.s32 0, %v6993
        %v6995 = vsel %vm6989, %v6994, %v6993
        %vm6996 = vcmp.lt.s32.totalorder %v6988, 0
        %v6997 = vsub.s32 0, %v6988
        %v6998 = vsel %vm6996, %v6997, %v6988
        %v6999 = vshrl.u32 %v6998, 4
        %v7000 = vand.u32 %v6998, 15
        %v7001 = vsub.s32 0, %v7000
        %v7002 = vsel %vm6996, %v7001, %v7000
        %vm7003 = vcmp.ne.s32.totalorder %v6995, 0
        %vm7004 = vcmp.ne.s32.totalorder %v7002, 0
        %vm7005 = vcmp.lt.s32.totalorder %v6995, 0
        %vm7006 = vcmp.lt.s32.totalorder %v7002, 0
        %vm7007 = vmand %vm7005, %vm7003
        %vm7008 = vmand %vm7006, %vm7004
        %v7009 = vadd.s32 %v6995, 16
        %v7010 = vadd.s32 %v7002, 16
        %v7011 = vsel %vm7007, %v7009, %v6995
        %v7012 = vsel %vm7008, %v7010, %v7002
        %vm7013 = vcmp.ge.s32.totalorder %v6987, 16
        %vm7014 = vcmp.ge.s32.totalorder %v6988, 16
        %vm7015 = vcmp.lt.s32.totalorder %v6987, 240
        %vm7016 = vcmp.lt.s32.totalorder %v6988, 240
        %vm7017 = vcmp.ge.s32.totalorder %v7011, 1
        %vm7018 = vcmp.ge.s32.totalorder %v7012, 1
        %vm7019 = vcmp.le.s32.totalorder %v7011, 14
        %vm7020 = vcmp.le.s32.totalorder %v7012, 14
        %v7021 = vld [vmem:[%s3] sm:$0xff]
        %v7022 = vld [vmem:[%s3 + $0x8] sm:$0xff]
        %v7023 = vld [vmem:[%s3 + $0x10] sm:$0xff]
        %v7024 = vld [vmem:[%s3 + $0x18] sm:$0xff]
        %7025 = vrot.lane.b32.xlu0 %v457, 17
        %v7026 = vpop.permute.xlu0 %7025
        %7027 = vrot.lane.b32.xlu0 %v463, 17
        %v7028 = vpop.permute.xlu0 %7027
        %7029 = vrot.lane.b32.xlu0 %v469, 17
        %v7030 = vpop.permute.xlu0 %7029
        %7031 = vrot.lane.b32.xlu0 %v475, 17
        %v7032 = vpop.permute.xlu0 %7031
        %7033 = vrot.lane.b32.xlu0 %v459, 17
        %v7034 = vpop.permute.xlu0 %7033
        %7035 = vrot.lane.b32.xlu0 %v465, 17
        %v7036 = vpop.permute.xlu0 %7035
        %7037 = vrot.lane.b32.xlu0 %v471, 17
        %v7038 = vpop.permute.xlu0 %7037
        %7039 = vrot.lane.b32.xlu0 %v477, 17
        %v7040 = vpop.permute.xlu0 %7039
        %vm7041 = vcmp.lt.s32.totalorder %v6987, 17
        %v7042 = vsel %vm7041, %v7026, %v7034
        %v7043 = vsel %vm7041, %v7028, %v7036
        %v7044 = vsel %vm7041, %v7030, %v7038
        %v7045 = vsel %vm7041, %v7032, %v7040
        %v7046 = vsel %vm7041, %v7034, %v7026
        %v7047 = vsel %vm7041, %v7036, %v7028
        %v7048 = vsel %vm7041, %v7038, %v7030
        %v7049 = vsel %vm7041, %v7040, %v7032
        %vm7050 = vmand %vm7013, %vm7017
        %vm7051 = vmand %vm7014, %vm7018
        %v7052 = vsel %vm7050, %v7046, 0.0
        %v7053 = vsel %vm7051, %v7042, 0.0
        %v7054 = vsel %vm7050, %v7047, 0.0
        %v7055 = vsel %vm7051, %v7043, 0.0
        %v7056 = vsel %vm7050, %v7048, 0.0
        %v7057 = vsel %vm7051, %v7044, 0.0
        %v7058 = vsel %vm7050, %v7049, 0.0
        %v7059 = vsel %vm7051, %v7045, 0.0
        %7061 = vset.pattern.permute.xlu0 0
        %7062 = vperm.xlu0 %7061, %v7021
        %v7063 = vpop.permute.xlu0 %7062
        %7066 = vset.pattern.permute.xlu0 0
        %7067 = vperm.xlu0 %7066, %v7022
        %v7068 = vpop.permute.xlu0 %7067
        %7071 = vset.pattern.permute.xlu0 0
        %7072 = vperm.xlu0 %7071, %v7023
        %v7073 = vpop.permute.xlu0 %7072
        %7076 = vset.pattern.permute.xlu0 0
        %7077 = vperm.xlu0 %7076, %v7024
        %v7078 = vpop.permute.xlu0 %7077
        %v7080 = vmul.f32 %v7063, %v7052
        %v7081 = vmul.f32 %v7063, %v7053
        %v7082 = vmul.f32 %v7068, %v7054
        %v7083 = vmul.f32 %v7068, %v7055
        %v7084 = vmul.f32 %v7073, %v7056
        %v7085 = vmul.f32 %v7073, %v7057
        %v7086 = vmul.f32 %v7078, %v7058
        %v7087 = vmul.f32 %v7078, %v7059
        %v7088 = vadd.f32 %v7080, 0.0
        %v7089 = vadd.f32 %v7081, 0.0
        %v7090 = vadd.f32 %v7082, 0.0
        %v7091 = vadd.f32 %v7083, 0.0
        %v7092 = vadd.f32 %v7084, 0.0
        %v7093 = vadd.f32 %v7085, 0.0
        %v7094 = vadd.f32 %v7086, 0.0
        %v7095 = vadd.f32 %v7087, 0.0
        %7096 = vrot.lane.b32.xlu0 %v457, 16
        %v7097 = vpop.permute.xlu0 %7096
        %7098 = vrot.lane.b32.xlu0 %v463, 16
        %v7099 = vpop.permute.xlu0 %7098
        %7100 = vrot.lane.b32.xlu0 %v469, 16
        %v7101 = vpop.permute.xlu0 %7100
        %7102 = vrot.lane.b32.xlu0 %v475, 16
        %v7103 = vpop.permute.xlu0 %7102
        %7104 = vrot.lane.b32.xlu0 %v459, 16
        %v7105 = vpop.permute.xlu0 %7104
        %7106 = vrot.lane.b32.xlu0 %v465, 16
        %v7107 = vpop.permute.xlu0 %7106
        %7108 = vrot.lane.b32.xlu0 %v471, 16
        %v7109 = vpop.permute.xlu0 %7108
        %7110 = vrot.lane.b32.xlu0 %v477, 16
        %v7111 = vpop.permute.xlu0 %7110
        %vm7112 = vcmp.lt.s32.totalorder %v6987, 16
        %v7113 = vsel %vm7112, %v7097, %v7105
        %v7114 = vsel %vm7112, %v7099, %v7107
        %v7115 = vsel %vm7112, %v7101, %v7109
        %v7116 = vsel %vm7112, %v7103, %v7111
        %v7117 = vsel %vm7112, %v7105, %v7097
        %v7118 = vsel %vm7112, %v7107, %v7099
        %v7119 = vsel %vm7112, %v7109, %v7101
        %v7120 = vsel %vm7112, %v7111, %v7103
        %v7121 = vsel %vm7013, %v7117, 0.0
        %v7122 = vsel %vm7014, %v7113, 0.0
        %v7123 = vsel %vm7013, %v7118, 0.0
        %v7124 = vsel %vm7014, %v7114, 0.0
        %v7125 = vsel %vm7013, %v7119, 0.0
        %v7126 = vsel %vm7014, %v7115, 0.0
        %v7127 = vsel %vm7013, %v7120, 0.0
        %v7128 = vsel %vm7014, %v7116, 0.0
        %7129 = vset.pattern.permute.xlu0 1
        %7130 = vperm.xlu0 %7129, %v7021
        %v7131 = vpop.permute.xlu0 %7130
        %7133 = vset.pattern.permute.xlu0 1
        %7134 = vperm.xlu0 %7133, %v7022
        %v7135 = vpop.permute.xlu0 %7134
        %7137 = vset.pattern.permute.xlu0 1
        %7138 = vperm.xlu0 %7137, %v7023
        %v7139 = vpop.permute.xlu0 %7138
        %7141 = vset.pattern.permute.xlu0 1
        %7142 = vperm.xlu0 %7141, %v7024
        %v7143 = vpop.permute.xlu0 %7142
        %v7145 = vmul.f32 %v7131, %v7121
        %v7146 = vmul.f32 %v7131, %v7122
        %v7147 = vmul.f32 %v7135, %v7123
        %v7148 = vmul.f32 %v7135, %v7124
        %v7149 = vmul.f32 %v7139, %v7125
        %v7150 = vmul.f32 %v7139, %v7126
        %v7151 = vmul.f32 %v7143, %v7127
        %v7152 = vmul.f32 %v7143, %v7128
        %v7153 = vadd.f32 %v7088, %v7145
        %v7154 = vadd.f32 %v7089, %v7146
        %v7155 = vadd.f32 %v7090, %v7147
        %v7156 = vadd.f32 %v7091, %v7148
        %v7157 = vadd.f32 %v7092, %v7149
        %v7158 = vadd.f32 %v7093, %v7150
        %v7159 = vadd.f32 %v7094, %v7151
        %v7160 = vadd.f32 %v7095, %v7152
        %7161 = vrot.lane.b32.xlu0 %v457, 15
        %v7162 = vpop.permute.xlu0 %7161
        %7163 = vrot.lane.b32.xlu0 %v463, 15
        %v7164 = vpop.permute.xlu0 %7163
        %7165 = vrot.lane.b32.xlu0 %v469, 15
        %v7166 = vpop.permute.xlu0 %7165
        %7167 = vrot.lane.b32.xlu0 %v475, 15
        %v7168 = vpop.permute.xlu0 %7167
        %7169 = vrot.lane.b32.xlu0 %v459, 15
        %v7170 = vpop.permute.xlu0 %7169
        %7171 = vrot.lane.b32.xlu0 %v465, 15
        %v7172 = vpop.permute.xlu0 %7171
        %7173 = vrot.lane.b32.xlu0 %v471, 15
        %v7174 = vpop.permute.xlu0 %7173
        %7175 = vrot.lane.b32.xlu0 %v477, 15
        %v7176 = vpop.permute.xlu0 %7175
        %vm7177 = vcmp.lt.s32.totalorder %v6987, 15
        %v7178 = vsel %vm7177, %v7162, %v7170
        %v7179 = vsel %vm7177, %v7164, %v7172
        %v7180 = vsel %vm7177, %v7166, %v7174
        %v7181 = vsel %vm7177, %v7168, %v7176
        %v7182 = vsel %vm7177, %v7170, %v7162
        %v7183 = vsel %vm7177, %v7172, %v7164
        %v7184 = vsel %vm7177, %v7174, %v7166
        %v7185 = vsel %vm7177, %v7176, %v7168
        %vm7186 = vmand %vm7013, %vm7019
        %vm7187 = vmand %vm7014, %vm7020
        %v7188 = vsel %vm7186, %v7182, 0.0
        %v7189 = vsel %vm7187, %v7178, 0.0
        %v7190 = vsel %vm7186, %v7183, 0.0
        %v7191 = vsel %vm7187, %v7179, 0.0
        %v7192 = vsel %vm7186, %v7184, 0.0
        %v7193 = vsel %vm7187, %v7180, 0.0
        %v7194 = vsel %vm7186, %v7185, 0.0
        %v7195 = vsel %vm7187, %v7181, 0.0
        %7196 = vset.pattern.permute.xlu0 2
        %7197 = vperm.xlu0 %7196, %v7021
        %v7198 = vpop.permute.xlu0 %7197
        %7200 = vset.pattern.permute.xlu0 2
        %7201 = vperm.xlu0 %7200, %v7022
        %v7202 = vpop.permute.xlu0 %7201
        %7204 = vset.pattern.permute.xlu0 2
        %7205 = vperm.xlu0 %7204, %v7023
        %v7206 = vpop.permute.xlu0 %7205
        %7208 = vset.pattern.permute.xlu0 2
        %7209 = vperm.xlu0 %7208, %v7024
        %v7210 = vpop.permute.xlu0 %7209
        %v7212 = vmul.f32 %v7198, %v7188
        %v7213 = vmul.f32 %v7198, %v7189
        %v7214 = vmul.f32 %v7202, %v7190
        %v7215 = vmul.f32 %v7202, %v7191
        %v7216 = vmul.f32 %v7206, %v7192
        %v7217 = vmul.f32 %v7206, %v7193
        %v7218 = vmul.f32 %v7210, %v7194
        %v7219 = vmul.f32 %v7210, %v7195
        %v7220 = vadd.f32 %v7153, %v7212
        %v7221 = vadd.f32 %v7154, %v7213
        %v7222 = vadd.f32 %v7155, %v7214
        %v7223 = vadd.f32 %v7156, %v7215
        %v7224 = vadd.f32 %v7157, %v7216
        %v7225 = vadd.f32 %v7158, %v7217
        %v7226 = vadd.f32 %v7159, %v7218
        %v7227 = vadd.f32 %v7160, %v7219
        %7228 = vrot.lane.b32.xlu0 %v457, 1
        %v7229 = vpop.permute.xlu0 %7228
        %7230 = vrot.lane.b32.xlu0 %v463, 1
        %v7231 = vpop.permute.xlu0 %7230
        %7232 = vrot.lane.b32.xlu0 %v469, 1
        %v7233 = vpop.permute.xlu0 %7232
        %7234 = vrot.lane.b32.xlu0 %v475, 1
        %v7235 = vpop.permute.xlu0 %7234
        %7236 = vrot.lane.b32.xlu0 %v459, 1
        %v7237 = vpop.permute.xlu0 %7236
        %7238 = vrot.lane.b32.xlu0 %v465, 1
        %v7239 = vpop.permute.xlu0 %7238
        %7240 = vrot.lane.b32.xlu0 %v471, 1
        %v7241 = vpop.permute.xlu0 %7240
        %7242 = vrot.lane.b32.xlu0 %v477, 1
        %v7243 = vpop.permute.xlu0 %7242
        %vm7244 = vcmp.lt.s32.totalorder %v6987, 1
        %v7245 = vsel %vm7244, %v7229, %v7237
        %v7246 = vsel %vm7244, %v7231, %v7239
        %v7247 = vsel %vm7244, %v7233, %v7241
        %v7248 = vsel %vm7244, %v7235, %v7243
        %v7249 = vsel %vm7244, %v7237, %v7229
        %v7250 = vsel %vm7244, %v7239, %v7231
        %v7251 = vsel %vm7244, %v7241, %v7233
        %v7252 = vsel %vm7244, %v7243, %v7235
        %v7253 = vsel %vm7017, %v7249, 0.0
        %v7254 = vsel %vm7018, %v7245, 0.0
        %v7255 = vsel %vm7017, %v7250, 0.0
        %v7256 = vsel %vm7018, %v7246, 0.0
        %v7257 = vsel %vm7017, %v7251, 0.0
        %v7258 = vsel %vm7018, %v7247, 0.0
        %v7259 = vsel %vm7017, %v7252, 0.0
        %v7260 = vsel %vm7018, %v7248, 0.0
        %7261 = vset.pattern.permute.xlu0 3
        %7262 = vperm.xlu0 %7261, %v7021
        %v7263 = vpop.permute.xlu0 %7262
        %7265 = vset.pattern.permute.xlu0 3
        %7266 = vperm.xlu0 %7265, %v7022
        %v7267 = vpop.permute.xlu0 %7266
        %7269 = vset.pattern.permute.xlu0 3
        %7270 = vperm.xlu0 %7269, %v7023
        %v7271 = vpop.permute.xlu0 %7270
        %7273 = vset.pattern.permute.xlu0 3
        %7274 = vperm.xlu0 %7273, %v7024
        %v7275 = vpop.permute.xlu0 %7274
        %v7277 = vmul.f32 %v7263, %v7253
        %v7278 = vmul.f32 %v7263, %v7254
        %v7279 = vmul.f32 %v7267, %v7255
        %v7280 = vmul.f32 %v7267, %v7256
        %v7281 = vmul.f32 %v7271, %v7257
        %v7282 = vmul.f32 %v7271, %v7258
        %v7283 = vmul.f32 %v7275, %v7259
        %v7284 = vmul.f32 %v7275, %v7260
        %v7285 = vadd.f32 %v7220, %v7277
        %v7286 = vadd.f32 %v7221, %v7278
        %v7287 = vadd.f32 %v7222, %v7279
        %v7288 = vadd.f32 %v7223, %v7280
        %v7289 = vadd.f32 %v7224, %v7281
        %v7290 = vadd.f32 %v7225, %v7282
        %v7291 = vadd.f32 %v7226, %v7283
        %v7292 = vadd.f32 %v7227, %v7284
        %7293 = vset.pattern.permute.xlu0 4
        %7294 = vperm.xlu0 %7293, %v7021
        %v7295 = vpop.permute.xlu0 %7294
        %7297 = vset.pattern.permute.xlu0 4
        %7298 = vperm.xlu0 %7297, %v7022
        %v7299 = vpop.permute.xlu0 %7298
        %7301 = vset.pattern.permute.xlu0 4
        %7302 = vperm.xlu0 %7301, %v7023
        %v7303 = vpop.permute.xlu0 %7302
        %7305 = vset.pattern.permute.xlu0 4
        %7306 = vperm.xlu0 %7305, %v7024
        %v7307 = vpop.permute.xlu0 %7306
        %v7309 = vmul.f32 %v7295, %v457
        %v7310 = vmul.f32 %v7295, %v459
        %v7311 = vmul.f32 %v7299, %v463
        %v7312 = vmul.f32 %v7299, %v465
        %v7313 = vmul.f32 %v7303, %v469
        %v7314 = vmul.f32 %v7303, %v471
        %v7315 = vmul.f32 %v7307, %v475
        %v7316 = vmul.f32 %v7307, %v477
        %v7317 = vadd.f32 %v7285, %v7309
        %v7318 = vadd.f32 %v7286, %v7310
        %v7319 = vadd.f32 %v7287, %v7311
        %v7320 = vadd.f32 %v7288, %v7312
        %v7321 = vadd.f32 %v7289, %v7313
        %v7322 = vadd.f32 %v7290, %v7314
        %v7323 = vadd.f32 %v7291, %v7315
        %v7324 = vadd.f32 %v7292, %v7316
        %7325 = vrot.lane.b32.xlu0 %v457, 127
        %v7326 = vpop.permute.xlu0 %7325
        %7327 = vrot.lane.b32.xlu0 %v463, 127
        %v7328 = vpop.permute.xlu0 %7327
        %7329 = vrot.lane.b32.xlu0 %v469, 127
        %v7330 = vpop.permute.xlu0 %7329
        %7331 = vrot.lane.b32.xlu0 %v475, 127
        %v7332 = vpop.permute.xlu0 %7331
        %7333 = vrot.lane.b32.xlu0 %v459, 127
        %v7334 = vpop.permute.xlu0 %7333
        %7335 = vrot.lane.b32.xlu0 %v465, 127
        %v7336 = vpop.permute.xlu0 %7335
        %7337 = vrot.lane.b32.xlu0 %v471, 127
        %v7338 = vpop.permute.xlu0 %7337
        %7339 = vrot.lane.b32.xlu0 %v477, 127
        %v7340 = vpop.permute.xlu0 %7339
        %vm7341 = vcmp.lt.s32.totalorder %v6987, 127
        %v7342 = vsel %vm7341, %v7326, %v7334
        %v7343 = vsel %vm7341, %v7328, %v7336
        %v7344 = vsel %vm7341, %v7330, %v7338
        %v7345 = vsel %vm7341, %v7332, %v7340
        %v7346 = vsel %vm7341, %v7334, %v7326
        %v7347 = vsel %vm7341, %v7336, %v7328
        %v7348 = vsel %vm7341, %v7338, %v7330
        %v7349 = vsel %vm7341, %v7340, %v7332
        %v7350 = vsel %vm7019, %v7342, 0.0
        %v7351 = vsel %vm7020, %v7346, 0.0
        %v7352 = vsel %vm7019, %v7343, 0.0
        %v7353 = vsel %vm7020, %v7347, 0.0
        %v7354 = vsel %vm7019, %v7344, 0.0
        %v7355 = vsel %vm7020, %v7348, 0.0
        %v7356 = vsel %vm7019, %v7345, 0.0
        %v7357 = vsel %vm7020, %v7349, 0.0
        %7358 = vset.pattern.permute.xlu0 5
        %7359 = vperm.xlu0 %7358, %v7021
        %v7360 = vpop.permute.xlu0 %7359
        %7362 = vset.pattern.permute.xlu0 5
        %7363 = vperm.xlu0 %7362, %v7022
        %v7364 = vpop.permute.xlu0 %7363
        %7366 = vset.pattern.permute.xlu0 5
        %7367 = vperm.xlu0 %7366, %v7023
        %v7368 = vpop.permute.xlu0 %7367
        %7370 = vset.pattern.permute.xlu0 5
        %7371 = vperm.xlu0 %7370, %v7024
        %v7372 = vpop.permute.xlu0 %7371
        %v7374 = vmul.f32 %v7360, %v7350
        %v7375 = vmul.f32 %v7360, %v7351
        %v7376 = vmul.f32 %v7364, %v7352
        %v7377 = vmul.f32 %v7364, %v7353
        %v7378 = vmul.f32 %v7368, %v7354
        %v7379 = vmul.f32 %v7368, %v7355
        %v7380 = vmul.f32 %v7372, %v7356
        %v7381 = vmul.f32 %v7372, %v7357
        %v7382 = vadd.f32 %v7317, %v7374
        %v7383 = vadd.f32 %v7318, %v7375
        %v7384 = vadd.f32 %v7319, %v7376
        %v7385 = vadd.f32 %v7320, %v7377
        %v7386 = vadd.f32 %v7321, %v7378
        %v7387 = vadd.f32 %v7322, %v7379
        %v7388 = vadd.f32 %v7323, %v7380
        %v7389 = vadd.f32 %v7324, %v7381
        %7390 = vrot.lane.b32.xlu0 %v457, 113
        %v7391 = vpop.permute.xlu0 %7390
        %7392 = vrot.lane.b32.xlu0 %v463, 113
        %v7393 = vpop.permute.xlu0 %7392
        %7394 = vrot.lane.b32.xlu0 %v469, 113
        %v7395 = vpop.permute.xlu0 %7394
        %7396 = vrot.lane.b32.xlu0 %v475, 113
        %v7397 = vpop.permute.xlu0 %7396
        %7398 = vrot.lane.b32.xlu0 %v459, 113
        %v7399 = vpop.permute.xlu0 %7398
        %7400 = vrot.lane.b32.xlu0 %v465, 113
        %v7401 = vpop.permute.xlu0 %7400
        %7402 = vrot.lane.b32.xlu0 %v471, 113
        %v7403 = vpop.permute.xlu0 %7402
        %7404 = vrot.lane.b32.xlu0 %v477, 113
        %v7405 = vpop.permute.xlu0 %7404
        %vm7406 = vcmp.lt.s32.totalorder %v6987, 113
        %v7407 = vsel %vm7406, %v7391, %v7399
        %v7408 = vsel %vm7406, %v7393, %v7401
        %v7409 = vsel %vm7406, %v7395, %v7403
        %v7410 = vsel %vm7406, %v7397, %v7405
        %v7411 = vsel %vm7406, %v7399, %v7391
        %v7412 = vsel %vm7406, %v7401, %v7393
        %v7413 = vsel %vm7406, %v7403, %v7395
        %v7414 = vsel %vm7406, %v7405, %v7397
        %vm7415 = vmand %vm7015, %vm7017
        %vm7416 = vmand %vm7016, %vm7018
        %v7417 = vsel %vm7415, %v7407, 0.0
        %v7418 = vsel %vm7416, %v7411, 0.0
        %v7419 = vsel %vm7415, %v7408, 0.0
        %v7420 = vsel %vm7416, %v7412, 0.0
        %v7421 = vsel %vm7415, %v7409, 0.0
        %v7422 = vsel %vm7416, %v7413, 0.0
        %v7423 = vsel %vm7415, %v7410, 0.0
        %v7424 = vsel %vm7416, %v7414, 0.0
        %7425 = vset.pattern.permute.xlu0 6
        %7426 = vperm.xlu0 %7425, %v7021
        %v7427 = vpop.permute.xlu0 %7426
        %7429 = vset.pattern.permute.xlu0 6
        %7430 = vperm.xlu0 %7429, %v7022
        %v7431 = vpop.permute.xlu0 %7430
        %7433 = vset.pattern.permute.xlu0 6
        %7434 = vperm.xlu0 %7433, %v7023
        %v7435 = vpop.permute.xlu0 %7434
        %7437 = vset.pattern.permute.xlu0 6
        %7438 = vperm.xlu0 %7437, %v7024
        %v7439 = vpop.permute.xlu0 %7438
        %v7441 = vmul.f32 %v7427, %v7417
        %v7442 = vmul.f32 %v7427, %v7418
        %v7443 = vmul.f32 %v7431, %v7419
        %v7444 = vmul.f32 %v7431, %v7420
        %v7445 = vmul.f32 %v7435, %v7421
        %v7446 = vmul.f32 %v7435, %v7422
        %v7447 = vmul.f32 %v7439, %v7423
        %v7448 = vmul.f32 %v7439, %v7424
        %v7449 = vadd.f32 %v7382, %v7441
        %v7450 = vadd.f32 %v7383, %v7442
        %v7451 = vadd.f32 %v7384, %v7443
        %v7452 = vadd.f32 %v7385, %v7444
        %v7453 = vadd.f32 %v7386, %v7445
        %v7454 = vadd.f32 %v7387, %v7446
        %v7455 = vadd.f32 %v7388, %v7447
        %v7456 = vadd.f32 %v7389, %v7448
        %7457 = vrot.lane.b32.xlu0 %v457, 112
        %v7458 = vpop.permute.xlu0 %7457
        %7459 = vrot.lane.b32.xlu0 %v463, 112
        %v7460 = vpop.permute.xlu0 %7459
        %7461 = vrot.lane.b32.xlu0 %v469, 112
        %v7462 = vpop.permute.xlu0 %7461
        %7463 = vrot.lane.b32.xlu0 %v475, 112
        %v7464 = vpop.permute.xlu0 %7463
        %7465 = vrot.lane.b32.xlu0 %v459, 112
        %v7466 = vpop.permute.xlu0 %7465
        %7467 = vrot.lane.b32.xlu0 %v465, 112
        %v7468 = vpop.permute.xlu0 %7467
        %7469 = vrot.lane.b32.xlu0 %v471, 112
        %v7470 = vpop.permute.xlu0 %7469
        %7471 = vrot.lane.b32.xlu0 %v477, 112
        %v7472 = vpop.permute.xlu0 %7471
        %vm7473 = vcmp.lt.s32.totalorder %v6987, 112
        %v7474 = vsel %vm7473, %v7458, %v7466
        %v7475 = vsel %vm7473, %v7460, %v7468
        %v7476 = vsel %vm7473, %v7462, %v7470
        %v7477 = vsel %vm7473, %v7464, %v7472
        %v7478 = vsel %vm7473, %v7466, %v7458
        %v7479 = vsel %vm7473, %v7468, %v7460
        %v7480 = vsel %vm7473, %v7470, %v7462
        %v7481 = vsel %vm7473, %v7472, %v7464
        %v7482 = vsel %vm7015, %v7474, 0.0
        %v7483 = vsel %vm7016, %v7478, 0.0
        %v7484 = vsel %vm7015, %v7475, 0.0
        %v7485 = vsel %vm7016, %v7479, 0.0
        %v7486 = vsel %vm7015, %v7476, 0.0
        %v7487 = vsel %vm7016, %v7480, 0.0
        %v7488 = vsel %vm7015, %v7477, 0.0
        %v7489 = vsel %vm7016, %v7481, 0.0
        %7490 = vset.pattern.permute.xlu0 7
        %7491 = vperm.xlu0 %7490, %v7021
        %v7492 = vpop.permute.xlu0 %7491
        %7494 = vset.pattern.permute.xlu0 7
        %7495 = vperm.xlu0 %7494, %v7022
        %v7496 = vpop.permute.xlu0 %7495
        %7498 = vset.pattern.permute.xlu0 7
        %7499 = vperm.xlu0 %7498, %v7023
        %v7500 = vpop.permute.xlu0 %7499
        %7502 = vset.pattern.permute.xlu0 7
        %7503 = vperm.xlu0 %7502, %v7024
        %v7504 = vpop.permute.xlu0 %7503
        %v7506 = vmul.f32 %v7492, %v7482
        %v7507 = vmul.f32 %v7492, %v7483
        %v7508 = vmul.f32 %v7496, %v7484
        %v7509 = vmul.f32 %v7496, %v7485
        %v7510 = vmul.f32 %v7500, %v7486
        %v7511 = vmul.f32 %v7500, %v7487
        %v7512 = vmul.f32 %v7504, %v7488
        %v7513 = vmul.f32 %v7504, %v7489
        %v7514 = vadd.f32 %v7449, %v7506
        %v7515 = vadd.f32 %v7450, %v7507
        %v7516 = vadd.f32 %v7451, %v7508
        %v7517 = vadd.f32 %v7452, %v7509
        %v7518 = vadd.f32 %v7453, %v7510
        %v7519 = vadd.f32 %v7454, %v7511
        %v7520 = vadd.f32 %v7455, %v7512
        %v7521 = vadd.f32 %v7456, %v7513
        %7522 = vrot.lane.b32.xlu0 %v457, 111
        %v7523 = vpop.permute.xlu0 %7522
        %7524 = vrot.lane.b32.xlu0 %v463, 111
        %v7525 = vpop.permute.xlu0 %7524
        %7526 = vrot.lane.b32.xlu0 %v469, 111
        %v7527 = vpop.permute.xlu0 %7526
        %7528 = vrot.lane.b32.xlu0 %v475, 111
        %v7529 = vpop.permute.xlu0 %7528
        %7530 = vrot.lane.b32.xlu0 %v459, 111
        %v7531 = vpop.permute.xlu0 %7530
        %7532 = vrot.lane.b32.xlu0 %v465, 111
        %v7533 = vpop.permute.xlu0 %7532
        %7534 = vrot.lane.b32.xlu0 %v471, 111
        %v7535 = vpop.permute.xlu0 %7534
        %7536 = vrot.lane.b32.xlu0 %v477, 111
        %v7537 = vpop.permute.xlu0 %7536
        %vm7538 = vcmp.lt.s32.totalorder %v6987, 111
        %v7539 = vsel %vm7538, %v7523, %v7531
        %v7540 = vsel %vm7538, %v7525, %v7533
        %v7541 = vsel %vm7538, %v7527, %v7535
        %v7542 = vsel %vm7538, %v7529, %v7537
        %v7543 = vsel %vm7538, %v7531, %v7523
        %v7544 = vsel %vm7538, %v7533, %v7525
        %v7545 = vsel %vm7538, %v7535, %v7527
        %v7546 = vsel %vm7538, %v7537, %v7529
        %vm7547 = vmand %vm7015, %vm7019
        %vm7548 = vmand %vm7016, %vm7020
        %v7549 = vsel %vm7547, %v7539, 0.0
        %v7550 = vsel %vm7548, %v7543, 0.0
        %v7551 = vsel %vm7547, %v7540, 0.0
        %v7552 = vsel %vm7548, %v7544, 0.0
        %v7553 = vsel %vm7547, %v7541, 0.0
        %v7554 = vsel %vm7548, %v7545, 0.0
        %v7555 = vsel %vm7547, %v7542, 0.0
        %v7556 = vsel %vm7548, %v7546, 0.0
        %7557 = vset.pattern.permute.xlu0 8
        %7558 = vperm.xlu0 %7557, %v7021
        %v7559 = vpop.permute.xlu0 %7558
        %7561 = vset.pattern.permute.xlu0 8
        %7562 = vperm.xlu0 %7561, %v7022
        %v7563 = vpop.permute.xlu0 %7562
        %7565 = vset.pattern.permute.xlu0 8
        %7566 = vperm.xlu0 %7565, %v7023
        %v7567 = vpop.permute.xlu0 %7566
        %7569 = vset.pattern.permute.xlu0 8
        %7570 = vperm.xlu0 %7569, %v7024
        %v7571 = vpop.permute.xlu0 %7570
        %v7573 = vmul.f32 %v7559, %v7549
        %v7574 = vmul.f32 %v7559, %v7550
        %v7575 = vmul.f32 %v7563, %v7551
        %v7576 = vmul.f32 %v7563, %v7552
        %v7577 = vmul.f32 %v7567, %v7553
        %v7578 = vmul.f32 %v7567, %v7554
        %v7579 = vmul.f32 %v7571, %v7555
        %v7580 = vmul.f32 %v7571, %v7556
        %v7581 = vadd.f32 %v7514, %v7573
        %v7582 = vadd.f32 %v7515, %v7574
        %v7583 = vadd.f32 %v7516, %v7575
        %v7584 = vadd.f32 %v7517, %v7576
        %v7585 = vadd.f32 %v7518, %v7577
        %v7586 = vadd.f32 %v7519, %v7578
        %v7587 = vadd.f32 %v7520, %v7579
        %v7588 = vadd.f32 %v7521, %v7580
        %v7589 = vld [vmem:[%s4] sm:$0xff]
        %v7590 = vld [vmem:[%s4 + $0x8] sm:$0xff]
        %v7591 = vld [vmem:[%s4 + $0x10] sm:$0xff]
        %v7592 = vld [vmem:[%s4 + $0x18] sm:$0xff]
        %7594 = vset.pattern.permute.xlu0 0
        %7595 = vperm.xlu0 %7594, %v7589
        %v7596 = vpop.permute.xlu0 %7595
        %7599 = vset.pattern.permute.xlu0 0
        %7600 = vperm.xlu0 %7599, %v7590
        %v7601 = vpop.permute.xlu0 %7600
        %7604 = vset.pattern.permute.xlu0 0
        %7605 = vperm.xlu0 %7604, %v7591
        %v7606 = vpop.permute.xlu0 %7605
        %7609 = vset.pattern.permute.xlu0 0
        %7610 = vperm.xlu0 %7609, %v7592
        %v7611 = vpop.permute.xlu0 %7610
        %v7613 = vadd.f32 %v7581, %v7596
        %v7614 = vadd.f32 %v7582, %v7596
        %v7615 = vadd.f32 %v7583, %v7601
        %v7616 = vadd.f32 %v7584, %v7601
        %v7617 = vadd.f32 %v7585, %v7606
        %v7618 = vadd.f32 %v7586, %v7606
        %v7619 = vadd.f32 %v7587, %v7611
        %v7620 = vadd.f32 %v7588, %v7611
        %v7629 = vcombine.low %v7613, %v7614
        %v7630 = vcombine.high %v7613, %v7614
        %v7631 = vcombine.low %v7615, %v7616
        %v7632 = vcombine.high %v7615, %v7616
        %v7633 = vcombine.low %v7617, %v7618
        %v7634 = vcombine.high %v7617, %v7618
        %v7635 = vcombine.low %v7619, %v7620
        %v7636 = vcombine.high %v7619, %v7620
        %v7645 = vadd.f32 %v6970, %v7629
        %v7646 = vadd.f32 %v6971, %v7630
        %v7647 = vadd.f32 %v6972, %v7631
        %v7648 = vadd.f32 %v6973, %v7632
        %v7649 = vadd.f32 %v6974, %v7633
        %v7650 = vadd.f32 %v6975, %v7634
        %v7651 = vadd.f32 %v6976, %v7635
        %v7652 = vadd.f32 %v6977, %v7636
        %v7653 = vld [vmem:[%s5] sm:$0xff]
        %v7654 = vld [vmem:[%s5 + $0x8] sm:$0xff]
        %v7655 = vld [vmem:[%s5 + $0x10] sm:$0xff]
        %v7656 = vld [vmem:[%s5 + $0x18] sm:$0xff]
        %v7657 = vld [vmem:[%s6] sm:$0xff]
        %v7658 = vld [vmem:[%s6 + $0x8] sm:$0xff]
        %v7659 = vld [vmem:[%s6 + $0x10] sm:$0xff]
        %v7660 = vld [vmem:[%s6 + $0x18] sm:$0xff]
        %7662 = vset.pattern.permute.xlu0 0
        %7663 = vperm.xlu0 %7662, %v7657
        %v7664 = vpop.permute.xlu0 %7663
        %7667 = vset.pattern.permute.xlu0 0
        %7668 = vperm.xlu0 %7667, %v7658
        %v7669 = vpop.permute.xlu0 %7668
        %7672 = vset.pattern.permute.xlu0 0
        %7673 = vperm.xlu0 %7672, %v7659
        %v7674 = vpop.permute.xlu0 %7673
        %7677 = vset.pattern.permute.xlu0 0
        %7678 = vperm.xlu0 %7677, %v7660
        %v7679 = vpop.permute.xlu0 %7678
        %v7689 = vcombine.low %v7645, %v7646
        %v7690 = vcombine.high %v7645, %v7646
        %v7691 = vcombine.low %v7647, %v7648
        %v7692 = vcombine.high %v7647, %v7648
        %v7693 = vcombine.low %v7649, %v7650
        %v7694 = vcombine.high %v7649, %v7650
        %v7695 = vcombine.low %v7651, %v7652
        %v7696 = vcombine.high %v7651, %v7652
        %v7706 = vsel %vm341, %v7653, 0
        %v7709 = vsel %vm341, %v7654, 0
        %v7712 = vsel %vm341, %v7655, 0
        %v7715 = vsel %vm341, %v7656, 0
        %7717 = vmatprep.subr.mxu0 0.0
        %7718 = vmatpush1.msra.mxu0 0.0
        %7719 = vmatprep.subr.mxu0 0.0
        %7720 = vmatpush1.msra.mxu0 0.0
        %7721 = vmatprep.subr.mxu0 0.0
        %7722 = vmatpush1.msra.mxu0 0.0
        %7723 = vmatprep.subr.mxu0 0.0
        %7724 = vmatpush1.msra.mxu0 0.0
        %7725 = vmatprep.subr.mxu0 0.0
        %7726 = vmatpush1.msra.mxu0 0.0
        %7727 = vmatprep.subr.mxu0 0.0
        %7728 = vmatpush1.msra.mxu0 0.0
        %7729 = vmatprep.subr.mxu0 0.0
        %7730 = vmatpush1.msra.mxu0 0.0
        %7731 = vmatprep.subr.mxu0 0.0
        %7732 = vmatpush1.msra.mxu0 0.0
        %7733 = vmatprep.subr.mxu0 0.0
        %7734 = vmatpush1.msra.mxu0 0.0
        %7735 = vmatprep.subr.mxu0 0.0
        %7736 = vmatpush1.msra.mxu0 0.0
        %7737 = vmatprep.subr.mxu0 0.0
        %7738 = vmatpush1.msra.mxu0 0.0
        %7739 = vmatprep.subr.mxu0 0.0
        %7740 = vmatpush1.msra.mxu0 0.0
        %7741 = vmatprep.subr.mxu0 %v7696
        %7742 = vmatpush1.msra.mxu0 %v7695
        %7743 = vmatprep.subr.mxu0 %v7694
        %7744 = vmatpush1.msra.mxu0 %v7693
        %7745 = vmatprep.subr.mxu0 %v7692
        %7746 = vmatpush1.msra.mxu0 %v7691
        %7747 = vmatprep.subr.mxu0 %v7690
        %7748 = vmatpush1.msra.mxu0 %v7689
        %7749 = vmatprep.subr.mxu0 0.0
        %7750 = vmatpush2.msra.mxu0 0.0
        %7751 = vmatprep.subr.mxu0 0.0
        %7752 = vmatpush2.msra.mxu0 0.0
        %7753 = vmatprep.subr.mxu0 0.0
        %7754 = vmatpush2.msra.mxu0 0.0
        %7755 = vmatprep.subr.mxu0 0.0
        %7756 = vmatpush2.msra.mxu0 0.0
        %7757 = vmatprep.subr.mxu0 0.0
        %7758 = vmatpush2.msra.mxu0 0.0
        %7759 = vmatprep.subr.mxu0 0.0
        %7760 = vmatpush2.msra.mxu0 0.0
        %7761 = vmatprep.subr.mxu0 0.0
        %7762 = vmatpush2.msra.mxu0 0.0
        %7763 = vmatprep.subr.mxu0 0.0
        %7764 = vmatpush2.msra.mxu0 0.0
        %7765 = vmatprep.subr.mxu0 0.0
        %7766 = vmatpush2.msra.mxu0 0.0
        %7767 = vmatprep.subr.mxu0 0.0
        %7768 = vmatpush2.msra.mxu0 0.0
        %7769 = vmatprep.subr.mxu0 0.0
        %7770 = vmatpush2.msra.mxu0 0.0
        %7771 = vmatprep.subr.mxu0 0.0
        %7772 = vmatpush2.msra.mxu0 0.0
        %7773 = vmatprep.subr.mxu0 0.0
        %7774 = vmatpush2.msra.mxu0 0.0
        %7775 = vmatprep.subr.mxu0 0.0
        %7776 = vmatpush2.msra.mxu0 0.0
        %7777 = vmatprep.subr.mxu0 0.0
        %7778 = vmatpush2.msra.mxu0 0.0
        %7779 = vmatprep.subr.mxu0 0.0
        %7780 = vmatpush2.msra.mxu0 0.0
        %7781 = vmatprep.mubr.f32.mxu0 0.0
        %7782 = vmatmul.mubr.f32.gmra.mxu0 %v7706
        %v7783 = vpop.f32.mrf.mxu0
        %v7784 = vadd.f32 %v7664, %v7783
        %v7785 = vpop.f32.mrf.mxu0
        %v7786 = vadd.f32 %v7664, %v7785
        %7787 = vmatprep.mubr.f32.mxu0 0.0
        %7788 = vmatmul.mubr.f32.gmra.mxu0 %v7709
        %v7789 = vpop.f32.mrf.mxu0
        %v7790 = vadd.f32 %v7669, %v7789
        %v7791 = vpop.f32.mrf.mxu0
        %v7792 = vadd.f32 %v7669, %v7791
        %7793 = vmatprep.mubr.f32.mxu0 0.0
        %7794 = vmatmul.mubr.f32.gmra.mxu0 %v7712
        %v7795 = vpop.f32.mrf.mxu0
        %v7796 = vadd.f32 %v7674, %v7795
        %v7797 = vpop.f32.mrf.mxu0
        %v7798 = vadd.f32 %v7674, %v7797
        %7799 = vmatprep.mubr.f32.mxu0 0.0
        %7800 = vmatmul.mubr.f32.gmra.mxu0 %v7715
        %v7801 = vpop.f32.mrf.mxu0
        %v7802 = vadd.f32 %v7679, %v7801
        %v7803 = vpop.f32.mrf.mxu0
        %v7804 = vadd.f32 %v7679, %v7803
        %7805 = vdwg.mxu0
        %7806 = vst [vmem:[%s271] sm:$0xff] %v7784
        %7807 = vst [vmem:[%s271 + $0x8] sm:$0xff] %v7786
        %7808 = vst [vmem:[%s271 + $0x10] sm:$0xff] %v7790
        %7809 = vst [vmem:[%s271 + $0x18] sm:$0xff] %v7792
        %7810 = vst [vmem:[%s271 + $0x20] sm:$0xff] %v7796
        %7811 = vst [vmem:[%s271 + $0x28] sm:$0xff] %v7798
        %7812 = vst [vmem:[%s271 + $0x30] sm:$0xff] %v7802
        %7813 = vst [vmem:[%s271 + $0x38] sm:$0xff] %v7804
        %s7814 = sand.u32 %s181, 1
        %s7815 = scalar_lea.sflag [#allocation3], %s7814
        %s7816 = sand.u32 %s181, 1
        %s7817 = smul.addr %s7816, 64
        %s7818 = scalar_lea.vmem [#allocation2], %s7817
        // Predicated region
        $region49: #{tpu_custom_call.1} parent=47 // pred_check
          %p7819 = pneg %p191
        $region50: #{tpu_custom_call.1} parent=47 // pred_check_branch
          %7821 = sbr.rel (%p7819) target = $region52
        $region51: #{tpu_custom_call.1} parent=47 // pred_region
          %s7823 = ssub.s32 1024, 1024
          %7824 = vsyncadd %s7815, %s7823
          %s7825 = smul.addr %s21, 8
          %s7826 = smul.addr %s7825, 128
          %s7827 = scalar_lea.hbm %s7, %s7826
          %s7828 = sshll.u32 %s7818, 4
          %s7829 = int_to_ptr.vmem [resolvable:$true] %s7828
          %7834 = dma.vmem_to_hbm [thread:$0]  %s7829, 1024, %s7827, %s7815, 256, 256, 16
        $region52: #{tpu_custom_call.1} parent=47 // pred_fallthru
          _
      $region48: #{tpu_custom_call.1} parent=5 // pred_fallthru
        _
      %p7835 = scmp.le.s32.totalorder 2, %s16
      // Predicated region
      $region53: #{tpu_custom_call.1} parent=5 // pred_check
        %p7836 = pneg %p7835
      $region54: #{tpu_custom_call.1} parent=5 // pred_check_branch
        %7838 = sbr.rel (%p7836) target = $region56
      $region55: #{tpu_custom_call.1} parent=5 // pred_region
        %s7839 = ssub.s32 %s16, 2
        // Predicated region
        $region57: #{tpu_custom_call.1} parent=55 // pred_check
          %p7840 = pneg %p197
        $region58: #{tpu_custom_call.1} parent=55 // pred_check_branch
          %7842 = sbr.rel (%p7840) target = $region60
        $region59: #{tpu_custom_call.1} parent=55 // pred_region
          %s7843 = sand.u32 %s182, 1
          %s7844 = scalar_lea.sflag [#allocation3], %s7843
          %s7845 = sand.u32 %s182, 1
          %s7846 = smul.addr %s7845, 64
          %s7847 = scalar_lea.vmem [#allocation2], %s7846
          %7848 = dma.done %s7844, 1024
        $region60: #{tpu_custom_call.1} parent=55 // pred_fallthru
          _
      $region56: #{tpu_custom_call.1} parent=5 // pred_fallthru
        _
    $region6: #{tpu_custom_call.1} parent=1 // loop_footer
      %s20 = sadd.s32 1, %s16
    $region7: #{tpu_custom_call.1} parent=1 // loop_footer_branch
      %15 = sbr.rel target = $region3
    $region8: #{tpu_custom_call.1} parent=1 // loop_exit
      _
    %7849 = vsyncpa [#allocation3], 1
    %s7850 = scalar_lea.sflag [#allocation3], 1
    %7851 = vsyncpa %s7850, 1

</llo_original>
